<compile_context>
chip_gen: v5e
topology: v5e:2x2
jax: 0.10.0
libtpu: 0.0.40
codegen_flags: <defaults>
</compile_context>

<pallas_src>
import jax
import jax.numpy as jnp
from jax import lax
from jax.experimental import pallas as pl
from jax.experimental.pallas import tpu as pltpu


def _repmixer_block_kernel(H, W, C, HID, K3, K7):
    P3 = K3 // 2
    P7 = K7 // 2

    def kernel(x_ref, w3_ref, b3_ref, w7_ref, w1_ref, b1_ref, w2_ref, b2_ref,
               o_ref, xcan_ref, ycan_ref):
        # Zero-padded canvases for the two depthwise convs.  Re-zeroed every grid step
        # (cheap vector stores) so the kernel stays correct when the "parallel" batch
        # axis is sharded across TensorCores and a core never sees program_id(0) == 0.
        xcan_ref[...] = jnp.zeros_like(xcan_ref)
        ycan_ref[...] = jnp.zeros_like(ycan_ref)
        xcan_ref[P3:P3 + H, P3:P3 + W, :] = x_ref[0]

        # ---- token mixer: reparameterized RepMixer = depthwise K3xK3 conv + bias ----
        y = jnp.zeros((H, W, C), jnp.float32)
        for i in range(K3):
            for j in range(K3):
                y = y + xcan_ref[i:i + H, j:j + W, :] * w3_ref[i, j, :]
        y = y + b3_ref[...]                          # (1, C) broadcasts over (H, W, C)

        # Park the residual base in the output VMEM block now; frees its 32 live vregs
        # during the 49-tap depthwise conv below.
        o_ref[0] = y.reshape(H * W, C)
        ycan_ref[P7:P7 + H, P7:P7 + W, :] = y

        # ---- ConvFFN depthwise K7xK7 conv (BatchNorm scale folded into w7, BatchNorm
        #      shift folded through fc1 into b1 during weight prep) ----
        h = jnp.zeros((H, W, C), jnp.float32)
        for i in range(K7):
            for j in range(K7):
                h = h + ycan_ref[i:i + H, j:j + W, :] * w7_ref[i, j, :]

        # ---- pointwise MLP on the MXU: fc1 -> GELU -> fc2 (block layer_scale folded) ----
        h2 = h.reshape(H * W, C)                     # lane-dense (256, 128)
        z = jnp.dot(h2, w1_ref[...], preferred_element_type=jnp.float32) + b1_ref[...]
        # TODO(synk): torch nn.GELU defaults to the exact erf form; the tanh
        # approximation is used here (and in the reference).
        z = jax.nn.gelu(z, approximate=True)
        f = jnp.dot(z, w2_ref[...], preferred_element_type=jnp.float32) + b2_ref[...]

        # ---- residual: out = token_mixer(x) + layer_scale * ConvFFN(token_mixer(x)) ----
        # TODO(synk): Dropout / DropPath are identity (p=0.0, eval mode); not emitted.
        o_ref[0] = o_ref[0] + f                      # unmasked 128-lane stores

    return kernel


def prepare_repmixer_block_weights(rm_w, rm_b, dw_w, bn_gamma, bn_beta, bn_mean,
                                   bn_var, fc1_w, fc1_b, fc2_w, fc2_b,
                                   layer_scale, eps=1e-5):
    """One-time weight prep (hoisted out of the per-call hot path).

    Converts PyTorch-layout parameters to channels-last, folds eval-mode BatchNorm
    (scale into the depthwise 7x7 weight, shift through fc1 into the fc1 bias), and
    folds the block-level layer_scale into the second 1x1 conv weight/bias.
    """
    C = rm_w.shape[0]
    inv_std = bn_gamma / jnp.sqrt(bn_var + eps)                # (C,)
    bn_shift = bn_beta - bn_mean * inv_std                     # (C,)
    w1 = fc1_w.T                                               # (C, HID)
    # shift @ W1 done elementwise in f32 to avoid any matmul precision surprises.
    b1 = fc1_b + jnp.sum(bn_shift[:, None] * w1, axis=0)       # (HID,)
    return dict(
        w3=jnp.transpose(rm_w[:, 0], (1, 2, 0)),               # (K3, K3, C)
        b3=rm_b.reshape(1, C),
        w7=jnp.transpose(dw_w[:, 0], (1, 2, 0)) * inv_std,     # (K7, K7, C), BN scale folded
        w1=w1,
        b1=b1.reshape(1, -1),
        w2=fc2_w.T * layer_scale[None, :],                     # (HID, C), layer_scale folded
        b2=(fc2_b * layer_scale).reshape(1, C),
    )


def repmixer_block_pallas(x_nchw, prep):
    """x_nchw: (B, C, H, W) float32. Returns (B, C, H, W)."""
    B, C, H, W = x_nchw.shape
    N = H * W
    K3 = prep["w3"].shape[0]
    K7 = prep["w7"].shape[0]
    HID = prep["w1"].shape[1]
    p3, p7 = K3 // 2, K7 // 2

    # NCHW -> channels-last tokens (XLA glue); zero-padding happens inside the kernel.
    x_nhwc = jnp.transpose(x_nchw, (0, 2, 3, 1))

    out_tok = pl.pallas_call(
        _repmixer_block_kernel(H, W, C, HID, K3, K7),
        out_shape=jax.ShapeDtypeStruct((B, N, C), jnp.float32),
        grid_spec=pltpu.PrefetchScalarGridSpec(
            num_scalar_prefetch=0,
            grid=(B,),
            in_specs=[
                pl.BlockSpec((1, H, W, C), lambda b: (b, 0, 0, 0)),     # x (channels-last)
                pl.BlockSpec((K3, K3, C), lambda b: (0, 0, 0)),         # repmixer dw weight
                pl.BlockSpec((1, C), lambda b: (0, 0)),                 # repmixer bias
                pl.BlockSpec((K7, K7, C), lambda b: (0, 0, 0)),         # ffn dw weight (BN folded)
                pl.BlockSpec((C, HID), lambda b: (0, 0)),               # fc1 weight
                pl.BlockSpec((1, HID), lambda b: (0, 0)),               # fc1 bias (BN shift folded)
                pl.BlockSpec((HID, C), lambda b: (0, 0)),               # fc2 weight (ls folded)
                pl.BlockSpec((1, C), lambda b: (0, 0)),                 # fc2 bias (ls folded)
            ],
            out_specs=pl.BlockSpec((1, N, C), lambda b: (b, 0, 0)),
            scratch_shapes=[
                pltpu.VMEM((H + 2 * p3, W + 2 * p3, C), jnp.float32),   # 3x3 canvas
                pltpu.VMEM((H + 2 * p7, W + 2 * p7, C), jnp.float32),   # 7x7 canvas
            ],
        ),
        compiler_params=pltpu.CompilerParams(
            dimension_semantics=("parallel",)),
    )(x_nhwc, prep["w3"], prep["b3"], prep["w7"], prep["w1"], prep["b1"],
      prep["w2"], prep["b2"])

    # tokens (B, N, C) -> NCHW
    return jnp.transpose(out_tok, (0, 2, 1)).reshape(B, C, H, W)


def repmixer_block_reference(x_nchw, rm_w, rm_b, dw_w, bn_gamma, bn_beta,
                             bn_mean, bn_var, fc1_w, fc1_b, fc2_w, fc2_b,
                             layer_scale, eps=1e-5):
    """Pure-JAX reference matching the PyTorch forward (eval mode, reparam RepMixer)."""
    B, C, H, W = x_nchw.shape
    dn = ("NCHW", "OIHW", "NCHW")
    hp = lax.Precision.HIGHEST
    # token mixer (reparameterized RepMixer): depthwise 3x3 conv + bias
    y = lax.conv_general_dilated(x_nchw, rm_w, (1, 1), [(1, 1), (1, 1)],
                                 dimension_numbers=dn, feature_group_count=C,
                                 precision=hp)
    y = y + rm_b[None, :, None, None]
    # ConvFFN: depthwise 7x7 conv -> BN (eval) -> fc1 -> GELU -> fc2
    h = lax.conv_general_dilated(y, dw_w, (1, 1), [(3, 3), (3, 3)],
                                 dimension_numbers=dn, feature_group_count=C,
                                 precision=hp)
    inv_std = bn_gamma / jnp.sqrt(bn_var + eps)
    h = (h - bn_mean[None, :, None, None]) * inv_std[None, :, None, None] \
        + bn_beta[None, :, None, None]
    h = jnp.einsum("bchw,oc->bohw", h, fc1_w, precision=hp) + fc1_b[None, :, None, None]
    h = jax.nn.gelu(h, approximate=True)   # torch exact-erf GELU approximated (see kernel TODO)
    h = jnp.einsum("bchw,oc->bohw", h, fc2_w, precision=hp) + fc2_b[None, :, None, None]
    return y + layer_scale[None, :, None, None] * h


if __name__ == "__main__":
    # Block config: dim=128, kernel_size=3, mlp_ratio=4.0 -> hidden=512; input NCHW.
    B, C, H, W = 2, 128, 16, 16
    HID = int(C * 4.0)
    eps = 1e-5

    key = jax.random.PRNGKey(0)
    ks = jax.random.split(key, 12)
    x = jax.random.normal(ks[0], (B, C, H, W), jnp.float32)
    rm_w = jax.random.normal(ks[1], (C, 1, 3, 3), jnp.float32) * 0.2      # depthwise 3x3
    rm_b = jax.random.normal(ks[2], (C,), jnp.float32) * 0.1
    dw_w = jax.random.normal(ks[3], (C, 1, 7, 7), jnp.float32) * 0.1      # depthwise 7x7
    bn_gamma = 1.0 + 0.1 * jax.random.normal(ks[4], (C,), jnp.float32)
    bn_beta = 0.1 * jax.random.normal(ks[5], (C,), jnp.float32)
    bn_mean = 0.1 * jax.random.normal(ks[6], (C,), jnp.float32)
    bn_var = jnp.abs(jax.random.normal(ks[7], (C,), jnp.float32)) + 0.5
    fc1_w = jax.random.normal(ks[8], (HID, C), jnp.float32) * 0.05        # 1x1 conv (out,in)
    fc1_b = 0.05 * jax.random.normal(ks[9], (HID,), jnp.float32)
    fc2_w = jax.random.normal(ks[10], (C, HID), jnp.float32) * 0.05       # 1x1 conv (out,in)
    fc2_b = 0.05 * jax.random.normal(ks[11], (C,), jnp.float32)
    layer_scale = jnp.full((C,), 0.1, jnp.float32)   # "trained" value (init is 1e-5)

    prep = prepare_repmixer_block_weights(rm_w, rm_b, dw_w, bn_gamma, bn_beta,
                                          bn_mean, bn_var, fc1_w, fc1_b,
                                          fc2_w, fc2_b, layer_scale, eps=eps)

    out = repmixer_block_pallas(x, prep)
    out = jax.block_until_ready(out)

    ref = repmixer_block_reference(x, rm_w, rm_b, dw_w, bn_gamma, bn_beta,
                                   bn_mean, bn_var, fc1_w, fc1_b, fc2_w, fc2_b,
                                   layer_scale, eps=eps)
    assert out.shape == (B, C, H, W)
    err = jnp.max(jnp.abs(out - ref))
    assert jnp.allclose(out, ref, atol=2e-4, rtol=2e-4), f"max err {err}"
    print("KERNEL_OK")
</pallas_src>

<mosaic_0001>
module attributes {stable_mosaic.version = 11 : i64} {
  func.func @kernel(%arg0: i32, %arg1: memref<1x16x16x128xf32, #tpu.memory_space<vmem>>, %arg2: memref<3x3x128xf32, #tpu.memory_space<vmem>>, %arg3: memref<1x128xf32, #tpu.memory_space<vmem>>, %arg4: memref<7x7x128xf32, #tpu.memory_space<vmem>>, %arg5: memref<128x512xf32, #tpu.memory_space<vmem>>, %arg6: memref<1x512xf32, #tpu.memory_space<vmem>>, %arg7: memref<512x128xf32, #tpu.memory_space<vmem>>, %arg8: memref<1x128xf32, #tpu.memory_space<vmem>>, %arg9: memref<1x256x128xf32, #tpu.memory_space<vmem>>, %arg10: memref<18x18x128xf32, #tpu.memory_space<vmem>>, %arg11: memref<22x22x128xf32, #tpu.memory_space<vmem>>) attributes {dimension_semantics = [#tpu.dimension_semantics<parallel>], iteration_bounds = array<i64: 2>, scalar_prefetch = 0 : i64, scratch_operands = 2 : i64, tpu.core_type = #tpu.core_type<tc>, window_params = [{transform_indices = @transform_0, window_bounds = array<i64: 1, 16, 16, 128>}, {pipeline_mode = #tpu.pipeline_mode<synchronous>, transform_indices = @transform_1, window_bounds = array<i64: 3, 3, 128>}, {pipeline_mode = #tpu.pipeline_mode<synchronous>, transform_indices = @transform_2, window_bounds = array<i64: 1, 128>}, {pipeline_mode = #tpu.pipeline_mode<synchronous>, transform_indices = @transform_3, window_bounds = array<i64: 7, 7, 128>}, {pipeline_mode = #tpu.pipeline_mode<synchronous>, transform_indices = @transform_4, window_bounds = array<i64: 128, 512>}, {pipeline_mode = #tpu.pipeline_mode<synchronous>, transform_indices = @transform_5, window_bounds = array<i64: 1, 512>}, {pipeline_mode = #tpu.pipeline_mode<synchronous>, transform_indices = @transform_6, window_bounds = array<i64: 512, 128>}, {pipeline_mode = #tpu.pipeline_mode<synchronous>, transform_indices = @transform_7, window_bounds = array<i64: 1, 128>}, {transform_indices = @transform_8, window_bounds = array<i64: 1, 256, 128>}]} {
    %cst = arith.constant 0.000000e+00 : f32
    %0 = vector.broadcast %cst : f32 to vector<18x18x128xf32>
    %c0 = arith.constant 0 : index
    %c0_0 = arith.constant 0 : index
    %c0_1 = arith.constant 0 : index
    %1 = vector.load %arg10[%c0, %c0_0, %c0_1] : memref<18x18x128xf32, #tpu.memory_space<vmem>>, vector<18x18x128xf32>
    tpu.vector_store %arg10[%c0, %c0_0, %c0_1], %0 {strides = array<i32>} : memref<18x18x128xf32, #tpu.memory_space<vmem>>, vector<18x18x128xf32>,
    %cst_2 = arith.constant 0.000000e+00 : f32
    %2 = vector.broadcast %cst_2 : f32 to vector<22x22x128xf32>
    %c0_3 = arith.constant 0 : index
    %c0_4 = arith.constant 0 : index
    %c0_5 = arith.constant 0 : index
    %3 = vector.load %arg11[%c0_3, %c0_4, %c0_5] : memref<22x22x128xf32, #tpu.memory_space<vmem>>, vector<22x22x128xf32>
    tpu.vector_store %arg11[%c0_3, %c0_4, %c0_5], %2 {strides = array<i32>} : memref<22x22x128xf32, #tpu.memory_space<vmem>>, vector<22x22x128xf32>,
    %c0_6 = arith.constant 0 : index
    %c0_7 = arith.constant 0 : index
    %c0_8 = arith.constant 0 : index
    %c0_9 = arith.constant 0 : index
    %4 = vector.load %arg1[%c0_6, %c0_7, %c0_8, %c0_9] : memref<1x16x16x128xf32, #tpu.memory_space<vmem>>, vector<1x16x16x128xf32>
    %5 = vector.shape_cast %4 : vector<1x16x16x128xf32> to vector<16x16x128xf32>
    %c1 = arith.constant 1 : index
    %c1_10 = arith.constant 1 : index
    %c0_11 = arith.constant 0 : index
    %6 = vector.load %arg10[%c1, %c1_10, %c0_11] : memref<18x18x128xf32, #tpu.memory_space<vmem>>, vector<16x16x128xf32>
    tpu.vector_store %arg10[%c1, %c1_10, %c0_11], %5 {strides = array<i32>} : memref<18x18x128xf32, #tpu.memory_space<vmem>>, vector<16x16x128xf32>,
    %cst_12 = arith.constant 0.000000e+00 : f32
    %7 = vector.broadcast %cst_12 : f32 to vector<16x16x128xf32>
    %c0_13 = arith.constant 0 : index
    %c0_14 = arith.constant 0 : index
    %c0_15 = arith.constant 0 : index
    %8 = vector.load %arg10[%c0_13, %c0_14, %c0_15] : memref<18x18x128xf32, #tpu.memory_space<vmem>>, vector<16x16x128xf32>
    %c0_16 = arith.constant 0 : index
    %c0_17 = arith.constant 0 : index
    %c0_18 = arith.constant 0 : index
    %9 = vector.load %arg2[%c0_16, %c0_17, %c0_18] : memref<3x3x128xf32, #tpu.memory_space<vmem>>, vector<1x1x128xf32>
    %10 = vector.shape_cast %9 : vector<1x1x128xf32> to vector<128xf32>
    %11 = vector.shape_cast %10 : vector<128xf32> to vector<1x1x128xf32>
    %12 = vector.broadcast %11 : vector<1x1x128xf32> to vector<16x16x128xf32>
    %13 = arith.mulf %8, %12 : vector<16x16x128xf32>
    %14 = arith.addf %7, %13 : vector<16x16x128xf32>
    %c0_19 = arith.constant 0 : index
    %c1_20 = arith.constant 1 : index
    %c0_21 = arith.constant 0 : index
    %15 = vector.load %arg10[%c0_19, %c1_20, %c0_21] : memref<18x18x128xf32, #tpu.memory_space<vmem>>, vector<16x16x128xf32>
    %c0_22 = arith.constant 0 : index
    %c1_23 = arith.constant 1 : index
    %c0_24 = arith.constant 0 : index
    %16 = vector.load %arg2[%c0_22, %c1_23, %c0_24] : memref<3x3x128xf32, #tpu.memory_space<vmem>>, vector<1x1x128xf32>
    %17 = vector.shape_cast %16 : vector<1x1x128xf32> to vector<128xf32>
    %18 = vector.shape_cast %17 : vector<128xf32> to vector<1x1x128xf32>
    %19 = vector.broadcast %18 : vector<1x1x128xf32> to vector<16x16x128xf32>
    %20 = arith.mulf %15, %19 : vector<16x16x128xf32>
    %21 = arith.addf %14, %20 : vector<16x16x128xf32>
    %c0_25 = arith.constant 0 : index
    %c2 = arith.constant 2 : index
    %c0_26 = arith.constant 0 : index
    %22 = vector.load %arg10[%c0_25, %c2, %c0_26] : memref<18x18x128xf32, #tpu.memory_space<vmem>>, vector<16x16x128xf32>
    %c0_27 = arith.constant 0 : index
    %c2_28 = arith.constant 2 : index
    %c0_29 = arith.constant 0 : index
    %23 = vector.load %arg2[%c0_27, %c2_28, %c0_29] : memref<3x3x128xf32, #tpu.memory_space<vmem>>, vector<1x1x128xf32>
    %24 = vector.shape_cast %23 : vector<1x1x128xf32> to vector<128xf32>
    %25 = vector.shape_cast %24 : vector<128xf32> to vector<1x1x128xf32>
    %26 = vector.broadcast %25 : vector<1x1x128xf32> to vector<16x16x128xf32>
    %27 = arith.mulf %22, %26 : vector<16x16x128xf32>
    %28 = arith.addf %21, %27 : vector<16x16x128xf32>
    %c1_30 = arith.constant 1 : index
    %c0_31 = arith.constant 0 : index
    %c0_32 = arith.constant 0 : index
    %29 = vector.load %arg10[%c1_30, %c0_31, %c0_32] : memref<18x18x128xf32, #tpu.memory_space<vmem>>, vector<16x16x128xf32>
    %c1_33 = arith.constant 1 : index
    %c0_34 = arith.constant 0 : index
    %c0_35 = arith.constant 0 : index
    %30 = vector.load %arg2[%c1_33, %c0_34, %c0_35] : memref<3x3x128xf32, #tpu.memory_space<vmem>>, vector<1x1x128xf32>
    %31 = vector.shape_cast %30 : vector<1x1x128xf32> to vector<128xf32>
    %32 = vector.shape_cast %31 : vector<128xf32> to vector<1x1x128xf32>
    %33 = vector.broadcast %32 : vector<1x1x128xf32> to vector<16x16x128xf32>
    %34 = arith.mulf %29, %33 : vector<16x16x128xf32>
    %35 = arith.addf %28, %34 : vector<16x16x128xf32>
    %c1_36 = arith.constant 1 : index
    %c1_37 = arith.constant 1 : index
    %c0_38 = arith.constant 0 : index
    %36 = vector.load %arg10[%c1_36, %c1_37, %c0_38] : memref<18x18x128xf32, #tpu.memory_space<vmem>>, vector<16x16x128xf32>
    %c1_39 = arith.constant 1 : index
    %c1_40 = arith.constant 1 : index
    %c0_41 = arith.constant 0 : index
    %37 = vector.load %arg2[%c1_39, %c1_40, %c0_41] : memref<3x3x128xf32, #tpu.memory_space<vmem>>, vector<1x1x128xf32>
    %38 = vector.shape_cast %37 : vector<1x1x128xf32> to vector<128xf32>
    %39 = vector.shape_cast %38 : vector<128xf32> to vector<1x1x128xf32>
    %40 = vector.broadcast %39 : vector<1x1x128xf32> to vector<16x16x128xf32>
    %41 = arith.mulf %36, %40 : vector<16x16x128xf32>
    %42 = arith.addf %35, %41 : vector<16x16x128xf32>
    %c1_42 = arith.constant 1 : index
    %c2_43 = arith.constant 2 : index
    %c0_44 = arith.constant 0 : index
    %43 = vector.load %arg10[%c1_42, %c2_43, %c0_44] : memref<18x18x128xf32, #tpu.memory_space<vmem>>, vector<16x16x128xf32>
    %c1_45 = arith.constant 1 : index
    %c2_46 = arith.constant 2 : index
    %c0_47 = arith.constant 0 : index
    %44 = vector.load %arg2[%c1_45, %c2_46, %c0_47] : memref<3x3x128xf32, #tpu.memory_space<vmem>>, vector<1x1x128xf32>
    %45 = vector.shape_cast %44 : vector<1x1x128xf32> to vector<128xf32>
    %46 = vector.shape_cast %45 : vector<128xf32> to vector<1x1x128xf32>
    %47 = vector.broadcast %46 : vector<1x1x128xf32> to vector<16x16x128xf32>
    %48 = arith.mulf %43, %47 : vector<16x16x128xf32>
    %49 = arith.addf %42, %48 : vector<16x16x128xf32>
    %c2_48 = arith.constant 2 : index
    %c0_49 = arith.constant 0 : index
    %c0_50 = arith.constant 0 : index
    %50 = vector.load %arg10[%c2_48, %c0_49, %c0_50] : memref<18x18x128xf32, #tpu.memory_space<vmem>>, vector<16x16x128xf32>
    %c2_51 = arith.constant 2 : index
    %c0_52 = arith.constant 0 : index
    %c0_53 = arith.constant 0 : index
    %51 = vector.load %arg2[%c2_51, %c0_52, %c0_53] : memref<3x3x128xf32, #tpu.memory_space<vmem>>, vector<1x1x128xf32>
    %52 = vector.shape_cast %51 : vector<1x1x128xf32> to vector<128xf32>
    %53 = vector.shape_cast %52 : vector<128xf32> to vector<1x1x128xf32>
    %54 = vector.broadcast %53 : vector<1x1x128xf32> to vector<16x16x128xf32>
    %55 = arith.mulf %50, %54 : vector<16x16x128xf32>
    %56 = arith.addf %49, %55 : vector<16x16x128xf32>
    %c2_54 = arith.constant 2 : index
    %c1_55 = arith.constant 1 : index
    %c0_56 = arith.constant 0 : index
    %57 = vector.load %arg10[%c2_54, %c1_55, %c0_56] : memref<18x18x128xf32, #tpu.memory_space<vmem>>, vector<16x16x128xf32>
    %c2_57 = arith.constant 2 : index
    %c1_58 = arith.constant 1 : index
    %c0_59 = arith.constant 0 : index
    %58 = vector.load %arg2[%c2_57, %c1_58, %c0_59] : memref<3x3x128xf32, #tpu.memory_space<vmem>>, vector<1x1x128xf32>
    %59 = vector.shape_cast %58 : vector<1x1x128xf32> to vector<128xf32>
    %60 = vector.shape_cast %59 : vector<128xf32> to vector<1x1x128xf32>
    %61 = vector.broadcast %60 : vector<1x1x128xf32> to vector<16x16x128xf32>
    %62 = arith.mulf %57, %61 : vector<16x16x128xf32>
    %63 = arith.addf %56, %62 : vector<16x16x128xf32>
    %c2_60 = arith.constant 2 : index
    %c2_61 = arith.constant 2 : index
    %c0_62 = arith.constant 0 : index
    %64 = vector.load %arg10[%c2_60, %c2_61, %c0_62] : memref<18x18x128xf32, #tpu.memory_space<vmem>>, vector<16x16x128xf32>
    %c2_63 = arith.constant 2 : index
    %c2_64 = arith.constant 2 : index
    %c0_65 = arith.constant 0 : index
    %65 = vector.load %arg2[%c2_63, %c2_64, %c0_65] : memref<3x3x128xf32, #tpu.memory_space<vmem>>, vector<1x1x128xf32>
    %66 = vector.shape_cast %65 : vector<1x1x128xf32> to vector<128xf32>
    %67 = vector.shape_cast %66 : vector<128xf32> to vector<1x1x128xf32>
    %68 = vector.broadcast %67 : vector<1x1x128xf32> to vector<16x16x128xf32>
    %69 = arith.mulf %64, %68 : vector<16x16x128xf32>
    %70 = arith.addf %63, %69 : vector<16x16x128xf32>
    %c0_66 = arith.constant 0 : index
    %c0_67 = arith.constant 0 : index
    %71 = vector.load %arg3[%c0_66, %c0_67] : memref<1x128xf32, #tpu.memory_space<vmem>>, vector<1x128xf32>
    %72 = vector.shape_cast %71 : vector<1x128xf32> to vector<1x1x128xf32>
    %73 = vector.broadcast %72 : vector<1x1x128xf32> to vector<16x16x128xf32>
    %74 = arith.addf %70, %73 : vector<16x16x128xf32>
    %75 = vector.shape_cast %74 : vector<16x16x128xf32> to vector<256x128xf32>
    %c0_68 = arith.constant 0 : index
    %c0_69 = arith.constant 0 : index
    %c0_70 = arith.constant 0 : index
    %76 = vector.load %arg9[%c0_68, %c0_69, %c0_70] : memref<1x256x128xf32, #tpu.memory_space<vmem>>, vector<1x256x128xf32>
    %77 = vector.shape_cast %76 : vector<1x256x128xf32> to vector<256x128xf32>
    %78 = vector.shape_cast %75 : vector<256x128xf32> to vector<1x256x128xf32>
    tpu.vector_store %arg9[%c0_68, %c0_69, %c0_70], %78 {strides = array<i32>} : memref<1x256x128xf32, #tpu.memory_space<vmem>>, vector<1x256x128xf32>,
    %c3 = arith.constant 3 : index
    %c3_71 = arith.constant 3 : index
    %c0_72 = arith.constant 0 : index
    %79 = vector.load %arg11[%c3, %c3_71, %c0_72] : memref<22x22x128xf32, #tpu.memory_space<vmem>>, vector<16x16x128xf32>
    tpu.vector_store %arg11[%c3, %c3_71, %c0_72], %74 {strides = array<i32>} : memref<22x22x128xf32, #tpu.memory_space<vmem>>, vector<16x16x128xf32>,
    %cst_73 = arith.constant 0.000000e+00 : f32
    %80 = vector.broadcast %cst_73 : f32 to vector<16x16x128xf32>
    %c0_74 = arith.constant 0 : index
    %c0_75 = arith.constant 0 : index
    %c0_76 = arith.constant 0 : index
    %81 = vector.load %arg11[%c0_74, %c0_75, %c0_76] : memref<22x22x128xf32, #tpu.memory_space<vmem>>, vector<16x16x128xf32>
    %c0_77 = arith.constant 0 : index
    %c0_78 = arith.constant 0 : index
    %c0_79 = arith.constant 0 : index
    %82 = vector.load %arg4[%c0_77, %c0_78, %c0_79] : memref<7x7x128xf32, #tpu.memory_space<vmem>>, vector<1x1x128xf32>
    %83 = vector.shape_cast %82 : vector<1x1x128xf32> to vector<128xf32>
    %84 = vector.shape_cast %83 : vector<128xf32> to vector<1x1x128xf32>
    %85 = vector.broadcast %84 : vector<1x1x128xf32> to vector<16x16x128xf32>
    %86 = arith.mulf %81, %85 : vector<16x16x128xf32>
    %87 = arith.addf %80, %86 : vector<16x16x128xf32>
    %c0_80 = arith.constant 0 : index
    %c1_81 = arith.constant 1 : index
    %c0_82 = arith.constant 0 : index
    %88 = vector.load %arg11[%c0_80, %c1_81, %c0_82] : memref<22x22x128xf32, #tpu.memory_space<vmem>>, vector<16x16x128xf32>
    %c0_83 = arith.constant 0 : index
    %c1_84 = arith.constant 1 : index
    %c0_85 = arith.constant 0 : index
    %89 = vector.load %arg4[%c0_83, %c1_84, %c0_85] : memref<7x7x128xf32, #tpu.memory_space<vmem>>, vector<1x1x128xf32>
    %90 = vector.shape_cast %89 : vector<1x1x128xf32> to vector<128xf32>
    %91 = vector.shape_cast %90 : vector<128xf32> to vector<1x1x128xf32>
    %92 = vector.broadcast %91 : vector<1x1x128xf32> to vector<16x16x128xf32>
    %93 = arith.mulf %88, %92 : vector<16x16x128xf32>
    %94 = arith.addf %87, %93 : vector<16x16x128xf32>
    %c0_86 = arith.constant 0 : index
    %c2_87 = arith.constant 2 : index
    %c0_88 = arith.constant 0 : index
    %95 = vector.load %arg11[%c0_86, %c2_87, %c0_88] : memref<22x22x128xf32, #tpu.memory_space<vmem>>, vector<16x16x128xf32>
    %c0_89 = arith.constant 0 : index
    %c2_90 = arith.constant 2 : index
    %c0_91 = arith.constant 0 : index
    %96 = vector.load %arg4[%c0_89, %c2_90, %c0_91] : memref<7x7x128xf32, #tpu.memory_space<vmem>>, vector<1x1x128xf32>
    %97 = vector.shape_cast %96 : vector<1x1x128xf32> to vector<128xf32>
    %98 = vector.shape_cast %97 : vector<128xf32> to vector<1x1x128xf32>
    %99 = vector.broadcast %98 : vector<1x1x128xf32> to vector<16x16x128xf32>
    %100 = arith.mulf %95, %99 : vector<16x16x128xf32>
    %101 = arith.addf %94, %100 : vector<16x16x128xf32>
    %c0_92 = arith.constant 0 : index
    %c3_93 = arith.constant 3 : index
    %c0_94 = arith.constant 0 : index
    %102 = vector.load %arg11[%c0_92, %c3_93, %c0_94] : memref<22x22x128xf32, #tpu.memory_space<vmem>>, vector<16x16x128xf32>
    %c0_95 = arith.constant 0 : index
    %c3_96 = arith.constant 3 : index
    %c0_97 = arith.constant 0 : index
    %103 = vector.load %arg4[%c0_95, %c3_96, %c0_97] : memref<7x7x128xf32, #tpu.memory_space<vmem>>, vector<1x1x128xf32>
    %104 = vector.shape_cast %103 : vector<1x1x128xf32> to vector<128xf32>
    %105 = vector.shape_cast %104 : vector<128xf32> to vector<1x1x128xf32>
    %106 = vector.broadcast %105 : vector<1x1x128xf32> to vector<16x16x128xf32>
    %107 = arith.mulf %102, %106 : vector<16x16x128xf32>
    %108 = arith.addf %101, %107 : vector<16x16x128xf32>
    %c0_98 = arith.constant 0 : index
    %c4 = arith.constant 4 : index
    %c0_99 = arith.constant 0 : index
    %109 = vector.load %arg11[%c0_98, %c4, %c0_99] : memref<22x22x128xf32, #tpu.memory_space<vmem>>, vector<16x16x128xf32>
    %c0_100 = arith.constant 0 : index
    %c4_101 = arith.constant 4 : index
    %c0_102 = arith.constant 0 : index
    %110 = vector.load %arg4[%c0_100, %c4_101, %c0_102] : memref<7x7x128xf32, #tpu.memory_space<vmem>>, vector<1x1x128xf32>
    %111 = vector.shape_cast %110 : vector<1x1x128xf32> to vector<128xf32>
    %112 = vector.shape_cast %111 : vector<128xf32> to vector<1x1x128xf32>
    %113 = vector.broadcast %112 : vector<1x1x128xf32> to vector<16x16x128xf32>
    %114 = arith.mulf %109, %113 : vector<16x16x128xf32>
    %115 = arith.addf %108, %114 : vector<16x16x128xf32>
    %c0_103 = arith.constant 0 : index
    %c5 = arith.constant 5 : index
    %c0_104 = arith.constant 0 : index
    %116 = vector.load %arg11[%c0_103, %c5, %c0_104] : memref<22x22x128xf32, #tpu.memory_space<vmem>>, vector<16x16x128xf32>
    %c0_105 = arith.constant 0 : index
    %c5_106 = arith.constant 5 : index
    %c0_107 = arith.constant 0 : index
    %117 = vector.load %arg4[%c0_105, %c5_106, %c0_107] : memref<7x7x128xf32, #tpu.memory_space<vmem>>, vector<1x1x128xf32>
    %118 = vector.shape_cast %117 : vector<1x1x128xf32> to vector<128xf32>
    %119 = vector.shape_cast %118 : vector<128xf32> to vector<1x1x128xf32>
    %120 = vector.broadcast %119 : vector<1x1x128xf32> to vector<16x16x128xf32>
    %121 = arith.mulf %116, %120 : vector<16x16x128xf32>
    %122 = arith.addf %115, %121 : vector<16x16x128xf32>
    %c0_108 = arith.constant 0 : index
    %c6 = arith.constant 6 : index
    %c0_109 = arith.constant 0 : index
    %123 = vector.load %arg11[%c0_108, %c6, %c0_109] : memref<22x22x128xf32, #tpu.memory_space<vmem>>, vector<16x16x128xf32>
    %c0_110 = arith.constant 0 : index
    %c6_111 = arith.constant 6 : index
    %c0_112 = arith.constant 0 : index
    %124 = vector.load %arg4[%c0_110, %c6_111, %c0_112] : memref<7x7x128xf32, #tpu.memory_space<vmem>>, vector<1x1x128xf32>
    %125 = vector.shape_cast %124 : vector<1x1x128xf32> to vector<128xf32>
    %126 = vector.shape_cast %125 : vector<128xf32> to vector<1x1x128xf32>
    %127 = vector.broadcast %126 : vector<1x1x128xf32> to vector<16x16x128xf32>
    %128 = arith.mulf %123, %127 : vector<16x16x128xf32>
    %129 = arith.addf %122, %128 : vector<16x16x128xf32>
    %c1_113 = arith.constant 1 : index
    %c0_114 = arith.constant 0 : index
    %c0_115 = arith.constant 0 : index
    %130 = vector.load %arg11[%c1_113, %c0_114, %c0_115] : memref<22x22x128xf32, #tpu.memory_space<vmem>>, vector<16x16x128xf32>
    %c1_116 = arith.constant 1 : index
    %c0_117 = arith.constant 0 : index
    %c0_118 = arith.constant 0 : index
    %131 = vector.load %arg4[%c1_116, %c0_117, %c0_118] : memref<7x7x128xf32, #tpu.memory_space<vmem>>, vector<1x1x128xf32>
    %132 = vector.shape_cast %131 : vector<1x1x128xf32> to vector<128xf32>
    %133 = vector.shape_cast %132 : vector<128xf32> to vector<1x1x128xf32>
    %134 = vector.broadcast %133 : vector<1x1x128xf32> to vector<16x16x128xf32>
    %135 = arith.mulf %130, %134 : vector<16x16x128xf32>
    %136 = arith.addf %129, %135 : vector<16x16x128xf32>
    %c1_119 = arith.constant 1 : index
    %c1_120 = arith.constant 1 : index
    %c0_121 = arith.constant 0 : index
    %137 = vector.load %arg11[%c1_119, %c1_120, %c0_121] : memref<22x22x128xf32, #tpu.memory_space<vmem>>, vector<16x16x128xf32>
    %c1_122 = arith.constant 1 : index
    %c1_123 = arith.constant 1 : index
    %c0_124 = arith.constant 0 : index
    %138 = vector.load %arg4[%c1_122, %c1_123, %c0_124] : memref<7x7x128xf32, #tpu.memory_space<vmem>>, vector<1x1x128xf32>
    %139 = vector.shape_cast %138 : vector<1x1x128xf32> to vector<128xf32>
    %140 = vector.shape_cast %139 : vector<128xf32> to vector<1x1x128xf32>
    %141 = vector.broadcast %140 : vector<1x1x128xf32> to vector<16x16x128xf32>
    %142 = arith.mulf %137, %141 : vector<16x16x128xf32>
    %143 = arith.addf %136, %142 : vector<16x16x128xf32>
    %c1_125 = arith.constant 1 : index
    %c2_126 = arith.constant 2 : index
    %c0_127 = arith.constant 0 : index
    %144 = vector.load %arg11[%c1_125, %c2_126, %c0_127] : memref<22x22x128xf32, #tpu.memory_space<vmem>>, vector<16x16x128xf32>
    %c1_128 = arith.constant 1 : index
    %c2_129 = arith.constant 2 : index
    %c0_130 = arith.constant 0 : index
    %145 = vector.load %arg4[%c1_128, %c2_129, %c0_130] : memref<7x7x128xf32, #tpu.memory_space<vmem>>, vector<1x1x128xf32>
    %146 = vector.shape_cast %145 : vector<1x1x128xf32> to vector<128xf32>
    %147 = vector.shape_cast %146 : vector<128xf32> to vector<1x1x128xf32>
    %148 = vector.broadcast %147 : vector<1x1x128xf32> to vector<16x16x128xf32>
    %149 = arith.mulf %144, %148 : vector<16x16x128xf32>
    %150 = arith.addf %143, %149 : vector<16x16x128xf32>
    %c1_131 = arith.constant 1 : index
    %c3_132 = arith.constant 3 : index
    %c0_133 = arith.constant 0 : index
    %151 = vector.load %arg11[%c1_131, %c3_132, %c0_133] : memref<22x22x128xf32, #tpu.memory_space<vmem>>, vector<16x16x128xf32>
    %c1_134 = arith.constant 1 : index
    %c3_135 = arith.constant 3 : index
    %c0_136 = arith.constant 0 : index
    %152 = vector.load %arg4[%c1_134, %c3_135, %c0_136] : memref<7x7x128xf32, #tpu.memory_space<vmem>>, vector<1x1x128xf32>
    %153 = vector.shape_cast %152 : vector<1x1x128xf32> to vector<128xf32>
    %154 = vector.shape_cast %153 : vector<128xf32> to vector<1x1x128xf32>
    %155 = vector.broadcast %154 : vector<1x1x128xf32> to vector<16x16x128xf32>
    %156 = arith.mulf %151, %155 : vector<16x16x128xf32>
    %157 = arith.addf %150, %156 : vector<16x16x128xf32>
    %c1_137 = arith.constant 1 : index
    %c4_138 = arith.constant 4 : index
    %c0_139 = arith.constant 0 : index
    %158 = vector.load %arg11[%c1_137, %c4_138, %c0_139] : memref<22x22x128xf32, #tpu.memory_space<vmem>>, vector<16x16x128xf32>
    %c1_140 = arith.constant 1 : index
    %c4_141 = arith.constant 4 : index
    %c0_142 = arith.constant 0 : index
    %159 = vector.load %arg4[%c1_140, %c4_141, %c0_142] : memref<7x7x128xf32, #tpu.memory_space<vmem>>, vector<1x1x128xf32>
    %160 = vector.shape_cast %159 : vector<1x1x128xf32> to vector<128xf32>
    %161 = vector.shape_cast %160 : vector<128xf32> to vector<1x1x128xf32>
    %162 = vector.broadcast %161 : vector<1x1x128xf32> to vector<16x16x128xf32>
    %163 = arith.mulf %158, %162 : vector<16x16x128xf32>
    %164 = arith.addf %157, %163 : vector<16x16x128xf32>
    %c1_143 = arith.constant 1 : index
    %c5_144 = arith.constant 5 : index
    %c0_145 = arith.constant 0 : index
    %165 = vector.load %arg11[%c1_143, %c5_144, %c0_145] : memref<22x22x128xf32, #tpu.memory_space<vmem>>, vector<16x16x128xf32>
    %c1_146 = arith.constant 1 : index
    %c5_147 = arith.constant 5 : index
    %c0_148 = arith.constant 0 : index
    %166 = vector.load %arg4[%c1_146, %c5_147, %c0_148] : memref<7x7x128xf32, #tpu.memory_space<vmem>>, vector<1x1x128xf32>
    %167 = vector.shape_cast %166 : vector<1x1x128xf32> to vector<128xf32>
    %168 = vector.shape_cast %167 : vector<128xf32> to vector<1x1x128xf32>
    %169 = vector.broadcast %168 : vector<1x1x128xf32> to vector<16x16x128xf32>
    %170 = arith.mulf %165, %169 : vector<16x16x128xf32>
    %171 = arith.addf %164, %170 : vector<16x16x128xf32>
    %c1_149 = arith.constant 1 : index
    %c6_150 = arith.constant 6 : index
    %c0_151 = arith.constant 0 : index
    %172 = vector.load %arg11[%c1_149, %c6_150, %c0_151] : memref<22x22x128xf32, #tpu.memory_space<vmem>>, vector<16x16x128xf32>
    %c1_152 = arith.constant 1 : index
    %c6_153 = arith.constant 6 : index
    %c0_154 = arith.constant 0 : index
    %173 = vector.load %arg4[%c1_152, %c6_153, %c0_154] : memref<7x7x128xf32, #tpu.memory_space<vmem>>, vector<1x1x128xf32>
    %174 = vector.shape_cast %173 : vector<1x1x128xf32> to vector<128xf32>
    %175 = vector.shape_cast %174 : vector<128xf32> to vector<1x1x128xf32>
    %176 = vector.broadcast %175 : vector<1x1x128xf32> to vector<16x16x128xf32>
    %177 = arith.mulf %172, %176 : vector<16x16x128xf32>
    %178 = arith.addf %171, %177 : vector<16x16x128xf32>
    %c2_155 = arith.constant 2 : index
    %c0_156 = arith.constant 0 : index
    %c0_157 = arith.constant 0 : index
    %179 = vector.load %arg11[%c2_155, %c0_156, %c0_157] : memref<22x22x128xf32, #tpu.memory_space<vmem>>, vector<16x16x128xf32>
    %c2_158 = arith.constant 2 : index
    %c0_159 = arith.constant 0 : index
    %c0_160 = arith.constant 0 : index
    %180 = vector.load %arg4[%c2_158, %c0_159, %c0_160] : memref<7x7x128xf32, #tpu.memory_space<vmem>>, vector<1x1x128xf32>
    %181 = vector.shape_cast %180 : vector<1x1x128xf32> to vector<128xf32>
    %182 = vector.shape_cast %181 : vector<128xf32> to vector<1x1x128xf32>
    %183 = vector.broadcast %182 : vector<1x1x128xf32> to vector<16x16x128xf32>
    %184 = arith.mulf %179, %183 : vector<16x16x128xf32>
    %185 = arith.addf %178, %184 : vector<16x16x128xf32>
    %c2_161 = arith.constant 2 : index
    %c1_162 = arith.constant 1 : index
    %c0_163 = arith.constant 0 : index
    %186 = vector.load %arg11[%c2_161, %c1_162, %c0_163] : memref<22x22x128xf32, #tpu.memory_space<vmem>>, vector<16x16x128xf32>
    %c2_164 = arith.constant 2 : index
    %c1_165 = arith.constant 1 : index
    %c0_166 = arith.constant 0 : index
    %187 = vector.load %arg4[%c2_164, %c1_165, %c0_166] : memref<7x7x128xf32, #tpu.memory_space<vmem>>, vector<1x1x128xf32>
    %188 = vector.shape_cast %187 : vector<1x1x128xf32> to vector<128xf32>
    %189 = vector.shape_cast %188 : vector<128xf32> to vector<1x1x128xf32>
    %190 = vector.broadcast %189 : vector<1x1x128xf32> to vector<16x16x128xf32>
    %191 = arith.mulf %186, %190 : vector<16x16x128xf32>
    %192 = arith.addf %185, %191 : vector<16x16x128xf32>
    %c2_167 = arith.constant 2 : index
    %c2_168 = arith.constant 2 : index
    %c0_169 = arith.constant 0 : index
    %193 = vector.load %arg11[%c2_167, %c2_168, %c0_169] : memref<22x22x128xf32, #tpu.memory_space<vmem>>, vector<16x16x128xf32>
    %c2_170 = arith.constant 2 : index
    %c2_171 = arith.constant 2 : index
    %c0_172 = arith.constant 0 : index
    %194 = vector.load %arg4[%c2_170, %c2_171, %c0_172] : memref<7x7x128xf32, #tpu.memory_space<vmem>>, vector<1x1x128xf32>
    %195 = vector.shape_cast %194 : vector<1x1x128xf32> to vector<128xf32>
    %196 = vector.shape_cast %195 : vector<128xf32> to vector<1x1x128xf32>
    %197 = vector.broadcast %196 : vector<1x1x128xf32> to vector<16x16x128xf32>
    %198 = arith.mulf %193, %197 : vector<16x16x128xf32>
    %199 = arith.addf %192, %198 : vector<16x16x128xf32>
    %c2_173 = arith.constant 2 : index
    %c3_174 = arith.constant 3 : index
    %c0_175 = arith.constant 0 : index
    %200 = vector.load %arg11[%c2_173, %c3_174, %c0_175] : memref<22x22x128xf32, #tpu.memory_space<vmem>>, vector<16x16x128xf32>
    %c2_176 = arith.constant 2 : index
    %c3_177 = arith.constant 3 : index
    %c0_178 = arith.constant 0 : index
    %201 = vector.load %arg4[%c2_176, %c3_177, %c0_178] : memref<7x7x128xf32, #tpu.memory_space<vmem>>, vector<1x1x128xf32>
    %202 = vector.shape_cast %201 : vector<1x1x128xf32> to vector<128xf32>
    %203 = vector.shape_cast %202 : vector<128xf32> to vector<1x1x128xf32>
    %204 = vector.broadcast %203 : vector<1x1x128xf32> to vector<16x16x128xf32>
    %205 = arith.mulf %200, %204 : vector<16x16x128xf32>
    %206 = arith.addf %199, %205 : vector<16x16x128xf32>
    %c2_179 = arith.constant 2 : index
    %c4_180 = arith.constant 4 : index
    %c0_181 = arith.constant 0 : index
    %207 = vector.load %arg11[%c2_179, %c4_180, %c0_181] : memref<22x22x128xf32, #tpu.memory_space<vmem>>, vector<16x16x128xf32>
    %c2_182 = arith.constant 2 : index
    %c4_183 = arith.constant 4 : index
    %c0_184 = arith.constant 0 : index
    %208 = vector.load %arg4[%c2_182, %c4_183, %c0_184] : memref<7x7x128xf32, #tpu.memory_space<vmem>>, vector<1x1x128xf32>
    %209 = vector.shape_cast %208 : vector<1x1x128xf32> to vector<128xf32>
    %210 = vector.shape_cast %209 : vector<128xf32> to vector<1x1x128xf32>
    %211 = vector.broadcast %210 : vector<1x1x128xf32> to vector<16x16x128xf32>
    %212 = arith.mulf %207, %211 : vector<16x16x128xf32>
    %213 = arith.addf %206, %212 : vector<16x16x128xf32>
    %c2_185 = arith.constant 2 : index
    %c5_186 = arith.constant 5 : index
    %c0_187 = arith.constant 0 : index
    %214 = vector.load %arg11[%c2_185, %c5_186, %c0_187] : memref<22x22x128xf32, #tpu.memory_space<vmem>>, vector<16x16x128xf32>
    %c2_188 = arith.constant 2 : index
    %c5_189 = arith.constant 5 : index
    %c0_190 = arith.constant 0 : index
    %215 = vector.load %arg4[%c2_188, %c5_189, %c0_190] : memref<7x7x128xf32, #tpu.memory_space<vmem>>, vector<1x1x128xf32>
    %216 = vector.shape_cast %215 : vector<1x1x128xf32> to vector<128xf32>
    %217 = vector.shape_cast %216 : vector<128xf32> to vector<1x1x128xf32>
    %218 = vector.broadcast %217 : vector<1x1x128xf32> to vector<16x16x128xf32>
    %219 = arith.mulf %214, %218 : vector<16x16x128xf32>
    %220 = arith.addf %213, %219 : vector<16x16x128xf32>
    %c2_191 = arith.constant 2 : index
    %c6_192 = arith.constant 6 : index
    %c0_193 = arith.constant 0 : index
    %221 = vector.load %arg11[%c2_191, %c6_192, %c0_193] : memref<22x22x128xf32, #tpu.memory_space<vmem>>, vector<16x16x128xf32>
    %c2_194 = arith.constant 2 : index
    %c6_195 = arith.constant 6 : index
    %c0_196 = arith.constant 0 : index
    %222 = vector.load %arg4[%c2_194, %c6_195, %c0_196] : memref<7x7x128xf32, #tpu.memory_space<vmem>>, vector<1x1x128xf32>
    %223 = vector.shape_cast %222 : vector<1x1x128xf32> to vector<128xf32>
    %224 = vector.shape_cast %223 : vector<128xf32> to vector<1x1x128xf32>
    %225 = vector.broadcast %224 : vector<1x1x128xf32> to vector<16x16x128xf32>
    %226 = arith.mulf %221, %225 : vector<16x16x128xf32>
    %227 = arith.addf %220, %226 : vector<16x16x128xf32>
    %c3_197 = arith.constant 3 : index
    %c0_198 = arith.constant 0 : index
    %c0_199 = arith.constant 0 : index
    %228 = vector.load %arg11[%c3_197, %c0_198, %c0_199] : memref<22x22x128xf32, #tpu.memory_space<vmem>>, vector<16x16x128xf32>
    %c3_200 = arith.constant 3 : index
    %c0_201 = arith.constant 0 : index
    %c0_202 = arith.constant 0 : index
    %229 = vector.load %arg4[%c3_200, %c0_201, %c0_202] : memref<7x7x128xf32, #tpu.memory_space<vmem>>, vector<1x1x128xf32>
    %230 = vector.shape_cast %229 : vector<1x1x128xf32> to vector<128xf32>
    %231 = vector.shape_cast %230 : vector<128xf32> to vector<1x1x128xf32>
    %232 = vector.broadcast %231 : vector<1x1x128xf32> to vector<16x16x128xf32>
    %233 = arith.mulf %228, %232 : vector<16x16x128xf32>
    %234 = arith.addf %227, %233 : vector<16x16x128xf32>
    %c3_203 = arith.constant 3 : index
    %c1_204 = arith.constant 1 : index
    %c0_205 = arith.constant 0 : index
    %235 = vector.load %arg11[%c3_203, %c1_204, %c0_205] : memref<22x22x128xf32, #tpu.memory_space<vmem>>, vector<16x16x128xf32>
    %c3_206 = arith.constant 3 : index
    %c1_207 = arith.constant 1 : index
    %c0_208 = arith.constant 0 : index
    %236 = vector.load %arg4[%c3_206, %c1_207, %c0_208] : memref<7x7x128xf32, #tpu.memory_space<vmem>>, vector<1x1x128xf32>
    %237 = vector.shape_cast %236 : vector<1x1x128xf32> to vector<128xf32>
    %238 = vector.shape_cast %237 : vector<128xf32> to vector<1x1x128xf32>
    %239 = vector.broadcast %238 : vector<1x1x128xf32> to vector<16x16x128xf32>
    %240 = arith.mulf %235, %239 : vector<16x16x128xf32>
    %241 = arith.addf %234, %240 : vector<16x16x128xf32>
    %c3_209 = arith.constant 3 : index
    %c2_210 = arith.constant 2 : index
    %c0_211 = arith.constant 0 : index
    %242 = vector.load %arg11[%c3_209, %c2_210, %c0_211] : memref<22x22x128xf32, #tpu.memory_space<vmem>>, vector<16x16x128xf32>
    %c3_212 = arith.constant 3 : index
    %c2_213 = arith.constant 2 : index
    %c0_214 = arith.constant 0 : index
    %243 = vector.load %arg4[%c3_212, %c2_213, %c0_214] : memref<7x7x128xf32, #tpu.memory_space<vmem>>, vector<1x1x128xf32>
    %244 = vector.shape_cast %243 : vector<1x1x128xf32> to vector<128xf32>
    %245 = vector.shape_cast %244 : vector<128xf32> to vector<1x1x128xf32>
    %246 = vector.broadcast %245 : vector<1x1x128xf32> to vector<16x16x128xf32>
    %247 = arith.mulf %242, %246 : vector<16x16x128xf32>
    %248 = arith.addf %241, %247 : vector<16x16x128xf32>
    %c3_215 = arith.constant 3 : index
    %c3_216 = arith.constant 3 : index
    %c0_217 = arith.constant 0 : index
    %249 = vector.load %arg11[%c3_215, %c3_216, %c0_217] : memref<22x22x128xf32, #tpu.memory_space<vmem>>, vector<16x16x128xf32>
    %c3_218 = arith.constant 3 : index
    %c3_219 = arith.constant 3 : index
    %c0_220 = arith.constant 0 : index
    %250 = vector.load %arg4[%c3_218, %c3_219, %c0_220] : memref<7x7x128xf32, #tpu.memory_space<vmem>>, vector<1x1x128xf32>
    %251 = vector.shape_cast %250 : vector<1x1x128xf32> to vector<128xf32>
    %252 = vector.shape_cast %251 : vector<128xf32> to vector<1x1x128xf32>
    %253 = vector.broadcast %252 : vector<1x1x128xf32> to vector<16x16x128xf32>
    %254 = arith.mulf %249, %253 : vector<16x16x128xf32>
    %255 = arith.addf %248, %254 : vector<16x16x128xf32>
    %c3_221 = arith.constant 3 : index
    %c4_222 = arith.constant 4 : index
    %c0_223 = arith.constant 0 : index
    %256 = vector.load %arg11[%c3_221, %c4_222, %c0_223] : memref<22x22x128xf32, #tpu.memory_space<vmem>>, vector<16x16x128xf32>
    %c3_224 = arith.constant 3 : index
    %c4_225 = arith.constant 4 : index
    %c0_226 = arith.constant 0 : index
    %257 = vector.load %arg4[%c3_224, %c4_225, %c0_226] : memref<7x7x128xf32, #tpu.memory_space<vmem>>, vector<1x1x128xf32>
    %258 = vector.shape_cast %257 : vector<1x1x128xf32> to vector<128xf32>
    %259 = vector.shape_cast %258 : vector<128xf32> to vector<1x1x128xf32>
    %260 = vector.broadcast %259 : vector<1x1x128xf32> to vector<16x16x128xf32>
    %261 = arith.mulf %256, %260 : vector<16x16x128xf32>
    %262 = arith.addf %255, %261 : vector<16x16x128xf32>
    %c3_227 = arith.constant 3 : index
    %c5_228 = arith.constant 5 : index
    %c0_229 = arith.constant 0 : index
    %263 = vector.load %arg11[%c3_227, %c5_228, %c0_229] : memref<22x22x128xf32, #tpu.memory_space<vmem>>, vector<16x16x128xf32>
    %c3_230 = arith.constant 3 : index
    %c5_231 = arith.constant 5 : index
    %c0_232 = arith.constant 0 : index
    %264 = vector.load %arg4[%c3_230, %c5_231, %c0_232] : memref<7x7x128xf32, #tpu.memory_space<vmem>>, vector<1x1x128xf32>
    %265 = vector.shape_cast %264 : vector<1x1x128xf32> to vector<128xf32>
    %266 = vector.shape_cast %265 : vector<128xf32> to vector<1x1x128xf32>
    %267 = vector.broadcast %266 : vector<1x1x128xf32> to vector<16x16x128xf32>
    %268 = arith.mulf %263, %267 : vector<16x16x128xf32>
    %269 = arith.addf %262, %268 : vector<16x16x128xf32>
    %c3_233 = arith.constant 3 : index
    %c6_234 = arith.constant 6 : index
    %c0_235 = arith.constant 0 : index
    %270 = vector.load %arg11[%c3_233, %c6_234, %c0_235] : memref<22x22x128xf32, #tpu.memory_space<vmem>>, vector<16x16x128xf32>
    %c3_236 = arith.constant 3 : index
    %c6_237 = arith.constant 6 : index
    %c0_238 = arith.constant 0 : index
    %271 = vector.load %arg4[%c3_236, %c6_237, %c0_238] : memref<7x7x128xf32, #tpu.memory_space<vmem>>, vector<1x1x128xf32>
    %272 = vector.shape_cast %271 : vector<1x1x128xf32> to vector<128xf32>
    %273 = vector.shape_cast %272 : vector<128xf32> to vector<1x1x128xf32>
    %274 = vector.broadcast %273 : vector<1x1x128xf32> to vector<16x16x128xf32>
    %275 = arith.mulf %270, %274 : vector<16x16x128xf32>
    %276 = arith.addf %269, %275 : vector<16x16x128xf32>
    %c4_239 = arith.constant 4 : index
    %c0_240 = arith.constant 0 : index
    %c0_241 = arith.constant 0 : index
    %277 = vector.load %arg11[%c4_239, %c0_240, %c0_241] : memref<22x22x128xf32, #tpu.memory_space<vmem>>, vector<16x16x128xf32>
    %c4_242 = arith.constant 4 : index
    %c0_243 = arith.constant 0 : index
    %c0_244 = arith.constant 0 : index
    %278 = vector.load %arg4[%c4_242, %c0_243, %c0_244] : memref<7x7x128xf32, #tpu.memory_space<vmem>>, vector<1x1x128xf32>
    %279 = vector.shape_cast %278 : vector<1x1x128xf32> to vector<128xf32>
    %280 = vector.shape_cast %279 : vector<128xf32> to vector<1x1x128xf32>
    %281 = vector.broadcast %280 : vector<1x1x128xf32> to vector<16x16x128xf32>
    %282 = arith.mulf %277, %281 : vector<16x16x128xf32>
    %283 = arith.addf %276, %282 : vector<16x16x128xf32>
    %c4_245 = arith.constant 4 : index
    %c1_246 = arith.constant 1 : index
    %c0_247 = arith.constant 0 : index
    %284 = vector.load %arg11[%c4_245, %c1_246, %c0_247] : memref<22x22x128xf32, #tpu.memory_space<vmem>>, vector<16x16x128xf32>
    %c4_248 = arith.constant 4 : index
    %c1_249 = arith.constant 1 : index
    %c0_250 = arith.constant 0 : index
    %285 = vector.load %arg4[%c4_248, %c1_249, %c0_250] : memref<7x7x128xf32, #tpu.memory_space<vmem>>, vector<1x1x128xf32>
    %286 = vector.shape_cast %285 : vector<1x1x128xf32> to vector<128xf32>
    %287 = vector.shape_cast %286 : vector<128xf32> to vector<1x1x128xf32>
    %288 = vector.broadcast %287 : vector<1x1x128xf32> to vector<16x16x128xf32>
    %289 = arith.mulf %284, %288 : vector<16x16x128xf32>
    %290 = arith.addf %283, %289 : vector<16x16x128xf32>
    %c4_251 = arith.constant 4 : index
    %c2_252 = arith.constant 2 : index
    %c0_253 = arith.constant 0 : index
    %291 = vector.load %arg11[%c4_251, %c2_252, %c0_253] : memref<22x22x128xf32, #tpu.memory_space<vmem>>, vector<16x16x128xf32>
    %c4_254 = arith.constant 4 : index
    %c2_255 = arith.constant 2 : index
    %c0_256 = arith.constant 0 : index
    %292 = vector.load %arg4[%c4_254, %c2_255, %c0_256] : memref<7x7x128xf32, #tpu.memory_space<vmem>>, vector<1x1x128xf32>
    %293 = vector.shape_cast %292 : vector<1x1x128xf32> to vector<128xf32>
    %294 = vector.shape_cast %293 : vector<128xf32> to vector<1x1x128xf32>
    %295 = vector.broadcast %294 : vector<1x1x128xf32> to vector<16x16x128xf32>
    %296 = arith.mulf %291, %295 : vector<16x16x128xf32>
    %297 = arith.addf %290, %296 : vector<16x16x128xf32>
    %c4_257 = arith.constant 4 : index
    %c3_258 = arith.constant 3 : index
    %c0_259 = arith.constant 0 : index
    %298 = vector.load %arg11[%c4_257, %c3_258, %c0_259] : memref<22x22x128xf32, #tpu.memory_space<vmem>>, vector<16x16x128xf32>
    %c4_260 = arith.constant 4 : index
    %c3_261 = arith.constant 3 : index
    %c0_262 = arith.constant 0 : index
    %299 = vector.load %arg4[%c4_260, %c3_261, %c0_262] : memref<7x7x128xf32, #tpu.memory_space<vmem>>, vector<1x1x128xf32>
    %300 = vector.shape_cast %299 : vector<1x1x128xf32> to vector<128xf32>
    %301 = vector.shape_cast %300 : vector<128xf32> to vector<1x1x128xf32>
    %302 = vector.broadcast %301 : vector<1x1x128xf32> to vector<16x16x128xf32>
    %303 = arith.mulf %298, %302 : vector<16x16x128xf32>
    %304 = arith.addf %297, %303 : vector<16x16x128xf32>
    %c4_263 = arith.constant 4 : index
    %c4_264 = arith.constant 4 : index
    %c0_265 = arith.constant 0 : index
    %305 = vector.load %arg11[%c4_263, %c4_264, %c0_265] : memref<22x22x128xf32, #tpu.memory_space<vmem>>, vector<16x16x128xf32>
    %c4_266 = arith.constant 4 : index
    %c4_267 = arith.constant 4 : index
    %c0_268 = arith.constant 0 : index
    %306 = vector.load %arg4[%c4_266, %c4_267, %c0_268] : memref<7x7x128xf32, #tpu.memory_space<vmem>>, vector<1x1x128xf32>
    %307 = vector.shape_cast %306 : vector<1x1x128xf32> to vector<128xf32>
    %308 = vector.shape_cast %307 : vector<128xf32> to vector<1x1x128xf32>
    %309 = vector.broadcast %308 : vector<1x1x128xf32> to vector<16x16x128xf32>
    %310 = arith.mulf %305, %309 : vector<16x16x128xf32>
    %311 = arith.addf %304, %310 : vector<16x16x128xf32>
    %c4_269 = arith.constant 4 : index
    %c5_270 = arith.constant 5 : index
    %c0_271 = arith.constant 0 : index
    %312 = vector.load %arg11[%c4_269, %c5_270, %c0_271] : memref<22x22x128xf32, #tpu.memory_space<vmem>>, vector<16x16x128xf32>
    %c4_272 = arith.constant 4 : index
    %c5_273 = arith.constant 5 : index
    %c0_274 = arith.constant 0 : index
    %313 = vector.load %arg4[%c4_272, %c5_273, %c0_274] : memref<7x7x128xf32, #tpu.memory_space<vmem>>, vector<1x1x128xf32>
    %314 = vector.shape_cast %313 : vector<1x1x128xf32> to vector<128xf32>
    %315 = vector.shape_cast %314 : vector<128xf32> to vector<1x1x128xf32>
    %316 = vector.broadcast %315 : vector<1x1x128xf32> to vector<16x16x128xf32>
    %317 = arith.mulf %312, %316 : vector<16x16x128xf32>
    %318 = arith.addf %311, %317 : vector<16x16x128xf32>
    %c4_275 = arith.constant 4 : index
    %c6_276 = arith.constant 6 : index
    %c0_277 = arith.constant 0 : index
    %319 = vector.load %arg11[%c4_275, %c6_276, %c0_277] : memref<22x22x128xf32, #tpu.memory_space<vmem>>, vector<16x16x128xf32>
    %c4_278 = arith.constant 4 : index
    %c6_279 = arith.constant 6 : index
    %c0_280 = arith.constant 0 : index
    %320 = vector.load %arg4[%c4_278, %c6_279, %c0_280] : memref<7x7x128xf32, #tpu.memory_space<vmem>>, vector<1x1x128xf32>
    %321 = vector.shape_cast %320 : vector<1x1x128xf32> to vector<128xf32>
    %322 = vector.shape_cast %321 : vector<128xf32> to vector<1x1x128xf32>
    %323 = vector.broadcast %322 : vector<1x1x128xf32> to vector<16x16x128xf32>
    %324 = arith.mulf %319, %323 : vector<16x16x128xf32>
    %325 = arith.addf %318, %324 : vector<16x16x128xf32>
    %c5_281 = arith.constant 5 : index
    %c0_282 = arith.constant 0 : index
    %c0_283 = arith.constant 0 : index
    %326 = vector.load %arg11[%c5_281, %c0_282, %c0_283] : memref<22x22x128xf32, #tpu.memory_space<vmem>>, vector<16x16x128xf32>
    %c5_284 = arith.constant 5 : index
    %c0_285 = arith.constant 0 : index
    %c0_286 = arith.constant 0 : index
    %327 = vector.load %arg4[%c5_284, %c0_285, %c0_286] : memref<7x7x128xf32, #tpu.memory_space<vmem>>, vector<1x1x128xf32>
    %328 = vector.shape_cast %327 : vector<1x1x128xf32> to vector<128xf32>
    %329 = vector.shape_cast %328 : vector<128xf32> to vector<1x1x128xf32>
    %330 = vector.broadcast %329 : vector<1x1x128xf32> to vector<16x16x128xf32>
    %331 = arith.mulf %326, %330 : vector<16x16x128xf32>
    %332 = arith.addf %325, %331 : vector<16x16x128xf32>
    %c5_287 = arith.constant 5 : index
    %c1_288 = arith.constant 1 : index
    %c0_289 = arith.constant 0 : index
    %333 = vector.load %arg11[%c5_287, %c1_288, %c0_289] : memref<22x22x128xf32, #tpu.memory_space<vmem>>, vector<16x16x128xf32>
    %c5_290 = arith.constant 5 : index
    %c1_291 = arith.constant 1 : index
    %c0_292 = arith.constant 0 : index
    %334 = vector.load %arg4[%c5_290, %c1_291, %c0_292] : memref<7x7x128xf32, #tpu.memory_space<vmem>>, vector<1x1x128xf32>
    %335 = vector.shape_cast %334 : vector<1x1x128xf32> to vector<128xf32>
    %336 = vector.shape_cast %335 : vector<128xf32> to vector<1x1x128xf32>
    %337 = vector.broadcast %336 : vector<1x1x128xf32> to vector<16x16x128xf32>
    %338 = arith.mulf %333, %337 : vector<16x16x128xf32>
    %339 = arith.addf %332, %338 : vector<16x16x128xf32>
    %c5_293 = arith.constant 5 : index
    %c2_294 = arith.constant 2 : index
    %c0_295 = arith.constant 0 : index
    %340 = vector.load %arg11[%c5_293, %c2_294, %c0_295] : memref<22x22x128xf32, #tpu.memory_space<vmem>>, vector<16x16x128xf32>
    %c5_296 = arith.constant 5 : index
    %c2_297 = arith.constant 2 : index
    %c0_298 = arith.constant 0 : index
    %341 = vector.load %arg4[%c5_296, %c2_297, %c0_298] : memref<7x7x128xf32, #tpu.memory_space<vmem>>, vector<1x1x128xf32>
    %342 = vector.shape_cast %341 : vector<1x1x128xf32> to vector<128xf32>
    %343 = vector.shape_cast %342 : vector<128xf32> to vector<1x1x128xf32>
    %344 = vector.broadcast %343 : vector<1x1x128xf32> to vector<16x16x128xf32>
    %345 = arith.mulf %340, %344 : vector<16x16x128xf32>
    %346 = arith.addf %339, %345 : vector<16x16x128xf32>
    %c5_299 = arith.constant 5 : index
    %c3_300 = arith.constant 3 : index
    %c0_301 = arith.constant 0 : index
    %347 = vector.load %arg11[%c5_299, %c3_300, %c0_301] : memref<22x22x128xf32, #tpu.memory_space<vmem>>, vector<16x16x128xf32>
    %c5_302 = arith.constant 5 : index
    %c3_303 = arith.constant 3 : index
    %c0_304 = arith.constant 0 : index
    %348 = vector.load %arg4[%c5_302, %c3_303, %c0_304] : memref<7x7x128xf32, #tpu.memory_space<vmem>>, vector<1x1x128xf32>
    %349 = vector.shape_cast %348 : vector<1x1x128xf32> to vector<128xf32>
    %350 = vector.shape_cast %349 : vector<128xf32> to vector<1x1x128xf32>
    %351 = vector.broadcast %350 : vector<1x1x128xf32> to vector<16x16x128xf32>
    %352 = arith.mulf %347, %351 : vector<16x16x128xf32>
    %353 = arith.addf %346, %352 : vector<16x16x128xf32>
    %c5_305 = arith.constant 5 : index
    %c4_306 = arith.constant 4 : index
    %c0_307 = arith.constant 0 : index
    %354 = vector.load %arg11[%c5_305, %c4_306, %c0_307] : memref<22x22x128xf32, #tpu.memory_space<vmem>>, vector<16x16x128xf32>
    %c5_308 = arith.constant 5 : index
    %c4_309 = arith.constant 4 : index
    %c0_310 = arith.constant 0 : index
    %355 = vector.load %arg4[%c5_308, %c4_309, %c0_310] : memref<7x7x128xf32, #tpu.memory_space<vmem>>, vector<1x1x128xf32>
    %356 = vector.shape_cast %355 : vector<1x1x128xf32> to vector<128xf32>
    %357 = vector.shape_cast %356 : vector<128xf32> to vector<1x1x128xf32>
    %358 = vector.broadcast %357 : vector<1x1x128xf32> to vector<16x16x128xf32>
    %359 = arith.mulf %354, %358 : vector<16x16x128xf32>
    %360 = arith.addf %353, %359 : vector<16x16x128xf32>
    %c5_311 = arith.constant 5 : index
    %c5_312 = arith.constant 5 : index
    %c0_313 = arith.constant 0 : index
    %361 = vector.load %arg11[%c5_311, %c5_312, %c0_313] : memref<22x22x128xf32, #tpu.memory_space<vmem>>, vector<16x16x128xf32>
    %c5_314 = arith.constant 5 : index
    %c5_315 = arith.constant 5 : index
    %c0_316 = arith.constant 0 : index
    %362 = vector.load %arg4[%c5_314, %c5_315, %c0_316] : memref<7x7x128xf32, #tpu.memory_space<vmem>>, vector<1x1x128xf32>
    %363 = vector.shape_cast %362 : vector<1x1x128xf32> to vector<128xf32>
    %364 = vector.shape_cast %363 : vector<128xf32> to vector<1x1x128xf32>
    %365 = vector.broadcast %364 : vector<1x1x128xf32> to vector<16x16x128xf32>
    %366 = arith.mulf %361, %365 : vector<16x16x128xf32>
    %367 = arith.addf %360, %366 : vector<16x16x128xf32>
    %c5_317 = arith.constant 5 : index
    %c6_318 = arith.constant 6 : index
    %c0_319 = arith.constant 0 : index
    %368 = vector.load %arg11[%c5_317, %c6_318, %c0_319] : memref<22x22x128xf32, #tpu.memory_space<vmem>>, vector<16x16x128xf32>
    %c5_320 = arith.constant 5 : index
    %c6_321 = arith.constant 6 : index
    %c0_322 = arith.constant 0 : index
    %369 = vector.load %arg4[%c5_320, %c6_321, %c0_322] : memref<7x7x128xf32, #tpu.memory_space<vmem>>, vector<1x1x128xf32>
    %370 = vector.shape_cast %369 : vector<1x1x128xf32> to vector<128xf32>
    %371 = vector.shape_cast %370 : vector<128xf32> to vector<1x1x128xf32>
    %372 = vector.broadcast %371 : vector<1x1x128xf32> to vector<16x16x128xf32>
    %373 = arith.mulf %368, %372 : vector<16x16x128xf32>
    %374 = arith.addf %367, %373 : vector<16x16x128xf32>
    %c6_323 = arith.constant 6 : index
    %c0_324 = arith.constant 0 : index
    %c0_325 = arith.constant 0 : index
    %375 = vector.load %arg11[%c6_323, %c0_324, %c0_325] : memref<22x22x128xf32, #tpu.memory_space<vmem>>, vector<16x16x128xf32>
    %c6_326 = arith.constant 6 : index
    %c0_327 = arith.constant 0 : index
    %c0_328 = arith.constant 0 : index
    %376 = vector.load %arg4[%c6_326, %c0_327, %c0_328] : memref<7x7x128xf32, #tpu.memory_space<vmem>>, vector<1x1x128xf32>
    %377 = vector.shape_cast %376 : vector<1x1x128xf32> to vector<128xf32>
    %378 = vector.shape_cast %377 : vector<128xf32> to vector<1x1x128xf32>
    %379 = vector.broadcast %378 : vector<1x1x128xf32> to vector<16x16x128xf32>
    %380 = arith.mulf %375, %379 : vector<16x16x128xf32>
    %381 = arith.addf %374, %380 : vector<16x16x128xf32>
    %c6_329 = arith.constant 6 : index
    %c1_330 = arith.constant 1 : index
    %c0_331 = arith.constant 0 : index
    %382 = vector.load %arg11[%c6_329, %c1_330, %c0_331] : memref<22x22x128xf32, #tpu.memory_space<vmem>>, vector<16x16x128xf32>
    %c6_332 = arith.constant 6 : index
    %c1_333 = arith.constant 1 : index
    %c0_334 = arith.constant 0 : index
    %383 = vector.load %arg4[%c6_332, %c1_333, %c0_334] : memref<7x7x128xf32, #tpu.memory_space<vmem>>, vector<1x1x128xf32>
    %384 = vector.shape_cast %383 : vector<1x1x128xf32> to vector<128xf32>
    %385 = vector.shape_cast %384 : vector<128xf32> to vector<1x1x128xf32>
    %386 = vector.broadcast %385 : vector<1x1x128xf32> to vector<16x16x128xf32>
    %387 = arith.mulf %382, %386 : vector<16x16x128xf32>
    %388 = arith.addf %381, %387 : vector<16x16x128xf32>
    %c6_335 = arith.constant 6 : index
    %c2_336 = arith.constant 2 : index
    %c0_337 = arith.constant 0 : index
    %389 = vector.load %arg11[%c6_335, %c2_336, %c0_337] : memref<22x22x128xf32, #tpu.memory_space<vmem>>, vector<16x16x128xf32>
    %c6_338 = arith.constant 6 : index
    %c2_339 = arith.constant 2 : index
    %c0_340 = arith.constant 0 : index
    %390 = vector.load %arg4[%c6_338, %c2_339, %c0_340] : memref<7x7x128xf32, #tpu.memory_space<vmem>>, vector<1x1x128xf32>
    %391 = vector.shape_cast %390 : vector<1x1x128xf32> to vector<128xf32>
    %392 = vector.shape_cast %391 : vector<128xf32> to vector<1x1x128xf32>
    %393 = vector.broadcast %392 : vector<1x1x128xf32> to vector<16x16x128xf32>
    %394 = arith.mulf %389, %393 : vector<16x16x128xf32>
    %395 = arith.addf %388, %394 : vector<16x16x128xf32>
    %c6_341 = arith.constant 6 : index
    %c3_342 = arith.constant 3 : index
    %c0_343 = arith.constant 0 : index
    %396 = vector.load %arg11[%c6_341, %c3_342, %c0_343] : memref<22x22x128xf32, #tpu.memory_space<vmem>>, vector<16x16x128xf32>
    %c6_344 = arith.constant 6 : index
    %c3_345 = arith.constant 3 : index
    %c0_346 = arith.constant 0 : index
    %397 = vector.load %arg4[%c6_344, %c3_345, %c0_346] : memref<7x7x128xf32, #tpu.memory_space<vmem>>, vector<1x1x128xf32>
    %398 = vector.shape_cast %397 : vector<1x1x128xf32> to vector<128xf32>
    %399 = vector.shape_cast %398 : vector<128xf32> to vector<1x1x128xf32>
    %400 = vector.broadcast %399 : vector<1x1x128xf32> to vector<16x16x128xf32>
    %401 = arith.mulf %396, %400 : vector<16x16x128xf32>
    %402 = arith.addf %395, %401 : vector<16x16x128xf32>
    %c6_347 = arith.constant 6 : index
    %c4_348 = arith.constant 4 : index
    %c0_349 = arith.constant 0 : index
    %403 = vector.load %arg11[%c6_347, %c4_348, %c0_349] : memref<22x22x128xf32, #tpu.memory_space<vmem>>, vector<16x16x128xf32>
    %c6_350 = arith.constant 6 : index
    %c4_351 = arith.constant 4 : index
    %c0_352 = arith.constant 0 : index
    %404 = vector.load %arg4[%c6_350, %c4_351, %c0_352] : memref<7x7x128xf32, #tpu.memory_space<vmem>>, vector<1x1x128xf32>
    %405 = vector.shape_cast %404 : vector<1x1x128xf32> to vector<128xf32>
    %406 = vector.shape_cast %405 : vector<128xf32> to vector<1x1x128xf32>
    %407 = vector.broadcast %406 : vector<1x1x128xf32> to vector<16x16x128xf32>
    %408 = arith.mulf %403, %407 : vector<16x16x128xf32>
    %409 = arith.addf %402, %408 : vector<16x16x128xf32>
    %c6_353 = arith.constant 6 : index
    %c5_354 = arith.constant 5 : index
    %c0_355 = arith.constant 0 : index
    %410 = vector.load %arg11[%c6_353, %c5_354, %c0_355] : memref<22x22x128xf32, #tpu.memory_space<vmem>>, vector<16x16x128xf32>
    %c6_356 = arith.constant 6 : index
    %c5_357 = arith.constant 5 : index
    %c0_358 = arith.constant 0 : index
    %411 = vector.load %arg4[%c6_356, %c5_357, %c0_358] : memref<7x7x128xf32, #tpu.memory_space<vmem>>, vector<1x1x128xf32>
    %412 = vector.shape_cast %411 : vector<1x1x128xf32> to vector<128xf32>
    %413 = vector.shape_cast %412 : vector<128xf32> to vector<1x1x128xf32>
    %414 = vector.broadcast %413 : vector<1x1x128xf32> to vector<16x16x128xf32>
    %415 = arith.mulf %410, %414 : vector<16x16x128xf32>
    %416 = arith.addf %409, %415 : vector<16x16x128xf32>
    %c6_359 = arith.constant 6 : index
    %c6_360 = arith.constant 6 : index
    %c0_361 = arith.constant 0 : index
    %417 = vector.load %arg11[%c6_359, %c6_360, %c0_361] : memref<22x22x128xf32, #tpu.memory_space<vmem>>, vector<16x16x128xf32>
    %c6_362 = arith.constant 6 : index
    %c6_363 = arith.constant 6 : index
    %c0_364 = arith.constant 0 : index
    %418 = vector.load %arg4[%c6_362, %c6_363, %c0_364] : memref<7x7x128xf32, #tpu.memory_space<vmem>>, vector<1x1x128xf32>
    %419 = vector.shape_cast %418 : vector<1x1x128xf32> to vector<128xf32>
    %420 = vector.shape_cast %419 : vector<128xf32> to vector<1x1x128xf32>
    %421 = vector.broadcast %420 : vector<1x1x128xf32> to vector<16x16x128xf32>
    %422 = arith.mulf %417, %421 : vector<16x16x128xf32>
    %423 = arith.addf %416, %422 : vector<16x16x128xf32>
    %424 = vector.shape_cast %423 : vector<16x16x128xf32> to vector<256x128xf32>
    %c0_365 = arith.constant 0 : index
    %c0_366 = arith.constant 0 : index
    %425 = vector.load %arg5[%c0_365, %c0_366] : memref<128x512xf32, #tpu.memory_space<vmem>>, vector<128x512xf32>
    %cst_367 = arith.constant dense<0.000000e+00> : vector<256x512xf32>
    %426 = tpu.matmul %424, %425, %cst_367 {dimension_numbers = #tpu.dot_dimension_numbers<[1], [0], [0], [1], [0, 0, 1, 1], [], []>} : vector<256x128xf32>, vector<128x512xf32>, vector<256x512xf32> -> vector<256x512xf32>
    %c0_368 = arith.constant 0 : index
    %c0_369 = arith.constant 0 : index
    %427 = vector.load %arg6[%c0_368, %c0_369] : memref<1x512xf32, #tpu.memory_space<vmem>>, vector<1x512xf32>
    %428 = vector.broadcast %427 : vector<1x512xf32> to vector<256x512xf32>
    %429 = arith.addf %426, %428 : vector<256x512xf32>
    %430 = arith.mulf %429, %429 : vector<256x512xf32>
    %431 = arith.mulf %429, %430 : vector<256x512xf32>
    %cst_370 = arith.constant 4.471500e-02 : f32
    %432 = vector.broadcast %cst_370 : f32 to vector<256x512xf32>
    %433 = arith.mulf %432, %431 : vector<256x512xf32>
    %434 = arith.addf %429, %433 : vector<256x512xf32>
    %cst_371 = arith.constant 0.797884583 : f32
    %435 = vector.broadcast %cst_371 : f32 to vector<256x512xf32>
    %436 = arith.mulf %435, %434 : vector<256x512xf32>
    %437 = math.tanh %436 : vector<256x512xf32>
    %cst_372 = arith.constant 1.000000e+00 : f32
    %438 = vector.broadcast %cst_372 : f32 to vector<256x512xf32>
    %439 = arith.addf %438, %437 : vector<256x512xf32>
    %cst_373 = arith.constant 5.000000e-01 : f32
    %440 = vector.broadcast %cst_373 : f32 to vector<256x512xf32>
    %441 = arith.mulf %440, %439 : vector<256x512xf32>
    %442 = arith.mulf %429, %441 : vector<256x512xf32>
    %c0_374 = arith.constant 0 : index
    %c0_375 = arith.constant 0 : index
    %443 = vector.load %arg7[%c0_374, %c0_375] : memref<512x128xf32, #tpu.memory_space<vmem>>, vector<512x128xf32>
    %cst_376 = arith.constant dense<0.000000e+00> : vector<256x128xf32>
    %444 = tpu.matmul %442, %443, %cst_376 {dimension_numbers = #tpu.dot_dimension_numbers<[1], [0], [0], [1], [0, 0, 1, 1], [], []>} : vector<256x512xf32>, vector<512x128xf32>, vector<256x128xf32> -> vector<256x128xf32>
    %c0_377 = arith.constant 0 : index
    %c0_378 = arith.constant 0 : index
    %445 = vector.load %arg8[%c0_377, %c0_378] : memref<1x128xf32, #tpu.memory_space<vmem>>, vector<1x128xf32>
    %446 = vector.broadcast %445 : vector<1x128xf32> to vector<256x128xf32>
    %447 = arith.addf %444, %446 : vector<256x128xf32>
    %c0_379 = arith.constant 0 : index
    %c0_380 = arith.constant 0 : index
    %c0_381 = arith.constant 0 : index
    %448 = vector.load %arg9[%c0_379, %c0_380, %c0_381] : memref<1x256x128xf32, #tpu.memory_space<vmem>>, vector<1x256x128xf32>
    %449 = vector.shape_cast %448 : vector<1x256x128xf32> to vector<256x128xf32>
    %450 = arith.addf %449, %447 : vector<256x128xf32>
    %c0_382 = arith.constant 0 : index
    %c0_383 = arith.constant 0 : index
    %c0_384 = arith.constant 0 : index
    %451 = vector.load %arg9[%c0_382, %c0_383, %c0_384] : memref<1x256x128xf32, #tpu.memory_space<vmem>>, vector<1x256x128xf32>
    %452 = vector.shape_cast %451 : vector<1x256x128xf32> to vector<256x128xf32>
    %453 = vector.shape_cast %450 : vector<256x128xf32> to vector<1x256x128xf32>
    tpu.vector_store %arg9[%c0_382, %c0_383, %c0_384], %453 {strides = array<i32>} : memref<1x256x128xf32, #tpu.memory_space<vmem>>, vector<1x256x128xf32>,
    return
  }
  func.func @transform_0(%arg0: i32) -> (i32, i32, i32, i32) {
    %c0_i32 = arith.constant 0 : i32
    %c0_i32_0 = arith.constant 0 : i32
    %c0_i32_1 = arith.constant 0 : i32
    %c0_i32_2 = arith.constant 0 : i32
    return %arg0, %c0_i32, %c0_i32_0, %c0_i32_1 : i32, i32, i32, i32
  }
  func.func @transform_1(%arg0: i32) -> (i32, i32, i32) {
    %c0_i32 = arith.constant 0 : i32
    %c0_i32_0 = arith.constant 0 : i32
    %c0_i32_1 = arith.constant 0 : i32
    %c0_i32_2 = arith.constant 0 : i32
    return %c0_i32, %c0_i32_0, %c0_i32_1 : i32, i32, i32
  }
  func.func @transform_2(%arg0: i32) -> (i32, i32) {
    %c0_i32 = arith.constant 0 : i32
    %c0_i32_0 = arith.constant 0 : i32
    %c0_i32_1 = arith.constant 0 : i32
    return %c0_i32, %c0_i32_0 : i32, i32
  }
  func.func @transform_3(%arg0: i32) -> (i32, i32, i32) {
    %c0_i32 = arith.constant 0 : i32
    %c0_i32_0 = arith.constant 0 : i32
    %c0_i32_1 = arith.constant 0 : i32
    %c0_i32_2 = arith.constant 0 : i32
    return %c0_i32, %c0_i32_0, %c0_i32_1 : i32, i32, i32
  }
  func.func @transform_4(%arg0: i32) -> (i32, i32) {
    %c0_i32 = arith.constant 0 : i32
    %c0_i32_0 = arith.constant 0 : i32
    %c0_i32_1 = arith.constant 0 : i32
    return %c0_i32, %c0_i32_0 : i32, i32
  }
  func.func @transform_5(%arg0: i32) -> (i32, i32) {
    %c0_i32 = arith.constant 0 : i32
    %c0_i32_0 = arith.constant 0 : i32
    %c0_i32_1 = arith.constant 0 : i32
    return %c0_i32, %c0_i32_0 : i32, i32
  }
  func.func @transform_6(%arg0: i32) -> (i32, i32) {
    %c0_i32 = arith.constant 0 : i32
    %c0_i32_0 = arith.constant 0 : i32
    %c0_i32_1 = arith.constant 0 : i32
    return %c0_i32, %c0_i32_0 : i32, i32
  }
  func.func @transform_7(%arg0: i32) -> (i32, i32) {
    %c0_i32 = arith.constant 0 : i32
    %c0_i32_0 = arith.constant 0 : i32
    %c0_i32_1 = arith.constant 0 : i32
    return %c0_i32, %c0_i32_0 : i32, i32
  }
  func.func @transform_8(%arg0: i32) -> (i32, i32, i32) {
    %c0_i32 = arith.constant 0 : i32
    %c0_i32_0 = arith.constant 0 : i32
    %c0_i32_1 = arith.constant 0 : i32
    return %arg0, %c0_i32, %c0_i32_0 : i32, i32, i32
  }
}

</mosaic_0001>

<llo_original>
// kernel: tpu_custom_call.1
$region0: #{tpu_custom_call.1}
  #allocation0 [shape = 'u32[]', space=smem, size = 0x4, offset = 0x4, fixed_abs, tag = 'smem constant byte address 0x4 - core index']
  #allocation1 [shape = 'u32[72,128]{1,0:T(1,128)}', space=vmem, size = 0x9000, scoped, tag = 'internal scratch']
  #allocation2 [shape = 'f32[18,18,128]{2,1,0:T(8,128)}', space=vmem, size = 0x36000, scoped, tag = 'scratch operand']
  #allocation3 [shape = 'f32[22,22,128]{2,1,0:T(8,128)}', space=vmem, size = 0x42000, scoped, tag = 'scratch operand']
  %s0 = inlined_call_operand.hbm [shape: f32[2,16,16,128], index: 0, kind: input, shape index: {}]
  %s1 = inlined_call_operand.hbm [shape: f32[3,3,128], index: 1, kind: input, shape index: {}]
  %s2 = inlined_call_operand.hbm [shape: f32[1,128], index: 2, kind: input, shape index: {}]
  %s3 = inlined_call_operand.hbm [shape: f32[7,7,128], index: 3, kind: input, shape index: {}]
  %s4 = inlined_call_operand.hbm [shape: f32[128,512], index: 4, kind: input, shape index: {}]
  %s5 = inlined_call_operand.vmem [shape: f32[1,512], index: 5, kind: input, shape index: {}]
  %s6 = inlined_call_operand.hbm [shape: f32[512,128], index: 6, kind: input, shape index: {}]
  %s7 = inlined_call_operand.vmem [shape: f32[1,128], index: 7, kind: input, shape index: {}]
  %s8 = inlined_call_operand.hbm [shape: f32[2,256,128], index: 8, kind: output, shape index: {}]
  %s9 = sld [smem:[#allocation0]]
  $region89: #{tpu_custom_call.1} parent=0
    _
  %s11 = ssub.s32 1, %s9
  %s12 = scalar_select 0, %s11, %s9
  $region1: #{tpu_custom_call.1} parent=0
    #allocation4 [shape = 'u8[262144]{0}', space=vmem, size = 0x40000, scoped, tag = 'input window, operand 0']
    #allocation5 [shape = 's32[2]{0}', space=sflag, size = 0x8, scoped, tag = 'scoped memory for tpu_custom_call.1']
    #allocation6 [shape = 's32[2]{0}', space=sflag, size = 0x8, scoped, tag = 'scoped memory for tpu_custom_call.1']
    #allocation7 [shape = 'u8[6144]{0}', space=vmem, size = 0x1800, scoped, tag = 'input window, operand 1, single buffered']
    #allocation8 [shape = 's32[1]{0}', space=sflag, size = 0x4, scoped, tag = 'scoped memory for tpu_custom_call.1']
    #allocation9 [shape = 'u8[512]{0}', space=vmem, size = 0x400, scoped, tag = 'input window, operand 2, single buffered']
    #allocation10 [shape = 'u8[28672]{0}', space=vmem, size = 0x7000, scoped, tag = 'input window, operand 3, single buffered']
    #allocation11 [shape = 's32[1]{0}', space=sflag, size = 0x4, scoped, tag = 'scoped memory for tpu_custom_call.1']
    #allocation12 [shape = 'u8[262144]{0}', space=vmem, size = 0x40000, scoped, tag = 'input window, operand 4, single buffered']
    #allocation13 [shape = 'u8[262144]{0}', space=vmem, size = 0x40000, scoped, tag = 'input window, operand 6, single buffered']
    #allocation14 [shape = 's32[1]{0}', space=sflag, size = 0x4, scoped, tag = 'scoped memory for tpu_custom_call.1']
    #allocation15 [shape = 'u8[262144]{0}', space=vmem, size = 0x40000, scoped, tag = 'output window, operand 0']
    %13 = vsyncpa [#allocation5], 0
    %s14 = scalar_lea.sflag [#allocation5], 1
    %15 = vsyncpa %s14, 0
    %16 = vsyncpa [#allocation8], 0
    %17 = vsyncpa [#allocation11], 0
    %18 = vsyncpa [#allocation14], 0
    %19 = vsyncpa [#allocation6], 0
    %s20 = scalar_lea.sflag [#allocation6], 1
    %21 = vsyncpa %s20, 0
    loop: start=0, step=1, limit=4
    $region2: #{tpu_custom_call.1} parent=1 // loop_pre_header
      _
    $region3: #{tpu_custom_call.1} parent=1 // loop_header
      %s23 = sphi 0, %s27
      %p24 = scmp.ge.s32.totalorder %s23, 4
      %s33 = sphi 0, %s35
      %s36 = sphi 0, %s33
      %s37 = sphi 0, %s36
      %s53 = sphi 0, %s37
      %s57 = sphi 0, %s57
      %s59 = sphi 0, %s57
      %s60 = sphi 0, %s59
      %s74 = sphi 0, %s60
      %s78 = sphi 0, %s78
      %s80 = sphi 0, %s78
      %s81 = sphi 0, %s80
      %s95 = sphi 0, %s81
      %s99 = sphi 0, %s99
      %s101 = sphi 0, %s99
      %s102 = sphi 0, %s101
      %s116 = sphi 0, %s102
      %s120 = sphi 0, %s120
      %s122 = sphi 0, %s120
      %s123 = sphi 0, %s122
      %s137 = sphi 0, %s123
      %s141 = sphi 0, %s141
      %s143 = sphi 0, %s141
      %s144 = sphi 0, %s143
      %s158 = sphi 0, %s144
      %s162 = sphi 0, %s162
      %s164 = sphi 0, %s162
      %s165 = sphi 0, %s164
      %s179 = sphi 0, %s165
      %s183 = sphi 0, %s183
      %s185 = sphi 0, %s183
      %s186 = sphi 0, %s185
      %s200 = sphi 0, %s186
      %s206 = sphi 0, %s208
      %s209 = sphi 0, %s206
      %s210 = sphi 0, %s209
      %s226 = sphi 0, %s210
    $region4: #{tpu_custom_call.1} parent=1 // loop_header_branch
      %26 = sbr.rel (%p24) target = $region8
    $region5: #{tpu_custom_call.1} parent=1 // loop_body
      %s28 = ssub.s32 %s23, 1
      %s29 = ssub.s32 %s23, 2
      %s30 = sadd.s32 %s23, 1
      %s31 = ssub.s32 %s23, %s30
      %p32 = scmp.eq.s32.totalorder %s31, 0
      %s34 = sadd.s32 %s33, 1
      %s35 = scalar_select %p32, %s33, %s34
      %p38 = pneg %p32
      %p39 = scmp.eq.s32.totalorder %s23, 1
      %p40 = por %p38, %p39
      %p41 = scmp.ne.s32.totalorder %s33, %s36
      %p42 = scmp.eq.s32.totalorder %s23, 0
      %p43 = por %p41, %p42
      %p44 = scmp.ne.s32.totalorder %s33, %s36
      %p45 = scmp.eq.s32.totalorder %s28, 1
      %p46 = por %p44, %p45
      %p47 = scmp.ne.s32.totalorder %s36, %s37
      %p48 = scmp.eq.s32.totalorder %s28, 0
      %p49 = por %p47, %p48
      %p50 = scmp.ne.s32.totalorder %s36, %s37
      %p51 = scmp.eq.s32.totalorder %s29, 1
      %p52 = por %p50, %p51
      %p54 = scmp.ne.s32.totalorder %s37, %s53
      %p55 = scmp.eq.s32.totalorder %s29, 0
      %p56 = por %p54, %p55
      %s58 = sadd.s32 %s57, 1
      %p61 = scmp.eq.s32.totalorder %s23, 1
      %p62 = scmp.ne.s32.totalorder %s57, %s59
      %p63 = scmp.eq.s32.totalorder %s23, 0
      %p64 = por %p62, %p63
      %p65 = scmp.ne.s32.totalorder %s57, %s59
      %p66 = scmp.eq.s32.totalorder %s28, 1
      %p67 = por %p65, %p66
      %p68 = scmp.ne.s32.totalorder %s59, %s60
      %p69 = scmp.eq.s32.totalorder %s28, 0
      %p70 = por %p68, %p69
      %p71 = scmp.ne.s32.totalorder %s59, %s60
      %p72 = scmp.eq.s32.totalorder %s29, 1
      %p73 = por %p71, %p72
      %p75 = scmp.ne.s32.totalorder %s60, %s74
      %p76 = scmp.eq.s32.totalorder %s29, 0
      %p77 = por %p75, %p76
      %s79 = sadd.s32 %s78, 1
      %p82 = scmp.eq.s32.totalorder %s23, 1
      %p83 = scmp.ne.s32.totalorder %s78, %s80
      %p84 = scmp.eq.s32.totalorder %s23, 0
      %p85 = por %p83, %p84
      %p86 = scmp.ne.s32.totalorder %s78, %s80
      %p87 = scmp.eq.s32.totalorder %s28, 1
      %p88 = por %p86, %p87
      %p89 = scmp.ne.s32.totalorder %s80, %s81
      %p90 = scmp.eq.s32.totalorder %s28, 0
      %p91 = por %p89, %p90
      %p92 = scmp.ne.s32.totalorder %s80, %s81
      %p93 = scmp.eq.s32.totalorder %s29, 1
      %p94 = por %p92, %p93
      %p96 = scmp.ne.s32.totalorder %s81, %s95
      %p97 = scmp.eq.s32.totalorder %s29, 0
      %p98 = por %p96, %p97
      %s100 = sadd.s32 %s99, 1
      %p103 = scmp.eq.s32.totalorder %s23, 1
      %p104 = scmp.ne.s32.totalorder %s99, %s101
      %p105 = scmp.eq.s32.totalorder %s23, 0
      %p106 = por %p104, %p105
      %p107 = scmp.ne.s32.totalorder %s99, %s101
      %p108 = scmp.eq.s32.totalorder %s28, 1
      %p109 = por %p107, %p108
      %p110 = scmp.ne.s32.totalorder %s101, %s102
      %p111 = scmp.eq.s32.totalorder %s28, 0
      %p112 = por %p110, %p111
      %p113 = scmp.ne.s32.totalorder %s101, %s102
      %p114 = scmp.eq.s32.totalorder %s29, 1
      %p115 = por %p113, %p114
      %p117 = scmp.ne.s32.totalorder %s102, %s116
      %p118 = scmp.eq.s32.totalorder %s29, 0
      %p119 = por %p117, %p118
      %s121 = sadd.s32 %s120, 1
      %p124 = scmp.eq.s32.totalorder %s23, 1
      %p125 = scmp.ne.s32.totalorder %s120, %s122
      %p126 = scmp.eq.s32.totalorder %s23, 0
      %p127 = por %p125, %p126
      %p128 = scmp.ne.s32.totalorder %s120, %s122
      %p129 = scmp.eq.s32.totalorder %s28, 1
      %p130 = por %p128, %p129
      %p131 = scmp.ne.s32.totalorder %s122, %s123
      %p132 = scmp.eq.s32.totalorder %s28, 0
      %p133 = por %p131, %p132
      %p134 = scmp.ne.s32.totalorder %s122, %s123
      %p135 = scmp.eq.s32.totalorder %s29, 1
      %p136 = por %p134, %p135
      %p138 = scmp.ne.s32.totalorder %s123, %s137
      %p139 = scmp.eq.s32.totalorder %s29, 0
      %p140 = por %p138, %p139
      %s142 = sadd.s32 %s141, 1
      %p145 = scmp.eq.s32.totalorder %s23, 1
      %p146 = scmp.ne.s32.totalorder %s141, %s143
      %p147 = scmp.eq.s32.totalorder %s23, 0
      %p148 = por %p146, %p147
      %p149 = scmp.ne.s32.totalorder %s141, %s143
      %p150 = scmp.eq.s32.totalorder %s28, 1
      %p151 = por %p149, %p150
      %p152 = scmp.ne.s32.totalorder %s143, %s144
      %p153 = scmp.eq.s32.totalorder %s28, 0
      %p154 = por %p152, %p153
      %p155 = scmp.ne.s32.totalorder %s143, %s144
      %p156 = scmp.eq.s32.totalorder %s29, 1
      %p157 = por %p155, %p156
      %p159 = scmp.ne.s32.totalorder %s144, %s158
      %p160 = scmp.eq.s32.totalorder %s29, 0
      %p161 = por %p159, %p160
      %s163 = sadd.s32 %s162, 1
      %p166 = scmp.eq.s32.totalorder %s23, 1
      %p167 = scmp.ne.s32.totalorder %s162, %s164
      %p168 = scmp.eq.s32.totalorder %s23, 0
      %p169 = por %p167, %p168
      %p170 = scmp.ne.s32.totalorder %s162, %s164
      %p171 = scmp.eq.s32.totalorder %s28, 1
      %p172 = por %p170, %p171
      %p173 = scmp.ne.s32.totalorder %s164, %s165
      %p174 = scmp.eq.s32.totalorder %s28, 0
      %p175 = por %p173, %p174
      %p176 = scmp.ne.s32.totalorder %s164, %s165
      %p177 = scmp.eq.s32.totalorder %s29, 1
      %p178 = por %p176, %p177
      %p180 = scmp.ne.s32.totalorder %s165, %s179
      %p181 = scmp.eq.s32.totalorder %s29, 0
      %p182 = por %p180, %p181
      %s184 = sadd.s32 %s183, 1
      %p187 = scmp.eq.s32.totalorder %s23, 1
      %p188 = scmp.ne.s32.totalorder %s183, %s185
      %p189 = scmp.eq.s32.totalorder %s23, 0
      %p190 = por %p188, %p189
      %p191 = scmp.ne.s32.totalorder %s183, %s185
      %p192 = scmp.eq.s32.totalorder %s28, 1
      %p193 = por %p191, %p192
      %p194 = scmp.ne.s32.totalorder %s185, %s186
      %p195 = scmp.eq.s32.totalorder %s28, 0
      %p196 = por %p194, %p195
      %p197 = scmp.ne.s32.totalorder %s185, %s186
      %p198 = scmp.eq.s32.totalorder %s29, 1
      %p199 = por %p197, %p198
      %p201 = scmp.ne.s32.totalorder %s186, %s200
      %p202 = scmp.eq.s32.totalorder %s29, 0
      %p203 = por %p201, %p202
      %s204 = ssub.s32 %s23, %s30
      %p205 = scmp.eq.s32.totalorder %s204, 0
      %s207 = sadd.s32 %s206, 1
      %s208 = scalar_select %p205, %s206, %s207
      %p211 = pneg %p205
      %p212 = scmp.eq.s32.totalorder %s23, 1
      %p213 = por %p211, %p212
      %p214 = scmp.ne.s32.totalorder %s206, %s209
      %p215 = scmp.eq.s32.totalorder %s23, 0
      %p216 = por %p214, %p215
      %p217 = scmp.ne.s32.totalorder %s206, %s209
      %p218 = scmp.eq.s32.totalorder %s28, 1
      %p219 = por %p217, %p218
      %p220 = scmp.ne.s32.totalorder %s209, %s210
      %p221 = scmp.eq.s32.totalorder %s28, 0
      %p222 = por %p220, %p221
      %p223 = scmp.ne.s32.totalorder %s209, %s210
      %p224 = scmp.eq.s32.totalorder %s29, 1
      %p225 = por %p223, %p224
      %p227 = scmp.ne.s32.totalorder %s210, %s226
      %p228 = scmp.eq.s32.totalorder %s29, 0
      %p229 = por %p227, %p228
      %p230 = scmp.le.s32.totalorder 1, %s23
      %p231 = scmp.lt.s32.totalorder %s23, 3
      %p232 = pnand %p230, %p231
      %p233 = pneg %p232
      // Predicated region
      $region9: #{tpu_custom_call.1} parent=5 // pred_check
        _
      $region10: #{tpu_custom_call.1} parent=5 // pred_check_branch
        %235 = sbr.rel (%p232) target = $region12
      $region11: #{tpu_custom_call.1} parent=5 // pred_region
        %s236 = ssub.s32 %s23, 1
        // Predicated region
        $region13: #{tpu_custom_call.1} parent=11 // pred_check
          %p237 = pneg %p70
        $region14: #{tpu_custom_call.1} parent=11 // pred_check_branch
          %239 = sbr.rel (%p237) target = $region16
        $region15: #{tpu_custom_call.1} parent=11 // pred_region
          %241 = vsyncadd [#allocation8], 0
          %s242 = sshll.u32 %s1, 4
          %s243 = int_to_ptr.hbm [resolvable:$true] %s242
          %s244 = sshll.u32 [#allocation7], 4
          %s245 = int_to_ptr.vmem [resolvable:$true] %s244
          %250 = dma.hbm_to_vmem [thread:$0]  %s243, 192, %s245, [#allocation8], 64, 64, 4
        $region16: #{tpu_custom_call.1} parent=11 // pred_fallthru
          _
        // Predicated region
        $region17: #{tpu_custom_call.1} parent=11 // pred_check
          %p251 = pneg %p91
        $region18: #{tpu_custom_call.1} parent=11 // pred_check_branch
          %253 = sbr.rel (%p251) target = $region20
        $region19: #{tpu_custom_call.1} parent=11 // pred_region
          %255 = vsyncadd [#allocation8], 0
          %s257 = sshll.u32 %s2, 4
          %s258 = int_to_ptr.hbm [resolvable:$true] %s257
          %s259 = sshll.u32 [#allocation9], 4
          %s260 = int_to_ptr.vmem [resolvable:$true] %s259
          %262 = dma.hbm_to_vmem [thread:$0]  %s258, 16, %s260, [#allocation8]
        $region20: #{tpu_custom_call.1} parent=11 // pred_fallthru
          _
        // Predicated region
        $region21: #{tpu_custom_call.1} parent=11 // pred_check
          %p263 = pneg %p112
        $region22: #{tpu_custom_call.1} parent=11 // pred_check_branch
          %265 = sbr.rel (%p263) target = $region24
        $region23: #{tpu_custom_call.1} parent=11 // pred_region
          %267 = vsyncadd [#allocation11], 0
          %s268 = sshll.u32 %s3, 4
          %s269 = int_to_ptr.hbm [resolvable:$true] %s268
          %s270 = sshll.u32 [#allocation10], 4
          %s271 = int_to_ptr.vmem [resolvable:$true] %s270
          %276 = dma.hbm_to_vmem [thread:$0]  %s269, 896, %s271, [#allocation11], 128, 128, 8
        $region24: #{tpu_custom_call.1} parent=11 // pred_fallthru
          _
        // Predicated region
        $region25: #{tpu_custom_call.1} parent=11 // pred_check
          %p277 = pneg %p133
        $region26: #{tpu_custom_call.1} parent=11 // pred_check_branch
          %279 = sbr.rel (%p277) target = $region28
        $region27: #{tpu_custom_call.1} parent=11 // pred_region
          %281 = vsyncadd [#allocation11], 0
          %s282 = sshll.u32 %s4, 4
          %s283 = int_to_ptr.hbm [resolvable:$true] %s282
          %s284 = sshll.u32 [#allocation12], 4
          %s285 = int_to_ptr.vmem [resolvable:$true] %s284
          %290 = dma.hbm_to_vmem [thread:$0]  %s283, 8192, %s285, [#allocation11], 512, 512, 32
        $region28: #{tpu_custom_call.1} parent=11 // pred_fallthru
          _
        // Predicated region
        $region29: #{tpu_custom_call.1} parent=11 // pred_check
          %p291 = pneg %p154
        $region30: #{tpu_custom_call.1} parent=11 // pred_check_branch
          %293 = sbr.rel (%p291) target = $region32
        $region31: #{tpu_custom_call.1} parent=11 // pred_region
          _
        $region32: #{tpu_custom_call.1} parent=11 // pred_fallthru
          _
        // Predicated region
        $region33: #{tpu_custom_call.1} parent=11 // pred_check
          %p294 = pneg %p175
        $region34: #{tpu_custom_call.1} parent=11 // pred_check_branch
          %296 = sbr.rel (%p294) target = $region36
        $region35: #{tpu_custom_call.1} parent=11 // pred_region
          %298 = vsyncadd [#allocation14], 0
          %s299 = sshll.u32 %s6, 4
          %s300 = int_to_ptr.hbm [resolvable:$true] %s299
          %s301 = sshll.u32 [#allocation13], 4
          %s302 = int_to_ptr.vmem [resolvable:$true] %s301
          %307 = dma.hbm_to_vmem [thread:$0]  %s300, 8192, %s302, [#allocation14], 128, 128, 8
        $region36: #{tpu_custom_call.1} parent=11 // pred_fallthru
          _
        // Predicated region
        $region37: #{tpu_custom_call.1} parent=11 // pred_check
          %p308 = pneg %p196
        $region38: #{tpu_custom_call.1} parent=11 // pred_check_branch
          %310 = sbr.rel (%p308) target = $region40
        $region39: #{tpu_custom_call.1} parent=11 // pred_region
          _
        $region40: #{tpu_custom_call.1} parent=11 // pred_fallthru
          _
      $region12: #{tpu_custom_call.1} parent=5 // pred_fallthru
        _
      %p311 = scmp.lt.s32.totalorder %s23, 2
      // Predicated region
      $region41: #{tpu_custom_call.1} parent=5 // pred_check
        %p312 = pneg %p311
      $region42: #{tpu_custom_call.1} parent=5 // pred_check_branch
        %314 = sbr.rel (%p312) target = $region44
      $region43: #{tpu_custom_call.1} parent=5 // pred_region
        // Predicated region
        $region45: #{tpu_custom_call.1} parent=43 // pred_check
          %p315 = pneg %p43
        $region46: #{tpu_custom_call.1} parent=43 // pred_check_branch
          %317 = sbr.rel (%p315) target = $region48
        $region47: #{tpu_custom_call.1} parent=43 // pred_region
          %s318 = sand.u32 %s33, 1
          %s319 = scalar_lea.sflag [#allocation5], %s318
          %s320 = sand.u32 %s33, 1
          %s321 = smul.addr %s320, 256
          %s322 = scalar_lea.vmem [#allocation4], %s321
          %324 = vsyncadd %s319, 0
          %s325 = smul.addr %s23, 32
          %s326 = smul.addr %s325, 8
          %s327 = scalar_lea.hbm %s0, %s326
          %s328 = sshll.u32 %s327, 4
          %s329 = int_to_ptr.hbm [resolvable:$true] %s328
          %s330 = sshll.u32 %s322, 4
          %s331 = int_to_ptr.vmem [resolvable:$true] %s330
          %336 = dma.hbm_to_vmem [thread:$0]  %s329, 4096, %s331, %s319, 128, 128, 8
        $region48: #{tpu_custom_call.1} parent=43 // pred_fallthru
          _
      $region44: #{tpu_custom_call.1} parent=5 // pred_fallthru
        _
      %p337 = scmp.le.s32.totalorder 1, %s23
      %p338 = scmp.lt.s32.totalorder %s23, 3
      %p339 = pnand %p337, %p338
      %p340 = pneg %p339
      // Predicated region
      $region49: #{tpu_custom_call.1} parent=5 // pred_check
        _
      $region50: #{tpu_custom_call.1} parent=5 // pred_check_branch
        %342 = sbr.rel (%p339) target = $region52
      $region51: #{tpu_custom_call.1} parent=5 // pred_region
        %s343 = ssub.s32 %s23, 1
        %s344 = sand.u32 %s36, 1
        %s345 = scalar_lea.sflag [#allocation5], %s344
        %s346 = sand.u32 %s36, 1
        %s347 = smul.addr %s346, 256
        %s348 = scalar_lea.vmem [#allocation4], %s347
        // Predicated region
        $region53: #{tpu_custom_call.1} parent=51 // pred_check
          %p349 = pneg %p49
        $region54: #{tpu_custom_call.1} parent=51 // pred_check_branch
          %351 = sbr.rel (%p349) target = $region56
        $region55: #{tpu_custom_call.1} parent=51 // pred_region
          %353 = dma.done %s345, 4096
        $region56: #{tpu_custom_call.1} parent=51 // pred_fallthru
          _
        // Predicated region
        $region57: #{tpu_custom_call.1} parent=51 // pred_check
          %p354 = pneg %p70
        $region58: #{tpu_custom_call.1} parent=51 // pred_check_branch
          %356 = sbr.rel (%p354) target = $region60
        $region59: #{tpu_custom_call.1} parent=51 // pred_region
          %358 = dma.done [#allocation8], 192
        $region60: #{tpu_custom_call.1} parent=51 // pred_fallthru
          _
        // Predicated region
        $region61: #{tpu_custom_call.1} parent=51 // pred_check
          %p359 = pneg %p91
        $region62: #{tpu_custom_call.1} parent=51 // pred_check_branch
          %361 = sbr.rel (%p359) target = $region64
        $region63: #{tpu_custom_call.1} parent=51 // pred_region
          %363 = dma.done [#allocation8], 16
        $region64: #{tpu_custom_call.1} parent=51 // pred_fallthru
          _
        // Predicated region
        $region65: #{tpu_custom_call.1} parent=51 // pred_check
          %p364 = pneg %p112
        $region66: #{tpu_custom_call.1} parent=51 // pred_check_branch
          %366 = sbr.rel (%p364) target = $region68
        $region67: #{tpu_custom_call.1} parent=51 // pred_region
          %368 = dma.done [#allocation11], 896
        $region68: #{tpu_custom_call.1} parent=51 // pred_fallthru
          _
        // Predicated region
        $region69: #{tpu_custom_call.1} parent=51 // pred_check
          %p369 = pneg %p133
        $region70: #{tpu_custom_call.1} parent=51 // pred_check_branch
          %371 = sbr.rel (%p369) target = $region72
        $region71: #{tpu_custom_call.1} parent=51 // pred_region
          %373 = dma.done [#allocation11], 8192
        $region72: #{tpu_custom_call.1} parent=51 // pred_fallthru
          _
        // Predicated region
        $region73: #{tpu_custom_call.1} parent=51 // pred_check
          %p374 = pneg %p175
        $region74: #{tpu_custom_call.1} parent=51 // pred_check_branch
          %376 = sbr.rel (%p374) target = $region76
        $region75: #{tpu_custom_call.1} parent=51 // pred_region
          %378 = dma.done [#allocation14], 8192
        $region76: #{tpu_custom_call.1} parent=51 // pred_fallthru
          _
        %s379 = sand.u32 %s36, 1
        %s380 = scalar_lea.sflag [#allocation5], %s379
        %s381 = sand.u32 %s36, 1
        %s382 = smul.addr %s381, 256
        %s383 = scalar_lea.vmem [#allocation4], %s382
        %p384 = pneg %p49
        %p385 = pneg %p46
        %p386 = pneg %p70
        %p387 = pneg %p67
        %p388 = pneg %p91
        %p389 = pneg %p88
        %p390 = pneg %p112
        %p391 = pneg %p109
        %p392 = pneg %p133
        %p393 = pneg %p130
        %p394 = pneg %p154
        %p395 = pneg %p151
        %p396 = pneg %p175
        %p397 = pneg %p172
        %p398 = pneg %p196
        %p399 = pneg %p193
        %p400 = pneg %p222
        %p401 = pneg %p219
        %s402 = sand.u32 %s209, 1
        %s403 = scalar_lea.sflag [#allocation6], %s402
        %s404 = sand.u32 %s209, 1
        %s405 = smul.addr %s404, 256
        %s406 = scalar_lea.vmem [#allocation15], %s405
        %407 = vst [vmem:[#allocation2] sm:$0xff] 0.0
        %408 = vst [vmem:[#allocation2 + $0x8] sm:$0xff] 0.0
        %409 = vst [vmem:[#allocation2 + $0x10] sm:$0x3] 0.0
        %410 = vst [vmem:[#allocation2 + $0x18] sm:$0xff] 0.0
        %411 = vst [vmem:[#allocation2 + $0x20] sm:$0xff] 0.0
        %412 = vst [vmem:[#allocation2 + $0x28] sm:$0x3] 0.0
        %413 = vst [vmem:[#allocation2 + $0x30] sm:$0xff] 0.0
        %414 = vst [vmem:[#allocation2 + $0x38] sm:$0xff] 0.0
        %415 = vst [vmem:[#allocation2 + $0x40] sm:$0x3] 0.0
        %416 = vst [vmem:[#allocation2 + $0x48] sm:$0xff] 0.0
        %417 = vst [vmem:[#allocation2 + $0x50] sm:$0xff] 0.0
        %418 = vst [vmem:[#allocation2 + $0x58] sm:$0x3] 0.0
        %419 = vst [vmem:[#allocation2 + $0x60] sm:$0xff] 0.0
        %420 = vst [vmem:[#allocation2 + $0x68] sm:$0xff] 0.0
        %421 = vst [vmem:[#allocation2 + $0x70] sm:$0x3] 0.0
        %422 = vst [vmem:[#allocation2 + $0x78] sm:$0xff] 0.0
        %423 = vst [vmem:[#allocation2 + $0x80] sm:$0xff] 0.0
        %424 = vst [vmem:[#allocation2 + $0x88] sm:$0x3] 0.0
        %425 = vst [vmem:[#allocation2 + $0x90] sm:$0xff] 0.0
        %426 = vst [vmem:[#allocation2 + $0x98] sm:$0xff] 0.0
        %427 = vst [vmem:[#allocation2 + $0xa0] sm:$0x3] 0.0
        %428 = vst [vmem:[#allocation2 + $0xa8] sm:$0xff] 0.0
        %429 = vst [vmem:[#allocation2 + $0xb0] sm:$0xff] 0.0
        %430 = vst [vmem:[#allocation2 + $0xb8] sm:$0x3] 0.0
        %431 = vst [vmem:[#allocation2 + $0xc0] sm:$0xff] 0.0
        %432 = vst [vmem:[#allocation2 + $0xc8] sm:$0xff] 0.0
        %433 = vst [vmem:[#allocation2 + $0xd0] sm:$0x3] 0.0
        %434 = vst [vmem:[#allocation2 + $0xd8] sm:$0xff] 0.0
        %435 = vst [vmem:[#allocation2 + $0xe0] sm:$0xff] 0.0
        %436 = vst [vmem:[#allocation2 + $0xe8] sm:$0x3] 0.0
        %437 = vst [vmem:[#allocation2 + $0xf0] sm:$0xff] 0.0
        %438 = vst [vmem:[#allocation2 + $0xf8] sm:$0xff] 0.0
        %439 = vst [vmem:[#allocation2 + $0x100] sm:$0x3] 0.0
        %440 = vst [vmem:[#allocation2 + $0x108] sm:$0xff] 0.0
        %441 = vst [vmem:[#allocation2 + $0x110] sm:$0xff] 0.0
        %442 = vst [vmem:[#allocation2 + $0x118] sm:$0x3] 0.0
        %443 = vst [vmem:[#allocation2 + $0x120] sm:$0xff] 0.0
        %444 = vst [vmem:[#allocation2 + $0x128] sm:$0xff] 0.0
        %445 = vst [vmem:[#allocation2 + $0x130] sm:$0x3] 0.0
        %446 = vst [vmem:[#allocation2 + $0x138] sm:$0xff] 0.0
        %447 = vst [vmem:[#allocation2 + $0x140] sm:$0xff] 0.0
        %448 = vst [vmem:[#allocation2 + $0x148] sm:$0x3] 0.0
        %449 = vst [vmem:[#allocation2 + $0x150] sm:$0xff] 0.0
        %450 = vst [vmem:[#allocation2 + $0x158] sm:$0xff] 0.0
        %451 = vst [vmem:[#allocation2 + $0x160] sm:$0x3] 0.0
        %452 = vst [vmem:[#allocation2 + $0x168] sm:$0xff] 0.0
        %453 = vst [vmem:[#allocation2 + $0x170] sm:$0xff] 0.0
        %454 = vst [vmem:[#allocation2 + $0x178] sm:$0x3] 0.0
        %455 = vst [vmem:[#allocation2 + $0x180] sm:$0xff] 0.0
        %456 = vst [vmem:[#allocation2 + $0x188] sm:$0xff] 0.0
        %457 = vst [vmem:[#allocation2 + $0x190] sm:$0x3] 0.0
        %458 = vst [vmem:[#allocation2 + $0x198] sm:$0xff] 0.0
        %459 = vst [vmem:[#allocation2 + $0x1a0] sm:$0xff] 0.0
        %460 = vst [vmem:[#allocation2 + $0x1a8] sm:$0x3] 0.0
        %461 = vst [vmem:[#allocation3] sm:$0xff] 0.0
        %462 = vst [vmem:[#allocation3 + $0x8] sm:$0xff] 0.0
        %463 = vst [vmem:[#allocation3 + $0x10] sm:$0x3f] 0.0
        %464 = vst [vmem:[#allocation3 + $0x18] sm:$0xff] 0.0
        %465 = vst [vmem:[#allocation3 + $0x20] sm:$0xff] 0.0
        %466 = vst [vmem:[#allocation3 + $0x28] sm:$0x3f] 0.0
        %467 = vst [vmem:[#allocation3 + $0x30] sm:$0xff] 0.0
        %468 = vst [vmem:[#allocation3 + $0x38] sm:$0xff] 0.0
        %469 = vst [vmem:[#allocation3 + $0x40] sm:$0x3f] 0.0
        %470 = vst [vmem:[#allocation3 + $0x48] sm:$0xff] 0.0
        %471 = vst [vmem:[#allocation3 + $0x50] sm:$0xff] 0.0
        %472 = vst [vmem:[#allocation3 + $0x58] sm:$0x3f] 0.0
        %473 = vst [vmem:[#allocation3 + $0x60] sm:$0xff] 0.0
        %474 = vst [vmem:[#allocation3 + $0x68] sm:$0xff] 0.0
        %475 = vst [vmem:[#allocation3 + $0x70] sm:$0x3f] 0.0
        %476 = vst [vmem:[#allocation3 + $0x78] sm:$0xff] 0.0
        %477 = vst [vmem:[#allocation3 + $0x80] sm:$0xff] 0.0
        %478 = vst [vmem:[#allocation3 + $0x88] sm:$0x3f] 0.0
        %479 = vst [vmem:[#allocation3 + $0x90] sm:$0xff] 0.0
        %480 = vst [vmem:[#allocation3 + $0x98] sm:$0xff] 0.0
        %481 = vst [vmem:[#allocation3 + $0xa0] sm:$0x3f] 0.0
        %482 = vst [vmem:[#allocation3 + $0xa8] sm:$0xff] 0.0
        %483 = vst [vmem:[#allocation3 + $0xb0] sm:$0xff] 0.0
        %484 = vst [vmem:[#allocation3 + $0xb8] sm:$0x3f] 0.0
        %485 = vst [vmem:[#allocation3 + $0xc0] sm:$0xff] 0.0
        %486 = vst [vmem:[#allocation3 + $0xc8] sm:$0xff] 0.0
        %487 = vst [vmem:[#allocation3 + $0xd0] sm:$0x3f] 0.0
        %488 = vst [vmem:[#allocation3 + $0xd8] sm:$0xff] 0.0
        %489 = vst [vmem:[#allocation3 + $0xe0] sm:$0xff] 0.0
        %490 = vst [vmem:[#allocation3 + $0xe8] sm:$0x3f] 0.0
        %491 = vst [vmem:[#allocation3 + $0xf0] sm:$0xff] 0.0
        %492 = vst [vmem:[#allocation3 + $0xf8] sm:$0xff] 0.0
        %493 = vst [vmem:[#allocation3 + $0x100] sm:$0x3f] 0.0
        %494 = vst [vmem:[#allocation3 + $0x108] sm:$0xff] 0.0
        %495 = vst [vmem:[#allocation3 + $0x110] sm:$0xff] 0.0
        %496 = vst [vmem:[#allocation3 + $0x118] sm:$0x3f] 0.0
        %497 = vst [vmem:[#allocation3 + $0x120] sm:$0xff] 0.0
        %498 = vst [vmem:[#allocation3 + $0x128] sm:$0xff] 0.0
        %499 = vst [vmem:[#allocation3 + $0x130] sm:$0x3f] 0.0
        %500 = vst [vmem:[#allocation3 + $0x138] sm:$0xff] 0.0
        %501 = vst [vmem:[#allocation3 + $0x140] sm:$0xff] 0.0
        %502 = vst [vmem:[#allocation3 + $0x148] sm:$0x3f] 0.0
        %503 = vst [vmem:[#allocation3 + $0x150] sm:$0xff] 0.0
        %504 = vst [vmem:[#allocation3 + $0x158] sm:$0xff] 0.0
        %505 = vst [vmem:[#allocation3 + $0x160] sm:$0x3f] 0.0
        %506 = vst [vmem:[#allocation3 + $0x168] sm:$0xff] 0.0
        %507 = vst [vmem:[#allocation3 + $0x170] sm:$0xff] 0.0
        %508 = vst [vmem:[#allocation3 + $0x178] sm:$0x3f] 0.0
        %509 = vst [vmem:[#allocation3 + $0x180] sm:$0xff] 0.0
        %510 = vst [vmem:[#allocation3 + $0x188] sm:$0xff] 0.0
        %511 = vst [vmem:[#allocation3 + $0x190] sm:$0x3f] 0.0
        %512 = vst [vmem:[#allocation3 + $0x198] sm:$0xff] 0.0
        %513 = vst [vmem:[#allocation3 + $0x1a0] sm:$0xff] 0.0
        %514 = vst [vmem:[#allocation3 + $0x1a8] sm:$0x3f] 0.0
        %515 = vst [vmem:[#allocation3 + $0x1b0] sm:$0xff] 0.0
        %516 = vst [vmem:[#allocation3 + $0x1b8] sm:$0xff] 0.0
        %517 = vst [vmem:[#allocation3 + $0x1c0] sm:$0x3f] 0.0
        %518 = vst [vmem:[#allocation3 + $0x1c8] sm:$0xff] 0.0
        %519 = vst [vmem:[#allocation3 + $0x1d0] sm:$0xff] 0.0
        %520 = vst [vmem:[#allocation3 + $0x1d8] sm:$0x3f] 0.0
        %521 = vst [vmem:[#allocation3 + $0x1e0] sm:$0xff] 0.0
        %522 = vst [vmem:[#allocation3 + $0x1e8] sm:$0xff] 0.0
        %523 = vst [vmem:[#allocation3 + $0x1f0] sm:$0x3f] 0.0
        %524 = vst [vmem:[#allocation3 + $0x1f8] sm:$0xff] 0.0
        %525 = vst [vmem:[#allocation3 + $0x200] sm:$0xff] 0.0
        %526 = vst [vmem:[#allocation3 + $0x208] sm:$0x3f] 0.0
        %v527 = vld [vmem:[%s348] sm:$0xff]
        %v528 = vld [vmem:[%s348 + $0x8] sm:$0xff]
        %v529 = vld [vmem:[%s348 + $0x10] sm:$0xff]
        %v530 = vld [vmem:[%s348 + $0x18] sm:$0xff]
        %v531 = vld [vmem:[%s348 + $0x20] sm:$0xff]
        %v532 = vld [vmem:[%s348 + $0x28] sm:$0xff]
        %v533 = vld [vmem:[%s348 + $0x30] sm:$0xff]
        %v534 = vld [vmem:[%s348 + $0x38] sm:$0xff]
        %v535 = vld [vmem:[%s348 + $0x40] sm:$0xff]
        %v536 = vld [vmem:[%s348 + $0x48] sm:$0xff]
        %v537 = vld [vmem:[%s348 + $0x50] sm:$0xff]
        %v538 = vld [vmem:[%s348 + $0x58] sm:$0xff]
        %v539 = vld [vmem:[%s348 + $0x60] sm:$0xff]
        %v540 = vld [vmem:[%s348 + $0x68] sm:$0xff]
        %v541 = vld [vmem:[%s348 + $0x70] sm:$0xff]
        %v542 = vld [vmem:[%s348 + $0x78] sm:$0xff]
        %v543 = vld [vmem:[%s348 + $0x80] sm:$0xff]
        %v544 = vld [vmem:[%s348 + $0x88] sm:$0xff]
        %v545 = vld [vmem:[%s348 + $0x90] sm:$0xff]
        %v546 = vld [vmem:[%s348 + $0x98] sm:$0xff]
        %v547 = vld [vmem:[%s348 + $0xa0] sm:$0xff]
        %v548 = vld [vmem:[%s348 + $0xa8] sm:$0xff]
        %v549 = vld [vmem:[%s348 + $0xb0] sm:$0xff]
        %v550 = vld [vmem:[%s348 + $0xb8] sm:$0xff]
        %v551 = vld [vmem:[%s348 + $0xc0] sm:$0xff]
        %v552 = vld [vmem:[%s348 + $0xc8] sm:$0xff]
        %v553 = vld [vmem:[%s348 + $0xd0] sm:$0xff]
        %v554 = vld [vmem:[%s348 + $0xd8] sm:$0xff]
        %v555 = vld [vmem:[%s348 + $0xe0] sm:$0xff]
        %v556 = vld [vmem:[%s348 + $0xe8] sm:$0xff]
        %v557 = vld [vmem:[%s348 + $0xf0] sm:$0xff]
        %v558 = vld [vmem:[%s348 + $0xf8] sm:$0xff]
        %s559 = scalar_lea.vmem [#allocation2], 24
        %560 = vst [vmem:[%s559 + $0x1] sm:$0xff] %v527
        %561 = vst [vmem:[%s559 + $0x9] sm:$0xff] %v528
        %562 = vst [vmem:[%s559 + $0x19] sm:$0xff] %v529
        %563 = vst [vmem:[%s559 + $0x21] sm:$0xff] %v530
        %564 = vst [vmem:[%s559 + $0x31] sm:$0xff] %v531
        %565 = vst [vmem:[%s559 + $0x39] sm:$0xff] %v532
        %566 = vst [vmem:[%s559 + $0x49] sm:$0xff] %v533
        %567 = vst [vmem:[%s559 + $0x51] sm:$0xff] %v534
        %568 = vst [vmem:[%s559 + $0x61] sm:$0xff] %v535
        %569 = vst [vmem:[%s559 + $0x69] sm:$0xff] %v536
        %570 = vst [vmem:[%s559 + $0x79] sm:$0xff] %v537
        %571 = vst [vmem:[%s559 + $0x81] sm:$0xff] %v538
        %572 = vst [vmem:[%s559 + $0x91] sm:$0xff] %v539
        %573 = vst [vmem:[%s559 + $0x99] sm:$0xff] %v540
        %574 = vst [vmem:[%s559 + $0xa9] sm:$0xff] %v541
        %575 = vst [vmem:[%s559 + $0xb1] sm:$0xff] %v542
        %576 = vst [vmem:[%s559 + $0xc1] sm:$0xff] %v543
        %577 = vst [vmem:[%s559 + $0xc9] sm:$0xff] %v544
        %578 = vst [vmem:[%s559 + $0xd9] sm:$0xff] %v545
        %579 = vst [vmem:[%s559 + $0xe1] sm:$0xff] %v546
        %580 = vst [vmem:[%s559 + $0xf1] sm:$0xff] %v547
        %581 = vst [vmem:[%s559 + $0xf9] sm:$0xff] %v548
        %582 = vst [vmem:[%s559 + $0x109] sm:$0xff] %v549
        %583 = vst [vmem:[%s559 + $0x111] sm:$0xff] %v550
        %584 = vst [vmem:[%s559 + $0x121] sm:$0xff] %v551
        %585 = vst [vmem:[%s559 + $0x129] sm:$0xff] %v552
        %586 = vst [vmem:[%s559 + $0x139] sm:$0xff] %v553
        %587 = vst [vmem:[%s559 + $0x141] sm:$0xff] %v554
        %588 = vst [vmem:[%s559 + $0x151] sm:$0xff] %v555
        %589 = vst [vmem:[%s559 + $0x159] sm:$0xff] %v556
        %590 = vst [vmem:[%s559 + $0x169] sm:$0xff] %v557
        %591 = vst [vmem:[%s559 + $0x171] sm:$0xff] %v558
        %v592 = vld [vmem:[#allocation2] sm:$0xff]
        %v593 = vld [vmem:[#allocation2 + $0x8] sm:$0xff]
        %v594 = vld [vmem:[#allocation2 + $0x18] sm:$0xff]
        %v595 = vld [vmem:[#allocation2 + $0x20] sm:$0xff]
        %v596 = vld [vmem:[#allocation2 + $0x30] sm:$0xff]
        %v597 = vld [vmem:[#allocation2 + $0x38] sm:$0xff]
        %v598 = vld [vmem:[#allocation2 + $0x48] sm:$0xff]
        %v599 = vld [vmem:[#allocation2 + $0x50] sm:$0xff]
        %v600 = vld [vmem:[#allocation2 + $0x60] sm:$0xff]
        %v601 = vld [vmem:[#allocation2 + $0x68] sm:$0xff]
        %v602 = vld [vmem:[#allocation2 + $0x78] sm:$0xff]
        %v603 = vld [vmem:[#allocation2 + $0x80] sm:$0xff]
        %v604 = vld [vmem:[#allocation2 + $0x90] sm:$0xff]
        %v605 = vld [vmem:[#allocation2 + $0x98] sm:$0xff]
        %v606 = vld [vmem:[#allocation2 + $0xa8] sm:$0xff]
        %v607 = vld [vmem:[#allocation2 + $0xb0] sm:$0xff]
        %v608 = vld [vmem:[#allocation2 + $0xc0] sm:$0xff]
        %v609 = vld [vmem:[#allocation2 + $0xc8] sm:$0xff]
        %v610 = vld [vmem:[#allocation2 + $0xd8] sm:$0xff]
        %v611 = vld [vmem:[#allocation2 + $0xe0] sm:$0xff]
        %v612 = vld [vmem:[#allocation2 + $0xf0] sm:$0xff]
        %v613 = vld [vmem:[#allocation2 + $0xf8] sm:$0xff]
        %v614 = vld [vmem:[#allocation2 + $0x108] sm:$0xff]
        %v615 = vld [vmem:[#allocation2 + $0x110] sm:$0xff]
        %v616 = vld [vmem:[#allocation2 + $0x120] sm:$0xff]
        %v617 = vld [vmem:[#allocation2 + $0x128] sm:$0xff]
        %v618 = vld [vmem:[#allocation2 + $0x138] sm:$0xff]
        %v619 = vld [vmem:[#allocation2 + $0x140] sm:$0xff]
        %v620 = vld [vmem:[#allocation2 + $0x150] sm:$0xff]
        %v621 = vld [vmem:[#allocation2 + $0x158] sm:$0xff]
        %v622 = vld [vmem:[#allocation2 + $0x168] sm:$0xff]
        %v623 = vld [vmem:[#allocation2 + $0x170] sm:$0xff]
        %v624 = vld [vmem:[#allocation7] sm:$0x1]
        %v625 = vperm.slane %v624, 0
        %v626 = vmul.f32 %v592, %v625
        %v627 = vmul.f32 %v593, %v625
        %v628 = vmul.f32 %v594, %v625
        %v629 = vmul.f32 %v595, %v625
        %v630 = vmul.f32 %v596, %v625
        %v631 = vmul.f32 %v597, %v625
        %v632 = vmul.f32 %v598, %v625
        %v633 = vmul.f32 %v599, %v625
        %v634 = vmul.f32 %v600, %v625
        %v635 = vmul.f32 %v601, %v625
        %v636 = vmul.f32 %v602, %v625
        %v637 = vmul.f32 %v603, %v625
        %v638 = vmul.f32 %v604, %v625
        %v639 = vmul.f32 %v605, %v625
        %v640 = vmul.f32 %v606, %v625
        %v641 = vmul.f32 %v607, %v625
        %v642 = vmul.f32 %v608, %v625
        %v643 = vmul.f32 %v609, %v625
        %v644 = vmul.f32 %v610, %v625
        %v645 = vmul.f32 %v611, %v625
        %v646 = vmul.f32 %v612, %v625
        %v647 = vmul.f32 %v613, %v625
        %v648 = vmul.f32 %v614, %v625
        %v649 = vmul.f32 %v615, %v625
        %v650 = vmul.f32 %v616, %v625
        %v651 = vmul.f32 %v617, %v625
        %v652 = vmul.f32 %v618, %v625
        %v653 = vmul.f32 %v619, %v625
        %v654 = vmul.f32 %v620, %v625
        %v655 = vmul.f32 %v621, %v625
        %v656 = vmul.f32 %v622, %v625
        %v657 = vmul.f32 %v623, %v625
        %v658 = vadd.f32 %v626, 0.0
        %v659 = vadd.f32 %v627, 0.0
        %v660 = vadd.f32 %v628, 0.0
        %v661 = vadd.f32 %v629, 0.0
        %v662 = vadd.f32 %v630, 0.0
        %v663 = vadd.f32 %v631, 0.0
        %v664 = vadd.f32 %v632, 0.0
        %v665 = vadd.f32 %v633, 0.0
        %v666 = vadd.f32 %v634, 0.0
        %v667 = vadd.f32 %v635, 0.0
        %v668 = vadd.f32 %v636, 0.0
        %v669 = vadd.f32 %v637, 0.0
        %v670 = vadd.f32 %v638, 0.0
        %v671 = vadd.f32 %v639, 0.0
        %v672 = vadd.f32 %v640, 0.0
        %v673 = vadd.f32 %v641, 0.0
        %v674 = vadd.f32 %v642, 0.0
        %v675 = vadd.f32 %v643, 0.0
        %v676 = vadd.f32 %v644, 0.0
        %v677 = vadd.f32 %v645, 0.0
        %v678 = vadd.f32 %v646, 0.0
        %v679 = vadd.f32 %v647, 0.0
        %v680 = vadd.f32 %v648, 0.0
        %v681 = vadd.f32 %v649, 0.0
        %v682 = vadd.f32 %v650, 0.0
        %v683 = vadd.f32 %v651, 0.0
        %v684 = vadd.f32 %v652, 0.0
        %v685 = vadd.f32 %v653, 0.0
        %v686 = vadd.f32 %v654, 0.0
        %v687 = vadd.f32 %v655, 0.0
        %v688 = vadd.f32 %v656, 0.0
        %v689 = vadd.f32 %v657, 0.0
        %v690 = vld [vmem:[#allocation2 + $0x1] sm:$0xff]
        %v691 = vld [vmem:[#allocation2 + $0x9] sm:$0xff]
        %v692 = vld [vmem:[#allocation2 + $0x19] sm:$0xff]
        %v693 = vld [vmem:[#allocation2 + $0x21] sm:$0xff]
        %v694 = vld [vmem:[#allocation2 + $0x31] sm:$0xff]
        %v695 = vld [vmem:[#allocation2 + $0x39] sm:$0xff]
        %v696 = vld [vmem:[#allocation2 + $0x49] sm:$0xff]
        %v697 = vld [vmem:[#allocation2 + $0x51] sm:$0xff]
        %v698 = vld [vmem:[#allocation2 + $0x61] sm:$0xff]
        %v699 = vld [vmem:[#allocation2 + $0x69] sm:$0xff]
        %v700 = vld [vmem:[#allocation2 + $0x79] sm:$0xff]
        %v701 = vld [vmem:[#allocation2 + $0x81] sm:$0xff]
        %v702 = vld [vmem:[#allocation2 + $0x91] sm:$0xff]
        %v703 = vld [vmem:[#allocation2 + $0x99] sm:$0xff]
        %v704 = vld [vmem:[#allocation2 + $0xa9] sm:$0xff]
        %v705 = vld [vmem:[#allocation2 + $0xb1] sm:$0xff]
        %v706 = vld [vmem:[#allocation2 + $0xc1] sm:$0xff]
        %v707 = vld [vmem:[#allocation2 + $0xc9] sm:$0xff]
        %v708 = vld [vmem:[#allocation2 + $0xd9] sm:$0xff]
        %v709 = vld [vmem:[#allocation2 + $0xe1] sm:$0xff]
        %v710 = vld [vmem:[#allocation2 + $0xf1] sm:$0xff]
        %v711 = vld [vmem:[#allocation2 + $0xf9] sm:$0xff]
        %v712 = vld [vmem:[#allocation2 + $0x109] sm:$0xff]
        %v713 = vld [vmem:[#allocation2 + $0x111] sm:$0xff]
        %v714 = vld [vmem:[#allocation2 + $0x121] sm:$0xff]
        %v715 = vld [vmem:[#allocation2 + $0x129] sm:$0xff]
        %v716 = vld [vmem:[#allocation2 + $0x139] sm:$0xff]
        %v717 = vld [vmem:[#allocation2 + $0x141] sm:$0xff]
        %v718 = vld [vmem:[#allocation2 + $0x151] sm:$0xff]
        %v719 = vld [vmem:[#allocation2 + $0x159] sm:$0xff]
        %v720 = vld [vmem:[#allocation2 + $0x169] sm:$0xff]
        %v721 = vld [vmem:[#allocation2 + $0x171] sm:$0xff]
        %v722 = vld [vmem:[#allocation7 + $0x1] sm:$0x1]
        %v723 = vperm.slane %v722, 0
        %v724 = vmul.f32 %v690, %v723
        %v725 = vmul.f32 %v691, %v723
        %v726 = vmul.f32 %v692, %v723
        %v727 = vmul.f32 %v693, %v723
        %v728 = vmul.f32 %v694, %v723
        %v729 = vmul.f32 %v695, %v723
        %v730 = vmul.f32 %v696, %v723
        %v731 = vmul.f32 %v697, %v723
        %v732 = vmul.f32 %v698, %v723
        %v733 = vmul.f32 %v699, %v723
        %v734 = vmul.f32 %v700, %v723
        %v735 = vmul.f32 %v701, %v723
        %v736 = vmul.f32 %v702, %v723
        %v737 = vmul.f32 %v703, %v723
        %v738 = vmul.f32 %v704, %v723
        %v739 = vmul.f32 %v705, %v723
        %v740 = vmul.f32 %v706, %v723
        %v741 = vmul.f32 %v707, %v723
        %v742 = vmul.f32 %v708, %v723
        %v743 = vmul.f32 %v709, %v723
        %v744 = vmul.f32 %v710, %v723
        %v745 = vmul.f32 %v711, %v723
        %v746 = vmul.f32 %v712, %v723
        %v747 = vmul.f32 %v713, %v723
        %v748 = vmul.f32 %v714, %v723
        %v749 = vmul.f32 %v715, %v723
        %v750 = vmul.f32 %v716, %v723
        %v751 = vmul.f32 %v717, %v723
        %v752 = vmul.f32 %v718, %v723
        %v753 = vmul.f32 %v719, %v723
        %v754 = vmul.f32 %v720, %v723
        %v755 = vmul.f32 %v721, %v723
        %v756 = vadd.f32 %v658, %v724
        %v757 = vadd.f32 %v659, %v725
        %v758 = vadd.f32 %v660, %v726
        %v759 = vadd.f32 %v661, %v727
        %v760 = vadd.f32 %v662, %v728
        %v761 = vadd.f32 %v663, %v729
        %v762 = vadd.f32 %v664, %v730
        %v763 = vadd.f32 %v665, %v731
        %v764 = vadd.f32 %v666, %v732
        %v765 = vadd.f32 %v667, %v733
        %v766 = vadd.f32 %v668, %v734
        %v767 = vadd.f32 %v669, %v735
        %v768 = vadd.f32 %v670, %v736
        %v769 = vadd.f32 %v671, %v737
        %v770 = vadd.f32 %v672, %v738
        %v771 = vadd.f32 %v673, %v739
        %v772 = vadd.f32 %v674, %v740
        %v773 = vadd.f32 %v675, %v741
        %v774 = vadd.f32 %v676, %v742
        %v775 = vadd.f32 %v677, %v743
        %v776 = vadd.f32 %v678, %v744
        %v777 = vadd.f32 %v679, %v745
        %v778 = vadd.f32 %v680, %v746
        %v779 = vadd.f32 %v681, %v747
        %v780 = vadd.f32 %v682, %v748
        %v781 = vadd.f32 %v683, %v749
        %v782 = vadd.f32 %v684, %v750
        %v783 = vadd.f32 %v685, %v751
        %v784 = vadd.f32 %v686, %v752
        %v785 = vadd.f32 %v687, %v753
        %v786 = vadd.f32 %v688, %v754
        %v787 = vadd.f32 %v689, %v755
        %v788 = vld [vmem:[#allocation2 + $0x2] sm:$0xff]
        %v789 = vld [vmem:[#allocation2 + $0xa] sm:$0xff]
        %v790 = vld [vmem:[#allocation2 + $0x1a] sm:$0xff]
        %v791 = vld [vmem:[#allocation2 + $0x22] sm:$0xff]
        %v792 = vld [vmem:[#allocation2 + $0x32] sm:$0xff]
        %v793 = vld [vmem:[#allocation2 + $0x3a] sm:$0xff]
        %v794 = vld [vmem:[#allocation2 + $0x4a] sm:$0xff]
        %v795 = vld [vmem:[#allocation2 + $0x52] sm:$0xff]
        %v796 = vld [vmem:[#allocation2 + $0x62] sm:$0xff]
        %v797 = vld [vmem:[#allocation2 + $0x6a] sm:$0xff]
        %v798 = vld [vmem:[#allocation2 + $0x7a] sm:$0xff]
        %v799 = vld [vmem:[#allocation2 + $0x82] sm:$0xff]
        %v800 = vld [vmem:[#allocation2 + $0x92] sm:$0xff]
        %v801 = vld [vmem:[#allocation2 + $0x9a] sm:$0xff]
        %v802 = vld [vmem:[#allocation2 + $0xaa] sm:$0xff]
        %v803 = vld [vmem:[#allocation2 + $0xb2] sm:$0xff]
        %v804 = vld [vmem:[#allocation2 + $0xc2] sm:$0xff]
        %v805 = vld [vmem:[#allocation2 + $0xca] sm:$0xff]
        %v806 = vld [vmem:[#allocation2 + $0xda] sm:$0xff]
        %v807 = vld [vmem:[#allocation2 + $0xe2] sm:$0xff]
        %v808 = vld [vmem:[#allocation2 + $0xf2] sm:$0xff]
        %v809 = vld [vmem:[#allocation2 + $0xfa] sm:$0xff]
        %v810 = vld [vmem:[#allocation2 + $0x10a] sm:$0xff]
        %v811 = vld [vmem:[#allocation2 + $0x112] sm:$0xff]
        %v812 = vld [vmem:[#allocation2 + $0x122] sm:$0xff]
        %v813 = vld [vmem:[#allocation2 + $0x12a] sm:$0xff]
        %v814 = vld [vmem:[#allocation2 + $0x13a] sm:$0xff]
        %v815 = vld [vmem:[#allocation2 + $0x142] sm:$0xff]
        %v816 = vld [vmem:[#allocation2 + $0x152] sm:$0xff]
        %v817 = vld [vmem:[#allocation2 + $0x15a] sm:$0xff]
        %v818 = vld [vmem:[#allocation2 + $0x16a] sm:$0xff]
        %v819 = vld [vmem:[#allocation2 + $0x172] sm:$0xff]
        %v820 = vld [vmem:[#allocation7 + $0x2] sm:$0x1]
        %v821 = vperm.slane %v820, 0
        %v822 = vmul.f32 %v788, %v821
        %v823 = vmul.f32 %v789, %v821
        %v824 = vmul.f32 %v790, %v821
        %v825 = vmul.f32 %v791, %v821
        %v826 = vmul.f32 %v792, %v821
        %v827 = vmul.f32 %v793, %v821
        %v828 = vmul.f32 %v794, %v821
        %v829 = vmul.f32 %v795, %v821
        %v830 = vmul.f32 %v796, %v821
        %v831 = vmul.f32 %v797, %v821
        %v832 = vmul.f32 %v798, %v821
        %v833 = vmul.f32 %v799, %v821
        %v834 = vmul.f32 %v800, %v821
        %v835 = vmul.f32 %v801, %v821
        %v836 = vmul.f32 %v802, %v821
        %v837 = vmul.f32 %v803, %v821
        %v838 = vmul.f32 %v804, %v821
        %v839 = vmul.f32 %v805, %v821
        %v840 = vmul.f32 %v806, %v821
        %v841 = vmul.f32 %v807, %v821
        %v842 = vmul.f32 %v808, %v821
        %v843 = vmul.f32 %v809, %v821
        %v844 = vmul.f32 %v810, %v821
        %v845 = vmul.f32 %v811, %v821
        %v846 = vmul.f32 %v812, %v821
        %v847 = vmul.f32 %v813, %v821
        %v848 = vmul.f32 %v814, %v821
        %v849 = vmul.f32 %v815, %v821
        %v850 = vmul.f32 %v816, %v821
        %v851 = vmul.f32 %v817, %v821
        %v852 = vmul.f32 %v818, %v821
        %v853 = vmul.f32 %v819, %v821
        %v854 = vadd.f32 %v756, %v822
        %v855 = vadd.f32 %v757, %v823
        %v856 = vadd.f32 %v758, %v824
        %v857 = vadd.f32 %v759, %v825
        %v858 = vadd.f32 %v760, %v826
        %v859 = vadd.f32 %v761, %v827
        %v860 = vadd.f32 %v762, %v828
        %v861 = vadd.f32 %v763, %v829
        %v862 = vadd.f32 %v764, %v830
        %v863 = vadd.f32 %v765, %v831
        %v864 = vadd.f32 %v766, %v832
        %v865 = vadd.f32 %v767, %v833
        %v866 = vadd.f32 %v768, %v834
        %v867 = vadd.f32 %v769, %v835
        %v868 = vadd.f32 %v770, %v836
        %v869 = vadd.f32 %v771, %v837
        %v870 = vadd.f32 %v772, %v838
        %v871 = vadd.f32 %v773, %v839
        %v872 = vadd.f32 %v774, %v840
        %v873 = vadd.f32 %v775, %v841
        %v874 = vadd.f32 %v776, %v842
        %v875 = vadd.f32 %v777, %v843
        %v876 = vadd.f32 %v778, %v844
        %v877 = vadd.f32 %v779, %v845
        %v878 = vadd.f32 %v780, %v846
        %v879 = vadd.f32 %v781, %v847
        %v880 = vadd.f32 %v782, %v848
        %v881 = vadd.f32 %v783, %v849
        %v882 = vadd.f32 %v784, %v850
        %v883 = vadd.f32 %v785, %v851
        %v884 = vadd.f32 %v786, %v852
        %v885 = vadd.f32 %v787, %v853
        %v886 = vld [vmem:[%s559] sm:$0xff]
        %v887 = vld [vmem:[%s559 + $0x8] sm:$0xff]
        %v888 = vld [vmem:[%s559 + $0x18] sm:$0xff]
        %v889 = vld [vmem:[%s559 + $0x20] sm:$0xff]
        %v890 = vld [vmem:[%s559 + $0x30] sm:$0xff]
        %v891 = vld [vmem:[%s559 + $0x38] sm:$0xff]
        %v892 = vld [vmem:[%s559 + $0x48] sm:$0xff]
        %v893 = vld [vmem:[%s559 + $0x50] sm:$0xff]
        %v894 = vld [vmem:[%s559 + $0x60] sm:$0xff]
        %v895 = vld [vmem:[%s559 + $0x68] sm:$0xff]
        %v896 = vld [vmem:[%s559 + $0x78] sm:$0xff]
        %v897 = vld [vmem:[%s559 + $0x80] sm:$0xff]
        %v898 = vld [vmem:[%s559 + $0x90] sm:$0xff]
        %v899 = vld [vmem:[%s559 + $0x98] sm:$0xff]
        %v900 = vld [vmem:[%s559 + $0xa8] sm:$0xff]
        %v901 = vld [vmem:[%s559 + $0xb0] sm:$0xff]
        %v902 = vld [vmem:[%s559 + $0xc0] sm:$0xff]
        %v903 = vld [vmem:[%s559 + $0xc8] sm:$0xff]
        %v904 = vld [vmem:[%s559 + $0xd8] sm:$0xff]
        %v905 = vld [vmem:[%s559 + $0xe0] sm:$0xff]
        %v906 = vld [vmem:[%s559 + $0xf0] sm:$0xff]
        %v907 = vld [vmem:[%s559 + $0xf8] sm:$0xff]
        %v908 = vld [vmem:[%s559 + $0x108] sm:$0xff]
        %v909 = vld [vmem:[%s559 + $0x110] sm:$0xff]
        %v910 = vld [vmem:[%s559 + $0x120] sm:$0xff]
        %v911 = vld [vmem:[%s559 + $0x128] sm:$0xff]
        %v912 = vld [vmem:[%s559 + $0x138] sm:$0xff]
        %v913 = vld [vmem:[%s559 + $0x140] sm:$0xff]
        %v914 = vld [vmem:[%s559 + $0x150] sm:$0xff]
        %v915 = vld [vmem:[%s559 + $0x158] sm:$0xff]
        %v916 = vld [vmem:[%s559 + $0x168] sm:$0xff]
        %v917 = vld [vmem:[%s559 + $0x170] sm:$0xff]
        %s918 = scalar_lea.vmem [#allocation7], 4
        %v919 = vld [vmem:[%s918] sm:$0x1]
        %v920 = vperm.slane %v919, 0
        %v921 = vmul.f32 %v886, %v920
        %v922 = vmul.f32 %v887, %v920
        %v923 = vmul.f32 %v888, %v920
        %v924 = vmul.f32 %v889, %v920
        %v925 = vmul.f32 %v890, %v920
        %v926 = vmul.f32 %v891, %v920
        %v927 = vmul.f32 %v892, %v920
        %v928 = vmul.f32 %v893, %v920
        %v929 = vmul.f32 %v894, %v920
        %v930 = vmul.f32 %v895, %v920
        %v931 = vmul.f32 %v896, %v920
        %v932 = vmul.f32 %v897, %v920
        %v933 = vmul.f32 %v898, %v920
        %v934 = vmul.f32 %v899, %v920
        %v935 = vmul.f32 %v900, %v920
        %v936 = vmul.f32 %v901, %v920
        %v937 = vmul.f32 %v902, %v920
        %v938 = vmul.f32 %v903, %v920
        %v939 = vmul.f32 %v904, %v920
        %v940 = vmul.f32 %v905, %v920
        %v941 = vmul.f32 %v906, %v920
        %v942 = vmul.f32 %v907, %v920
        %v943 = vmul.f32 %v908, %v920
        %v944 = vmul.f32 %v909, %v920
        %v945 = vmul.f32 %v910, %v920
        %v946 = vmul.f32 %v911, %v920
        %v947 = vmul.f32 %v912, %v920
        %v948 = vmul.f32 %v913, %v920
        %v949 = vmul.f32 %v914, %v920
        %v950 = vmul.f32 %v915, %v920
        %v951 = vmul.f32 %v916, %v920
        %v952 = vmul.f32 %v917, %v920
        %v953 = vadd.f32 %v854, %v921
        %v954 = vadd.f32 %v855, %v922
        %v955 = vadd.f32 %v856, %v923
        %v956 = vadd.f32 %v857, %v924
        %v957 = vadd.f32 %v858, %v925
        %v958 = vadd.f32 %v859, %v926
        %v959 = vadd.f32 %v860, %v927
        %v960 = vadd.f32 %v861, %v928
        %v961 = vadd.f32 %v862, %v929
        %v962 = vadd.f32 %v863, %v930
        %v963 = vadd.f32 %v864, %v931
        %v964 = vadd.f32 %v865, %v932
        %v965 = vadd.f32 %v866, %v933
        %v966 = vadd.f32 %v867, %v934
        %v967 = vadd.f32 %v868, %v935
        %v968 = vadd.f32 %v869, %v936
        %v969 = vadd.f32 %v870, %v937
        %v970 = vadd.f32 %v871, %v938
        %v971 = vadd.f32 %v872, %v939
        %v972 = vadd.f32 %v873, %v940
        %v973 = vadd.f32 %v874, %v941
        %v974 = vadd.f32 %v875, %v942
        %v975 = vadd.f32 %v876, %v943
        %v976 = vadd.f32 %v877, %v944
        %v977 = vadd.f32 %v878, %v945
        %v978 = vadd.f32 %v879, %v946
        %v979 = vadd.f32 %v880, %v947
        %v980 = vadd.f32 %v881, %v948
        %v981 = vadd.f32 %v882, %v949
        %v982 = vadd.f32 %v883, %v950
        %v983 = vadd.f32 %v884, %v951
        %v984 = vadd.f32 %v885, %v952
        %v985 = vld [vmem:[%s559 + $0x1] sm:$0xff]
        %v986 = vld [vmem:[%s559 + $0x9] sm:$0xff]
        %v987 = vld [vmem:[%s559 + $0x19] sm:$0xff]
        %v988 = vld [vmem:[%s559 + $0x21] sm:$0xff]
        %v989 = vld [vmem:[%s559 + $0x31] sm:$0xff]
        %v990 = vld [vmem:[%s559 + $0x39] sm:$0xff]
        %v991 = vld [vmem:[%s559 + $0x49] sm:$0xff]
        %v992 = vld [vmem:[%s559 + $0x51] sm:$0xff]
        %v993 = vld [vmem:[%s559 + $0x61] sm:$0xff]
        %v994 = vld [vmem:[%s559 + $0x69] sm:$0xff]
        %v995 = vld [vmem:[%s559 + $0x79] sm:$0xff]
        %v996 = vld [vmem:[%s559 + $0x81] sm:$0xff]
        %v997 = vld [vmem:[%s559 + $0x91] sm:$0xff]
        %v998 = vld [vmem:[%s559 + $0x99] sm:$0xff]
        %v999 = vld [vmem:[%s559 + $0xa9] sm:$0xff]
        %v1000 = vld [vmem:[%s559 + $0xb1] sm:$0xff]
        %v1001 = vld [vmem:[%s559 + $0xc1] sm:$0xff]
        %v1002 = vld [vmem:[%s559 + $0xc9] sm:$0xff]
        %v1003 = vld [vmem:[%s559 + $0xd9] sm:$0xff]
        %v1004 = vld [vmem:[%s559 + $0xe1] sm:$0xff]
        %v1005 = vld [vmem:[%s559 + $0xf1] sm:$0xff]
        %v1006 = vld [vmem:[%s559 + $0xf9] sm:$0xff]
        %v1007 = vld [vmem:[%s559 + $0x109] sm:$0xff]
        %v1008 = vld [vmem:[%s559 + $0x111] sm:$0xff]
        %v1009 = vld [vmem:[%s559 + $0x121] sm:$0xff]
        %v1010 = vld [vmem:[%s559 + $0x129] sm:$0xff]
        %v1011 = vld [vmem:[%s559 + $0x139] sm:$0xff]
        %v1012 = vld [vmem:[%s559 + $0x141] sm:$0xff]
        %v1013 = vld [vmem:[%s559 + $0x151] sm:$0xff]
        %v1014 = vld [vmem:[%s559 + $0x159] sm:$0xff]
        %v1015 = vld [vmem:[%s559 + $0x169] sm:$0xff]
        %v1016 = vld [vmem:[%s559 + $0x171] sm:$0xff]
        %v1017 = vld [vmem:[%s918 + $0x1] sm:$0x1]
        %v1018 = vperm.slane %v1017, 0
        %v1019 = vmul.f32 %v985, %v1018
        %v1020 = vmul.f32 %v986, %v1018
        %v1021 = vmul.f32 %v987, %v1018
        %v1022 = vmul.f32 %v988, %v1018
        %v1023 = vmul.f32 %v989, %v1018
        %v1024 = vmul.f32 %v990, %v1018
        %v1025 = vmul.f32 %v991, %v1018
        %v1026 = vmul.f32 %v992, %v1018
        %v1027 = vmul.f32 %v993, %v1018
        %v1028 = vmul.f32 %v994, %v1018
        %v1029 = vmul.f32 %v995, %v1018
        %v1030 = vmul.f32 %v996, %v1018
        %v1031 = vmul.f32 %v997, %v1018
        %v1032 = vmul.f32 %v998, %v1018
        %v1033 = vmul.f32 %v999, %v1018
        %v1034 = vmul.f32 %v1000, %v1018
        %v1035 = vmul.f32 %v1001, %v1018
        %v1036 = vmul.f32 %v1002, %v1018
        %v1037 = vmul.f32 %v1003, %v1018
        %v1038 = vmul.f32 %v1004, %v1018
        %v1039 = vmul.f32 %v1005, %v1018
        %v1040 = vmul.f32 %v1006, %v1018
        %v1041 = vmul.f32 %v1007, %v1018
        %v1042 = vmul.f32 %v1008, %v1018
        %v1043 = vmul.f32 %v1009, %v1018
        %v1044 = vmul.f32 %v1010, %v1018
        %v1045 = vmul.f32 %v1011, %v1018
        %v1046 = vmul.f32 %v1012, %v1018
        %v1047 = vmul.f32 %v1013, %v1018
        %v1048 = vmul.f32 %v1014, %v1018
        %v1049 = vmul.f32 %v1015, %v1018
        %v1050 = vmul.f32 %v1016, %v1018
        %v1051 = vadd.f32 %v953, %v1019
        %v1052 = vadd.f32 %v954, %v1020
        %v1053 = vadd.f32 %v955, %v1021
        %v1054 = vadd.f32 %v956, %v1022
        %v1055 = vadd.f32 %v957, %v1023
        %v1056 = vadd.f32 %v958, %v1024
        %v1057 = vadd.f32 %v959, %v1025
        %v1058 = vadd.f32 %v960, %v1026
        %v1059 = vadd.f32 %v961, %v1027
        %v1060 = vadd.f32 %v962, %v1028
        %v1061 = vadd.f32 %v963, %v1029
        %v1062 = vadd.f32 %v964, %v1030
        %v1063 = vadd.f32 %v965, %v1031
        %v1064 = vadd.f32 %v966, %v1032
        %v1065 = vadd.f32 %v967, %v1033
        %v1066 = vadd.f32 %v968, %v1034
        %v1067 = vadd.f32 %v969, %v1035
        %v1068 = vadd.f32 %v970, %v1036
        %v1069 = vadd.f32 %v971, %v1037
        %v1070 = vadd.f32 %v972, %v1038
        %v1071 = vadd.f32 %v973, %v1039
        %v1072 = vadd.f32 %v974, %v1040
        %v1073 = vadd.f32 %v975, %v1041
        %v1074 = vadd.f32 %v976, %v1042
        %v1075 = vadd.f32 %v977, %v1043
        %v1076 = vadd.f32 %v978, %v1044
        %v1077 = vadd.f32 %v979, %v1045
        %v1078 = vadd.f32 %v980, %v1046
        %v1079 = vadd.f32 %v981, %v1047
        %v1080 = vadd.f32 %v982, %v1048
        %v1081 = vadd.f32 %v983, %v1049
        %v1082 = vadd.f32 %v984, %v1050
        %v1083 = vld [vmem:[%s559 + $0x2] sm:$0xff]
        %v1084 = vld [vmem:[%s559 + $0xa] sm:$0xff]
        %v1085 = vld [vmem:[%s559 + $0x1a] sm:$0xff]
        %v1086 = vld [vmem:[%s559 + $0x22] sm:$0xff]
        %v1087 = vld [vmem:[%s559 + $0x32] sm:$0xff]
        %v1088 = vld [vmem:[%s559 + $0x3a] sm:$0xff]
        %v1089 = vld [vmem:[%s559 + $0x4a] sm:$0xff]
        %v1090 = vld [vmem:[%s559 + $0x52] sm:$0xff]
        %v1091 = vld [vmem:[%s559 + $0x62] sm:$0xff]
        %v1092 = vld [vmem:[%s559 + $0x6a] sm:$0xff]
        %v1093 = vld [vmem:[%s559 + $0x7a] sm:$0xff]
        %v1094 = vld [vmem:[%s559 + $0x82] sm:$0xff]
        %v1095 = vld [vmem:[%s559 + $0x92] sm:$0xff]
        %v1096 = vld [vmem:[%s559 + $0x9a] sm:$0xff]
        %v1097 = vld [vmem:[%s559 + $0xaa] sm:$0xff]
        %v1098 = vld [vmem:[%s559 + $0xb2] sm:$0xff]
        %v1099 = vld [vmem:[%s559 + $0xc2] sm:$0xff]
        %v1100 = vld [vmem:[%s559 + $0xca] sm:$0xff]
        %v1101 = vld [vmem:[%s559 + $0xda] sm:$0xff]
        %v1102 = vld [vmem:[%s559 + $0xe2] sm:$0xff]
        %v1103 = vld [vmem:[%s559 + $0xf2] sm:$0xff]
        %v1104 = vld [vmem:[%s559 + $0xfa] sm:$0xff]
        %v1105 = vld [vmem:[%s559 + $0x10a] sm:$0xff]
        %v1106 = vld [vmem:[%s559 + $0x112] sm:$0xff]
        %v1107 = vld [vmem:[%s559 + $0x122] sm:$0xff]
        %v1108 = vld [vmem:[%s559 + $0x12a] sm:$0xff]
        %v1109 = vld [vmem:[%s559 + $0x13a] sm:$0xff]
        %v1110 = vld [vmem:[%s559 + $0x142] sm:$0xff]
        %v1111 = vld [vmem:[%s559 + $0x152] sm:$0xff]
        %v1112 = vld [vmem:[%s559 + $0x15a] sm:$0xff]
        %v1113 = vld [vmem:[%s559 + $0x16a] sm:$0xff]
        %v1114 = vld [vmem:[%s559 + $0x172] sm:$0xff]
        %v1115 = vld [vmem:[%s918 + $0x2] sm:$0x1]
        %v1116 = vperm.slane %v1115, 0
        %v1117 = vmul.f32 %v1083, %v1116
        %v1118 = vmul.f32 %v1084, %v1116
        %v1119 = vmul.f32 %v1085, %v1116
        %v1120 = vmul.f32 %v1086, %v1116
        %v1121 = vmul.f32 %v1087, %v1116
        %v1122 = vmul.f32 %v1088, %v1116
        %v1123 = vmul.f32 %v1089, %v1116
        %v1124 = vmul.f32 %v1090, %v1116
        %v1125 = vmul.f32 %v1091, %v1116
        %v1126 = vmul.f32 %v1092, %v1116
        %v1127 = vmul.f32 %v1093, %v1116
        %v1128 = vmul.f32 %v1094, %v1116
        %v1129 = vmul.f32 %v1095, %v1116
        %v1130 = vmul.f32 %v1096, %v1116
        %v1131 = vmul.f32 %v1097, %v1116
        %v1132 = vmul.f32 %v1098, %v1116
        %v1133 = vmul.f32 %v1099, %v1116
        %v1134 = vmul.f32 %v1100, %v1116
        %v1135 = vmul.f32 %v1101, %v1116
        %v1136 = vmul.f32 %v1102, %v1116
        %v1137 = vmul.f32 %v1103, %v1116
        %v1138 = vmul.f32 %v1104, %v1116
        %v1139 = vmul.f32 %v1105, %v1116
        %v1140 = vmul.f32 %v1106, %v1116
        %v1141 = vmul.f32 %v1107, %v1116
        %v1142 = vmul.f32 %v1108, %v1116
        %v1143 = vmul.f32 %v1109, %v1116
        %v1144 = vmul.f32 %v1110, %v1116
        %v1145 = vmul.f32 %v1111, %v1116
        %v1146 = vmul.f32 %v1112, %v1116
        %v1147 = vmul.f32 %v1113, %v1116
        %v1148 = vmul.f32 %v1114, %v1116
        %v1149 = vadd.f32 %v1051, %v1117
        %v1150 = vadd.f32 %v1052, %v1118
        %v1151 = vadd.f32 %v1053, %v1119
        %v1152 = vadd.f32 %v1054, %v1120
        %v1153 = vadd.f32 %v1055, %v1121
        %v1154 = vadd.f32 %v1056, %v1122
        %v1155 = vadd.f32 %v1057, %v1123
        %v1156 = vadd.f32 %v1058, %v1124
        %v1157 = vadd.f32 %v1059, %v1125
        %v1158 = vadd.f32 %v1060, %v1126
        %v1159 = vadd.f32 %v1061, %v1127
        %v1160 = vadd.f32 %v1062, %v1128
        %v1161 = vadd.f32 %v1063, %v1129
        %v1162 = vadd.f32 %v1064, %v1130
        %v1163 = vadd.f32 %v1065, %v1131
        %v1164 = vadd.f32 %v1066, %v1132
        %v1165 = vadd.f32 %v1067, %v1133
        %v1166 = vadd.f32 %v1068, %v1134
        %v1167 = vadd.f32 %v1069, %v1135
        %v1168 = vadd.f32 %v1070, %v1136
        %v1169 = vadd.f32 %v1071, %v1137
        %v1170 = vadd.f32 %v1072, %v1138
        %v1171 = vadd.f32 %v1073, %v1139
        %v1172 = vadd.f32 %v1074, %v1140
        %v1173 = vadd.f32 %v1075, %v1141
        %v1174 = vadd.f32 %v1076, %v1142
        %v1175 = vadd.f32 %v1077, %v1143
        %v1176 = vadd.f32 %v1078, %v1144
        %v1177 = vadd.f32 %v1079, %v1145
        %v1178 = vadd.f32 %v1080, %v1146
        %v1179 = vadd.f32 %v1081, %v1147
        %v1180 = vadd.f32 %v1082, %v1148
        %s1181 = scalar_lea.vmem [#allocation2], 48
        %v1182 = vld [vmem:[%s1181] sm:$0xff]
        %v1183 = vld [vmem:[%s1181 + $0x8] sm:$0xff]
        %v1184 = vld [vmem:[%s1181 + $0x18] sm:$0xff]
        %v1185 = vld [vmem:[%s1181 + $0x20] sm:$0xff]
        %v1186 = vld [vmem:[%s1181 + $0x30] sm:$0xff]
        %v1187 = vld [vmem:[%s1181 + $0x38] sm:$0xff]
        %v1188 = vld [vmem:[%s1181 + $0x48] sm:$0xff]
        %v1189 = vld [vmem:[%s1181 + $0x50] sm:$0xff]
        %v1190 = vld [vmem:[%s1181 + $0x60] sm:$0xff]
        %v1191 = vld [vmem:[%s1181 + $0x68] sm:$0xff]
        %v1192 = vld [vmem:[%s1181 + $0x78] sm:$0xff]
        %v1193 = vld [vmem:[%s1181 + $0x80] sm:$0xff]
        %v1194 = vld [vmem:[%s1181 + $0x90] sm:$0xff]
        %v1195 = vld [vmem:[%s1181 + $0x98] sm:$0xff]
        %v1196 = vld [vmem:[%s1181 + $0xa8] sm:$0xff]
        %v1197 = vld [vmem:[%s1181 + $0xb0] sm:$0xff]
        %v1198 = vld [vmem:[%s1181 + $0xc0] sm:$0xff]
        %v1199 = vld [vmem:[%s1181 + $0xc8] sm:$0xff]
        %v1200 = vld [vmem:[%s1181 + $0xd8] sm:$0xff]
        %v1201 = vld [vmem:[%s1181 + $0xe0] sm:$0xff]
        %v1202 = vld [vmem:[%s1181 + $0xf0] sm:$0xff]
        %v1203 = vld [vmem:[%s1181 + $0xf8] sm:$0xff]
        %v1204 = vld [vmem:[%s1181 + $0x108] sm:$0xff]
        %v1205 = vld [vmem:[%s1181 + $0x110] sm:$0xff]
        %v1206 = vld [vmem:[%s1181 + $0x120] sm:$0xff]
        %v1207 = vld [vmem:[%s1181 + $0x128] sm:$0xff]
        %v1208 = vld [vmem:[%s1181 + $0x138] sm:$0xff]
        %v1209 = vld [vmem:[%s1181 + $0x140] sm:$0xff]
        %v1210 = vld [vmem:[%s1181 + $0x150] sm:$0xff]
        %v1211 = vld [vmem:[%s1181 + $0x158] sm:$0xff]
        %v1212 = vld [vmem:[%s1181 + $0x168] sm:$0xff]
        %v1213 = vld [vmem:[%s1181 + $0x170] sm:$0xff]
        %s1214 = scalar_lea.vmem [#allocation7], 8
        %v1215 = vld [vmem:[%s1214] sm:$0x1]
        %v1216 = vperm.slane %v1215, 0
        %v1217 = vmul.f32 %v1182, %v1216
        %v1218 = vmul.f32 %v1183, %v1216
        %v1219 = vmul.f32 %v1184, %v1216
        %v1220 = vmul.f32 %v1185, %v1216
        %v1221 = vmul.f32 %v1186, %v1216
        %v1222 = vmul.f32 %v1187, %v1216
        %v1223 = vmul.f32 %v1188, %v1216
        %v1224 = vmul.f32 %v1189, %v1216
        %v1225 = vmul.f32 %v1190, %v1216
        %v1226 = vmul.f32 %v1191, %v1216
        %v1227 = vmul.f32 %v1192, %v1216
        %v1228 = vmul.f32 %v1193, %v1216
        %v1229 = vmul.f32 %v1194, %v1216
        %v1230 = vmul.f32 %v1195, %v1216
        %v1231 = vmul.f32 %v1196, %v1216
        %v1232 = vmul.f32 %v1197, %v1216
        %v1233 = vmul.f32 %v1198, %v1216
        %v1234 = vmul.f32 %v1199, %v1216
        %v1235 = vmul.f32 %v1200, %v1216
        %v1236 = vmul.f32 %v1201, %v1216
        %v1237 = vmul.f32 %v1202, %v1216
        %v1238 = vmul.f32 %v1203, %v1216
        %v1239 = vmul.f32 %v1204, %v1216
        %v1240 = vmul.f32 %v1205, %v1216
        %v1241 = vmul.f32 %v1206, %v1216
        %v1242 = vmul.f32 %v1207, %v1216
        %v1243 = vmul.f32 %v1208, %v1216
        %v1244 = vmul.f32 %v1209, %v1216
        %v1245 = vmul.f32 %v1210, %v1216
        %v1246 = vmul.f32 %v1211, %v1216
        %v1247 = vmul.f32 %v1212, %v1216
        %v1248 = vmul.f32 %v1213, %v1216
        %v1249 = vadd.f32 %v1149, %v1217
        %v1250 = vadd.f32 %v1150, %v1218
        %v1251 = vadd.f32 %v1151, %v1219
        %v1252 = vadd.f32 %v1152, %v1220
        %v1253 = vadd.f32 %v1153, %v1221
        %v1254 = vadd.f32 %v1154, %v1222
        %v1255 = vadd.f32 %v1155, %v1223
        %v1256 = vadd.f32 %v1156, %v1224
        %v1257 = vadd.f32 %v1157, %v1225
        %v1258 = vadd.f32 %v1158, %v1226
        %v1259 = vadd.f32 %v1159, %v1227
        %v1260 = vadd.f32 %v1160, %v1228
        %v1261 = vadd.f32 %v1161, %v1229
        %v1262 = vadd.f32 %v1162, %v1230
        %v1263 = vadd.f32 %v1163, %v1231
        %v1264 = vadd.f32 %v1164, %v1232
        %v1265 = vadd.f32 %v1165, %v1233
        %v1266 = vadd.f32 %v1166, %v1234
        %v1267 = vadd.f32 %v1167, %v1235
        %v1268 = vadd.f32 %v1168, %v1236
        %v1269 = vadd.f32 %v1169, %v1237
        %v1270 = vadd.f32 %v1170, %v1238
        %v1271 = vadd.f32 %v1171, %v1239
        %v1272 = vadd.f32 %v1172, %v1240
        %v1273 = vadd.f32 %v1173, %v1241
        %v1274 = vadd.f32 %v1174, %v1242
        %v1275 = vadd.f32 %v1175, %v1243
        %v1276 = vadd.f32 %v1176, %v1244
        %v1277 = vadd.f32 %v1177, %v1245
        %v1278 = vadd.f32 %v1178, %v1246
        %v1279 = vadd.f32 %v1179, %v1247
        %v1280 = vadd.f32 %v1180, %v1248
        %v1281 = vld [vmem:[%s1181 + $0x1] sm:$0xff]
        %v1282 = vld [vmem:[%s1181 + $0x9] sm:$0xff]
        %v1283 = vld [vmem:[%s1181 + $0x19] sm:$0xff]
        %v1284 = vld [vmem:[%s1181 + $0x21] sm:$0xff]
        %v1285 = vld [vmem:[%s1181 + $0x31] sm:$0xff]
        %v1286 = vld [vmem:[%s1181 + $0x39] sm:$0xff]
        %v1287 = vld [vmem:[%s1181 + $0x49] sm:$0xff]
        %v1288 = vld [vmem:[%s1181 + $0x51] sm:$0xff]
        %v1289 = vld [vmem:[%s1181 + $0x61] sm:$0xff]
        %v1290 = vld [vmem:[%s1181 + $0x69] sm:$0xff]
        %v1291 = vld [vmem:[%s1181 + $0x79] sm:$0xff]
        %v1292 = vld [vmem:[%s1181 + $0x81] sm:$0xff]
        %v1293 = vld [vmem:[%s1181 + $0x91] sm:$0xff]
        %v1294 = vld [vmem:[%s1181 + $0x99] sm:$0xff]
        %v1295 = vld [vmem:[%s1181 + $0xa9] sm:$0xff]
        %v1296 = vld [vmem:[%s1181 + $0xb1] sm:$0xff]
        %v1297 = vld [vmem:[%s1181 + $0xc1] sm:$0xff]
        %v1298 = vld [vmem:[%s1181 + $0xc9] sm:$0xff]
        %v1299 = vld [vmem:[%s1181 + $0xd9] sm:$0xff]
        %v1300 = vld [vmem:[%s1181 + $0xe1] sm:$0xff]
        %v1301 = vld [vmem:[%s1181 + $0xf1] sm:$0xff]
        %v1302 = vld [vmem:[%s1181 + $0xf9] sm:$0xff]
        %v1303 = vld [vmem:[%s1181 + $0x109] sm:$0xff]
        %v1304 = vld [vmem:[%s1181 + $0x111] sm:$0xff]
        %v1305 = vld [vmem:[%s1181 + $0x121] sm:$0xff]
        %v1306 = vld [vmem:[%s1181 + $0x129] sm:$0xff]
        %v1307 = vld [vmem:[%s1181 + $0x139] sm:$0xff]
        %v1308 = vld [vmem:[%s1181 + $0x141] sm:$0xff]
        %v1309 = vld [vmem:[%s1181 + $0x151] sm:$0xff]
        %v1310 = vld [vmem:[%s1181 + $0x159] sm:$0xff]
        %v1311 = vld [vmem:[%s1181 + $0x169] sm:$0xff]
        %v1312 = vld [vmem:[%s1181 + $0x171] sm:$0xff]
        %v1313 = vld [vmem:[%s1214 + $0x1] sm:$0x1]
        %v1314 = vperm.slane %v1313, 0
        %v1315 = vmul.f32 %v1281, %v1314
        %v1316 = vmul.f32 %v1282, %v1314
        %v1317 = vmul.f32 %v1283, %v1314
        %v1318 = vmul.f32 %v1284, %v1314
        %v1319 = vmul.f32 %v1285, %v1314
        %v1320 = vmul.f32 %v1286, %v1314
        %v1321 = vmul.f32 %v1287, %v1314
        %v1322 = vmul.f32 %v1288, %v1314
        %v1323 = vmul.f32 %v1289, %v1314
        %v1324 = vmul.f32 %v1290, %v1314
        %v1325 = vmul.f32 %v1291, %v1314
        %v1326 = vmul.f32 %v1292, %v1314
        %v1327 = vmul.f32 %v1293, %v1314
        %v1328 = vmul.f32 %v1294, %v1314
        %v1329 = vmul.f32 %v1295, %v1314
        %v1330 = vmul.f32 %v1296, %v1314
        %v1331 = vmul.f32 %v1297, %v1314
        %v1332 = vmul.f32 %v1298, %v1314
        %v1333 = vmul.f32 %v1299, %v1314
        %v1334 = vmul.f32 %v1300, %v1314
        %v1335 = vmul.f32 %v1301, %v1314
        %v1336 = vmul.f32 %v1302, %v1314
        %v1337 = vmul.f32 %v1303, %v1314
        %v1338 = vmul.f32 %v1304, %v1314
        %v1339 = vmul.f32 %v1305, %v1314
        %v1340 = vmul.f32 %v1306, %v1314
        %v1341 = vmul.f32 %v1307, %v1314
        %v1342 = vmul.f32 %v1308, %v1314
        %v1343 = vmul.f32 %v1309, %v1314
        %v1344 = vmul.f32 %v1310, %v1314
        %v1345 = vmul.f32 %v1311, %v1314
        %v1346 = vmul.f32 %v1312, %v1314
        %v1347 = vadd.f32 %v1249, %v1315
        %v1348 = vadd.f32 %v1250, %v1316
        %v1349 = vadd.f32 %v1251, %v1317
        %v1350 = vadd.f32 %v1252, %v1318
        %v1351 = vadd.f32 %v1253, %v1319
        %v1352 = vadd.f32 %v1254, %v1320
        %v1353 = vadd.f32 %v1255, %v1321
        %v1354 = vadd.f32 %v1256, %v1322
        %v1355 = vadd.f32 %v1257, %v1323
        %v1356 = vadd.f32 %v1258, %v1324
        %v1357 = vadd.f32 %v1259, %v1325
        %v1358 = vadd.f32 %v1260, %v1326
        %v1359 = vadd.f32 %v1261, %v1327
        %v1360 = vadd.f32 %v1262, %v1328
        %v1361 = vadd.f32 %v1263, %v1329
        %v1362 = vadd.f32 %v1264, %v1330
        %v1363 = vadd.f32 %v1265, %v1331
        %v1364 = vadd.f32 %v1266, %v1332
        %v1365 = vadd.f32 %v1267, %v1333
        %v1366 = vadd.f32 %v1268, %v1334
        %v1367 = vadd.f32 %v1269, %v1335
        %v1368 = vadd.f32 %v1270, %v1336
        %v1369 = vadd.f32 %v1271, %v1337
        %v1370 = vadd.f32 %v1272, %v1338
        %v1371 = vadd.f32 %v1273, %v1339
        %v1372 = vadd.f32 %v1274, %v1340
        %v1373 = vadd.f32 %v1275, %v1341
        %v1374 = vadd.f32 %v1276, %v1342
        %v1375 = vadd.f32 %v1277, %v1343
        %v1376 = vadd.f32 %v1278, %v1344
        %v1377 = vadd.f32 %v1279, %v1345
        %v1378 = vadd.f32 %v1280, %v1346
        %v1379 = vld [vmem:[%s1181 + $0x2] sm:$0xff]
        %v1380 = vld [vmem:[%s1181 + $0xa] sm:$0xff]
        %v1381 = vld [vmem:[%s1181 + $0x1a] sm:$0xff]
        %v1382 = vld [vmem:[%s1181 + $0x22] sm:$0xff]
        %v1383 = vld [vmem:[%s1181 + $0x32] sm:$0xff]
        %v1384 = vld [vmem:[%s1181 + $0x3a] sm:$0xff]
        %v1385 = vld [vmem:[%s1181 + $0x4a] sm:$0xff]
        %v1386 = vld [vmem:[%s1181 + $0x52] sm:$0xff]
        %v1387 = vld [vmem:[%s1181 + $0x62] sm:$0xff]
        %v1388 = vld [vmem:[%s1181 + $0x6a] sm:$0xff]
        %v1389 = vld [vmem:[%s1181 + $0x7a] sm:$0xff]
        %v1390 = vld [vmem:[%s1181 + $0x82] sm:$0xff]
        %v1391 = vld [vmem:[%s1181 + $0x92] sm:$0xff]
        %v1392 = vld [vmem:[%s1181 + $0x9a] sm:$0xff]
        %v1393 = vld [vmem:[%s1181 + $0xaa] sm:$0xff]
        %v1394 = vld [vmem:[%s1181 + $0xb2] sm:$0xff]
        %v1395 = vld [vmem:[%s1181 + $0xc2] sm:$0xff]
        %v1396 = vld [vmem:[%s1181 + $0xca] sm:$0xff]
        %v1397 = vld [vmem:[%s1181 + $0xda] sm:$0xff]
        %v1398 = vld [vmem:[%s1181 + $0xe2] sm:$0xff]
        %v1399 = vld [vmem:[%s1181 + $0xf2] sm:$0xff]
        %v1400 = vld [vmem:[%s1181 + $0xfa] sm:$0xff]
        %v1401 = vld [vmem:[%s1181 + $0x10a] sm:$0xff]
        %v1402 = vld [vmem:[%s1181 + $0x112] sm:$0xff]
        %v1403 = vld [vmem:[%s1181 + $0x122] sm:$0xff]
        %v1404 = vld [vmem:[%s1181 + $0x12a] sm:$0xff]
        %v1405 = vld [vmem:[%s1181 + $0x13a] sm:$0xff]
        %v1406 = vld [vmem:[%s1181 + $0x142] sm:$0xff]
        %v1407 = vld [vmem:[%s1181 + $0x152] sm:$0xff]
        %v1408 = vld [vmem:[%s1181 + $0x15a] sm:$0xff]
        %v1409 = vld [vmem:[%s1181 + $0x16a] sm:$0xff]
        %v1410 = vld [vmem:[%s1181 + $0x172] sm:$0xff]
        %v1411 = vld [vmem:[%s1214 + $0x2] sm:$0x1]
        %v1412 = vperm.slane %v1411, 0
        %v1413 = vmul.f32 %v1379, %v1412
        %v1414 = vmul.f32 %v1380, %v1412
        %v1415 = vmul.f32 %v1381, %v1412
        %v1416 = vmul.f32 %v1382, %v1412
        %v1417 = vmul.f32 %v1383, %v1412
        %v1418 = vmul.f32 %v1384, %v1412
        %v1419 = vmul.f32 %v1385, %v1412
        %v1420 = vmul.f32 %v1386, %v1412
        %v1421 = vmul.f32 %v1387, %v1412
        %v1422 = vmul.f32 %v1388, %v1412
        %v1423 = vmul.f32 %v1389, %v1412
        %v1424 = vmul.f32 %v1390, %v1412
        %v1425 = vmul.f32 %v1391, %v1412
        %v1426 = vmul.f32 %v1392, %v1412
        %v1427 = vmul.f32 %v1393, %v1412
        %v1428 = vmul.f32 %v1394, %v1412
        %v1429 = vmul.f32 %v1395, %v1412
        %v1430 = vmul.f32 %v1396, %v1412
        %v1431 = vmul.f32 %v1397, %v1412
        %v1432 = vmul.f32 %v1398, %v1412
        %v1433 = vmul.f32 %v1399, %v1412
        %v1434 = vmul.f32 %v1400, %v1412
        %v1435 = vmul.f32 %v1401, %v1412
        %v1436 = vmul.f32 %v1402, %v1412
        %v1437 = vmul.f32 %v1403, %v1412
        %v1438 = vmul.f32 %v1404, %v1412
        %v1439 = vmul.f32 %v1405, %v1412
        %v1440 = vmul.f32 %v1406, %v1412
        %v1441 = vmul.f32 %v1407, %v1412
        %v1442 = vmul.f32 %v1408, %v1412
        %v1443 = vmul.f32 %v1409, %v1412
        %v1444 = vmul.f32 %v1410, %v1412
        %v1445 = vadd.f32 %v1347, %v1413
        %v1446 = vadd.f32 %v1348, %v1414
        %v1447 = vadd.f32 %v1349, %v1415
        %v1448 = vadd.f32 %v1350, %v1416
        %v1449 = vadd.f32 %v1351, %v1417
        %v1450 = vadd.f32 %v1352, %v1418
        %v1451 = vadd.f32 %v1353, %v1419
        %v1452 = vadd.f32 %v1354, %v1420
        %v1453 = vadd.f32 %v1355, %v1421
        %v1454 = vadd.f32 %v1356, %v1422
        %v1455 = vadd.f32 %v1357, %v1423
        %v1456 = vadd.f32 %v1358, %v1424
        %v1457 = vadd.f32 %v1359, %v1425
        %v1458 = vadd.f32 %v1360, %v1426
        %v1459 = vadd.f32 %v1361, %v1427
        %v1460 = vadd.f32 %v1362, %v1428
        %v1461 = vadd.f32 %v1363, %v1429
        %v1462 = vadd.f32 %v1364, %v1430
        %v1463 = vadd.f32 %v1365, %v1431
        %v1464 = vadd.f32 %v1366, %v1432
        %v1465 = vadd.f32 %v1367, %v1433
        %v1466 = vadd.f32 %v1368, %v1434
        %v1467 = vadd.f32 %v1369, %v1435
        %v1468 = vadd.f32 %v1370, %v1436
        %v1469 = vadd.f32 %v1371, %v1437
        %v1470 = vadd.f32 %v1372, %v1438
        %v1471 = vadd.f32 %v1373, %v1439
        %v1472 = vadd.f32 %v1374, %v1440
        %v1473 = vadd.f32 %v1375, %v1441
        %v1474 = vadd.f32 %v1376, %v1442
        %v1475 = vadd.f32 %v1377, %v1443
        %v1476 = vadd.f32 %v1378, %v1444
        %v1477 = vld [vmem:[#allocation9] sm:$0x1]
        %v1479 = vperm.slane %v1477, 0
        %v1481 = vadd.f32 %v1445, %v1479
        %v1482 = vadd.f32 %v1446, %v1479
        %v1483 = vadd.f32 %v1447, %v1479
        %v1484 = vadd.f32 %v1448, %v1479
        %v1485 = vadd.f32 %v1449, %v1479
        %v1486 = vadd.f32 %v1450, %v1479
        %v1487 = vadd.f32 %v1451, %v1479
        %v1488 = vadd.f32 %v1452, %v1479
        %v1489 = vadd.f32 %v1453, %v1479
        %v1490 = vadd.f32 %v1454, %v1479
        %v1491 = vadd.f32 %v1455, %v1479
        %v1492 = vadd.f32 %v1456, %v1479
        %v1493 = vadd.f32 %v1457, %v1479
        %v1494 = vadd.f32 %v1458, %v1479
        %v1495 = vadd.f32 %v1459, %v1479
        %v1496 = vadd.f32 %v1460, %v1479
        %v1497 = vadd.f32 %v1461, %v1479
        %v1498 = vadd.f32 %v1462, %v1479
        %v1499 = vadd.f32 %v1463, %v1479
        %v1500 = vadd.f32 %v1464, %v1479
        %v1501 = vadd.f32 %v1465, %v1479
        %v1502 = vadd.f32 %v1466, %v1479
        %v1503 = vadd.f32 %v1467, %v1479
        %v1504 = vadd.f32 %v1468, %v1479
        %v1505 = vadd.f32 %v1469, %v1479
        %v1506 = vadd.f32 %v1470, %v1479
        %v1507 = vadd.f32 %v1471, %v1479
        %v1508 = vadd.f32 %v1472, %v1479
        %v1509 = vadd.f32 %v1473, %v1479
        %v1510 = vadd.f32 %v1474, %v1479
        %v1511 = vadd.f32 %v1475, %v1479
        %v1512 = vadd.f32 %v1476, %v1479
        %1513 = vst [vmem:[%s406] sm:$0xff] %v1481
        %1514 = vst [vmem:[%s406 + $0x8] sm:$0xff] %v1482
        %1515 = vst [vmem:[%s406 + $0x10] sm:$0xff] %v1483
        %1516 = vst [vmem:[%s406 + $0x18] sm:$0xff] %v1484
        %1517 = vst [vmem:[%s406 + $0x20] sm:$0xff] %v1485
        %1518 = vst [vmem:[%s406 + $0x28] sm:$0xff] %v1486
        %1519 = vst [vmem:[%s406 + $0x30] sm:$0xff] %v1487
        %1520 = vst [vmem:[%s406 + $0x38] sm:$0xff] %v1488
        %1521 = vst [vmem:[%s406 + $0x40] sm:$0xff] %v1489
        %1522 = vst [vmem:[%s406 + $0x48] sm:$0xff] %v1490
        %1523 = vst [vmem:[%s406 + $0x50] sm:$0xff] %v1491
        %1524 = vst [vmem:[%s406 + $0x58] sm:$0xff] %v1492
        %1525 = vst [vmem:[%s406 + $0x60] sm:$0xff] %v1493
        %1526 = vst [vmem:[%s406 + $0x68] sm:$0xff] %v1494
        %1527 = vst [vmem:[%s406 + $0x70] sm:$0xff] %v1495
        %1528 = vst [vmem:[%s406 + $0x78] sm:$0xff] %v1496
        %1529 = vst [vmem:[%s406 + $0x80] sm:$0xff] %v1497
        %1530 = vst [vmem:[%s406 + $0x88] sm:$0xff] %v1498
        %1531 = vst [vmem:[%s406 + $0x90] sm:$0xff] %v1499
        %1532 = vst [vmem:[%s406 + $0x98] sm:$0xff] %v1500
        %1533 = vst [vmem:[%s406 + $0xa0] sm:$0xff] %v1501
        %1534 = vst [vmem:[%s406 + $0xa8] sm:$0xff] %v1502
        %1535 = vst [vmem:[%s406 + $0xb0] sm:$0xff] %v1503
        %1536 = vst [vmem:[%s406 + $0xb8] sm:$0xff] %v1504
        %1537 = vst [vmem:[%s406 + $0xc0] sm:$0xff] %v1505
        %1538 = vst [vmem:[%s406 + $0xc8] sm:$0xff] %v1506
        %1539 = vst [vmem:[%s406 + $0xd0] sm:$0xff] %v1507
        %1540 = vst [vmem:[%s406 + $0xd8] sm:$0xff] %v1508
        %1541 = vst [vmem:[%s406 + $0xe0] sm:$0xff] %v1509
        %1542 = vst [vmem:[%s406 + $0xe8] sm:$0xff] %v1510
        %1543 = vst [vmem:[%s406 + $0xf0] sm:$0xff] %v1511
        %1544 = vst [vmem:[%s406 + $0xf8] sm:$0xff] %v1512
        %s1545 = scalar_lea.vmem [#allocation3], 72
        %1546 = vst [vmem:[%s1545 + $0x3] sm:$0xff] %v1481
        %1547 = vst [vmem:[%s1545 + $0xb] sm:$0xff] %v1482
        %1548 = vst [vmem:[%s1545 + $0x1b] sm:$0xff] %v1483
        %1549 = vst [vmem:[%s1545 + $0x23] sm:$0xff] %v1484
        %1550 = vst [vmem:[%s1545 + $0x33] sm:$0xff] %v1485
        %1551 = vst [vmem:[%s1545 + $0x3b] sm:$0xff] %v1486
        %1552 = vst [vmem:[%s1545 + $0x4b] sm:$0xff] %v1487
        %1553 = vst [vmem:[%s1545 + $0x53] sm:$0xff] %v1488
        %1554 = vst [vmem:[%s1545 + $0x63] sm:$0xff] %v1489
        %1555 = vst [vmem:[%s1545 + $0x6b] sm:$0xff] %v1490
        %1556 = vst [vmem:[%s1545 + $0x7b] sm:$0xff] %v1491
        %1557 = vst [vmem:[%s1545 + $0x83] sm:$0xff] %v1492
        %1558 = vst [vmem:[%s1545 + $0x93] sm:$0xff] %v1493
        %1559 = vst [vmem:[%s1545 + $0x9b] sm:$0xff] %v1494
        %1560 = vst [vmem:[%s1545 + $0xab] sm:$0xff] %v1495
        %1561 = vst [vmem:[%s1545 + $0xb3] sm:$0xff] %v1496
        %1562 = vst [vmem:[%s1545 + $0xc3] sm:$0xff] %v1497
        %1563 = vst [vmem:[%s1545 + $0xcb] sm:$0xff] %v1498
        %1564 = vst [vmem:[%s1545 + $0xdb] sm:$0xff] %v1499
        %1565 = vst [vmem:[%s1545 + $0xe3] sm:$0xff] %v1500
        %1566 = vst [vmem:[%s1545 + $0xf3] sm:$0xff] %v1501
        %1567 = vst [vmem:[%s1545 + $0xfb] sm:$0xff] %v1502
        %1568 = vst [vmem:[%s1545 + $0x10b] sm:$0xff] %v1503
        %1569 = vst [vmem:[%s1545 + $0x113] sm:$0xff] %v1504
        %1570 = vst [vmem:[%s1545 + $0x123] sm:$0xff] %v1505
        %1571 = vst [vmem:[%s1545 + $0x12b] sm:$0xff] %v1506
        %1572 = vst [vmem:[%s1545 + $0x13b] sm:$0xff] %v1507
        %1573 = vst [vmem:[%s1545 + $0x143] sm:$0xff] %v1508
        %1574 = vst [vmem:[%s1545 + $0x153] sm:$0xff] %v1509
        %1575 = vst [vmem:[%s1545 + $0x15b] sm:$0xff] %v1510
        %1576 = vst [vmem:[%s1545 + $0x16b] sm:$0xff] %v1511
        %1577 = vst [vmem:[%s1545 + $0x173] sm:$0xff] %v1512
        %v1578 = vld [vmem:[#allocation3] sm:$0xff]
        %v1579 = vld [vmem:[#allocation3 + $0x8] sm:$0xff]
        %v1580 = vld [vmem:[#allocation3 + $0x18] sm:$0xff]
        %v1581 = vld [vmem:[#allocation3 + $0x20] sm:$0xff]
        %v1582 = vld [vmem:[#allocation3 + $0x30] sm:$0xff]
        %v1583 = vld [vmem:[#allocation3 + $0x38] sm:$0xff]
        %v1584 = vld [vmem:[#allocation3 + $0x48] sm:$0xff]
        %v1585 = vld [vmem:[#allocation3 + $0x50] sm:$0xff]
        %v1586 = vld [vmem:[#allocation3 + $0x60] sm:$0xff]
        %v1587 = vld [vmem:[#allocation3 + $0x68] sm:$0xff]
        %v1588 = vld [vmem:[#allocation3 + $0x78] sm:$0xff]
        %v1589 = vld [vmem:[#allocation3 + $0x80] sm:$0xff]
        %v1590 = vld [vmem:[#allocation3 + $0x90] sm:$0xff]
        %v1591 = vld [vmem:[#allocation3 + $0x98] sm:$0xff]
        %v1592 = vld [vmem:[#allocation3 + $0xa8] sm:$0xff]
        %v1593 = vld [vmem:[#allocation3 + $0xb0] sm:$0xff]
        %v1594 = vld [vmem:[#allocation3 + $0xc0] sm:$0xff]
        %v1595 = vld [vmem:[#allocation3 + $0xc8] sm:$0xff]
        %v1596 = vld [vmem:[#allocation3 + $0xd8] sm:$0xff]
        %v1597 = vld [vmem:[#allocation3 + $0xe0] sm:$0xff]
        %v1598 = vld [vmem:[#allocation3 + $0xf0] sm:$0xff]
        %v1599 = vld [vmem:[#allocation3 + $0xf8] sm:$0xff]
        %v1600 = vld [vmem:[#allocation3 + $0x108] sm:$0xff]
        %v1601 = vld [vmem:[#allocation3 + $0x110] sm:$0xff]
        %v1602 = vld [vmem:[#allocation3 + $0x120] sm:$0xff]
        %v1603 = vld [vmem:[#allocation3 + $0x128] sm:$0xff]
        %v1604 = vld [vmem:[#allocation3 + $0x138] sm:$0xff]
        %v1605 = vld [vmem:[#allocation3 + $0x140] sm:$0xff]
        %v1606 = vld [vmem:[#allocation3 + $0x150] sm:$0xff]
        %v1607 = vld [vmem:[#allocation3 + $0x158] sm:$0xff]
        %v1608 = vld [vmem:[#allocation3 + $0x168] sm:$0xff]
        %v1609 = vld [vmem:[#allocation3 + $0x170] sm:$0xff]
        %v1610 = vld [vmem:[#allocation10] sm:$0x1]
        %v1611 = vperm.slane %v1610, 0
        %v1612 = vmul.f32 %v1578, %v1611
        %v1613 = vmul.f32 %v1579, %v1611
        %v1614 = vmul.f32 %v1580, %v1611
        %v1615 = vmul.f32 %v1581, %v1611
        %v1616 = vmul.f32 %v1582, %v1611
        %v1617 = vmul.f32 %v1583, %v1611
        %v1618 = vmul.f32 %v1584, %v1611
        %v1619 = vmul.f32 %v1585, %v1611
        %v1620 = vmul.f32 %v1586, %v1611
        %v1621 = vmul.f32 %v1587, %v1611
        %v1622 = vmul.f32 %v1588, %v1611
        %v1623 = vmul.f32 %v1589, %v1611
        %v1624 = vmul.f32 %v1590, %v1611
        %v1625 = vmul.f32 %v1591, %v1611
        %v1626 = vmul.f32 %v1592, %v1611
        %v1627 = vmul.f32 %v1593, %v1611
        %v1628 = vmul.f32 %v1594, %v1611
        %v1629 = vmul.f32 %v1595, %v1611
        %v1630 = vmul.f32 %v1596, %v1611
        %v1631 = vmul.f32 %v1597, %v1611
        %v1632 = vmul.f32 %v1598, %v1611
        %v1633 = vmul.f32 %v1599, %v1611
        %v1634 = vmul.f32 %v1600, %v1611
        %v1635 = vmul.f32 %v1601, %v1611
        %v1636 = vmul.f32 %v1602, %v1611
        %v1637 = vmul.f32 %v1603, %v1611
        %v1638 = vmul.f32 %v1604, %v1611
        %v1639 = vmul.f32 %v1605, %v1611
        %v1640 = vmul.f32 %v1606, %v1611
        %v1641 = vmul.f32 %v1607, %v1611
        %v1642 = vmul.f32 %v1608, %v1611
        %v1643 = vmul.f32 %v1609, %v1611
        %v1644 = vadd.f32 %v1612, 0.0
        %v1645 = vadd.f32 %v1613, 0.0
        %v1646 = vadd.f32 %v1614, 0.0
        %v1647 = vadd.f32 %v1615, 0.0
        %v1648 = vadd.f32 %v1616, 0.0
        %v1649 = vadd.f32 %v1617, 0.0
        %v1650 = vadd.f32 %v1618, 0.0
        %v1651 = vadd.f32 %v1619, 0.0
        %v1652 = vadd.f32 %v1620, 0.0
        %v1653 = vadd.f32 %v1621, 0.0
        %v1654 = vadd.f32 %v1622, 0.0
        %v1655 = vadd.f32 %v1623, 0.0
        %v1656 = vadd.f32 %v1624, 0.0
        %v1657 = vadd.f32 %v1625, 0.0
        %v1658 = vadd.f32 %v1626, 0.0
        %v1659 = vadd.f32 %v1627, 0.0
        %v1660 = vadd.f32 %v1628, 0.0
        %v1661 = vadd.f32 %v1629, 0.0
        %v1662 = vadd.f32 %v1630, 0.0
        %v1663 = vadd.f32 %v1631, 0.0
        %v1664 = vadd.f32 %v1632, 0.0
        %v1665 = vadd.f32 %v1633, 0.0
        %v1666 = vadd.f32 %v1634, 0.0
        %v1667 = vadd.f32 %v1635, 0.0
        %v1668 = vadd.f32 %v1636, 0.0
        %v1669 = vadd.f32 %v1637, 0.0
        %v1670 = vadd.f32 %v1638, 0.0
        %v1671 = vadd.f32 %v1639, 0.0
        %v1672 = vadd.f32 %v1640, 0.0
        %v1673 = vadd.f32 %v1641, 0.0
        %v1674 = vadd.f32 %v1642, 0.0
        %v1675 = vadd.f32 %v1643, 0.0
        %v1676 = vld [vmem:[#allocation3 + $0x1] sm:$0xff]
        %v1677 = vld [vmem:[#allocation3 + $0x9] sm:$0xff]
        %v1678 = vld [vmem:[#allocation3 + $0x19] sm:$0xff]
        %v1679 = vld [vmem:[#allocation3 + $0x21] sm:$0xff]
        %v1680 = vld [vmem:[#allocation3 + $0x31] sm:$0xff]
        %v1681 = vld [vmem:[#allocation3 + $0x39] sm:$0xff]
        %v1682 = vld [vmem:[#allocation3 + $0x49] sm:$0xff]
        %v1683 = vld [vmem:[#allocation3 + $0x51] sm:$0xff]
        %v1684 = vld [vmem:[#allocation3 + $0x61] sm:$0xff]
        %v1685 = vld [vmem:[#allocation3 + $0x69] sm:$0xff]
        %v1686 = vld [vmem:[#allocation3 + $0x79] sm:$0xff]
        %v1687 = vld [vmem:[#allocation3 + $0x81] sm:$0xff]
        %v1688 = vld [vmem:[#allocation3 + $0x91] sm:$0xff]
        %v1689 = vld [vmem:[#allocation3 + $0x99] sm:$0xff]
        %v1690 = vld [vmem:[#allocation3 + $0xa9] sm:$0xff]
        %v1691 = vld [vmem:[#allocation3 + $0xb1] sm:$0xff]
        %v1692 = vld [vmem:[#allocation3 + $0xc1] sm:$0xff]
        %v1693 = vld [vmem:[#allocation3 + $0xc9] sm:$0xff]
        %v1694 = vld [vmem:[#allocation3 + $0xd9] sm:$0xff]
        %v1695 = vld [vmem:[#allocation3 + $0xe1] sm:$0xff]
        %v1696 = vld [vmem:[#allocation3 + $0xf1] sm:$0xff]
        %v1697 = vld [vmem:[#allocation3 + $0xf9] sm:$0xff]
        %v1698 = vld [vmem:[#allocation3 + $0x109] sm:$0xff]
        %v1699 = vld [vmem:[#allocation3 + $0x111] sm:$0xff]
        %v1700 = vld [vmem:[#allocation3 + $0x121] sm:$0xff]
        %v1701 = vld [vmem:[#allocation3 + $0x129] sm:$0xff]
        %v1702 = vld [vmem:[#allocation3 + $0x139] sm:$0xff]
        %v1703 = vld [vmem:[#allocation3 + $0x141] sm:$0xff]
        %v1704 = vld [vmem:[#allocation3 + $0x151] sm:$0xff]
        %v1705 = vld [vmem:[#allocation3 + $0x159] sm:$0xff]
        %v1706 = vld [vmem:[#allocation3 + $0x169] sm:$0xff]
        %v1707 = vld [vmem:[#allocation3 + $0x171] sm:$0xff]
        %v1708 = vld [vmem:[#allocation10 + $0x1] sm:$0x1]
        %v1709 = vperm.slane %v1708, 0
        %v1710 = vmul.f32 %v1676, %v1709
        %v1711 = vmul.f32 %v1677, %v1709
        %v1712 = vmul.f32 %v1678, %v1709
        %v1713 = vmul.f32 %v1679, %v1709
        %v1714 = vmul.f32 %v1680, %v1709
        %v1715 = vmul.f32 %v1681, %v1709
        %v1716 = vmul.f32 %v1682, %v1709
        %v1717 = vmul.f32 %v1683, %v1709
        %v1718 = vmul.f32 %v1684, %v1709
        %v1719 = vmul.f32 %v1685, %v1709
        %v1720 = vmul.f32 %v1686, %v1709
        %v1721 = vmul.f32 %v1687, %v1709
        %v1722 = vmul.f32 %v1688, %v1709
        %v1723 = vmul.f32 %v1689, %v1709
        %v1724 = vmul.f32 %v1690, %v1709
        %v1725 = vmul.f32 %v1691, %v1709
        %v1726 = vmul.f32 %v1692, %v1709
        %v1727 = vmul.f32 %v1693, %v1709
        %v1728 = vmul.f32 %v1694, %v1709
        %v1729 = vmul.f32 %v1695, %v1709
        %v1730 = vmul.f32 %v1696, %v1709
        %v1731 = vmul.f32 %v1697, %v1709
        %v1732 = vmul.f32 %v1698, %v1709
        %v1733 = vmul.f32 %v1699, %v1709
        %v1734 = vmul.f32 %v1700, %v1709
        %v1735 = vmul.f32 %v1701, %v1709
        %v1736 = vmul.f32 %v1702, %v1709
        %v1737 = vmul.f32 %v1703, %v1709
        %v1738 = vmul.f32 %v1704, %v1709
        %v1739 = vmul.f32 %v1705, %v1709
        %v1740 = vmul.f32 %v1706, %v1709
        %v1741 = vmul.f32 %v1707, %v1709
        %v1742 = vadd.f32 %v1644, %v1710
        %v1743 = vadd.f32 %v1645, %v1711
        %v1744 = vadd.f32 %v1646, %v1712
        %v1745 = vadd.f32 %v1647, %v1713
        %v1746 = vadd.f32 %v1648, %v1714
        %v1747 = vadd.f32 %v1649, %v1715
        %v1748 = vadd.f32 %v1650, %v1716
        %v1749 = vadd.f32 %v1651, %v1717
        %v1750 = vadd.f32 %v1652, %v1718
        %v1751 = vadd.f32 %v1653, %v1719
        %v1752 = vadd.f32 %v1654, %v1720
        %v1753 = vadd.f32 %v1655, %v1721
        %v1754 = vadd.f32 %v1656, %v1722
        %v1755 = vadd.f32 %v1657, %v1723
        %v1756 = vadd.f32 %v1658, %v1724
        %v1757 = vadd.f32 %v1659, %v1725
        %v1758 = vadd.f32 %v1660, %v1726
        %v1759 = vadd.f32 %v1661, %v1727
        %v1760 = vadd.f32 %v1662, %v1728
        %v1761 = vadd.f32 %v1663, %v1729
        %v1762 = vadd.f32 %v1664, %v1730
        %v1763 = vadd.f32 %v1665, %v1731
        %v1764 = vadd.f32 %v1666, %v1732
        %v1765 = vadd.f32 %v1667, %v1733
        %v1766 = vadd.f32 %v1668, %v1734
        %v1767 = vadd.f32 %v1669, %v1735
        %v1768 = vadd.f32 %v1670, %v1736
        %v1769 = vadd.f32 %v1671, %v1737
        %v1770 = vadd.f32 %v1672, %v1738
        %v1771 = vadd.f32 %v1673, %v1739
        %v1772 = vadd.f32 %v1674, %v1740
        %v1773 = vadd.f32 %v1675, %v1741
        %v1774 = vld [vmem:[#allocation3 + $0x2] sm:$0xff]
        %v1775 = vld [vmem:[#allocation3 + $0xa] sm:$0xff]
        %v1776 = vld [vmem:[#allocation3 + $0x1a] sm:$0xff]
        %v1777 = vld [vmem:[#allocation3 + $0x22] sm:$0xff]
        %v1778 = vld [vmem:[#allocation3 + $0x32] sm:$0xff]
        %v1779 = vld [vmem:[#allocation3 + $0x3a] sm:$0xff]
        %v1780 = vld [vmem:[#allocation3 + $0x4a] sm:$0xff]
        %v1781 = vld [vmem:[#allocation3 + $0x52] sm:$0xff]
        %v1782 = vld [vmem:[#allocation3 + $0x62] sm:$0xff]
        %v1783 = vld [vmem:[#allocation3 + $0x6a] sm:$0xff]
        %v1784 = vld [vmem:[#allocation3 + $0x7a] sm:$0xff]
        %v1785 = vld [vmem:[#allocation3 + $0x82] sm:$0xff]
        %v1786 = vld [vmem:[#allocation3 + $0x92] sm:$0xff]
        %v1787 = vld [vmem:[#allocation3 + $0x9a] sm:$0xff]
        %v1788 = vld [vmem:[#allocation3 + $0xaa] sm:$0xff]
        %v1789 = vld [vmem:[#allocation3 + $0xb2] sm:$0xff]
        %v1790 = vld [vmem:[#allocation3 + $0xc2] sm:$0xff]
        %v1791 = vld [vmem:[#allocation3 + $0xca] sm:$0xff]
        %v1792 = vld [vmem:[#allocation3 + $0xda] sm:$0xff]
        %v1793 = vld [vmem:[#allocation3 + $0xe2] sm:$0xff]
        %v1794 = vld [vmem:[#allocation3 + $0xf2] sm:$0xff]
        %v1795 = vld [vmem:[#allocation3 + $0xfa] sm:$0xff]
        %v1796 = vld [vmem:[#allocation3 + $0x10a] sm:$0xff]
        %v1797 = vld [vmem:[#allocation3 + $0x112] sm:$0xff]
        %v1798 = vld [vmem:[#allocation3 + $0x122] sm:$0xff]
        %v1799 = vld [vmem:[#allocation3 + $0x12a] sm:$0xff]
        %v1800 = vld [vmem:[#allocation3 + $0x13a] sm:$0xff]
        %v1801 = vld [vmem:[#allocation3 + $0x142] sm:$0xff]
        %v1802 = vld [vmem:[#allocation3 + $0x152] sm:$0xff]
        %v1803 = vld [vmem:[#allocation3 + $0x15a] sm:$0xff]
        %v1804 = vld [vmem:[#allocation3 + $0x16a] sm:$0xff]
        %v1805 = vld [vmem:[#allocation3 + $0x172] sm:$0xff]
        %v1806 = vld [vmem:[#allocation10 + $0x2] sm:$0x1]
        %v1807 = vperm.slane %v1806, 0
        %v1808 = vmul.f32 %v1774, %v1807
        %v1809 = vmul.f32 %v1775, %v1807
        %v1810 = vmul.f32 %v1776, %v1807
        %v1811 = vmul.f32 %v1777, %v1807
        %v1812 = vmul.f32 %v1778, %v1807
        %v1813 = vmul.f32 %v1779, %v1807
        %v1814 = vmul.f32 %v1780, %v1807
        %v1815 = vmul.f32 %v1781, %v1807
        %v1816 = vmul.f32 %v1782, %v1807
        %v1817 = vmul.f32 %v1783, %v1807
        %v1818 = vmul.f32 %v1784, %v1807
        %v1819 = vmul.f32 %v1785, %v1807
        %v1820 = vmul.f32 %v1786, %v1807
        %v1821 = vmul.f32 %v1787, %v1807
        %v1822 = vmul.f32 %v1788, %v1807
        %v1823 = vmul.f32 %v1789, %v1807
        %v1824 = vmul.f32 %v1790, %v1807
        %v1825 = vmul.f32 %v1791, %v1807
        %v1826 = vmul.f32 %v1792, %v1807
        %v1827 = vmul.f32 %v1793, %v1807
        %v1828 = vmul.f32 %v1794, %v1807
        %v1829 = vmul.f32 %v1795, %v1807
        %v1830 = vmul.f32 %v1796, %v1807
        %v1831 = vmul.f32 %v1797, %v1807
        %v1832 = vmul.f32 %v1798, %v1807
        %v1833 = vmul.f32 %v1799, %v1807
        %v1834 = vmul.f32 %v1800, %v1807
        %v1835 = vmul.f32 %v1801, %v1807
        %v1836 = vmul.f32 %v1802, %v1807
        %v1837 = vmul.f32 %v1803, %v1807
        %v1838 = vmul.f32 %v1804, %v1807
        %v1839 = vmul.f32 %v1805, %v1807
        %v1840 = vadd.f32 %v1742, %v1808
        %v1841 = vadd.f32 %v1743, %v1809
        %v1842 = vadd.f32 %v1744, %v1810
        %v1843 = vadd.f32 %v1745, %v1811
        %v1844 = vadd.f32 %v1746, %v1812
        %v1845 = vadd.f32 %v1747, %v1813
        %v1846 = vadd.f32 %v1748, %v1814
        %v1847 = vadd.f32 %v1749, %v1815
        %v1848 = vadd.f32 %v1750, %v1816
        %v1849 = vadd.f32 %v1751, %v1817
        %v1850 = vadd.f32 %v1752, %v1818
        %v1851 = vadd.f32 %v1753, %v1819
        %v1852 = vadd.f32 %v1754, %v1820
        %v1853 = vadd.f32 %v1755, %v1821
        %v1854 = vadd.f32 %v1756, %v1822
        %v1855 = vadd.f32 %v1757, %v1823
        %v1856 = vadd.f32 %v1758, %v1824
        %v1857 = vadd.f32 %v1759, %v1825
        %v1858 = vadd.f32 %v1760, %v1826
        %v1859 = vadd.f32 %v1761, %v1827
        %v1860 = vadd.f32 %v1762, %v1828
        %v1861 = vadd.f32 %v1763, %v1829
        %v1862 = vadd.f32 %v1764, %v1830
        %v1863 = vadd.f32 %v1765, %v1831
        %v1864 = vadd.f32 %v1766, %v1832
        %v1865 = vadd.f32 %v1767, %v1833
        %v1866 = vadd.f32 %v1768, %v1834
        %v1867 = vadd.f32 %v1769, %v1835
        %v1868 = vadd.f32 %v1770, %v1836
        %v1869 = vadd.f32 %v1771, %v1837
        %v1870 = vadd.f32 %v1772, %v1838
        %v1871 = vadd.f32 %v1773, %v1839
        %v1872 = vld [vmem:[#allocation3 + $0x3] sm:$0xff]
        %v1873 = vld [vmem:[#allocation3 + $0xb] sm:$0xff]
        %v1874 = vld [vmem:[#allocation3 + $0x1b] sm:$0xff]
        %v1875 = vld [vmem:[#allocation3 + $0x23] sm:$0xff]
        %v1876 = vld [vmem:[#allocation3 + $0x33] sm:$0xff]
        %v1877 = vld [vmem:[#allocation3 + $0x3b] sm:$0xff]
        %v1878 = vld [vmem:[#allocation3 + $0x4b] sm:$0xff]
        %v1879 = vld [vmem:[#allocation3 + $0x53] sm:$0xff]
        %v1880 = vld [vmem:[#allocation3 + $0x63] sm:$0xff]
        %v1881 = vld [vmem:[#allocation3 + $0x6b] sm:$0xff]
        %v1882 = vld [vmem:[#allocation3 + $0x7b] sm:$0xff]
        %v1883 = vld [vmem:[#allocation3 + $0x83] sm:$0xff]
        %v1884 = vld [vmem:[#allocation3 + $0x93] sm:$0xff]
        %v1885 = vld [vmem:[#allocation3 + $0x9b] sm:$0xff]
        %v1886 = vld [vmem:[#allocation3 + $0xab] sm:$0xff]
        %v1887 = vld [vmem:[#allocation3 + $0xb3] sm:$0xff]
        %v1888 = vld [vmem:[#allocation3 + $0xc3] sm:$0xff]
        %v1889 = vld [vmem:[#allocation3 + $0xcb] sm:$0xff]
        %v1890 = vld [vmem:[#allocation3 + $0xdb] sm:$0xff]
        %v1891 = vld [vmem:[#allocation3 + $0xe3] sm:$0xff]
        %v1892 = vld [vmem:[#allocation3 + $0xf3] sm:$0xff]
        %v1893 = vld [vmem:[#allocation3 + $0xfb] sm:$0xff]
        %v1894 = vld [vmem:[#allocation3 + $0x10b] sm:$0xff]
        %v1895 = vld [vmem:[#allocation3 + $0x113] sm:$0xff]
        %v1896 = vld [vmem:[#allocation3 + $0x123] sm:$0xff]
        %v1897 = vld [vmem:[#allocation3 + $0x12b] sm:$0xff]
        %v1898 = vld [vmem:[#allocation3 + $0x13b] sm:$0xff]
        %v1899 = vld [vmem:[#allocation3 + $0x143] sm:$0xff]
        %v1900 = vld [vmem:[#allocation3 + $0x153] sm:$0xff]
        %v1901 = vld [vmem:[#allocation3 + $0x15b] sm:$0xff]
        %v1902 = vld [vmem:[#allocation3 + $0x16b] sm:$0xff]
        %v1903 = vld [vmem:[#allocation3 + $0x173] sm:$0xff]
        %v1904 = vld [vmem:[#allocation10 + $0x3] sm:$0x1]
        %v1905 = vperm.slane %v1904, 0
        %v1906 = vmul.f32 %v1872, %v1905
        %v1907 = vmul.f32 %v1873, %v1905
        %v1908 = vmul.f32 %v1874, %v1905
        %v1909 = vmul.f32 %v1875, %v1905
        %v1910 = vmul.f32 %v1876, %v1905
        %v1911 = vmul.f32 %v1877, %v1905
        %v1912 = vmul.f32 %v1878, %v1905
        %v1913 = vmul.f32 %v1879, %v1905
        %v1914 = vmul.f32 %v1880, %v1905
        %v1915 = vmul.f32 %v1881, %v1905
        %v1916 = vmul.f32 %v1882, %v1905
        %v1917 = vmul.f32 %v1883, %v1905
        %v1918 = vmul.f32 %v1884, %v1905
        %v1919 = vmul.f32 %v1885, %v1905
        %v1920 = vmul.f32 %v1886, %v1905
        %v1921 = vmul.f32 %v1887, %v1905
        %v1922 = vmul.f32 %v1888, %v1905
        %v1923 = vmul.f32 %v1889, %v1905
        %v1924 = vmul.f32 %v1890, %v1905
        %v1925 = vmul.f32 %v1891, %v1905
        %v1926 = vmul.f32 %v1892, %v1905
        %v1927 = vmul.f32 %v1893, %v1905
        %v1928 = vmul.f32 %v1894, %v1905
        %v1929 = vmul.f32 %v1895, %v1905
        %v1930 = vmul.f32 %v1896, %v1905
        %v1931 = vmul.f32 %v1897, %v1905
        %v1932 = vmul.f32 %v1898, %v1905
        %v1933 = vmul.f32 %v1899, %v1905
        %v1934 = vmul.f32 %v1900, %v1905
        %v1935 = vmul.f32 %v1901, %v1905
        %v1936 = vmul.f32 %v1902, %v1905
        %v1937 = vmul.f32 %v1903, %v1905
        %v1938 = vadd.f32 %v1840, %v1906
        %v1939 = vadd.f32 %v1841, %v1907
        %v1940 = vadd.f32 %v1842, %v1908
        %v1941 = vadd.f32 %v1843, %v1909
        %v1942 = vadd.f32 %v1844, %v1910
        %v1943 = vadd.f32 %v1845, %v1911
        %v1944 = vadd.f32 %v1846, %v1912
        %v1945 = vadd.f32 %v1847, %v1913
        %v1946 = vadd.f32 %v1848, %v1914
        %v1947 = vadd.f32 %v1849, %v1915
        %v1948 = vadd.f32 %v1850, %v1916
        %v1949 = vadd.f32 %v1851, %v1917
        %v1950 = vadd.f32 %v1852, %v1918
        %v1951 = vadd.f32 %v1853, %v1919
        %v1952 = vadd.f32 %v1854, %v1920
        %v1953 = vadd.f32 %v1855, %v1921
        %v1954 = vadd.f32 %v1856, %v1922
        %v1955 = vadd.f32 %v1857, %v1923
        %v1956 = vadd.f32 %v1858, %v1924
        %v1957 = vadd.f32 %v1859, %v1925
        %v1958 = vadd.f32 %v1860, %v1926
        %v1959 = vadd.f32 %v1861, %v1927
        %v1960 = vadd.f32 %v1862, %v1928
        %v1961 = vadd.f32 %v1863, %v1929
        %v1962 = vadd.f32 %v1864, %v1930
        %v1963 = vadd.f32 %v1865, %v1931
        %v1964 = vadd.f32 %v1866, %v1932
        %v1965 = vadd.f32 %v1867, %v1933
        %v1966 = vadd.f32 %v1868, %v1934
        %v1967 = vadd.f32 %v1869, %v1935
        %v1968 = vadd.f32 %v1870, %v1936
        %v1969 = vadd.f32 %v1871, %v1937
        %v1970 = vld [vmem:[#allocation3 + $0x4] sm:$0xff]
        %v1971 = vld [vmem:[#allocation3 + $0xc] sm:$0xff]
        %v1972 = vld [vmem:[#allocation3 + $0x1c] sm:$0xff]
        %v1973 = vld [vmem:[#allocation3 + $0x24] sm:$0xff]
        %v1974 = vld [vmem:[#allocation3 + $0x34] sm:$0xff]
        %v1975 = vld [vmem:[#allocation3 + $0x3c] sm:$0xff]
        %v1976 = vld [vmem:[#allocation3 + $0x4c] sm:$0xff]
        %v1977 = vld [vmem:[#allocation3 + $0x54] sm:$0xff]
        %v1978 = vld [vmem:[#allocation3 + $0x64] sm:$0xff]
        %v1979 = vld [vmem:[#allocation3 + $0x6c] sm:$0xff]
        %v1980 = vld [vmem:[#allocation3 + $0x7c] sm:$0xff]
        %v1981 = vld [vmem:[#allocation3 + $0x84] sm:$0xff]
        %v1982 = vld [vmem:[#allocation3 + $0x94] sm:$0xff]
        %v1983 = vld [vmem:[#allocation3 + $0x9c] sm:$0xff]
        %v1984 = vld [vmem:[#allocation3 + $0xac] sm:$0xff]
        %v1985 = vld [vmem:[#allocation3 + $0xb4] sm:$0xff]
        %v1986 = vld [vmem:[#allocation3 + $0xc4] sm:$0xff]
        %v1987 = vld [vmem:[#allocation3 + $0xcc] sm:$0xff]
        %v1988 = vld [vmem:[#allocation3 + $0xdc] sm:$0xff]
        %v1989 = vld [vmem:[#allocation3 + $0xe4] sm:$0xff]
        %v1990 = vld [vmem:[#allocation3 + $0xf4] sm:$0xff]
        %v1991 = vld [vmem:[#allocation3 + $0xfc] sm:$0xff]
        %v1992 = vld [vmem:[#allocation3 + $0x10c] sm:$0xff]
        %v1993 = vld [vmem:[#allocation3 + $0x114] sm:$0xff]
        %v1994 = vld [vmem:[#allocation3 + $0x124] sm:$0xff]
        %v1995 = vld [vmem:[#allocation3 + $0x12c] sm:$0xff]
        %v1996 = vld [vmem:[#allocation3 + $0x13c] sm:$0xff]
        %v1997 = vld [vmem:[#allocation3 + $0x144] sm:$0xff]
        %v1998 = vld [vmem:[#allocation3 + $0x154] sm:$0xff]
        %v1999 = vld [vmem:[#allocation3 + $0x15c] sm:$0xff]
        %v2000 = vld [vmem:[#allocation3 + $0x16c] sm:$0xff]
        %v2001 = vld [vmem:[#allocation3 + $0x174] sm:$0xff]
        %v2002 = vld [vmem:[#allocation10 + $0x4] sm:$0x1]
        %v2003 = vperm.slane %v2002, 0
        %v2004 = vmul.f32 %v1970, %v2003
        %v2005 = vmul.f32 %v1971, %v2003
        %v2006 = vmul.f32 %v1972, %v2003
        %v2007 = vmul.f32 %v1973, %v2003
        %v2008 = vmul.f32 %v1974, %v2003
        %v2009 = vmul.f32 %v1975, %v2003
        %v2010 = vmul.f32 %v1976, %v2003
        %v2011 = vmul.f32 %v1977, %v2003
        %v2012 = vmul.f32 %v1978, %v2003
        %v2013 = vmul.f32 %v1979, %v2003
        %v2014 = vmul.f32 %v1980, %v2003
        %v2015 = vmul.f32 %v1981, %v2003
        %v2016 = vmul.f32 %v1982, %v2003
        %v2017 = vmul.f32 %v1983, %v2003
        %v2018 = vmul.f32 %v1984, %v2003
        %v2019 = vmul.f32 %v1985, %v2003
        %v2020 = vmul.f32 %v1986, %v2003
        %v2021 = vmul.f32 %v1987, %v2003
        %v2022 = vmul.f32 %v1988, %v2003
        %v2023 = vmul.f32 %v1989, %v2003
        %v2024 = vmul.f32 %v1990, %v2003
        %v2025 = vmul.f32 %v1991, %v2003
        %v2026 = vmul.f32 %v1992, %v2003
        %v2027 = vmul.f32 %v1993, %v2003
        %v2028 = vmul.f32 %v1994, %v2003
        %v2029 = vmul.f32 %v1995, %v2003
        %v2030 = vmul.f32 %v1996, %v2003
        %v2031 = vmul.f32 %v1997, %v2003
        %v2032 = vmul.f32 %v1998, %v2003
        %v2033 = vmul.f32 %v1999, %v2003
        %v2034 = vmul.f32 %v2000, %v2003
        %v2035 = vmul.f32 %v2001, %v2003
        %v2036 = vadd.f32 %v1938, %v2004
        %v2037 = vadd.f32 %v1939, %v2005
        %v2038 = vadd.f32 %v1940, %v2006
        %v2039 = vadd.f32 %v1941, %v2007
        %v2040 = vadd.f32 %v1942, %v2008
        %v2041 = vadd.f32 %v1943, %v2009
        %v2042 = vadd.f32 %v1944, %v2010
        %v2043 = vadd.f32 %v1945, %v2011
        %v2044 = vadd.f32 %v1946, %v2012
        %v2045 = vadd.f32 %v1947, %v2013
        %v2046 = vadd.f32 %v1948, %v2014
        %v2047 = vadd.f32 %v1949, %v2015
        %v2048 = vadd.f32 %v1950, %v2016
        %v2049 = vadd.f32 %v1951, %v2017
        %v2050 = vadd.f32 %v1952, %v2018
        %v2051 = vadd.f32 %v1953, %v2019
        %v2052 = vadd.f32 %v1954, %v2020
        %v2053 = vadd.f32 %v1955, %v2021
        %v2054 = vadd.f32 %v1956, %v2022
        %v2055 = vadd.f32 %v1957, %v2023
        %v2056 = vadd.f32 %v1958, %v2024
        %v2057 = vadd.f32 %v1959, %v2025
        %v2058 = vadd.f32 %v1960, %v2026
        %v2059 = vadd.f32 %v1961, %v2027
        %v2060 = vadd.f32 %v1962, %v2028
        %v2061 = vadd.f32 %v1963, %v2029
        %v2062 = vadd.f32 %v1964, %v2030
        %v2063 = vadd.f32 %v1965, %v2031
        %v2064 = vadd.f32 %v1966, %v2032
        %v2065 = vadd.f32 %v1967, %v2033
        %v2066 = vadd.f32 %v1968, %v2034
        %v2067 = vadd.f32 %v1969, %v2035
        %v2068 = vld [vmem:[#allocation3 + $0x5] sm:$0xff]
        %v2069 = vld [vmem:[#allocation3 + $0xd] sm:$0xff]
        %v2070 = vld [vmem:[#allocation3 + $0x1d] sm:$0xff]
        %v2071 = vld [vmem:[#allocation3 + $0x25] sm:$0xff]
        %v2072 = vld [vmem:[#allocation3 + $0x35] sm:$0xff]
        %v2073 = vld [vmem:[#allocation3 + $0x3d] sm:$0xff]
        %v2074 = vld [vmem:[#allocation3 + $0x4d] sm:$0xff]
        %v2075 = vld [vmem:[#allocation3 + $0x55] sm:$0xff]
        %v2076 = vld [vmem:[#allocation3 + $0x65] sm:$0xff]
        %v2077 = vld [vmem:[#allocation3 + $0x6d] sm:$0xff]
        %v2078 = vld [vmem:[#allocation3 + $0x7d] sm:$0xff]
        %v2079 = vld [vmem:[#allocation3 + $0x85] sm:$0xff]
        %v2080 = vld [vmem:[#allocation3 + $0x95] sm:$0xff]
        %v2081 = vld [vmem:[#allocation3 + $0x9d] sm:$0xff]
        %v2082 = vld [vmem:[#allocation3 + $0xad] sm:$0xff]
        %v2083 = vld [vmem:[#allocation3 + $0xb5] sm:$0xff]
        %v2084 = vld [vmem:[#allocation3 + $0xc5] sm:$0xff]
        %v2085 = vld [vmem:[#allocation3 + $0xcd] sm:$0xff]
        %v2086 = vld [vmem:[#allocation3 + $0xdd] sm:$0xff]
        %v2087 = vld [vmem:[#allocation3 + $0xe5] sm:$0xff]
        %v2088 = vld [vmem:[#allocation3 + $0xf5] sm:$0xff]
        %v2089 = vld [vmem:[#allocation3 + $0xfd] sm:$0xff]
        %v2090 = vld [vmem:[#allocation3 + $0x10d] sm:$0xff]
        %v2091 = vld [vmem:[#allocation3 + $0x115] sm:$0xff]
        %v2092 = vld [vmem:[#allocation3 + $0x125] sm:$0xff]
        %v2093 = vld [vmem:[#allocation3 + $0x12d] sm:$0xff]
        %v2094 = vld [vmem:[#allocation3 + $0x13d] sm:$0xff]
        %v2095 = vld [vmem:[#allocation3 + $0x145] sm:$0xff]
        %v2096 = vld [vmem:[#allocation3 + $0x155] sm:$0xff]
        %v2097 = vld [vmem:[#allocation3 + $0x15d] sm:$0xff]
        %v2098 = vld [vmem:[#allocation3 + $0x16d] sm:$0xff]
        %v2099 = vld [vmem:[#allocation3 + $0x175] sm:$0xff]
        %v2100 = vld [vmem:[#allocation10 + $0x5] sm:$0x1]
        %v2101 = vperm.slane %v2100, 0
        %v2102 = vmul.f32 %v2068, %v2101
        %v2103 = vmul.f32 %v2069, %v2101
        %v2104 = vmul.f32 %v2070, %v2101
        %v2105 = vmul.f32 %v2071, %v2101
        %v2106 = vmul.f32 %v2072, %v2101
        %v2107 = vmul.f32 %v2073, %v2101
        %v2108 = vmul.f32 %v2074, %v2101
        %v2109 = vmul.f32 %v2075, %v2101
        %v2110 = vmul.f32 %v2076, %v2101
        %v2111 = vmul.f32 %v2077, %v2101
        %v2112 = vmul.f32 %v2078, %v2101
        %v2113 = vmul.f32 %v2079, %v2101
        %v2114 = vmul.f32 %v2080, %v2101
        %v2115 = vmul.f32 %v2081, %v2101
        %v2116 = vmul.f32 %v2082, %v2101
        %v2117 = vmul.f32 %v2083, %v2101
        %v2118 = vmul.f32 %v2084, %v2101
        %v2119 = vmul.f32 %v2085, %v2101
        %v2120 = vmul.f32 %v2086, %v2101
        %v2121 = vmul.f32 %v2087, %v2101
        %v2122 = vmul.f32 %v2088, %v2101
        %v2123 = vmul.f32 %v2089, %v2101
        %v2124 = vmul.f32 %v2090, %v2101
        %v2125 = vmul.f32 %v2091, %v2101
        %v2126 = vmul.f32 %v2092, %v2101
        %v2127 = vmul.f32 %v2093, %v2101
        %v2128 = vmul.f32 %v2094, %v2101
        %v2129 = vmul.f32 %v2095, %v2101
        %v2130 = vmul.f32 %v2096, %v2101
        %v2131 = vmul.f32 %v2097, %v2101
        %v2132 = vmul.f32 %v2098, %v2101
        %v2133 = vmul.f32 %v2099, %v2101
        %v2134 = vadd.f32 %v2036, %v2102
        %v2135 = vadd.f32 %v2037, %v2103
        %v2136 = vadd.f32 %v2038, %v2104
        %v2137 = vadd.f32 %v2039, %v2105
        %v2138 = vadd.f32 %v2040, %v2106
        %v2139 = vadd.f32 %v2041, %v2107
        %v2140 = vadd.f32 %v2042, %v2108
        %v2141 = vadd.f32 %v2043, %v2109
        %v2142 = vadd.f32 %v2044, %v2110
        %v2143 = vadd.f32 %v2045, %v2111
        %v2144 = vadd.f32 %v2046, %v2112
        %v2145 = vadd.f32 %v2047, %v2113
        %v2146 = vadd.f32 %v2048, %v2114
        %v2147 = vadd.f32 %v2049, %v2115
        %v2148 = vadd.f32 %v2050, %v2116
        %v2149 = vadd.f32 %v2051, %v2117
        %v2150 = vadd.f32 %v2052, %v2118
        %v2151 = vadd.f32 %v2053, %v2119
        %v2152 = vadd.f32 %v2054, %v2120
        %v2153 = vadd.f32 %v2055, %v2121
        %v2154 = vadd.f32 %v2056, %v2122
        %v2155 = vadd.f32 %v2057, %v2123
        %v2156 = vadd.f32 %v2058, %v2124
        %v2157 = vadd.f32 %v2059, %v2125
        %v2158 = vadd.f32 %v2060, %v2126
        %v2159 = vadd.f32 %v2061, %v2127
        %v2160 = vadd.f32 %v2062, %v2128
        %v2161 = vadd.f32 %v2063, %v2129
        %v2162 = vadd.f32 %v2064, %v2130
        %v2163 = vadd.f32 %v2065, %v2131
        %v2164 = vadd.f32 %v2066, %v2132
        %v2165 = vadd.f32 %v2067, %v2133
        %v2166 = vld [vmem:[#allocation3 + $0x6] sm:$0xff]
        %v2167 = vld [vmem:[#allocation3 + $0xe] sm:$0xff]
        %v2168 = vld [vmem:[#allocation3 + $0x1e] sm:$0xff]
        %v2169 = vld [vmem:[#allocation3 + $0x26] sm:$0xff]
        %v2170 = vld [vmem:[#allocation3 + $0x36] sm:$0xff]
        %v2171 = vld [vmem:[#allocation3 + $0x3e] sm:$0xff]
        %v2172 = vld [vmem:[#allocation3 + $0x4e] sm:$0xff]
        %v2173 = vld [vmem:[#allocation3 + $0x56] sm:$0xff]
        %v2174 = vld [vmem:[#allocation3 + $0x66] sm:$0xff]
        %v2175 = vld [vmem:[#allocation3 + $0x6e] sm:$0xff]
        %v2176 = vld [vmem:[#allocation3 + $0x7e] sm:$0xff]
        %v2177 = vld [vmem:[#allocation3 + $0x86] sm:$0xff]
        %v2178 = vld [vmem:[#allocation3 + $0x96] sm:$0xff]
        %v2179 = vld [vmem:[#allocation3 + $0x9e] sm:$0xff]
        %v2180 = vld [vmem:[#allocation3 + $0xae] sm:$0xff]
        %v2181 = vld [vmem:[#allocation3 + $0xb6] sm:$0xff]
        %v2182 = vld [vmem:[#allocation3 + $0xc6] sm:$0xff]
        %v2183 = vld [vmem:[#allocation3 + $0xce] sm:$0xff]
        %v2184 = vld [vmem:[#allocation3 + $0xde] sm:$0xff]
        %v2185 = vld [vmem:[#allocation3 + $0xe6] sm:$0xff]
        %v2186 = vld [vmem:[#allocation3 + $0xf6] sm:$0xff]
        %v2187 = vld [vmem:[#allocation3 + $0xfe] sm:$0xff]
        %v2188 = vld [vmem:[#allocation3 + $0x10e] sm:$0xff]
        %v2189 = vld [vmem:[#allocation3 + $0x116] sm:$0xff]
        %v2190 = vld [vmem:[#allocation3 + $0x126] sm:$0xff]
        %v2191 = vld [vmem:[#allocation3 + $0x12e] sm:$0xff]
        %v2192 = vld [vmem:[#allocation3 + $0x13e] sm:$0xff]
        %v2193 = vld [vmem:[#allocation3 + $0x146] sm:$0xff]
        %v2194 = vld [vmem:[#allocation3 + $0x156] sm:$0xff]
        %v2195 = vld [vmem:[#allocation3 + $0x15e] sm:$0xff]
        %v2196 = vld [vmem:[#allocation3 + $0x16e] sm:$0xff]
        %v2197 = vld [vmem:[#allocation3 + $0x176] sm:$0xff]
        %v2198 = vld [vmem:[#allocation10 + $0x6] sm:$0x1]
        %v2199 = vperm.slane %v2198, 0
        %v2200 = vmul.f32 %v2166, %v2199
        %v2201 = vmul.f32 %v2167, %v2199
        %v2202 = vmul.f32 %v2168, %v2199
        %v2203 = vmul.f32 %v2169, %v2199
        %v2204 = vmul.f32 %v2170, %v2199
        %v2205 = vmul.f32 %v2171, %v2199
        %v2206 = vmul.f32 %v2172, %v2199
        %v2207 = vmul.f32 %v2173, %v2199
        %v2208 = vmul.f32 %v2174, %v2199
        %v2209 = vmul.f32 %v2175, %v2199
        %v2210 = vmul.f32 %v2176, %v2199
        %v2211 = vmul.f32 %v2177, %v2199
        %v2212 = vmul.f32 %v2178, %v2199
        %v2213 = vmul.f32 %v2179, %v2199
        %v2214 = vmul.f32 %v2180, %v2199
        %v2215 = vmul.f32 %v2181, %v2199
        %v2216 = vmul.f32 %v2182, %v2199
        %v2217 = vmul.f32 %v2183, %v2199
        %v2218 = vmul.f32 %v2184, %v2199
        %v2219 = vmul.f32 %v2185, %v2199
        %v2220 = vmul.f32 %v2186, %v2199
        %v2221 = vmul.f32 %v2187, %v2199
        %v2222 = vmul.f32 %v2188, %v2199
        %v2223 = vmul.f32 %v2189, %v2199
        %v2224 = vmul.f32 %v2190, %v2199
        %v2225 = vmul.f32 %v2191, %v2199
        %v2226 = vmul.f32 %v2192, %v2199
        %v2227 = vmul.f32 %v2193, %v2199
        %v2228 = vmul.f32 %v2194, %v2199
        %v2229 = vmul.f32 %v2195, %v2199
        %v2230 = vmul.f32 %v2196, %v2199
        %v2231 = vmul.f32 %v2197, %v2199
        %v2232 = vadd.f32 %v2134, %v2200
        %v2233 = vadd.f32 %v2135, %v2201
        %v2234 = vadd.f32 %v2136, %v2202
        %v2235 = vadd.f32 %v2137, %v2203
        %v2236 = vadd.f32 %v2138, %v2204
        %v2237 = vadd.f32 %v2139, %v2205
        %v2238 = vadd.f32 %v2140, %v2206
        %v2239 = vadd.f32 %v2141, %v2207
        %v2240 = vadd.f32 %v2142, %v2208
        %v2241 = vadd.f32 %v2143, %v2209
        %v2242 = vadd.f32 %v2144, %v2210
        %v2243 = vadd.f32 %v2145, %v2211
        %v2244 = vadd.f32 %v2146, %v2212
        %v2245 = vadd.f32 %v2147, %v2213
        %v2246 = vadd.f32 %v2148, %v2214
        %v2247 = vadd.f32 %v2149, %v2215
        %v2248 = vadd.f32 %v2150, %v2216
        %v2249 = vadd.f32 %v2151, %v2217
        %v2250 = vadd.f32 %v2152, %v2218
        %v2251 = vadd.f32 %v2153, %v2219
        %v2252 = vadd.f32 %v2154, %v2220
        %v2253 = vadd.f32 %v2155, %v2221
        %v2254 = vadd.f32 %v2156, %v2222
        %v2255 = vadd.f32 %v2157, %v2223
        %v2256 = vadd.f32 %v2158, %v2224
        %v2257 = vadd.f32 %v2159, %v2225
        %v2258 = vadd.f32 %v2160, %v2226
        %v2259 = vadd.f32 %v2161, %v2227
        %v2260 = vadd.f32 %v2162, %v2228
        %v2261 = vadd.f32 %v2163, %v2229
        %v2262 = vadd.f32 %v2164, %v2230
        %v2263 = vadd.f32 %v2165, %v2231
        %s2264 = scalar_lea.vmem [#allocation3], 24
        %v2265 = vld [vmem:[%s2264] sm:$0xff]
        %v2266 = vld [vmem:[%s2264 + $0x8] sm:$0xff]
        %v2267 = vld [vmem:[%s2264 + $0x18] sm:$0xff]
        %v2268 = vld [vmem:[%s2264 + $0x20] sm:$0xff]
        %v2269 = vld [vmem:[%s2264 + $0x30] sm:$0xff]
        %v2270 = vld [vmem:[%s2264 + $0x38] sm:$0xff]
        %v2271 = vld [vmem:[%s2264 + $0x48] sm:$0xff]
        %v2272 = vld [vmem:[%s2264 + $0x50] sm:$0xff]
        %v2273 = vld [vmem:[%s2264 + $0x60] sm:$0xff]
        %v2274 = vld [vmem:[%s2264 + $0x68] sm:$0xff]
        %v2275 = vld [vmem:[%s2264 + $0x78] sm:$0xff]
        %v2276 = vld [vmem:[%s2264 + $0x80] sm:$0xff]
        %v2277 = vld [vmem:[%s2264 + $0x90] sm:$0xff]
        %v2278 = vld [vmem:[%s2264 + $0x98] sm:$0xff]
        %v2279 = vld [vmem:[%s2264 + $0xa8] sm:$0xff]
        %v2280 = vld [vmem:[%s2264 + $0xb0] sm:$0xff]
        %v2281 = vld [vmem:[%s2264 + $0xc0] sm:$0xff]
        %v2282 = vld [vmem:[%s2264 + $0xc8] sm:$0xff]
        %v2283 = vld [vmem:[%s2264 + $0xd8] sm:$0xff]
        %v2284 = vld [vmem:[%s2264 + $0xe0] sm:$0xff]
        %v2285 = vld [vmem:[%s2264 + $0xf0] sm:$0xff]
        %v2286 = vld [vmem:[%s2264 + $0xf8] sm:$0xff]
        %v2287 = vld [vmem:[%s2264 + $0x108] sm:$0xff]
        %v2288 = vld [vmem:[%s2264 + $0x110] sm:$0xff]
        %v2289 = vld [vmem:[%s2264 + $0x120] sm:$0xff]
        %v2290 = vld [vmem:[%s2264 + $0x128] sm:$0xff]
        %v2291 = vld [vmem:[%s2264 + $0x138] sm:$0xff]
        %v2292 = vld [vmem:[%s2264 + $0x140] sm:$0xff]
        %v2293 = vld [vmem:[%s2264 + $0x150] sm:$0xff]
        %v2294 = vld [vmem:[%s2264 + $0x158] sm:$0xff]
        %v2295 = vld [vmem:[%s2264 + $0x168] sm:$0xff]
        %v2296 = vld [vmem:[%s2264 + $0x170] sm:$0xff]
        %s2297 = scalar_lea.vmem [#allocation10], 8
        %v2298 = vld [vmem:[%s2297] sm:$0x1]
        %v2299 = vperm.slane %v2298, 0
        %v2300 = vmul.f32 %v2265, %v2299
        %v2301 = vmul.f32 %v2266, %v2299
        %v2302 = vmul.f32 %v2267, %v2299
        %v2303 = vmul.f32 %v2268, %v2299
        %v2304 = vmul.f32 %v2269, %v2299
        %v2305 = vmul.f32 %v2270, %v2299
        %v2306 = vmul.f32 %v2271, %v2299
        %v2307 = vmul.f32 %v2272, %v2299
        %v2308 = vmul.f32 %v2273, %v2299
        %v2309 = vmul.f32 %v2274, %v2299
        %v2310 = vmul.f32 %v2275, %v2299
        %v2311 = vmul.f32 %v2276, %v2299
        %v2312 = vmul.f32 %v2277, %v2299
        %v2313 = vmul.f32 %v2278, %v2299
        %v2314 = vmul.f32 %v2279, %v2299
        %v2315 = vmul.f32 %v2280, %v2299
        %v2316 = vmul.f32 %v2281, %v2299
        %v2317 = vmul.f32 %v2282, %v2299
        %v2318 = vmul.f32 %v2283, %v2299
        %v2319 = vmul.f32 %v2284, %v2299
        %v2320 = vmul.f32 %v2285, %v2299
        %v2321 = vmul.f32 %v2286, %v2299
        %v2322 = vmul.f32 %v2287, %v2299
        %v2323 = vmul.f32 %v2288, %v2299
        %v2324 = vmul.f32 %v2289, %v2299
        %v2325 = vmul.f32 %v2290, %v2299
        %v2326 = vmul.f32 %v2291, %v2299
        %v2327 = vmul.f32 %v2292, %v2299
        %v2328 = vmul.f32 %v2293, %v2299
        %v2329 = vmul.f32 %v2294, %v2299
        %v2330 = vmul.f32 %v2295, %v2299
        %v2331 = vmul.f32 %v2296, %v2299
        %v2332 = vadd.f32 %v2232, %v2300
        %v2333 = vadd.f32 %v2233, %v2301
        %v2334 = vadd.f32 %v2234, %v2302
        %v2335 = vadd.f32 %v2235, %v2303
        %v2336 = vadd.f32 %v2236, %v2304
        %v2337 = vadd.f32 %v2237, %v2305
        %v2338 = vadd.f32 %v2238, %v2306
        %v2339 = vadd.f32 %v2239, %v2307
        %v2340 = vadd.f32 %v2240, %v2308
        %v2341 = vadd.f32 %v2241, %v2309
        %v2342 = vadd.f32 %v2242, %v2310
        %v2343 = vadd.f32 %v2243, %v2311
        %v2344 = vadd.f32 %v2244, %v2312
        %v2345 = vadd.f32 %v2245, %v2313
        %v2346 = vadd.f32 %v2246, %v2314
        %v2347 = vadd.f32 %v2247, %v2315
        %v2348 = vadd.f32 %v2248, %v2316
        %v2349 = vadd.f32 %v2249, %v2317
        %v2350 = vadd.f32 %v2250, %v2318
        %v2351 = vadd.f32 %v2251, %v2319
        %v2352 = vadd.f32 %v2252, %v2320
        %v2353 = vadd.f32 %v2253, %v2321
        %v2354 = vadd.f32 %v2254, %v2322
        %v2355 = vadd.f32 %v2255, %v2323
        %v2356 = vadd.f32 %v2256, %v2324
        %v2357 = vadd.f32 %v2257, %v2325
        %v2358 = vadd.f32 %v2258, %v2326
        %v2359 = vadd.f32 %v2259, %v2327
        %v2360 = vadd.f32 %v2260, %v2328
        %v2361 = vadd.f32 %v2261, %v2329
        %v2362 = vadd.f32 %v2262, %v2330
        %v2363 = vadd.f32 %v2263, %v2331
        %v2364 = vld [vmem:[%s2264 + $0x1] sm:$0xff]
        %v2365 = vld [vmem:[%s2264 + $0x9] sm:$0xff]
        %v2366 = vld [vmem:[%s2264 + $0x19] sm:$0xff]
        %v2367 = vld [vmem:[%s2264 + $0x21] sm:$0xff]
        %v2368 = vld [vmem:[%s2264 + $0x31] sm:$0xff]
        %v2369 = vld [vmem:[%s2264 + $0x39] sm:$0xff]
        %v2370 = vld [vmem:[%s2264 + $0x49] sm:$0xff]
        %v2371 = vld [vmem:[%s2264 + $0x51] sm:$0xff]
        %v2372 = vld [vmem:[%s2264 + $0x61] sm:$0xff]
        %v2373 = vld [vmem:[%s2264 + $0x69] sm:$0xff]
        %v2374 = vld [vmem:[%s2264 + $0x79] sm:$0xff]
        %v2375 = vld [vmem:[%s2264 + $0x81] sm:$0xff]
        %v2376 = vld [vmem:[%s2264 + $0x91] sm:$0xff]
        %v2377 = vld [vmem:[%s2264 + $0x99] sm:$0xff]
        %v2378 = vld [vmem:[%s2264 + $0xa9] sm:$0xff]
        %v2379 = vld [vmem:[%s2264 + $0xb1] sm:$0xff]
        %v2380 = vld [vmem:[%s2264 + $0xc1] sm:$0xff]
        %v2381 = vld [vmem:[%s2264 + $0xc9] sm:$0xff]
        %v2382 = vld [vmem:[%s2264 + $0xd9] sm:$0xff]
        %v2383 = vld [vmem:[%s2264 + $0xe1] sm:$0xff]
        %v2384 = vld [vmem:[%s2264 + $0xf1] sm:$0xff]
        %v2385 = vld [vmem:[%s2264 + $0xf9] sm:$0xff]
        %v2386 = vld [vmem:[%s2264 + $0x109] sm:$0xff]
        %v2387 = vld [vmem:[%s2264 + $0x111] sm:$0xff]
        %v2388 = vld [vmem:[%s2264 + $0x121] sm:$0xff]
        %v2389 = vld [vmem:[%s2264 + $0x129] sm:$0xff]
        %v2390 = vld [vmem:[%s2264 + $0x139] sm:$0xff]
        %v2391 = vld [vmem:[%s2264 + $0x141] sm:$0xff]
        %v2392 = vld [vmem:[%s2264 + $0x151] sm:$0xff]
        %v2393 = vld [vmem:[%s2264 + $0x159] sm:$0xff]
        %v2394 = vld [vmem:[%s2264 + $0x169] sm:$0xff]
        %v2395 = vld [vmem:[%s2264 + $0x171] sm:$0xff]
        %v2396 = vld [vmem:[%s2297 + $0x1] sm:$0x1]
        %v2397 = vperm.slane %v2396, 0
        %v2398 = vmul.f32 %v2364, %v2397
        %v2399 = vmul.f32 %v2365, %v2397
        %v2400 = vmul.f32 %v2366, %v2397
        %v2401 = vmul.f32 %v2367, %v2397
        %v2402 = vmul.f32 %v2368, %v2397
        %v2403 = vmul.f32 %v2369, %v2397
        %v2404 = vmul.f32 %v2370, %v2397
        %v2405 = vmul.f32 %v2371, %v2397
        %v2406 = vmul.f32 %v2372, %v2397
        %v2407 = vmul.f32 %v2373, %v2397
        %v2408 = vmul.f32 %v2374, %v2397
        %v2409 = vmul.f32 %v2375, %v2397
        %v2410 = vmul.f32 %v2376, %v2397
        %v2411 = vmul.f32 %v2377, %v2397
        %v2412 = vmul.f32 %v2378, %v2397
        %v2413 = vmul.f32 %v2379, %v2397
        %v2414 = vmul.f32 %v2380, %v2397
        %v2415 = vmul.f32 %v2381, %v2397
        %v2416 = vmul.f32 %v2382, %v2397
        %v2417 = vmul.f32 %v2383, %v2397
        %v2418 = vmul.f32 %v2384, %v2397
        %v2419 = vmul.f32 %v2385, %v2397
        %v2420 = vmul.f32 %v2386, %v2397
        %v2421 = vmul.f32 %v2387, %v2397
        %v2422 = vmul.f32 %v2388, %v2397
        %v2423 = vmul.f32 %v2389, %v2397
        %v2424 = vmul.f32 %v2390, %v2397
        %v2425 = vmul.f32 %v2391, %v2397
        %v2426 = vmul.f32 %v2392, %v2397
        %v2427 = vmul.f32 %v2393, %v2397
        %v2428 = vmul.f32 %v2394, %v2397
        %v2429 = vmul.f32 %v2395, %v2397
        %v2430 = vadd.f32 %v2332, %v2398
        %v2431 = vadd.f32 %v2333, %v2399
        %v2432 = vadd.f32 %v2334, %v2400
        %v2433 = vadd.f32 %v2335, %v2401
        %v2434 = vadd.f32 %v2336, %v2402
        %v2435 = vadd.f32 %v2337, %v2403
        %v2436 = vadd.f32 %v2338, %v2404
        %v2437 = vadd.f32 %v2339, %v2405
        %v2438 = vadd.f32 %v2340, %v2406
        %v2439 = vadd.f32 %v2341, %v2407
        %v2440 = vadd.f32 %v2342, %v2408
        %v2441 = vadd.f32 %v2343, %v2409
        %v2442 = vadd.f32 %v2344, %v2410
        %v2443 = vadd.f32 %v2345, %v2411
        %v2444 = vadd.f32 %v2346, %v2412
        %v2445 = vadd.f32 %v2347, %v2413
        %v2446 = vadd.f32 %v2348, %v2414
        %v2447 = vadd.f32 %v2349, %v2415
        %v2448 = vadd.f32 %v2350, %v2416
        %v2449 = vadd.f32 %v2351, %v2417
        %v2450 = vadd.f32 %v2352, %v2418
        %v2451 = vadd.f32 %v2353, %v2419
        %v2452 = vadd.f32 %v2354, %v2420
        %v2453 = vadd.f32 %v2355, %v2421
        %v2454 = vadd.f32 %v2356, %v2422
        %v2455 = vadd.f32 %v2357, %v2423
        %v2456 = vadd.f32 %v2358, %v2424
        %v2457 = vadd.f32 %v2359, %v2425
        %v2458 = vadd.f32 %v2360, %v2426
        %v2459 = vadd.f32 %v2361, %v2427
        %v2460 = vadd.f32 %v2362, %v2428
        %v2461 = vadd.f32 %v2363, %v2429
        %v2462 = vld [vmem:[%s2264 + $0x2] sm:$0xff]
        %v2463 = vld [vmem:[%s2264 + $0xa] sm:$0xff]
        %v2464 = vld [vmem:[%s2264 + $0x1a] sm:$0xff]
        %v2465 = vld [vmem:[%s2264 + $0x22] sm:$0xff]
        %v2466 = vld [vmem:[%s2264 + $0x32] sm:$0xff]
        %v2467 = vld [vmem:[%s2264 + $0x3a] sm:$0xff]
        %v2468 = vld [vmem:[%s2264 + $0x4a] sm:$0xff]
        %v2469 = vld [vmem:[%s2264 + $0x52] sm:$0xff]
        %v2470 = vld [vmem:[%s2264 + $0x62] sm:$0xff]
        %v2471 = vld [vmem:[%s2264 + $0x6a] sm:$0xff]
        %v2472 = vld [vmem:[%s2264 + $0x7a] sm:$0xff]
        %v2473 = vld [vmem:[%s2264 + $0x82] sm:$0xff]
        %v2474 = vld [vmem:[%s2264 + $0x92] sm:$0xff]
        %v2475 = vld [vmem:[%s2264 + $0x9a] sm:$0xff]
        %v2476 = vld [vmem:[%s2264 + $0xaa] sm:$0xff]
        %v2477 = vld [vmem:[%s2264 + $0xb2] sm:$0xff]
        %v2478 = vld [vmem:[%s2264 + $0xc2] sm:$0xff]
        %v2479 = vld [vmem:[%s2264 + $0xca] sm:$0xff]
        %v2480 = vld [vmem:[%s2264 + $0xda] sm:$0xff]
        %v2481 = vld [vmem:[%s2264 + $0xe2] sm:$0xff]
        %v2482 = vld [vmem:[%s2264 + $0xf2] sm:$0xff]
        %v2483 = vld [vmem:[%s2264 + $0xfa] sm:$0xff]
        %v2484 = vld [vmem:[%s2264 + $0x10a] sm:$0xff]
        %v2485 = vld [vmem:[%s2264 + $0x112] sm:$0xff]
        %v2486 = vld [vmem:[%s2264 + $0x122] sm:$0xff]
        %v2487 = vld [vmem:[%s2264 + $0x12a] sm:$0xff]
        %v2488 = vld [vmem:[%s2264 + $0x13a] sm:$0xff]
        %v2489 = vld [vmem:[%s2264 + $0x142] sm:$0xff]
        %v2490 = vld [vmem:[%s2264 + $0x152] sm:$0xff]
        %v2491 = vld [vmem:[%s2264 + $0x15a] sm:$0xff]
        %v2492 = vld [vmem:[%s2264 + $0x16a] sm:$0xff]
        %v2493 = vld [vmem:[%s2264 + $0x172] sm:$0xff]
        %v2494 = vld [vmem:[%s2297 + $0x2] sm:$0x1]
        %v2495 = vperm.slane %v2494, 0
        %v2496 = vmul.f32 %v2462, %v2495
        %v2497 = vmul.f32 %v2463, %v2495
        %v2498 = vmul.f32 %v2464, %v2495
        %v2499 = vmul.f32 %v2465, %v2495
        %v2500 = vmul.f32 %v2466, %v2495
        %v2501 = vmul.f32 %v2467, %v2495
        %v2502 = vmul.f32 %v2468, %v2495
        %v2503 = vmul.f32 %v2469, %v2495
        %v2504 = vmul.f32 %v2470, %v2495
        %v2505 = vmul.f32 %v2471, %v2495
        %v2506 = vmul.f32 %v2472, %v2495
        %v2507 = vmul.f32 %v2473, %v2495
        %v2508 = vmul.f32 %v2474, %v2495
        %v2509 = vmul.f32 %v2475, %v2495
        %v2510 = vmul.f32 %v2476, %v2495
        %v2511 = vmul.f32 %v2477, %v2495
        %v2512 = vmul.f32 %v2478, %v2495
        %v2513 = vmul.f32 %v2479, %v2495
        %v2514 = vmul.f32 %v2480, %v2495
        %v2515 = vmul.f32 %v2481, %v2495
        %v2516 = vmul.f32 %v2482, %v2495
        %v2517 = vmul.f32 %v2483, %v2495
        %v2518 = vmul.f32 %v2484, %v2495
        %v2519 = vmul.f32 %v2485, %v2495
        %v2520 = vmul.f32 %v2486, %v2495
        %v2521 = vmul.f32 %v2487, %v2495
        %v2522 = vmul.f32 %v2488, %v2495
        %v2523 = vmul.f32 %v2489, %v2495
        %v2524 = vmul.f32 %v2490, %v2495
        %v2525 = vmul.f32 %v2491, %v2495
        %v2526 = vmul.f32 %v2492, %v2495
        %v2527 = vmul.f32 %v2493, %v2495
        %v2528 = vadd.f32 %v2430, %v2496
        %v2529 = vadd.f32 %v2431, %v2497
        %v2530 = vadd.f32 %v2432, %v2498
        %v2531 = vadd.f32 %v2433, %v2499
        %v2532 = vadd.f32 %v2434, %v2500
        %v2533 = vadd.f32 %v2435, %v2501
        %v2534 = vadd.f32 %v2436, %v2502
        %v2535 = vadd.f32 %v2437, %v2503
        %v2536 = vadd.f32 %v2438, %v2504
        %v2537 = vadd.f32 %v2439, %v2505
        %v2538 = vadd.f32 %v2440, %v2506
        %v2539 = vadd.f32 %v2441, %v2507
        %v2540 = vadd.f32 %v2442, %v2508
        %v2541 = vadd.f32 %v2443, %v2509
        %v2542 = vadd.f32 %v2444, %v2510
        %v2543 = vadd.f32 %v2445, %v2511
        %v2544 = vadd.f32 %v2446, %v2512
        %v2545 = vadd.f32 %v2447, %v2513
        %v2546 = vadd.f32 %v2448, %v2514
        %v2547 = vadd.f32 %v2449, %v2515
        %v2548 = vadd.f32 %v2450, %v2516
        %v2549 = vadd.f32 %v2451, %v2517
        %v2550 = vadd.f32 %v2452, %v2518
        %v2551 = vadd.f32 %v2453, %v2519
        %v2552 = vadd.f32 %v2454, %v2520
        %v2553 = vadd.f32 %v2455, %v2521
        %v2554 = vadd.f32 %v2456, %v2522
        %v2555 = vadd.f32 %v2457, %v2523
        %v2556 = vadd.f32 %v2458, %v2524
        %v2557 = vadd.f32 %v2459, %v2525
        %v2558 = vadd.f32 %v2460, %v2526
        %v2559 = vadd.f32 %v2461, %v2527
        %v2560 = vld [vmem:[%s2264 + $0x3] sm:$0xff]
        %v2561 = vld [vmem:[%s2264 + $0xb] sm:$0xff]
        %v2562 = vld [vmem:[%s2264 + $0x1b] sm:$0xff]
        %v2563 = vld [vmem:[%s2264 + $0x23] sm:$0xff]
        %v2564 = vld [vmem:[%s2264 + $0x33] sm:$0xff]
        %v2565 = vld [vmem:[%s2264 + $0x3b] sm:$0xff]
        %v2566 = vld [vmem:[%s2264 + $0x4b] sm:$0xff]
        %v2567 = vld [vmem:[%s2264 + $0x53] sm:$0xff]
        %v2568 = vld [vmem:[%s2264 + $0x63] sm:$0xff]
        %v2569 = vld [vmem:[%s2264 + $0x6b] sm:$0xff]
        %v2570 = vld [vmem:[%s2264 + $0x7b] sm:$0xff]
        %v2571 = vld [vmem:[%s2264 + $0x83] sm:$0xff]
        %v2572 = vld [vmem:[%s2264 + $0x93] sm:$0xff]
        %v2573 = vld [vmem:[%s2264 + $0x9b] sm:$0xff]
        %v2574 = vld [vmem:[%s2264 + $0xab] sm:$0xff]
        %v2575 = vld [vmem:[%s2264 + $0xb3] sm:$0xff]
        %v2576 = vld [vmem:[%s2264 + $0xc3] sm:$0xff]
        %v2577 = vld [vmem:[%s2264 + $0xcb] sm:$0xff]
        %v2578 = vld [vmem:[%s2264 + $0xdb] sm:$0xff]
        %v2579 = vld [vmem:[%s2264 + $0xe3] sm:$0xff]
        %v2580 = vld [vmem:[%s2264 + $0xf3] sm:$0xff]
        %v2581 = vld [vmem:[%s2264 + $0xfb] sm:$0xff]
        %v2582 = vld [vmem:[%s2264 + $0x10b] sm:$0xff]
        %v2583 = vld [vmem:[%s2264 + $0x113] sm:$0xff]
        %v2584 = vld [vmem:[%s2264 + $0x123] sm:$0xff]
        %v2585 = vld [vmem:[%s2264 + $0x12b] sm:$0xff]
        %v2586 = vld [vmem:[%s2264 + $0x13b] sm:$0xff]
        %v2587 = vld [vmem:[%s2264 + $0x143] sm:$0xff]
        %v2588 = vld [vmem:[%s2264 + $0x153] sm:$0xff]
        %v2589 = vld [vmem:[%s2264 + $0x15b] sm:$0xff]
        %v2590 = vld [vmem:[%s2264 + $0x16b] sm:$0xff]
        %v2591 = vld [vmem:[%s2264 + $0x173] sm:$0xff]
        %v2592 = vld [vmem:[%s2297 + $0x3] sm:$0x1]
        %v2593 = vperm.slane %v2592, 0
        %v2594 = vmul.f32 %v2560, %v2593
        %v2595 = vmul.f32 %v2561, %v2593
        %v2596 = vmul.f32 %v2562, %v2593
        %v2597 = vmul.f32 %v2563, %v2593
        %v2598 = vmul.f32 %v2564, %v2593
        %v2599 = vmul.f32 %v2565, %v2593
        %v2600 = vmul.f32 %v2566, %v2593
        %v2601 = vmul.f32 %v2567, %v2593
        %v2602 = vmul.f32 %v2568, %v2593
        %v2603 = vmul.f32 %v2569, %v2593
        %v2604 = vmul.f32 %v2570, %v2593
        %v2605 = vmul.f32 %v2571, %v2593
        %v2606 = vmul.f32 %v2572, %v2593
        %v2607 = vmul.f32 %v2573, %v2593
        %v2608 = vmul.f32 %v2574, %v2593
        %v2609 = vmul.f32 %v2575, %v2593
        %v2610 = vmul.f32 %v2576, %v2593
        %v2611 = vmul.f32 %v2577, %v2593
        %v2612 = vmul.f32 %v2578, %v2593
        %v2613 = vmul.f32 %v2579, %v2593
        %v2614 = vmul.f32 %v2580, %v2593
        %v2615 = vmul.f32 %v2581, %v2593
        %v2616 = vmul.f32 %v2582, %v2593
        %v2617 = vmul.f32 %v2583, %v2593
        %v2618 = vmul.f32 %v2584, %v2593
        %v2619 = vmul.f32 %v2585, %v2593
        %v2620 = vmul.f32 %v2586, %v2593
        %v2621 = vmul.f32 %v2587, %v2593
        %v2622 = vmul.f32 %v2588, %v2593
        %v2623 = vmul.f32 %v2589, %v2593
        %v2624 = vmul.f32 %v2590, %v2593
        %v2625 = vmul.f32 %v2591, %v2593
        %v2626 = vadd.f32 %v2528, %v2594
        %v2627 = vadd.f32 %v2529, %v2595
        %v2628 = vadd.f32 %v2530, %v2596
        %v2629 = vadd.f32 %v2531, %v2597
        %v2630 = vadd.f32 %v2532, %v2598
        %v2631 = vadd.f32 %v2533, %v2599
        %v2632 = vadd.f32 %v2534, %v2600
        %v2633 = vadd.f32 %v2535, %v2601
        %v2634 = vadd.f32 %v2536, %v2602
        %v2635 = vadd.f32 %v2537, %v2603
        %v2636 = vadd.f32 %v2538, %v2604
        %v2637 = vadd.f32 %v2539, %v2605
        %v2638 = vadd.f32 %v2540, %v2606
        %v2639 = vadd.f32 %v2541, %v2607
        %v2640 = vadd.f32 %v2542, %v2608
        %v2641 = vadd.f32 %v2543, %v2609
        %v2642 = vadd.f32 %v2544, %v2610
        %v2643 = vadd.f32 %v2545, %v2611
        %v2644 = vadd.f32 %v2546, %v2612
        %v2645 = vadd.f32 %v2547, %v2613
        %v2646 = vadd.f32 %v2548, %v2614
        %v2647 = vadd.f32 %v2549, %v2615
        %v2648 = vadd.f32 %v2550, %v2616
        %v2649 = vadd.f32 %v2551, %v2617
        %v2650 = vadd.f32 %v2552, %v2618
        %v2651 = vadd.f32 %v2553, %v2619
        %v2652 = vadd.f32 %v2554, %v2620
        %v2653 = vadd.f32 %v2555, %v2621
        %v2654 = vadd.f32 %v2556, %v2622
        %v2655 = vadd.f32 %v2557, %v2623
        %v2656 = vadd.f32 %v2558, %v2624
        %v2657 = vadd.f32 %v2559, %v2625
        %v2658 = vld [vmem:[%s2264 + $0x4] sm:$0xff]
        %v2659 = vld [vmem:[%s2264 + $0xc] sm:$0xff]
        %v2660 = vld [vmem:[%s2264 + $0x1c] sm:$0xff]
        %v2661 = vld [vmem:[%s2264 + $0x24] sm:$0xff]
        %v2662 = vld [vmem:[%s2264 + $0x34] sm:$0xff]
        %v2663 = vld [vmem:[%s2264 + $0x3c] sm:$0xff]
        %v2664 = vld [vmem:[%s2264 + $0x4c] sm:$0xff]
        %v2665 = vld [vmem:[%s2264 + $0x54] sm:$0xff]
        %v2666 = vld [vmem:[%s2264 + $0x64] sm:$0xff]
        %v2667 = vld [vmem:[%s2264 + $0x6c] sm:$0xff]
        %v2668 = vld [vmem:[%s2264 + $0x7c] sm:$0xff]
        %v2669 = vld [vmem:[%s2264 + $0x84] sm:$0xff]
        %v2670 = vld [vmem:[%s2264 + $0x94] sm:$0xff]
        %v2671 = vld [vmem:[%s2264 + $0x9c] sm:$0xff]
        %v2672 = vld [vmem:[%s2264 + $0xac] sm:$0xff]
        %v2673 = vld [vmem:[%s2264 + $0xb4] sm:$0xff]
        %v2674 = vld [vmem:[%s2264 + $0xc4] sm:$0xff]
        %v2675 = vld [vmem:[%s2264 + $0xcc] sm:$0xff]
        %v2676 = vld [vmem:[%s2264 + $0xdc] sm:$0xff]
        %v2677 = vld [vmem:[%s2264 + $0xe4] sm:$0xff]
        %v2678 = vld [vmem:[%s2264 + $0xf4] sm:$0xff]
        %v2679 = vld [vmem:[%s2264 + $0xfc] sm:$0xff]
        %v2680 = vld [vmem:[%s2264 + $0x10c] sm:$0xff]
        %v2681 = vld [vmem:[%s2264 + $0x114] sm:$0xff]
        %v2682 = vld [vmem:[%s2264 + $0x124] sm:$0xff]
        %v2683 = vld [vmem:[%s2264 + $0x12c] sm:$0xff]
        %v2684 = vld [vmem:[%s2264 + $0x13c] sm:$0xff]
        %v2685 = vld [vmem:[%s2264 + $0x144] sm:$0xff]
        %v2686 = vld [vmem:[%s2264 + $0x154] sm:$0xff]
        %v2687 = vld [vmem:[%s2264 + $0x15c] sm:$0xff]
        %v2688 = vld [vmem:[%s2264 + $0x16c] sm:$0xff]
        %v2689 = vld [vmem:[%s2264 + $0x174] sm:$0xff]
        %v2690 = vld [vmem:[%s2297 + $0x4] sm:$0x1]
        %v2691 = vperm.slane %v2690, 0
        %v2692 = vmul.f32 %v2658, %v2691
        %v2693 = vmul.f32 %v2659, %v2691
        %v2694 = vmul.f32 %v2660, %v2691
        %v2695 = vmul.f32 %v2661, %v2691
        %v2696 = vmul.f32 %v2662, %v2691
        %v2697 = vmul.f32 %v2663, %v2691
        %v2698 = vmul.f32 %v2664, %v2691
        %v2699 = vmul.f32 %v2665, %v2691
        %v2700 = vmul.f32 %v2666, %v2691
        %v2701 = vmul.f32 %v2667, %v2691
        %v2702 = vmul.f32 %v2668, %v2691
        %v2703 = vmul.f32 %v2669, %v2691
        %v2704 = vmul.f32 %v2670, %v2691
        %v2705 = vmul.f32 %v2671, %v2691
        %v2706 = vmul.f32 %v2672, %v2691
        %v2707 = vmul.f32 %v2673, %v2691
        %v2708 = vmul.f32 %v2674, %v2691
        %v2709 = vmul.f32 %v2675, %v2691
        %v2710 = vmul.f32 %v2676, %v2691
        %v2711 = vmul.f32 %v2677, %v2691
        %v2712 = vmul.f32 %v2678, %v2691
        %v2713 = vmul.f32 %v2679, %v2691
        %v2714 = vmul.f32 %v2680, %v2691
        %v2715 = vmul.f32 %v2681, %v2691
        %v2716 = vmul.f32 %v2682, %v2691
        %v2717 = vmul.f32 %v2683, %v2691
        %v2718 = vmul.f32 %v2684, %v2691
        %v2719 = vmul.f32 %v2685, %v2691
        %v2720 = vmul.f32 %v2686, %v2691
        %v2721 = vmul.f32 %v2687, %v2691
        %v2722 = vmul.f32 %v2688, %v2691
        %v2723 = vmul.f32 %v2689, %v2691
        %v2724 = vadd.f32 %v2626, %v2692
        %v2725 = vadd.f32 %v2627, %v2693
        %v2726 = vadd.f32 %v2628, %v2694
        %v2727 = vadd.f32 %v2629, %v2695
        %v2728 = vadd.f32 %v2630, %v2696
        %v2729 = vadd.f32 %v2631, %v2697
        %v2730 = vadd.f32 %v2632, %v2698
        %v2731 = vadd.f32 %v2633, %v2699
        %v2732 = vadd.f32 %v2634, %v2700
        %v2733 = vadd.f32 %v2635, %v2701
        %v2734 = vadd.f32 %v2636, %v2702
        %v2735 = vadd.f32 %v2637, %v2703
        %v2736 = vadd.f32 %v2638, %v2704
        %v2737 = vadd.f32 %v2639, %v2705
        %v2738 = vadd.f32 %v2640, %v2706
        %v2739 = vadd.f32 %v2641, %v2707
        %v2740 = vadd.f32 %v2642, %v2708
        %v2741 = vadd.f32 %v2643, %v2709
        %v2742 = vadd.f32 %v2644, %v2710
        %v2743 = vadd.f32 %v2645, %v2711
        %v2744 = vadd.f32 %v2646, %v2712
        %v2745 = vadd.f32 %v2647, %v2713
        %v2746 = vadd.f32 %v2648, %v2714
        %v2747 = vadd.f32 %v2649, %v2715
        %v2748 = vadd.f32 %v2650, %v2716
        %v2749 = vadd.f32 %v2651, %v2717
        %v2750 = vadd.f32 %v2652, %v2718
        %v2751 = vadd.f32 %v2653, %v2719
        %v2752 = vadd.f32 %v2654, %v2720
        %v2753 = vadd.f32 %v2655, %v2721
        %v2754 = vadd.f32 %v2656, %v2722
        %v2755 = vadd.f32 %v2657, %v2723
        %v2756 = vld [vmem:[%s2264 + $0x5] sm:$0xff]
        %v2757 = vld [vmem:[%s2264 + $0xd] sm:$0xff]
        %v2758 = vld [vmem:[%s2264 + $0x1d] sm:$0xff]
        %v2759 = vld [vmem:[%s2264 + $0x25] sm:$0xff]
        %v2760 = vld [vmem:[%s2264 + $0x35] sm:$0xff]
        %v2761 = vld [vmem:[%s2264 + $0x3d] sm:$0xff]
        %v2762 = vld [vmem:[%s2264 + $0x4d] sm:$0xff]
        %v2763 = vld [vmem:[%s2264 + $0x55] sm:$0xff]
        %v2764 = vld [vmem:[%s2264 + $0x65] sm:$0xff]
        %v2765 = vld [vmem:[%s2264 + $0x6d] sm:$0xff]
        %v2766 = vld [vmem:[%s2264 + $0x7d] sm:$0xff]
        %v2767 = vld [vmem:[%s2264 + $0x85] sm:$0xff]
        %v2768 = vld [vmem:[%s2264 + $0x95] sm:$0xff]
        %v2769 = vld [vmem:[%s2264 + $0x9d] sm:$0xff]
        %v2770 = vld [vmem:[%s2264 + $0xad] sm:$0xff]
        %v2771 = vld [vmem:[%s2264 + $0xb5] sm:$0xff]
        %v2772 = vld [vmem:[%s2264 + $0xc5] sm:$0xff]
        %v2773 = vld [vmem:[%s2264 + $0xcd] sm:$0xff]
        %v2774 = vld [vmem:[%s2264 + $0xdd] sm:$0xff]
        %v2775 = vld [vmem:[%s2264 + $0xe5] sm:$0xff]
        %v2776 = vld [vmem:[%s2264 + $0xf5] sm:$0xff]
        %v2777 = vld [vmem:[%s2264 + $0xfd] sm:$0xff]
        %v2778 = vld [vmem:[%s2264 + $0x10d] sm:$0xff]
        %v2779 = vld [vmem:[%s2264 + $0x115] sm:$0xff]
        %v2780 = vld [vmem:[%s2264 + $0x125] sm:$0xff]
        %v2781 = vld [vmem:[%s2264 + $0x12d] sm:$0xff]
        %v2782 = vld [vmem:[%s2264 + $0x13d] sm:$0xff]
        %v2783 = vld [vmem:[%s2264 + $0x145] sm:$0xff]
        %v2784 = vld [vmem:[%s2264 + $0x155] sm:$0xff]
        %v2785 = vld [vmem:[%s2264 + $0x15d] sm:$0xff]
        %v2786 = vld [vmem:[%s2264 + $0x16d] sm:$0xff]
        %v2787 = vld [vmem:[%s2264 + $0x175] sm:$0xff]
        %v2788 = vld [vmem:[%s2297 + $0x5] sm:$0x1]
        %v2789 = vperm.slane %v2788, 0
        %v2790 = vmul.f32 %v2756, %v2789
        %v2791 = vmul.f32 %v2757, %v2789
        %v2792 = vmul.f32 %v2758, %v2789
        %v2793 = vmul.f32 %v2759, %v2789
        %v2794 = vmul.f32 %v2760, %v2789
        %v2795 = vmul.f32 %v2761, %v2789
        %v2796 = vmul.f32 %v2762, %v2789
        %v2797 = vmul.f32 %v2763, %v2789
        %v2798 = vmul.f32 %v2764, %v2789
        %v2799 = vmul.f32 %v2765, %v2789
        %v2800 = vmul.f32 %v2766, %v2789
        %v2801 = vmul.f32 %v2767, %v2789
        %v2802 = vmul.f32 %v2768, %v2789
        %v2803 = vmul.f32 %v2769, %v2789
        %v2804 = vmul.f32 %v2770, %v2789
        %v2805 = vmul.f32 %v2771, %v2789
        %v2806 = vmul.f32 %v2772, %v2789
        %v2807 = vmul.f32 %v2773, %v2789
        %v2808 = vmul.f32 %v2774, %v2789
        %v2809 = vmul.f32 %v2775, %v2789
        %v2810 = vmul.f32 %v2776, %v2789
        %v2811 = vmul.f32 %v2777, %v2789
        %v2812 = vmul.f32 %v2778, %v2789
        %v2813 = vmul.f32 %v2779, %v2789
        %v2814 = vmul.f32 %v2780, %v2789
        %v2815 = vmul.f32 %v2781, %v2789
        %v2816 = vmul.f32 %v2782, %v2789
        %v2817 = vmul.f32 %v2783, %v2789
        %v2818 = vmul.f32 %v2784, %v2789
        %v2819 = vmul.f32 %v2785, %v2789
        %v2820 = vmul.f32 %v2786, %v2789
        %v2821 = vmul.f32 %v2787, %v2789
        %v2822 = vadd.f32 %v2724, %v2790
        %v2823 = vadd.f32 %v2725, %v2791
        %v2824 = vadd.f32 %v2726, %v2792
        %v2825 = vadd.f32 %v2727, %v2793
        %v2826 = vadd.f32 %v2728, %v2794
        %v2827 = vadd.f32 %v2729, %v2795
        %v2828 = vadd.f32 %v2730, %v2796
        %v2829 = vadd.f32 %v2731, %v2797
        %v2830 = vadd.f32 %v2732, %v2798
        %v2831 = vadd.f32 %v2733, %v2799
        %v2832 = vadd.f32 %v2734, %v2800
        %v2833 = vadd.f32 %v2735, %v2801
        %v2834 = vadd.f32 %v2736, %v2802
        %v2835 = vadd.f32 %v2737, %v2803
        %v2836 = vadd.f32 %v2738, %v2804
        %v2837 = vadd.f32 %v2739, %v2805
        %v2838 = vadd.f32 %v2740, %v2806
        %v2839 = vadd.f32 %v2741, %v2807
        %v2840 = vadd.f32 %v2742, %v2808
        %v2841 = vadd.f32 %v2743, %v2809
        %v2842 = vadd.f32 %v2744, %v2810
        %v2843 = vadd.f32 %v2745, %v2811
        %v2844 = vadd.f32 %v2746, %v2812
        %v2845 = vadd.f32 %v2747, %v2813
        %v2846 = vadd.f32 %v2748, %v2814
        %v2847 = vadd.f32 %v2749, %v2815
        %v2848 = vadd.f32 %v2750, %v2816
        %v2849 = vadd.f32 %v2751, %v2817
        %v2850 = vadd.f32 %v2752, %v2818
        %v2851 = vadd.f32 %v2753, %v2819
        %v2852 = vadd.f32 %v2754, %v2820
        %v2853 = vadd.f32 %v2755, %v2821
        %v2854 = vld [vmem:[%s2264 + $0x6] sm:$0xff]
        %v2855 = vld [vmem:[%s2264 + $0xe] sm:$0xff]
        %v2856 = vld [vmem:[%s2264 + $0x1e] sm:$0xff]
        %v2857 = vld [vmem:[%s2264 + $0x26] sm:$0xff]
        %v2858 = vld [vmem:[%s2264 + $0x36] sm:$0xff]
        %v2859 = vld [vmem:[%s2264 + $0x3e] sm:$0xff]
        %v2860 = vld [vmem:[%s2264 + $0x4e] sm:$0xff]
        %v2861 = vld [vmem:[%s2264 + $0x56] sm:$0xff]
        %v2862 = vld [vmem:[%s2264 + $0x66] sm:$0xff]
        %v2863 = vld [vmem:[%s2264 + $0x6e] sm:$0xff]
        %v2864 = vld [vmem:[%s2264 + $0x7e] sm:$0xff]
        %v2865 = vld [vmem:[%s2264 + $0x86] sm:$0xff]
        %v2866 = vld [vmem:[%s2264 + $0x96] sm:$0xff]
        %v2867 = vld [vmem:[%s2264 + $0x9e] sm:$0xff]
        %v2868 = vld [vmem:[%s2264 + $0xae] sm:$0xff]
        %v2869 = vld [vmem:[%s2264 + $0xb6] sm:$0xff]
        %v2870 = vld [vmem:[%s2264 + $0xc6] sm:$0xff]
        %v2871 = vld [vmem:[%s2264 + $0xce] sm:$0xff]
        %v2872 = vld [vmem:[%s2264 + $0xde] sm:$0xff]
        %v2873 = vld [vmem:[%s2264 + $0xe6] sm:$0xff]
        %v2874 = vld [vmem:[%s2264 + $0xf6] sm:$0xff]
        %v2875 = vld [vmem:[%s2264 + $0xfe] sm:$0xff]
        %v2876 = vld [vmem:[%s2264 + $0x10e] sm:$0xff]
        %v2877 = vld [vmem:[%s2264 + $0x116] sm:$0xff]
        %v2878 = vld [vmem:[%s2264 + $0x126] sm:$0xff]
        %v2879 = vld [vmem:[%s2264 + $0x12e] sm:$0xff]
        %v2880 = vld [vmem:[%s2264 + $0x13e] sm:$0xff]
        %v2881 = vld [vmem:[%s2264 + $0x146] sm:$0xff]
        %v2882 = vld [vmem:[%s2264 + $0x156] sm:$0xff]
        %v2883 = vld [vmem:[%s2264 + $0x15e] sm:$0xff]
        %v2884 = vld [vmem:[%s2264 + $0x16e] sm:$0xff]
        %v2885 = vld [vmem:[%s2264 + $0x176] sm:$0xff]
        %v2886 = vld [vmem:[%s2297 + $0x6] sm:$0x1]
        %v2887 = vperm.slane %v2886, 0
        %v2888 = vmul.f32 %v2854, %v2887
        %v2889 = vmul.f32 %v2855, %v2887
        %v2890 = vmul.f32 %v2856, %v2887
        %v2891 = vmul.f32 %v2857, %v2887
        %v2892 = vmul.f32 %v2858, %v2887
        %v2893 = vmul.f32 %v2859, %v2887
        %v2894 = vmul.f32 %v2860, %v2887
        %v2895 = vmul.f32 %v2861, %v2887
        %v2896 = vmul.f32 %v2862, %v2887
        %v2897 = vmul.f32 %v2863, %v2887
        %v2898 = vmul.f32 %v2864, %v2887
        %v2899 = vmul.f32 %v2865, %v2887
        %v2900 = vmul.f32 %v2866, %v2887
        %v2901 = vmul.f32 %v2867, %v2887
        %v2902 = vmul.f32 %v2868, %v2887
        %v2903 = vmul.f32 %v2869, %v2887
        %v2904 = vmul.f32 %v2870, %v2887
        %v2905 = vmul.f32 %v2871, %v2887
        %v2906 = vmul.f32 %v2872, %v2887
        %v2907 = vmul.f32 %v2873, %v2887
        %v2908 = vmul.f32 %v2874, %v2887
        %v2909 = vmul.f32 %v2875, %v2887
        %v2910 = vmul.f32 %v2876, %v2887
        %v2911 = vmul.f32 %v2877, %v2887
        %v2912 = vmul.f32 %v2878, %v2887
        %v2913 = vmul.f32 %v2879, %v2887
        %v2914 = vmul.f32 %v2880, %v2887
        %v2915 = vmul.f32 %v2881, %v2887
        %v2916 = vmul.f32 %v2882, %v2887
        %v2917 = vmul.f32 %v2883, %v2887
        %v2918 = vmul.f32 %v2884, %v2887
        %v2919 = vmul.f32 %v2885, %v2887
        %v2920 = vadd.f32 %v2822, %v2888
        %v2921 = vadd.f32 %v2823, %v2889
        %v2922 = vadd.f32 %v2824, %v2890
        %v2923 = vadd.f32 %v2825, %v2891
        %v2924 = vadd.f32 %v2826, %v2892
        %v2925 = vadd.f32 %v2827, %v2893
        %v2926 = vadd.f32 %v2828, %v2894
        %v2927 = vadd.f32 %v2829, %v2895
        %v2928 = vadd.f32 %v2830, %v2896
        %v2929 = vadd.f32 %v2831, %v2897
        %v2930 = vadd.f32 %v2832, %v2898
        %v2931 = vadd.f32 %v2833, %v2899
        %v2932 = vadd.f32 %v2834, %v2900
        %v2933 = vadd.f32 %v2835, %v2901
        %v2934 = vadd.f32 %v2836, %v2902
        %v2935 = vadd.f32 %v2837, %v2903
        %v2936 = vadd.f32 %v2838, %v2904
        %v2937 = vadd.f32 %v2839, %v2905
        %v2938 = vadd.f32 %v2840, %v2906
        %v2939 = vadd.f32 %v2841, %v2907
        %v2940 = vadd.f32 %v2842, %v2908
        %v2941 = vadd.f32 %v2843, %v2909
        %v2942 = vadd.f32 %v2844, %v2910
        %v2943 = vadd.f32 %v2845, %v2911
        %v2944 = vadd.f32 %v2846, %v2912
        %v2945 = vadd.f32 %v2847, %v2913
        %v2946 = vadd.f32 %v2848, %v2914
        %v2947 = vadd.f32 %v2849, %v2915
        %v2948 = vadd.f32 %v2850, %v2916
        %v2949 = vadd.f32 %v2851, %v2917
        %v2950 = vadd.f32 %v2852, %v2918
        %v2951 = vadd.f32 %v2853, %v2919
        %s2952 = scalar_lea.vmem [#allocation3], 48
        %v2953 = vld [vmem:[%s2952] sm:$0xff]
        %v2954 = vld [vmem:[%s2952 + $0x8] sm:$0xff]
        %v2955 = vld [vmem:[%s2952 + $0x18] sm:$0xff]
        %v2956 = vld [vmem:[%s2952 + $0x20] sm:$0xff]
        %v2957 = vld [vmem:[%s2952 + $0x30] sm:$0xff]
        %v2958 = vld [vmem:[%s2952 + $0x38] sm:$0xff]
        %v2959 = vld [vmem:[%s2952 + $0x48] sm:$0xff]
        %v2960 = vld [vmem:[%s2952 + $0x50] sm:$0xff]
        %v2961 = vld [vmem:[%s2952 + $0x60] sm:$0xff]
        %v2962 = vld [vmem:[%s2952 + $0x68] sm:$0xff]
        %v2963 = vld [vmem:[%s2952 + $0x78] sm:$0xff]
        %v2964 = vld [vmem:[%s2952 + $0x80] sm:$0xff]
        %v2965 = vld [vmem:[%s2952 + $0x90] sm:$0xff]
        %v2966 = vld [vmem:[%s2952 + $0x98] sm:$0xff]
        %v2967 = vld [vmem:[%s2952 + $0xa8] sm:$0xff]
        %v2968 = vld [vmem:[%s2952 + $0xb0] sm:$0xff]
        %v2969 = vld [vmem:[%s2952 + $0xc0] sm:$0xff]
        %v2970 = vld [vmem:[%s2952 + $0xc8] sm:$0xff]
        %v2971 = vld [vmem:[%s2952 + $0xd8] sm:$0xff]
        %v2972 = vld [vmem:[%s2952 + $0xe0] sm:$0xff]
        %v2973 = vld [vmem:[%s2952 + $0xf0] sm:$0xff]
        %v2974 = vld [vmem:[%s2952 + $0xf8] sm:$0xff]
        %v2975 = vld [vmem:[%s2952 + $0x108] sm:$0xff]
        %v2976 = vld [vmem:[%s2952 + $0x110] sm:$0xff]
        %v2977 = vld [vmem:[%s2952 + $0x120] sm:$0xff]
        %v2978 = vld [vmem:[%s2952 + $0x128] sm:$0xff]
        %v2979 = vld [vmem:[%s2952 + $0x138] sm:$0xff]
        %v2980 = vld [vmem:[%s2952 + $0x140] sm:$0xff]
        %v2981 = vld [vmem:[%s2952 + $0x150] sm:$0xff]
        %v2982 = vld [vmem:[%s2952 + $0x158] sm:$0xff]
        %v2983 = vld [vmem:[%s2952 + $0x168] sm:$0xff]
        %v2984 = vld [vmem:[%s2952 + $0x170] sm:$0xff]
        %s2985 = scalar_lea.vmem [#allocation10], 16
        %v2986 = vld [vmem:[%s2985] sm:$0x1]
        %v2987 = vperm.slane %v2986, 0
        %v2988 = vmul.f32 %v2953, %v2987
        %v2989 = vmul.f32 %v2954, %v2987
        %v2990 = vmul.f32 %v2955, %v2987
        %v2991 = vmul.f32 %v2956, %v2987
        %v2992 = vmul.f32 %v2957, %v2987
        %v2993 = vmul.f32 %v2958, %v2987
        %v2994 = vmul.f32 %v2959, %v2987
        %v2995 = vmul.f32 %v2960, %v2987
        %v2996 = vmul.f32 %v2961, %v2987
        %v2997 = vmul.f32 %v2962, %v2987
        %v2998 = vmul.f32 %v2963, %v2987
        %v2999 = vmul.f32 %v2964, %v2987
        %v3000 = vmul.f32 %v2965, %v2987
        %v3001 = vmul.f32 %v2966, %v2987
        %v3002 = vmul.f32 %v2967, %v2987
        %v3003 = vmul.f32 %v2968, %v2987
        %v3004 = vmul.f32 %v2969, %v2987
        %v3005 = vmul.f32 %v2970, %v2987
        %v3006 = vmul.f32 %v2971, %v2987
        %v3007 = vmul.f32 %v2972, %v2987
        %v3008 = vmul.f32 %v2973, %v2987
        %v3009 = vmul.f32 %v2974, %v2987
        %v3010 = vmul.f32 %v2975, %v2987
        %v3011 = vmul.f32 %v2976, %v2987
        %v3012 = vmul.f32 %v2977, %v2987
        %v3013 = vmul.f32 %v2978, %v2987
        %v3014 = vmul.f32 %v2979, %v2987
        %v3015 = vmul.f32 %v2980, %v2987
        %v3016 = vmul.f32 %v2981, %v2987
        %v3017 = vmul.f32 %v2982, %v2987
        %v3018 = vmul.f32 %v2983, %v2987
        %v3019 = vmul.f32 %v2984, %v2987
        %v3020 = vadd.f32 %v2920, %v2988
        %v3021 = vadd.f32 %v2921, %v2989
        %v3022 = vadd.f32 %v2922, %v2990
        %v3023 = vadd.f32 %v2923, %v2991
        %v3024 = vadd.f32 %v2924, %v2992
        %v3025 = vadd.f32 %v2925, %v2993
        %v3026 = vadd.f32 %v2926, %v2994
        %v3027 = vadd.f32 %v2927, %v2995
        %v3028 = vadd.f32 %v2928, %v2996
        %v3029 = vadd.f32 %v2929, %v2997
        %v3030 = vadd.f32 %v2930, %v2998
        %v3031 = vadd.f32 %v2931, %v2999
        %v3032 = vadd.f32 %v2932, %v3000
        %v3033 = vadd.f32 %v2933, %v3001
        %v3034 = vadd.f32 %v2934, %v3002
        %v3035 = vadd.f32 %v2935, %v3003
        %v3036 = vadd.f32 %v2936, %v3004
        %v3037 = vadd.f32 %v2937, %v3005
        %v3038 = vadd.f32 %v2938, %v3006
        %v3039 = vadd.f32 %v2939, %v3007
        %v3040 = vadd.f32 %v2940, %v3008
        %v3041 = vadd.f32 %v2941, %v3009
        %v3042 = vadd.f32 %v2942, %v3010
        %v3043 = vadd.f32 %v2943, %v3011
        %v3044 = vadd.f32 %v2944, %v3012
        %v3045 = vadd.f32 %v2945, %v3013
        %v3046 = vadd.f32 %v2946, %v3014
        %v3047 = vadd.f32 %v2947, %v3015
        %v3048 = vadd.f32 %v2948, %v3016
        %v3049 = vadd.f32 %v2949, %v3017
        %v3050 = vadd.f32 %v2950, %v3018
        %v3051 = vadd.f32 %v2951, %v3019
        %v3052 = vld [vmem:[%s2952 + $0x1] sm:$0xff]
        %v3053 = vld [vmem:[%s2952 + $0x9] sm:$0xff]
        %v3054 = vld [vmem:[%s2952 + $0x19] sm:$0xff]
        %v3055 = vld [vmem:[%s2952 + $0x21] sm:$0xff]
        %v3056 = vld [vmem:[%s2952 + $0x31] sm:$0xff]
        %v3057 = vld [vmem:[%s2952 + $0x39] sm:$0xff]
        %v3058 = vld [vmem:[%s2952 + $0x49] sm:$0xff]
        %v3059 = vld [vmem:[%s2952 + $0x51] sm:$0xff]
        %v3060 = vld [vmem:[%s2952 + $0x61] sm:$0xff]
        %v3061 = vld [vmem:[%s2952 + $0x69] sm:$0xff]
        %v3062 = vld [vmem:[%s2952 + $0x79] sm:$0xff]
        %v3063 = vld [vmem:[%s2952 + $0x81] sm:$0xff]
        %v3064 = vld [vmem:[%s2952 + $0x91] sm:$0xff]
        %v3065 = vld [vmem:[%s2952 + $0x99] sm:$0xff]
        %v3066 = vld [vmem:[%s2952 + $0xa9] sm:$0xff]
        %v3067 = vld [vmem:[%s2952 + $0xb1] sm:$0xff]
        %v3068 = vld [vmem:[%s2952 + $0xc1] sm:$0xff]
        %v3069 = vld [vmem:[%s2952 + $0xc9] sm:$0xff]
        %v3070 = vld [vmem:[%s2952 + $0xd9] sm:$0xff]
        %v3071 = vld [vmem:[%s2952 + $0xe1] sm:$0xff]
        %v3072 = vld [vmem:[%s2952 + $0xf1] sm:$0xff]
        %v3073 = vld [vmem:[%s2952 + $0xf9] sm:$0xff]
        %v3074 = vld [vmem:[%s2952 + $0x109] sm:$0xff]
        %v3075 = vld [vmem:[%s2952 + $0x111] sm:$0xff]
        %v3076 = vld [vmem:[%s2952 + $0x121] sm:$0xff]
        %v3077 = vld [vmem:[%s2952 + $0x129] sm:$0xff]
        %v3078 = vld [vmem:[%s2952 + $0x139] sm:$0xff]
        %v3079 = vld [vmem:[%s2952 + $0x141] sm:$0xff]
        %v3080 = vld [vmem:[%s2952 + $0x151] sm:$0xff]
        %v3081 = vld [vmem:[%s2952 + $0x159] sm:$0xff]
        %v3082 = vld [vmem:[%s2952 + $0x169] sm:$0xff]
        %v3083 = vld [vmem:[%s2952 + $0x171] sm:$0xff]
        %v3084 = vld [vmem:[%s2985 + $0x1] sm:$0x1]
        %v3085 = vperm.slane %v3084, 0
        %v3086 = vmul.f32 %v3052, %v3085
        %v3087 = vmul.f32 %v3053, %v3085
        %v3088 = vmul.f32 %v3054, %v3085
        %v3089 = vmul.f32 %v3055, %v3085
        %v3090 = vmul.f32 %v3056, %v3085
        %v3091 = vmul.f32 %v3057, %v3085
        %v3092 = vmul.f32 %v3058, %v3085
        %v3093 = vmul.f32 %v3059, %v3085
        %v3094 = vmul.f32 %v3060, %v3085
        %v3095 = vmul.f32 %v3061, %v3085
        %v3096 = vmul.f32 %v3062, %v3085
        %v3097 = vmul.f32 %v3063, %v3085
        %v3098 = vmul.f32 %v3064, %v3085
        %v3099 = vmul.f32 %v3065, %v3085
        %v3100 = vmul.f32 %v3066, %v3085
        %v3101 = vmul.f32 %v3067, %v3085
        %v3102 = vmul.f32 %v3068, %v3085
        %v3103 = vmul.f32 %v3069, %v3085
        %v3104 = vmul.f32 %v3070, %v3085
        %v3105 = vmul.f32 %v3071, %v3085
        %v3106 = vmul.f32 %v3072, %v3085
        %v3107 = vmul.f32 %v3073, %v3085
        %v3108 = vmul.f32 %v3074, %v3085
        %v3109 = vmul.f32 %v3075, %v3085
        %v3110 = vmul.f32 %v3076, %v3085
        %v3111 = vmul.f32 %v3077, %v3085
        %v3112 = vmul.f32 %v3078, %v3085
        %v3113 = vmul.f32 %v3079, %v3085
        %v3114 = vmul.f32 %v3080, %v3085
        %v3115 = vmul.f32 %v3081, %v3085
        %v3116 = vmul.f32 %v3082, %v3085
        %v3117 = vmul.f32 %v3083, %v3085
        %v3118 = vadd.f32 %v3020, %v3086
        %v3119 = vadd.f32 %v3021, %v3087
        %v3120 = vadd.f32 %v3022, %v3088
        %v3121 = vadd.f32 %v3023, %v3089
        %v3122 = vadd.f32 %v3024, %v3090
        %v3123 = vadd.f32 %v3025, %v3091
        %v3124 = vadd.f32 %v3026, %v3092
        %v3125 = vadd.f32 %v3027, %v3093
        %v3126 = vadd.f32 %v3028, %v3094
        %v3127 = vadd.f32 %v3029, %v3095
        %v3128 = vadd.f32 %v3030, %v3096
        %v3129 = vadd.f32 %v3031, %v3097
        %v3130 = vadd.f32 %v3032, %v3098
        %v3131 = vadd.f32 %v3033, %v3099
        %v3132 = vadd.f32 %v3034, %v3100
        %v3133 = vadd.f32 %v3035, %v3101
        %v3134 = vadd.f32 %v3036, %v3102
        %v3135 = vadd.f32 %v3037, %v3103
        %v3136 = vadd.f32 %v3038, %v3104
        %v3137 = vadd.f32 %v3039, %v3105
        %v3138 = vadd.f32 %v3040, %v3106
        %v3139 = vadd.f32 %v3041, %v3107
        %v3140 = vadd.f32 %v3042, %v3108
        %v3141 = vadd.f32 %v3043, %v3109
        %v3142 = vadd.f32 %v3044, %v3110
        %v3143 = vadd.f32 %v3045, %v3111
        %v3144 = vadd.f32 %v3046, %v3112
        %v3145 = vadd.f32 %v3047, %v3113
        %v3146 = vadd.f32 %v3048, %v3114
        %v3147 = vadd.f32 %v3049, %v3115
        %v3148 = vadd.f32 %v3050, %v3116
        %v3149 = vadd.f32 %v3051, %v3117
        %v3150 = vld [vmem:[%s2952 + $0x2] sm:$0xff]
        %v3151 = vld [vmem:[%s2952 + $0xa] sm:$0xff]
        %v3152 = vld [vmem:[%s2952 + $0x1a] sm:$0xff]
        %v3153 = vld [vmem:[%s2952 + $0x22] sm:$0xff]
        %v3154 = vld [vmem:[%s2952 + $0x32] sm:$0xff]
        %v3155 = vld [vmem:[%s2952 + $0x3a] sm:$0xff]
        %v3156 = vld [vmem:[%s2952 + $0x4a] sm:$0xff]
        %v3157 = vld [vmem:[%s2952 + $0x52] sm:$0xff]
        %v3158 = vld [vmem:[%s2952 + $0x62] sm:$0xff]
        %v3159 = vld [vmem:[%s2952 + $0x6a] sm:$0xff]
        %v3160 = vld [vmem:[%s2952 + $0x7a] sm:$0xff]
        %v3161 = vld [vmem:[%s2952 + $0x82] sm:$0xff]
        %v3162 = vld [vmem:[%s2952 + $0x92] sm:$0xff]
        %v3163 = vld [vmem:[%s2952 + $0x9a] sm:$0xff]
        %v3164 = vld [vmem:[%s2952 + $0xaa] sm:$0xff]
        %v3165 = vld [vmem:[%s2952 + $0xb2] sm:$0xff]
        %v3166 = vld [vmem:[%s2952 + $0xc2] sm:$0xff]
        %v3167 = vld [vmem:[%s2952 + $0xca] sm:$0xff]
        %v3168 = vld [vmem:[%s2952 + $0xda] sm:$0xff]
        %v3169 = vld [vmem:[%s2952 + $0xe2] sm:$0xff]
        %v3170 = vld [vmem:[%s2952 + $0xf2] sm:$0xff]
        %v3171 = vld [vmem:[%s2952 + $0xfa] sm:$0xff]
        %v3172 = vld [vmem:[%s2952 + $0x10a] sm:$0xff]
        %v3173 = vld [vmem:[%s2952 + $0x112] sm:$0xff]
        %v3174 = vld [vmem:[%s2952 + $0x122] sm:$0xff]
        %v3175 = vld [vmem:[%s2952 + $0x12a] sm:$0xff]
        %v3176 = vld [vmem:[%s2952 + $0x13a] sm:$0xff]
        %v3177 = vld [vmem:[%s2952 + $0x142] sm:$0xff]
        %v3178 = vld [vmem:[%s2952 + $0x152] sm:$0xff]
        %v3179 = vld [vmem:[%s2952 + $0x15a] sm:$0xff]
        %v3180 = vld [vmem:[%s2952 + $0x16a] sm:$0xff]
        %v3181 = vld [vmem:[%s2952 + $0x172] sm:$0xff]
        %v3182 = vld [vmem:[%s2985 + $0x2] sm:$0x1]
        %v3183 = vperm.slane %v3182, 0
        %v3184 = vmul.f32 %v3150, %v3183
        %v3185 = vmul.f32 %v3151, %v3183
        %v3186 = vmul.f32 %v3152, %v3183
        %v3187 = vmul.f32 %v3153, %v3183
        %v3188 = vmul.f32 %v3154, %v3183
        %v3189 = vmul.f32 %v3155, %v3183
        %v3190 = vmul.f32 %v3156, %v3183
        %v3191 = vmul.f32 %v3157, %v3183
        %v3192 = vmul.f32 %v3158, %v3183
        %v3193 = vmul.f32 %v3159, %v3183
        %v3194 = vmul.f32 %v3160, %v3183
        %v3195 = vmul.f32 %v3161, %v3183
        %v3196 = vmul.f32 %v3162, %v3183
        %v3197 = vmul.f32 %v3163, %v3183
        %v3198 = vmul.f32 %v3164, %v3183
        %v3199 = vmul.f32 %v3165, %v3183
        %v3200 = vmul.f32 %v3166, %v3183
        %v3201 = vmul.f32 %v3167, %v3183
        %v3202 = vmul.f32 %v3168, %v3183
        %v3203 = vmul.f32 %v3169, %v3183
        %v3204 = vmul.f32 %v3170, %v3183
        %v3205 = vmul.f32 %v3171, %v3183
        %v3206 = vmul.f32 %v3172, %v3183
        %v3207 = vmul.f32 %v3173, %v3183
        %v3208 = vmul.f32 %v3174, %v3183
        %v3209 = vmul.f32 %v3175, %v3183
        %v3210 = vmul.f32 %v3176, %v3183
        %v3211 = vmul.f32 %v3177, %v3183
        %v3212 = vmul.f32 %v3178, %v3183
        %v3213 = vmul.f32 %v3179, %v3183
        %v3214 = vmul.f32 %v3180, %v3183
        %v3215 = vmul.f32 %v3181, %v3183
        %v3216 = vadd.f32 %v3118, %v3184
        %v3217 = vadd.f32 %v3119, %v3185
        %v3218 = vadd.f32 %v3120, %v3186
        %v3219 = vadd.f32 %v3121, %v3187
        %v3220 = vadd.f32 %v3122, %v3188
        %v3221 = vadd.f32 %v3123, %v3189
        %v3222 = vadd.f32 %v3124, %v3190
        %v3223 = vadd.f32 %v3125, %v3191
        %v3224 = vadd.f32 %v3126, %v3192
        %v3225 = vadd.f32 %v3127, %v3193
        %v3226 = vadd.f32 %v3128, %v3194
        %v3227 = vadd.f32 %v3129, %v3195
        %v3228 = vadd.f32 %v3130, %v3196
        %v3229 = vadd.f32 %v3131, %v3197
        %v3230 = vadd.f32 %v3132, %v3198
        %v3231 = vadd.f32 %v3133, %v3199
        %v3232 = vadd.f32 %v3134, %v3200
        %v3233 = vadd.f32 %v3135, %v3201
        %v3234 = vadd.f32 %v3136, %v3202
        %v3235 = vadd.f32 %v3137, %v3203
        %v3236 = vadd.f32 %v3138, %v3204
        %v3237 = vadd.f32 %v3139, %v3205
        %v3238 = vadd.f32 %v3140, %v3206
        %v3239 = vadd.f32 %v3141, %v3207
        %v3240 = vadd.f32 %v3142, %v3208
        %v3241 = vadd.f32 %v3143, %v3209
        %v3242 = vadd.f32 %v3144, %v3210
        %v3243 = vadd.f32 %v3145, %v3211
        %v3244 = vadd.f32 %v3146, %v3212
        %v3245 = vadd.f32 %v3147, %v3213
        %v3246 = vadd.f32 %v3148, %v3214
        %v3247 = vadd.f32 %v3149, %v3215
        %v3248 = vld [vmem:[%s2952 + $0x3] sm:$0xff]
        %v3249 = vld [vmem:[%s2952 + $0xb] sm:$0xff]
        %v3250 = vld [vmem:[%s2952 + $0x1b] sm:$0xff]
        %v3251 = vld [vmem:[%s2952 + $0x23] sm:$0xff]
        %v3252 = vld [vmem:[%s2952 + $0x33] sm:$0xff]
        %v3253 = vld [vmem:[%s2952 + $0x3b] sm:$0xff]
        %v3254 = vld [vmem:[%s2952 + $0x4b] sm:$0xff]
        %v3255 = vld [vmem:[%s2952 + $0x53] sm:$0xff]
        %v3256 = vld [vmem:[%s2952 + $0x63] sm:$0xff]
        %v3257 = vld [vmem:[%s2952 + $0x6b] sm:$0xff]
        %v3258 = vld [vmem:[%s2952 + $0x7b] sm:$0xff]
        %v3259 = vld [vmem:[%s2952 + $0x83] sm:$0xff]
        %v3260 = vld [vmem:[%s2952 + $0x93] sm:$0xff]
        %v3261 = vld [vmem:[%s2952 + $0x9b] sm:$0xff]
        %v3262 = vld [vmem:[%s2952 + $0xab] sm:$0xff]
        %v3263 = vld [vmem:[%s2952 + $0xb3] sm:$0xff]
        %v3264 = vld [vmem:[%s2952 + $0xc3] sm:$0xff]
        %v3265 = vld [vmem:[%s2952 + $0xcb] sm:$0xff]
        %v3266 = vld [vmem:[%s2952 + $0xdb] sm:$0xff]
        %v3267 = vld [vmem:[%s2952 + $0xe3] sm:$0xff]
        %v3268 = vld [vmem:[%s2952 + $0xf3] sm:$0xff]
        %v3269 = vld [vmem:[%s2952 + $0xfb] sm:$0xff]
        %v3270 = vld [vmem:[%s2952 + $0x10b] sm:$0xff]
        %v3271 = vld [vmem:[%s2952 + $0x113] sm:$0xff]
        %v3272 = vld [vmem:[%s2952 + $0x123] sm:$0xff]
        %v3273 = vld [vmem:[%s2952 + $0x12b] sm:$0xff]
        %v3274 = vld [vmem:[%s2952 + $0x13b] sm:$0xff]
        %v3275 = vld [vmem:[%s2952 + $0x143] sm:$0xff]
        %v3276 = vld [vmem:[%s2952 + $0x153] sm:$0xff]
        %v3277 = vld [vmem:[%s2952 + $0x15b] sm:$0xff]
        %v3278 = vld [vmem:[%s2952 + $0x16b] sm:$0xff]
        %v3279 = vld [vmem:[%s2952 + $0x173] sm:$0xff]
        %v3280 = vld [vmem:[%s2985 + $0x3] sm:$0x1]
        %v3281 = vperm.slane %v3280, 0
        %v3282 = vmul.f32 %v3248, %v3281
        %v3283 = vmul.f32 %v3249, %v3281
        %v3284 = vmul.f32 %v3250, %v3281
        %v3285 = vmul.f32 %v3251, %v3281
        %v3286 = vmul.f32 %v3252, %v3281
        %v3287 = vmul.f32 %v3253, %v3281
        %v3288 = vmul.f32 %v3254, %v3281
        %v3289 = vmul.f32 %v3255, %v3281
        %v3290 = vmul.f32 %v3256, %v3281
        %v3291 = vmul.f32 %v3257, %v3281
        %v3292 = vmul.f32 %v3258, %v3281
        %v3293 = vmul.f32 %v3259, %v3281
        %v3294 = vmul.f32 %v3260, %v3281
        %v3295 = vmul.f32 %v3261, %v3281
        %v3296 = vmul.f32 %v3262, %v3281
        %v3297 = vmul.f32 %v3263, %v3281
        %v3298 = vmul.f32 %v3264, %v3281
        %v3299 = vmul.f32 %v3265, %v3281
        %v3300 = vmul.f32 %v3266, %v3281
        %v3301 = vmul.f32 %v3267, %v3281
        %v3302 = vmul.f32 %v3268, %v3281
        %v3303 = vmul.f32 %v3269, %v3281
        %v3304 = vmul.f32 %v3270, %v3281
        %v3305 = vmul.f32 %v3271, %v3281
        %v3306 = vmul.f32 %v3272, %v3281
        %v3307 = vmul.f32 %v3273, %v3281
        %v3308 = vmul.f32 %v3274, %v3281
        %v3309 = vmul.f32 %v3275, %v3281
        %v3310 = vmul.f32 %v3276, %v3281
        %v3311 = vmul.f32 %v3277, %v3281
        %v3312 = vmul.f32 %v3278, %v3281
        %v3313 = vmul.f32 %v3279, %v3281
        %v3314 = vadd.f32 %v3216, %v3282
        %v3315 = vadd.f32 %v3217, %v3283
        %v3316 = vadd.f32 %v3218, %v3284
        %v3317 = vadd.f32 %v3219, %v3285
        %v3318 = vadd.f32 %v3220, %v3286
        %v3319 = vadd.f32 %v3221, %v3287
        %v3320 = vadd.f32 %v3222, %v3288
        %v3321 = vadd.f32 %v3223, %v3289
        %v3322 = vadd.f32 %v3224, %v3290
        %v3323 = vadd.f32 %v3225, %v3291
        %v3324 = vadd.f32 %v3226, %v3292
        %v3325 = vadd.f32 %v3227, %v3293
        %v3326 = vadd.f32 %v3228, %v3294
        %v3327 = vadd.f32 %v3229, %v3295
        %v3328 = vadd.f32 %v3230, %v3296
        %v3329 = vadd.f32 %v3231, %v3297
        %v3330 = vadd.f32 %v3232, %v3298
        %v3331 = vadd.f32 %v3233, %v3299
        %v3332 = vadd.f32 %v3234, %v3300
        %v3333 = vadd.f32 %v3235, %v3301
        %v3334 = vadd.f32 %v3236, %v3302
        %v3335 = vadd.f32 %v3237, %v3303
        %v3336 = vadd.f32 %v3238, %v3304
        %v3337 = vadd.f32 %v3239, %v3305
        %v3338 = vadd.f32 %v3240, %v3306
        %v3339 = vadd.f32 %v3241, %v3307
        %v3340 = vadd.f32 %v3242, %v3308
        %v3341 = vadd.f32 %v3243, %v3309
        %v3342 = vadd.f32 %v3244, %v3310
        %v3343 = vadd.f32 %v3245, %v3311
        %v3344 = vadd.f32 %v3246, %v3312
        %v3345 = vadd.f32 %v3247, %v3313
        %v3346 = vld [vmem:[%s2952 + $0x4] sm:$0xff]
        %v3347 = vld [vmem:[%s2952 + $0xc] sm:$0xff]
        %v3348 = vld [vmem:[%s2952 + $0x1c] sm:$0xff]
        %v3349 = vld [vmem:[%s2952 + $0x24] sm:$0xff]
        %v3350 = vld [vmem:[%s2952 + $0x34] sm:$0xff]
        %v3351 = vld [vmem:[%s2952 + $0x3c] sm:$0xff]
        %v3352 = vld [vmem:[%s2952 + $0x4c] sm:$0xff]
        %v3353 = vld [vmem:[%s2952 + $0x54] sm:$0xff]
        %v3354 = vld [vmem:[%s2952 + $0x64] sm:$0xff]
        %v3355 = vld [vmem:[%s2952 + $0x6c] sm:$0xff]
        %v3356 = vld [vmem:[%s2952 + $0x7c] sm:$0xff]
        %v3357 = vld [vmem:[%s2952 + $0x84] sm:$0xff]
        %v3358 = vld [vmem:[%s2952 + $0x94] sm:$0xff]
        %v3359 = vld [vmem:[%s2952 + $0x9c] sm:$0xff]
        %v3360 = vld [vmem:[%s2952 + $0xac] sm:$0xff]
        %v3361 = vld [vmem:[%s2952 + $0xb4] sm:$0xff]
        %v3362 = vld [vmem:[%s2952 + $0xc4] sm:$0xff]
        %v3363 = vld [vmem:[%s2952 + $0xcc] sm:$0xff]
        %v3364 = vld [vmem:[%s2952 + $0xdc] sm:$0xff]
        %v3365 = vld [vmem:[%s2952 + $0xe4] sm:$0xff]
        %v3366 = vld [vmem:[%s2952 + $0xf4] sm:$0xff]
        %v3367 = vld [vmem:[%s2952 + $0xfc] sm:$0xff]
        %v3368 = vld [vmem:[%s2952 + $0x10c] sm:$0xff]
        %v3369 = vld [vmem:[%s2952 + $0x114] sm:$0xff]
        %v3370 = vld [vmem:[%s2952 + $0x124] sm:$0xff]
        %v3371 = vld [vmem:[%s2952 + $0x12c] sm:$0xff]
        %v3372 = vld [vmem:[%s2952 + $0x13c] sm:$0xff]
        %v3373 = vld [vmem:[%s2952 + $0x144] sm:$0xff]
        %v3374 = vld [vmem:[%s2952 + $0x154] sm:$0xff]
        %v3375 = vld [vmem:[%s2952 + $0x15c] sm:$0xff]
        %v3376 = vld [vmem:[%s2952 + $0x16c] sm:$0xff]
        %v3377 = vld [vmem:[%s2952 + $0x174] sm:$0xff]
        %v3378 = vld [vmem:[%s2985 + $0x4] sm:$0x1]
        %v3379 = vperm.slane %v3378, 0
        %v3380 = vmul.f32 %v3346, %v3379
        %v3381 = vmul.f32 %v3347, %v3379
        %v3382 = vmul.f32 %v3348, %v3379
        %v3383 = vmul.f32 %v3349, %v3379
        %v3384 = vmul.f32 %v3350, %v3379
        %v3385 = vmul.f32 %v3351, %v3379
        %v3386 = vmul.f32 %v3352, %v3379
        %v3387 = vmul.f32 %v3353, %v3379
        %v3388 = vmul.f32 %v3354, %v3379
        %v3389 = vmul.f32 %v3355, %v3379
        %v3390 = vmul.f32 %v3356, %v3379
        %v3391 = vmul.f32 %v3357, %v3379
        %v3392 = vmul.f32 %v3358, %v3379
        %v3393 = vmul.f32 %v3359, %v3379
        %v3394 = vmul.f32 %v3360, %v3379
        %v3395 = vmul.f32 %v3361, %v3379
        %v3396 = vmul.f32 %v3362, %v3379
        %v3397 = vmul.f32 %v3363, %v3379
        %v3398 = vmul.f32 %v3364, %v3379
        %v3399 = vmul.f32 %v3365, %v3379
        %v3400 = vmul.f32 %v3366, %v3379
        %v3401 = vmul.f32 %v3367, %v3379
        %v3402 = vmul.f32 %v3368, %v3379
        %v3403 = vmul.f32 %v3369, %v3379
        %v3404 = vmul.f32 %v3370, %v3379
        %v3405 = vmul.f32 %v3371, %v3379
        %v3406 = vmul.f32 %v3372, %v3379
        %v3407 = vmul.f32 %v3373, %v3379
        %v3408 = vmul.f32 %v3374, %v3379
        %v3409 = vmul.f32 %v3375, %v3379
        %v3410 = vmul.f32 %v3376, %v3379
        %v3411 = vmul.f32 %v3377, %v3379
        %v3412 = vadd.f32 %v3314, %v3380
        %v3413 = vadd.f32 %v3315, %v3381
        %v3414 = vadd.f32 %v3316, %v3382
        %v3415 = vadd.f32 %v3317, %v3383
        %v3416 = vadd.f32 %v3318, %v3384
        %v3417 = vadd.f32 %v3319, %v3385
        %v3418 = vadd.f32 %v3320, %v3386
        %v3419 = vadd.f32 %v3321, %v3387
        %v3420 = vadd.f32 %v3322, %v3388
        %v3421 = vadd.f32 %v3323, %v3389
        %v3422 = vadd.f32 %v3324, %v3390
        %v3423 = vadd.f32 %v3325, %v3391
        %v3424 = vadd.f32 %v3326, %v3392
        %v3425 = vadd.f32 %v3327, %v3393
        %v3426 = vadd.f32 %v3328, %v3394
        %v3427 = vadd.f32 %v3329, %v3395
        %v3428 = vadd.f32 %v3330, %v3396
        %v3429 = vadd.f32 %v3331, %v3397
        %v3430 = vadd.f32 %v3332, %v3398
        %v3431 = vadd.f32 %v3333, %v3399
        %v3432 = vadd.f32 %v3334, %v3400
        %v3433 = vadd.f32 %v3335, %v3401
        %v3434 = vadd.f32 %v3336, %v3402
        %v3435 = vadd.f32 %v3337, %v3403
        %v3436 = vadd.f32 %v3338, %v3404
        %v3437 = vadd.f32 %v3339, %v3405
        %v3438 = vadd.f32 %v3340, %v3406
        %v3439 = vadd.f32 %v3341, %v3407
        %v3440 = vadd.f32 %v3342, %v3408
        %v3441 = vadd.f32 %v3343, %v3409
        %v3442 = vadd.f32 %v3344, %v3410
        %v3443 = vadd.f32 %v3345, %v3411
        %v3444 = vld [vmem:[%s2952 + $0x5] sm:$0xff]
        %v3445 = vld [vmem:[%s2952 + $0xd] sm:$0xff]
        %v3446 = vld [vmem:[%s2952 + $0x1d] sm:$0xff]
        %v3447 = vld [vmem:[%s2952 + $0x25] sm:$0xff]
        %v3448 = vld [vmem:[%s2952 + $0x35] sm:$0xff]
        %v3449 = vld [vmem:[%s2952 + $0x3d] sm:$0xff]
        %v3450 = vld [vmem:[%s2952 + $0x4d] sm:$0xff]
        %v3451 = vld [vmem:[%s2952 + $0x55] sm:$0xff]
        %v3452 = vld [vmem:[%s2952 + $0x65] sm:$0xff]
        %v3453 = vld [vmem:[%s2952 + $0x6d] sm:$0xff]
        %v3454 = vld [vmem:[%s2952 + $0x7d] sm:$0xff]
        %v3455 = vld [vmem:[%s2952 + $0x85] sm:$0xff]
        %v3456 = vld [vmem:[%s2952 + $0x95] sm:$0xff]
        %v3457 = vld [vmem:[%s2952 + $0x9d] sm:$0xff]
        %v3458 = vld [vmem:[%s2952 + $0xad] sm:$0xff]
        %v3459 = vld [vmem:[%s2952 + $0xb5] sm:$0xff]
        %v3460 = vld [vmem:[%s2952 + $0xc5] sm:$0xff]
        %v3461 = vld [vmem:[%s2952 + $0xcd] sm:$0xff]
        %v3462 = vld [vmem:[%s2952 + $0xdd] sm:$0xff]
        %v3463 = vld [vmem:[%s2952 + $0xe5] sm:$0xff]
        %v3464 = vld [vmem:[%s2952 + $0xf5] sm:$0xff]
        %v3465 = vld [vmem:[%s2952 + $0xfd] sm:$0xff]
        %v3466 = vld [vmem:[%s2952 + $0x10d] sm:$0xff]
        %v3467 = vld [vmem:[%s2952 + $0x115] sm:$0xff]
        %v3468 = vld [vmem:[%s2952 + $0x125] sm:$0xff]
        %v3469 = vld [vmem:[%s2952 + $0x12d] sm:$0xff]
        %v3470 = vld [vmem:[%s2952 + $0x13d] sm:$0xff]
        %v3471 = vld [vmem:[%s2952 + $0x145] sm:$0xff]
        %v3472 = vld [vmem:[%s2952 + $0x155] sm:$0xff]
        %v3473 = vld [vmem:[%s2952 + $0x15d] sm:$0xff]
        %v3474 = vld [vmem:[%s2952 + $0x16d] sm:$0xff]
        %v3475 = vld [vmem:[%s2952 + $0x175] sm:$0xff]
        %v3476 = vld [vmem:[%s2985 + $0x5] sm:$0x1]
        %v3477 = vperm.slane %v3476, 0
        %v3478 = vmul.f32 %v3444, %v3477
        %v3479 = vmul.f32 %v3445, %v3477
        %v3480 = vmul.f32 %v3446, %v3477
        %v3481 = vmul.f32 %v3447, %v3477
        %v3482 = vmul.f32 %v3448, %v3477
        %v3483 = vmul.f32 %v3449, %v3477
        %v3484 = vmul.f32 %v3450, %v3477
        %v3485 = vmul.f32 %v3451, %v3477
        %v3486 = vmul.f32 %v3452, %v3477
        %v3487 = vmul.f32 %v3453, %v3477
        %v3488 = vmul.f32 %v3454, %v3477
        %v3489 = vmul.f32 %v3455, %v3477
        %v3490 = vmul.f32 %v3456, %v3477
        %v3491 = vmul.f32 %v3457, %v3477
        %v3492 = vmul.f32 %v3458, %v3477
        %v3493 = vmul.f32 %v3459, %v3477
        %v3494 = vmul.f32 %v3460, %v3477
        %v3495 = vmul.f32 %v3461, %v3477
        %v3496 = vmul.f32 %v3462, %v3477
        %v3497 = vmul.f32 %v3463, %v3477
        %v3498 = vmul.f32 %v3464, %v3477
        %v3499 = vmul.f32 %v3465, %v3477
        %v3500 = vmul.f32 %v3466, %v3477
        %v3501 = vmul.f32 %v3467, %v3477
        %v3502 = vmul.f32 %v3468, %v3477
        %v3503 = vmul.f32 %v3469, %v3477
        %v3504 = vmul.f32 %v3470, %v3477
        %v3505 = vmul.f32 %v3471, %v3477
        %v3506 = vmul.f32 %v3472, %v3477
        %v3507 = vmul.f32 %v3473, %v3477
        %v3508 = vmul.f32 %v3474, %v3477
        %v3509 = vmul.f32 %v3475, %v3477
        %v3510 = vadd.f32 %v3412, %v3478
        %v3511 = vadd.f32 %v3413, %v3479
        %v3512 = vadd.f32 %v3414, %v3480
        %v3513 = vadd.f32 %v3415, %v3481
        %v3514 = vadd.f32 %v3416, %v3482
        %v3515 = vadd.f32 %v3417, %v3483
        %v3516 = vadd.f32 %v3418, %v3484
        %v3517 = vadd.f32 %v3419, %v3485
        %v3518 = vadd.f32 %v3420, %v3486
        %v3519 = vadd.f32 %v3421, %v3487
        %v3520 = vadd.f32 %v3422, %v3488
        %v3521 = vadd.f32 %v3423, %v3489
        %v3522 = vadd.f32 %v3424, %v3490
        %v3523 = vadd.f32 %v3425, %v3491
        %v3524 = vadd.f32 %v3426, %v3492
        %v3525 = vadd.f32 %v3427, %v3493
        %v3526 = vadd.f32 %v3428, %v3494
        %v3527 = vadd.f32 %v3429, %v3495
        %v3528 = vadd.f32 %v3430, %v3496
        %v3529 = vadd.f32 %v3431, %v3497
        %v3530 = vadd.f32 %v3432, %v3498
        %v3531 = vadd.f32 %v3433, %v3499
        %v3532 = vadd.f32 %v3434, %v3500
        %v3533 = vadd.f32 %v3435, %v3501
        %v3534 = vadd.f32 %v3436, %v3502
        %v3535 = vadd.f32 %v3437, %v3503
        %v3536 = vadd.f32 %v3438, %v3504
        %v3537 = vadd.f32 %v3439, %v3505
        %v3538 = vadd.f32 %v3440, %v3506
        %v3539 = vadd.f32 %v3441, %v3507
        %v3540 = vadd.f32 %v3442, %v3508
        %v3541 = vadd.f32 %v3443, %v3509
        %v3542 = vld [vmem:[%s2952 + $0x6] sm:$0xff]
        %v3543 = vld [vmem:[%s2952 + $0xe] sm:$0xff]
        %v3544 = vld [vmem:[%s2952 + $0x1e] sm:$0xff]
        %v3545 = vld [vmem:[%s2952 + $0x26] sm:$0xff]
        %v3546 = vld [vmem:[%s2952 + $0x36] sm:$0xff]
        %v3547 = vld [vmem:[%s2952 + $0x3e] sm:$0xff]
        %v3548 = vld [vmem:[%s2952 + $0x4e] sm:$0xff]
        %v3549 = vld [vmem:[%s2952 + $0x56] sm:$0xff]
        %v3550 = vld [vmem:[%s2952 + $0x66] sm:$0xff]
        %v3551 = vld [vmem:[%s2952 + $0x6e] sm:$0xff]
        %v3552 = vld [vmem:[%s2952 + $0x7e] sm:$0xff]
        %v3553 = vld [vmem:[%s2952 + $0x86] sm:$0xff]
        %v3554 = vld [vmem:[%s2952 + $0x96] sm:$0xff]
        %v3555 = vld [vmem:[%s2952 + $0x9e] sm:$0xff]
        %v3556 = vld [vmem:[%s2952 + $0xae] sm:$0xff]
        %v3557 = vld [vmem:[%s2952 + $0xb6] sm:$0xff]
        %v3558 = vld [vmem:[%s2952 + $0xc6] sm:$0xff]
        %v3559 = vld [vmem:[%s2952 + $0xce] sm:$0xff]
        %v3560 = vld [vmem:[%s2952 + $0xde] sm:$0xff]
        %v3561 = vld [vmem:[%s2952 + $0xe6] sm:$0xff]
        %v3562 = vld [vmem:[%s2952 + $0xf6] sm:$0xff]
        %v3563 = vld [vmem:[%s2952 + $0xfe] sm:$0xff]
        %v3564 = vld [vmem:[%s2952 + $0x10e] sm:$0xff]
        %v3565 = vld [vmem:[%s2952 + $0x116] sm:$0xff]
        %v3566 = vld [vmem:[%s2952 + $0x126] sm:$0xff]
        %v3567 = vld [vmem:[%s2952 + $0x12e] sm:$0xff]
        %v3568 = vld [vmem:[%s2952 + $0x13e] sm:$0xff]
        %v3569 = vld [vmem:[%s2952 + $0x146] sm:$0xff]
        %v3570 = vld [vmem:[%s2952 + $0x156] sm:$0xff]
        %v3571 = vld [vmem:[%s2952 + $0x15e] sm:$0xff]
        %v3572 = vld [vmem:[%s2952 + $0x16e] sm:$0xff]
        %v3573 = vld [vmem:[%s2952 + $0x176] sm:$0xff]
        %v3574 = vld [vmem:[%s2985 + $0x6] sm:$0x1]
        %v3575 = vperm.slane %v3574, 0
        %v3576 = vmul.f32 %v3542, %v3575
        %v3577 = vmul.f32 %v3543, %v3575
        %v3578 = vmul.f32 %v3544, %v3575
        %v3579 = vmul.f32 %v3545, %v3575
        %v3580 = vmul.f32 %v3546, %v3575
        %v3581 = vmul.f32 %v3547, %v3575
        %v3582 = vmul.f32 %v3548, %v3575
        %v3583 = vmul.f32 %v3549, %v3575
        %v3584 = vmul.f32 %v3550, %v3575
        %v3585 = vmul.f32 %v3551, %v3575
        %v3586 = vmul.f32 %v3552, %v3575
        %v3587 = vmul.f32 %v3553, %v3575
        %v3588 = vmul.f32 %v3554, %v3575
        %v3589 = vmul.f32 %v3555, %v3575
        %v3590 = vmul.f32 %v3556, %v3575
        %v3591 = vmul.f32 %v3557, %v3575
        %v3592 = vmul.f32 %v3558, %v3575
        %v3593 = vmul.f32 %v3559, %v3575
        %v3594 = vmul.f32 %v3560, %v3575
        %v3595 = vmul.f32 %v3561, %v3575
        %v3596 = vmul.f32 %v3562, %v3575
        %v3597 = vmul.f32 %v3563, %v3575
        %v3598 = vmul.f32 %v3564, %v3575
        %v3599 = vmul.f32 %v3565, %v3575
        %v3600 = vmul.f32 %v3566, %v3575
        %v3601 = vmul.f32 %v3567, %v3575
        %v3602 = vmul.f32 %v3568, %v3575
        %v3603 = vmul.f32 %v3569, %v3575
        %v3604 = vmul.f32 %v3570, %v3575
        %v3605 = vmul.f32 %v3571, %v3575
        %v3606 = vmul.f32 %v3572, %v3575
        %v3607 = vmul.f32 %v3573, %v3575
        %v3608 = vadd.f32 %v3510, %v3576
        %v3609 = vadd.f32 %v3511, %v3577
        %v3610 = vadd.f32 %v3512, %v3578
        %v3611 = vadd.f32 %v3513, %v3579
        %v3612 = vadd.f32 %v3514, %v3580
        %v3613 = vadd.f32 %v3515, %v3581
        %v3614 = vadd.f32 %v3516, %v3582
        %v3615 = vadd.f32 %v3517, %v3583
        %v3616 = vadd.f32 %v3518, %v3584
        %v3617 = vadd.f32 %v3519, %v3585
        %v3618 = vadd.f32 %v3520, %v3586
        %v3619 = vadd.f32 %v3521, %v3587
        %v3620 = vadd.f32 %v3522, %v3588
        %v3621 = vadd.f32 %v3523, %v3589
        %v3622 = vadd.f32 %v3524, %v3590
        %v3623 = vadd.f32 %v3525, %v3591
        %v3624 = vadd.f32 %v3526, %v3592
        %v3625 = vadd.f32 %v3527, %v3593
        %v3626 = vadd.f32 %v3528, %v3594
        %v3627 = vadd.f32 %v3529, %v3595
        %v3628 = vadd.f32 %v3530, %v3596
        %v3629 = vadd.f32 %v3531, %v3597
        %v3630 = vadd.f32 %v3532, %v3598
        %v3631 = vadd.f32 %v3533, %v3599
        %v3632 = vadd.f32 %v3534, %v3600
        %v3633 = vadd.f32 %v3535, %v3601
        %v3634 = vadd.f32 %v3536, %v3602
        %v3635 = vadd.f32 %v3537, %v3603
        %v3636 = vadd.f32 %v3538, %v3604
        %v3637 = vadd.f32 %v3539, %v3605
        %v3638 = vadd.f32 %v3540, %v3606
        %v3639 = vadd.f32 %v3541, %v3607
        %v3640 = vld [vmem:[%s1545] sm:$0xff]
        %v3641 = vld [vmem:[%s1545 + $0x8] sm:$0xff]
        %v3642 = vld [vmem:[%s1545 + $0x18] sm:$0xff]
        %v3643 = vld [vmem:[%s1545 + $0x20] sm:$0xff]
        %v3644 = vld [vmem:[%s1545 + $0x30] sm:$0xff]
        %v3645 = vld [vmem:[%s1545 + $0x38] sm:$0xff]
        %v3646 = vld [vmem:[%s1545 + $0x48] sm:$0xff]
        %v3647 = vld [vmem:[%s1545 + $0x50] sm:$0xff]
        %v3648 = vld [vmem:[%s1545 + $0x60] sm:$0xff]
        %v3649 = vld [vmem:[%s1545 + $0x68] sm:$0xff]
        %v3650 = vld [vmem:[%s1545 + $0x78] sm:$0xff]
        %v3651 = vld [vmem:[%s1545 + $0x80] sm:$0xff]
        %v3652 = vld [vmem:[%s1545 + $0x90] sm:$0xff]
        %v3653 = vld [vmem:[%s1545 + $0x98] sm:$0xff]
        %v3654 = vld [vmem:[%s1545 + $0xa8] sm:$0xff]
        %v3655 = vld [vmem:[%s1545 + $0xb0] sm:$0xff]
        %v3656 = vld [vmem:[%s1545 + $0xc0] sm:$0xff]
        %v3657 = vld [vmem:[%s1545 + $0xc8] sm:$0xff]
        %v3658 = vld [vmem:[%s1545 + $0xd8] sm:$0xff]
        %v3659 = vld [vmem:[%s1545 + $0xe0] sm:$0xff]
        %v3660 = vld [vmem:[%s1545 + $0xf0] sm:$0xff]
        %v3661 = vld [vmem:[%s1545 + $0xf8] sm:$0xff]
        %v3662 = vld [vmem:[%s1545 + $0x108] sm:$0xff]
        %v3663 = vld [vmem:[%s1545 + $0x110] sm:$0xff]
        %v3664 = vld [vmem:[%s1545 + $0x120] sm:$0xff]
        %v3665 = vld [vmem:[%s1545 + $0x128] sm:$0xff]
        %v3666 = vld [vmem:[%s1545 + $0x138] sm:$0xff]
        %v3667 = vld [vmem:[%s1545 + $0x140] sm:$0xff]
        %v3668 = vld [vmem:[%s1545 + $0x150] sm:$0xff]
        %v3669 = vld [vmem:[%s1545 + $0x158] sm:$0xff]
        %v3670 = vld [vmem:[%s1545 + $0x168] sm:$0xff]
        %v3671 = vld [vmem:[%s1545 + $0x170] sm:$0xff]
        %s3672 = scalar_lea.vmem [#allocation10], 24
        %v3673 = vld [vmem:[%s3672] sm:$0x1]
        %v3674 = vperm.slane %v3673, 0
        %v3675 = vmul.f32 %v3640, %v3674
        %v3676 = vmul.f32 %v3641, %v3674
        %v3677 = vmul.f32 %v3642, %v3674
        %v3678 = vmul.f32 %v3643, %v3674
        %v3679 = vmul.f32 %v3644, %v3674
        %v3680 = vmul.f32 %v3645, %v3674
        %v3681 = vmul.f32 %v3646, %v3674
        %v3682 = vmul.f32 %v3647, %v3674
        %v3683 = vmul.f32 %v3648, %v3674
        %v3684 = vmul.f32 %v3649, %v3674
        %v3685 = vmul.f32 %v3650, %v3674
        %v3686 = vmul.f32 %v3651, %v3674
        %v3687 = vmul.f32 %v3652, %v3674
        %v3688 = vmul.f32 %v3653, %v3674
        %v3689 = vmul.f32 %v3654, %v3674
        %v3690 = vmul.f32 %v3655, %v3674
        %v3691 = vmul.f32 %v3656, %v3674
        %v3692 = vmul.f32 %v3657, %v3674
        %v3693 = vmul.f32 %v3658, %v3674
        %v3694 = vmul.f32 %v3659, %v3674
        %v3695 = vmul.f32 %v3660, %v3674
        %v3696 = vmul.f32 %v3661, %v3674
        %v3697 = vmul.f32 %v3662, %v3674
        %v3698 = vmul.f32 %v3663, %v3674
        %v3699 = vmul.f32 %v3664, %v3674
        %v3700 = vmul.f32 %v3665, %v3674
        %v3701 = vmul.f32 %v3666, %v3674
        %v3702 = vmul.f32 %v3667, %v3674
        %v3703 = vmul.f32 %v3668, %v3674
        %v3704 = vmul.f32 %v3669, %v3674
        %v3705 = vmul.f32 %v3670, %v3674
        %v3706 = vmul.f32 %v3671, %v3674
        %v3707 = vadd.f32 %v3608, %v3675
        %v3708 = vadd.f32 %v3609, %v3676
        %v3709 = vadd.f32 %v3610, %v3677
        %v3710 = vadd.f32 %v3611, %v3678
        %v3711 = vadd.f32 %v3612, %v3679
        %v3712 = vadd.f32 %v3613, %v3680
        %v3713 = vadd.f32 %v3614, %v3681
        %v3714 = vadd.f32 %v3615, %v3682
        %v3715 = vadd.f32 %v3616, %v3683
        %v3716 = vadd.f32 %v3617, %v3684
        %v3717 = vadd.f32 %v3618, %v3685
        %v3718 = vadd.f32 %v3619, %v3686
        %v3719 = vadd.f32 %v3620, %v3687
        %v3720 = vadd.f32 %v3621, %v3688
        %v3721 = vadd.f32 %v3622, %v3689
        %v3722 = vadd.f32 %v3623, %v3690
        %v3723 = vadd.f32 %v3624, %v3691
        %v3724 = vadd.f32 %v3625, %v3692
        %v3725 = vadd.f32 %v3626, %v3693
        %v3726 = vadd.f32 %v3627, %v3694
        %v3727 = vadd.f32 %v3628, %v3695
        %v3728 = vadd.f32 %v3629, %v3696
        %v3729 = vadd.f32 %v3630, %v3697
        %v3730 = vadd.f32 %v3631, %v3698
        %v3731 = vadd.f32 %v3632, %v3699
        %v3732 = vadd.f32 %v3633, %v3700
        %v3733 = vadd.f32 %v3634, %v3701
        %v3734 = vadd.f32 %v3635, %v3702
        %v3735 = vadd.f32 %v3636, %v3703
        %v3736 = vadd.f32 %v3637, %v3704
        %v3737 = vadd.f32 %v3638, %v3705
        %v3738 = vadd.f32 %v3639, %v3706
        %v3739 = vld [vmem:[%s1545 + $0x1] sm:$0xff]
        %v3740 = vld [vmem:[%s1545 + $0x9] sm:$0xff]
        %v3741 = vld [vmem:[%s1545 + $0x19] sm:$0xff]
        %v3742 = vld [vmem:[%s1545 + $0x21] sm:$0xff]
        %v3743 = vld [vmem:[%s1545 + $0x31] sm:$0xff]
        %v3744 = vld [vmem:[%s1545 + $0x39] sm:$0xff]
        %v3745 = vld [vmem:[%s1545 + $0x49] sm:$0xff]
        %v3746 = vld [vmem:[%s1545 + $0x51] sm:$0xff]
        %v3747 = vld [vmem:[%s1545 + $0x61] sm:$0xff]
        %v3748 = vld [vmem:[%s1545 + $0x69] sm:$0xff]
        %v3749 = vld [vmem:[%s1545 + $0x79] sm:$0xff]
        %v3750 = vld [vmem:[%s1545 + $0x81] sm:$0xff]
        %v3751 = vld [vmem:[%s1545 + $0x91] sm:$0xff]
        %v3752 = vld [vmem:[%s1545 + $0x99] sm:$0xff]
        %v3753 = vld [vmem:[%s1545 + $0xa9] sm:$0xff]
        %v3754 = vld [vmem:[%s1545 + $0xb1] sm:$0xff]
        %v3755 = vld [vmem:[%s1545 + $0xc1] sm:$0xff]
        %v3756 = vld [vmem:[%s1545 + $0xc9] sm:$0xff]
        %v3757 = vld [vmem:[%s1545 + $0xd9] sm:$0xff]
        %v3758 = vld [vmem:[%s1545 + $0xe1] sm:$0xff]
        %v3759 = vld [vmem:[%s1545 + $0xf1] sm:$0xff]
        %v3760 = vld [vmem:[%s1545 + $0xf9] sm:$0xff]
        %v3761 = vld [vmem:[%s1545 + $0x109] sm:$0xff]
        %v3762 = vld [vmem:[%s1545 + $0x111] sm:$0xff]
        %v3763 = vld [vmem:[%s1545 + $0x121] sm:$0xff]
        %v3764 = vld [vmem:[%s1545 + $0x129] sm:$0xff]
        %v3765 = vld [vmem:[%s1545 + $0x139] sm:$0xff]
        %v3766 = vld [vmem:[%s1545 + $0x141] sm:$0xff]
        %v3767 = vld [vmem:[%s1545 + $0x151] sm:$0xff]
        %v3768 = vld [vmem:[%s1545 + $0x159] sm:$0xff]
        %v3769 = vld [vmem:[%s1545 + $0x169] sm:$0xff]
        %v3770 = vld [vmem:[%s1545 + $0x171] sm:$0xff]
        %v3771 = vld [vmem:[%s3672 + $0x1] sm:$0x1]
        %v3772 = vperm.slane %v3771, 0
        %v3773 = vmul.f32 %v3739, %v3772
        %v3774 = vmul.f32 %v3740, %v3772
        %v3775 = vmul.f32 %v3741, %v3772
        %v3776 = vmul.f32 %v3742, %v3772
        %v3777 = vmul.f32 %v3743, %v3772
        %v3778 = vmul.f32 %v3744, %v3772
        %v3779 = vmul.f32 %v3745, %v3772
        %v3780 = vmul.f32 %v3746, %v3772
        %v3781 = vmul.f32 %v3747, %v3772
        %v3782 = vmul.f32 %v3748, %v3772
        %v3783 = vmul.f32 %v3749, %v3772
        %v3784 = vmul.f32 %v3750, %v3772
        %v3785 = vmul.f32 %v3751, %v3772
        %v3786 = vmul.f32 %v3752, %v3772
        %v3787 = vmul.f32 %v3753, %v3772
        %v3788 = vmul.f32 %v3754, %v3772
        %v3789 = vmul.f32 %v3755, %v3772
        %v3790 = vmul.f32 %v3756, %v3772
        %v3791 = vmul.f32 %v3757, %v3772
        %v3792 = vmul.f32 %v3758, %v3772
        %v3793 = vmul.f32 %v3759, %v3772
        %v3794 = vmul.f32 %v3760, %v3772
        %v3795 = vmul.f32 %v3761, %v3772
        %v3796 = vmul.f32 %v3762, %v3772
        %v3797 = vmul.f32 %v3763, %v3772
        %v3798 = vmul.f32 %v3764, %v3772
        %v3799 = vmul.f32 %v3765, %v3772
        %v3800 = vmul.f32 %v3766, %v3772
        %v3801 = vmul.f32 %v3767, %v3772
        %v3802 = vmul.f32 %v3768, %v3772
        %v3803 = vmul.f32 %v3769, %v3772
        %v3804 = vmul.f32 %v3770, %v3772
        %v3805 = vadd.f32 %v3707, %v3773
        %v3806 = vadd.f32 %v3708, %v3774
        %v3807 = vadd.f32 %v3709, %v3775
        %v3808 = vadd.f32 %v3710, %v3776
        %v3809 = vadd.f32 %v3711, %v3777
        %v3810 = vadd.f32 %v3712, %v3778
        %v3811 = vadd.f32 %v3713, %v3779
        %v3812 = vadd.f32 %v3714, %v3780
        %v3813 = vadd.f32 %v3715, %v3781
        %v3814 = vadd.f32 %v3716, %v3782
        %v3815 = vadd.f32 %v3717, %v3783
        %v3816 = vadd.f32 %v3718, %v3784
        %v3817 = vadd.f32 %v3719, %v3785
        %v3818 = vadd.f32 %v3720, %v3786
        %v3819 = vadd.f32 %v3721, %v3787
        %v3820 = vadd.f32 %v3722, %v3788
        %v3821 = vadd.f32 %v3723, %v3789
        %v3822 = vadd.f32 %v3724, %v3790
        %v3823 = vadd.f32 %v3725, %v3791
        %v3824 = vadd.f32 %v3726, %v3792
        %v3825 = vadd.f32 %v3727, %v3793
        %v3826 = vadd.f32 %v3728, %v3794
        %v3827 = vadd.f32 %v3729, %v3795
        %v3828 = vadd.f32 %v3730, %v3796
        %v3829 = vadd.f32 %v3731, %v3797
        %v3830 = vadd.f32 %v3732, %v3798
        %v3831 = vadd.f32 %v3733, %v3799
        %v3832 = vadd.f32 %v3734, %v3800
        %v3833 = vadd.f32 %v3735, %v3801
        %v3834 = vadd.f32 %v3736, %v3802
        %v3835 = vadd.f32 %v3737, %v3803
        %v3836 = vadd.f32 %v3738, %v3804
        %v3837 = vld [vmem:[%s1545 + $0x2] sm:$0xff]
        %v3838 = vld [vmem:[%s1545 + $0xa] sm:$0xff]
        %v3839 = vld [vmem:[%s1545 + $0x1a] sm:$0xff]
        %v3840 = vld [vmem:[%s1545 + $0x22] sm:$0xff]
        %v3841 = vld [vmem:[%s1545 + $0x32] sm:$0xff]
        %v3842 = vld [vmem:[%s1545 + $0x3a] sm:$0xff]
        %v3843 = vld [vmem:[%s1545 + $0x4a] sm:$0xff]
        %v3844 = vld [vmem:[%s1545 + $0x52] sm:$0xff]
        %v3845 = vld [vmem:[%s1545 + $0x62] sm:$0xff]
        %v3846 = vld [vmem:[%s1545 + $0x6a] sm:$0xff]
        %v3847 = vld [vmem:[%s1545 + $0x7a] sm:$0xff]
        %v3848 = vld [vmem:[%s1545 + $0x82] sm:$0xff]
        %v3849 = vld [vmem:[%s1545 + $0x92] sm:$0xff]
        %v3850 = vld [vmem:[%s1545 + $0x9a] sm:$0xff]
        %v3851 = vld [vmem:[%s1545 + $0xaa] sm:$0xff]
        %v3852 = vld [vmem:[%s1545 + $0xb2] sm:$0xff]
        %v3853 = vld [vmem:[%s1545 + $0xc2] sm:$0xff]
        %v3854 = vld [vmem:[%s1545 + $0xca] sm:$0xff]
        %v3855 = vld [vmem:[%s1545 + $0xda] sm:$0xff]
        %v3856 = vld [vmem:[%s1545 + $0xe2] sm:$0xff]
        %v3857 = vld [vmem:[%s1545 + $0xf2] sm:$0xff]
        %v3858 = vld [vmem:[%s1545 + $0xfa] sm:$0xff]
        %v3859 = vld [vmem:[%s1545 + $0x10a] sm:$0xff]
        %v3860 = vld [vmem:[%s1545 + $0x112] sm:$0xff]
        %v3861 = vld [vmem:[%s1545 + $0x122] sm:$0xff]
        %v3862 = vld [vmem:[%s1545 + $0x12a] sm:$0xff]
        %v3863 = vld [vmem:[%s1545 + $0x13a] sm:$0xff]
        %v3864 = vld [vmem:[%s1545 + $0x142] sm:$0xff]
        %v3865 = vld [vmem:[%s1545 + $0x152] sm:$0xff]
        %v3866 = vld [vmem:[%s1545 + $0x15a] sm:$0xff]
        %v3867 = vld [vmem:[%s1545 + $0x16a] sm:$0xff]
        %v3868 = vld [vmem:[%s1545 + $0x172] sm:$0xff]
        %v3869 = vld [vmem:[%s3672 + $0x2] sm:$0x1]
        %v3870 = vperm.slane %v3869, 0
        %v3871 = vmul.f32 %v3837, %v3870
        %v3872 = vmul.f32 %v3838, %v3870
        %v3873 = vmul.f32 %v3839, %v3870
        %v3874 = vmul.f32 %v3840, %v3870
        %v3875 = vmul.f32 %v3841, %v3870
        %v3876 = vmul.f32 %v3842, %v3870
        %v3877 = vmul.f32 %v3843, %v3870
        %v3878 = vmul.f32 %v3844, %v3870
        %v3879 = vmul.f32 %v3845, %v3870
        %v3880 = vmul.f32 %v3846, %v3870
        %v3881 = vmul.f32 %v3847, %v3870
        %v3882 = vmul.f32 %v3848, %v3870
        %v3883 = vmul.f32 %v3849, %v3870
        %v3884 = vmul.f32 %v3850, %v3870
        %v3885 = vmul.f32 %v3851, %v3870
        %v3886 = vmul.f32 %v3852, %v3870
        %v3887 = vmul.f32 %v3853, %v3870
        %v3888 = vmul.f32 %v3854, %v3870
        %v3889 = vmul.f32 %v3855, %v3870
        %v3890 = vmul.f32 %v3856, %v3870
        %v3891 = vmul.f32 %v3857, %v3870
        %v3892 = vmul.f32 %v3858, %v3870
        %v3893 = vmul.f32 %v3859, %v3870
        %v3894 = vmul.f32 %v3860, %v3870
        %v3895 = vmul.f32 %v3861, %v3870
        %v3896 = vmul.f32 %v3862, %v3870
        %v3897 = vmul.f32 %v3863, %v3870
        %v3898 = vmul.f32 %v3864, %v3870
        %v3899 = vmul.f32 %v3865, %v3870
        %v3900 = vmul.f32 %v3866, %v3870
        %v3901 = vmul.f32 %v3867, %v3870
        %v3902 = vmul.f32 %v3868, %v3870
        %v3903 = vadd.f32 %v3805, %v3871
        %v3904 = vadd.f32 %v3806, %v3872
        %v3905 = vadd.f32 %v3807, %v3873
        %v3906 = vadd.f32 %v3808, %v3874
        %v3907 = vadd.f32 %v3809, %v3875
        %v3908 = vadd.f32 %v3810, %v3876
        %v3909 = vadd.f32 %v3811, %v3877
        %v3910 = vadd.f32 %v3812, %v3878
        %v3911 = vadd.f32 %v3813, %v3879
        %v3912 = vadd.f32 %v3814, %v3880
        %v3913 = vadd.f32 %v3815, %v3881
        %v3914 = vadd.f32 %v3816, %v3882
        %v3915 = vadd.f32 %v3817, %v3883
        %v3916 = vadd.f32 %v3818, %v3884
        %v3917 = vadd.f32 %v3819, %v3885
        %v3918 = vadd.f32 %v3820, %v3886
        %v3919 = vadd.f32 %v3821, %v3887
        %v3920 = vadd.f32 %v3822, %v3888
        %v3921 = vadd.f32 %v3823, %v3889
        %v3922 = vadd.f32 %v3824, %v3890
        %v3923 = vadd.f32 %v3825, %v3891
        %v3924 = vadd.f32 %v3826, %v3892
        %v3925 = vadd.f32 %v3827, %v3893
        %v3926 = vadd.f32 %v3828, %v3894
        %v3927 = vadd.f32 %v3829, %v3895
        %v3928 = vadd.f32 %v3830, %v3896
        %v3929 = vadd.f32 %v3831, %v3897
        %v3930 = vadd.f32 %v3832, %v3898
        %v3931 = vadd.f32 %v3833, %v3899
        %v3932 = vadd.f32 %v3834, %v3900
        %v3933 = vadd.f32 %v3835, %v3901
        %v3934 = vadd.f32 %v3836, %v3902
        %v3935 = vld [vmem:[%s1545 + $0x3] sm:$0xff]
        %v3936 = vld [vmem:[%s1545 + $0xb] sm:$0xff]
        %v3937 = vld [vmem:[%s1545 + $0x1b] sm:$0xff]
        %v3938 = vld [vmem:[%s1545 + $0x23] sm:$0xff]
        %v3939 = vld [vmem:[%s1545 + $0x33] sm:$0xff]
        %v3940 = vld [vmem:[%s1545 + $0x3b] sm:$0xff]
        %v3941 = vld [vmem:[%s1545 + $0x4b] sm:$0xff]
        %v3942 = vld [vmem:[%s1545 + $0x53] sm:$0xff]
        %v3943 = vld [vmem:[%s1545 + $0x63] sm:$0xff]
        %v3944 = vld [vmem:[%s1545 + $0x6b] sm:$0xff]
        %v3945 = vld [vmem:[%s1545 + $0x7b] sm:$0xff]
        %v3946 = vld [vmem:[%s1545 + $0x83] sm:$0xff]
        %v3947 = vld [vmem:[%s1545 + $0x93] sm:$0xff]
        %v3948 = vld [vmem:[%s1545 + $0x9b] sm:$0xff]
        %v3949 = vld [vmem:[%s1545 + $0xab] sm:$0xff]
        %v3950 = vld [vmem:[%s1545 + $0xb3] sm:$0xff]
        %v3951 = vld [vmem:[%s1545 + $0xc3] sm:$0xff]
        %v3952 = vld [vmem:[%s1545 + $0xcb] sm:$0xff]
        %v3953 = vld [vmem:[%s1545 + $0xdb] sm:$0xff]
        %v3954 = vld [vmem:[%s1545 + $0xe3] sm:$0xff]
        %v3955 = vld [vmem:[%s1545 + $0xf3] sm:$0xff]
        %v3956 = vld [vmem:[%s1545 + $0xfb] sm:$0xff]
        %v3957 = vld [vmem:[%s1545 + $0x10b] sm:$0xff]
        %v3958 = vld [vmem:[%s1545 + $0x113] sm:$0xff]
        %v3959 = vld [vmem:[%s1545 + $0x123] sm:$0xff]
        %v3960 = vld [vmem:[%s1545 + $0x12b] sm:$0xff]
        %v3961 = vld [vmem:[%s1545 + $0x13b] sm:$0xff]
        %v3962 = vld [vmem:[%s1545 + $0x143] sm:$0xff]
        %v3963 = vld [vmem:[%s1545 + $0x153] sm:$0xff]
        %v3964 = vld [vmem:[%s1545 + $0x15b] sm:$0xff]
        %v3965 = vld [vmem:[%s1545 + $0x16b] sm:$0xff]
        %v3966 = vld [vmem:[%s1545 + $0x173] sm:$0xff]
        %v3967 = vld [vmem:[%s3672 + $0x3] sm:$0x1]
        %v3968 = vperm.slane %v3967, 0
        %v3969 = vmul.f32 %v3935, %v3968
        %v3970 = vmul.f32 %v3936, %v3968
        %v3971 = vmul.f32 %v3937, %v3968
        %v3972 = vmul.f32 %v3938, %v3968
        %v3973 = vmul.f32 %v3939, %v3968
        %v3974 = vmul.f32 %v3940, %v3968
        %v3975 = vmul.f32 %v3941, %v3968
        %v3976 = vmul.f32 %v3942, %v3968
        %v3977 = vmul.f32 %v3943, %v3968
        %v3978 = vmul.f32 %v3944, %v3968
        %v3979 = vmul.f32 %v3945, %v3968
        %v3980 = vmul.f32 %v3946, %v3968
        %v3981 = vmul.f32 %v3947, %v3968
        %v3982 = vmul.f32 %v3948, %v3968
        %v3983 = vmul.f32 %v3949, %v3968
        %v3984 = vmul.f32 %v3950, %v3968
        %v3985 = vmul.f32 %v3951, %v3968
        %v3986 = vmul.f32 %v3952, %v3968
        %v3987 = vmul.f32 %v3953, %v3968
        %v3988 = vmul.f32 %v3954, %v3968
        %v3989 = vmul.f32 %v3955, %v3968
        %v3990 = vmul.f32 %v3956, %v3968
        %v3991 = vmul.f32 %v3957, %v3968
        %v3992 = vmul.f32 %v3958, %v3968
        %v3993 = vmul.f32 %v3959, %v3968
        %v3994 = vmul.f32 %v3960, %v3968
        %v3995 = vmul.f32 %v3961, %v3968
        %v3996 = vmul.f32 %v3962, %v3968
        %v3997 = vmul.f32 %v3963, %v3968
        %v3998 = vmul.f32 %v3964, %v3968
        %v3999 = vmul.f32 %v3965, %v3968
        %v4000 = vmul.f32 %v3966, %v3968
        %v4001 = vadd.f32 %v3903, %v3969
        %v4002 = vadd.f32 %v3904, %v3970
        %v4003 = vadd.f32 %v3905, %v3971
        %v4004 = vadd.f32 %v3906, %v3972
        %v4005 = vadd.f32 %v3907, %v3973
        %v4006 = vadd.f32 %v3908, %v3974
        %v4007 = vadd.f32 %v3909, %v3975
        %v4008 = vadd.f32 %v3910, %v3976
        %v4009 = vadd.f32 %v3911, %v3977
        %v4010 = vadd.f32 %v3912, %v3978
        %v4011 = vadd.f32 %v3913, %v3979
        %v4012 = vadd.f32 %v3914, %v3980
        %v4013 = vadd.f32 %v3915, %v3981
        %v4014 = vadd.f32 %v3916, %v3982
        %v4015 = vadd.f32 %v3917, %v3983
        %v4016 = vadd.f32 %v3918, %v3984
        %v4017 = vadd.f32 %v3919, %v3985
        %v4018 = vadd.f32 %v3920, %v3986
        %v4019 = vadd.f32 %v3921, %v3987
        %v4020 = vadd.f32 %v3922, %v3988
        %v4021 = vadd.f32 %v3923, %v3989
        %v4022 = vadd.f32 %v3924, %v3990
        %v4023 = vadd.f32 %v3925, %v3991
        %v4024 = vadd.f32 %v3926, %v3992
        %v4025 = vadd.f32 %v3927, %v3993
        %v4026 = vadd.f32 %v3928, %v3994
        %v4027 = vadd.f32 %v3929, %v3995
        %v4028 = vadd.f32 %v3930, %v3996
        %v4029 = vadd.f32 %v3931, %v3997
        %v4030 = vadd.f32 %v3932, %v3998
        %v4031 = vadd.f32 %v3933, %v3999
        %v4032 = vadd.f32 %v3934, %v4000
        %v4033 = vld [vmem:[%s1545 + $0x4] sm:$0xff]
        %v4034 = vld [vmem:[%s1545 + $0xc] sm:$0xff]
        %v4035 = vld [vmem:[%s1545 + $0x1c] sm:$0xff]
        %v4036 = vld [vmem:[%s1545 + $0x24] sm:$0xff]
        %v4037 = vld [vmem:[%s1545 + $0x34] sm:$0xff]
        %v4038 = vld [vmem:[%s1545 + $0x3c] sm:$0xff]
        %v4039 = vld [vmem:[%s1545 + $0x4c] sm:$0xff]
        %v4040 = vld [vmem:[%s1545 + $0x54] sm:$0xff]
        %v4041 = vld [vmem:[%s1545 + $0x64] sm:$0xff]
        %v4042 = vld [vmem:[%s1545 + $0x6c] sm:$0xff]
        %v4043 = vld [vmem:[%s1545 + $0x7c] sm:$0xff]
        %v4044 = vld [vmem:[%s1545 + $0x84] sm:$0xff]
        %v4045 = vld [vmem:[%s1545 + $0x94] sm:$0xff]
        %v4046 = vld [vmem:[%s1545 + $0x9c] sm:$0xff]
        %v4047 = vld [vmem:[%s1545 + $0xac] sm:$0xff]
        %v4048 = vld [vmem:[%s1545 + $0xb4] sm:$0xff]
        %v4049 = vld [vmem:[%s1545 + $0xc4] sm:$0xff]
        %v4050 = vld [vmem:[%s1545 + $0xcc] sm:$0xff]
        %v4051 = vld [vmem:[%s1545 + $0xdc] sm:$0xff]
        %v4052 = vld [vmem:[%s1545 + $0xe4] sm:$0xff]
        %v4053 = vld [vmem:[%s1545 + $0xf4] sm:$0xff]
        %v4054 = vld [vmem:[%s1545 + $0xfc] sm:$0xff]
        %v4055 = vld [vmem:[%s1545 + $0x10c] sm:$0xff]
        %v4056 = vld [vmem:[%s1545 + $0x114] sm:$0xff]
        %v4057 = vld [vmem:[%s1545 + $0x124] sm:$0xff]
        %v4058 = vld [vmem:[%s1545 + $0x12c] sm:$0xff]
        %v4059 = vld [vmem:[%s1545 + $0x13c] sm:$0xff]
        %v4060 = vld [vmem:[%s1545 + $0x144] sm:$0xff]
        %v4061 = vld [vmem:[%s1545 + $0x154] sm:$0xff]
        %v4062 = vld [vmem:[%s1545 + $0x15c] sm:$0xff]
        %v4063 = vld [vmem:[%s1545 + $0x16c] sm:$0xff]
        %v4064 = vld [vmem:[%s1545 + $0x174] sm:$0xff]
        %v4065 = vld [vmem:[%s3672 + $0x4] sm:$0x1]
        %v4066 = vperm.slane %v4065, 0
        %v4067 = vmul.f32 %v4033, %v4066
        %v4068 = vmul.f32 %v4034, %v4066
        %v4069 = vmul.f32 %v4035, %v4066
        %v4070 = vmul.f32 %v4036, %v4066
        %v4071 = vmul.f32 %v4037, %v4066
        %v4072 = vmul.f32 %v4038, %v4066
        %v4073 = vmul.f32 %v4039, %v4066
        %v4074 = vmul.f32 %v4040, %v4066
        %v4075 = vmul.f32 %v4041, %v4066
        %v4076 = vmul.f32 %v4042, %v4066
        %v4077 = vmul.f32 %v4043, %v4066
        %v4078 = vmul.f32 %v4044, %v4066
        %v4079 = vmul.f32 %v4045, %v4066
        %v4080 = vmul.f32 %v4046, %v4066
        %v4081 = vmul.f32 %v4047, %v4066
        %v4082 = vmul.f32 %v4048, %v4066
        %v4083 = vmul.f32 %v4049, %v4066
        %v4084 = vmul.f32 %v4050, %v4066
        %v4085 = vmul.f32 %v4051, %v4066
        %v4086 = vmul.f32 %v4052, %v4066
        %v4087 = vmul.f32 %v4053, %v4066
        %v4088 = vmul.f32 %v4054, %v4066
        %v4089 = vmul.f32 %v4055, %v4066
        %v4090 = vmul.f32 %v4056, %v4066
        %v4091 = vmul.f32 %v4057, %v4066
        %v4092 = vmul.f32 %v4058, %v4066
        %v4093 = vmul.f32 %v4059, %v4066
        %v4094 = vmul.f32 %v4060, %v4066
        %v4095 = vmul.f32 %v4061, %v4066
        %v4096 = vmul.f32 %v4062, %v4066
        %v4097 = vmul.f32 %v4063, %v4066
        %v4098 = vmul.f32 %v4064, %v4066
        %v4099 = vadd.f32 %v4001, %v4067
        %v4100 = vadd.f32 %v4002, %v4068
        %v4101 = vadd.f32 %v4003, %v4069
        %v4102 = vadd.f32 %v4004, %v4070
        %v4103 = vadd.f32 %v4005, %v4071
        %v4104 = vadd.f32 %v4006, %v4072
        %v4105 = vadd.f32 %v4007, %v4073
        %v4106 = vadd.f32 %v4008, %v4074
        %v4107 = vadd.f32 %v4009, %v4075
        %v4108 = vadd.f32 %v4010, %v4076
        %v4109 = vadd.f32 %v4011, %v4077
        %v4110 = vadd.f32 %v4012, %v4078
        %v4111 = vadd.f32 %v4013, %v4079
        %v4112 = vadd.f32 %v4014, %v4080
        %v4113 = vadd.f32 %v4015, %v4081
        %v4114 = vadd.f32 %v4016, %v4082
        %v4115 = vadd.f32 %v4017, %v4083
        %v4116 = vadd.f32 %v4018, %v4084
        %v4117 = vadd.f32 %v4019, %v4085
        %v4118 = vadd.f32 %v4020, %v4086
        %v4119 = vadd.f32 %v4021, %v4087
        %v4120 = vadd.f32 %v4022, %v4088
        %v4121 = vadd.f32 %v4023, %v4089
        %v4122 = vadd.f32 %v4024, %v4090
        %v4123 = vadd.f32 %v4025, %v4091
        %v4124 = vadd.f32 %v4026, %v4092
        %v4125 = vadd.f32 %v4027, %v4093
        %v4126 = vadd.f32 %v4028, %v4094
        %v4127 = vadd.f32 %v4029, %v4095
        %v4128 = vadd.f32 %v4030, %v4096
        %v4129 = vadd.f32 %v4031, %v4097
        %v4130 = vadd.f32 %v4032, %v4098
        %v4131 = vld [vmem:[%s1545 + $0x5] sm:$0xff]
        %v4132 = vld [vmem:[%s1545 + $0xd] sm:$0xff]
        %v4133 = vld [vmem:[%s1545 + $0x1d] sm:$0xff]
        %v4134 = vld [vmem:[%s1545 + $0x25] sm:$0xff]
        %v4135 = vld [vmem:[%s1545 + $0x35] sm:$0xff]
        %v4136 = vld [vmem:[%s1545 + $0x3d] sm:$0xff]
        %v4137 = vld [vmem:[%s1545 + $0x4d] sm:$0xff]
        %v4138 = vld [vmem:[%s1545 + $0x55] sm:$0xff]
        %v4139 = vld [vmem:[%s1545 + $0x65] sm:$0xff]
        %v4140 = vld [vmem:[%s1545 + $0x6d] sm:$0xff]
        %v4141 = vld [vmem:[%s1545 + $0x7d] sm:$0xff]
        %v4142 = vld [vmem:[%s1545 + $0x85] sm:$0xff]
        %v4143 = vld [vmem:[%s1545 + $0x95] sm:$0xff]
        %v4144 = vld [vmem:[%s1545 + $0x9d] sm:$0xff]
        %v4145 = vld [vmem:[%s1545 + $0xad] sm:$0xff]
        %v4146 = vld [vmem:[%s1545 + $0xb5] sm:$0xff]
        %v4147 = vld [vmem:[%s1545 + $0xc5] sm:$0xff]
        %v4148 = vld [vmem:[%s1545 + $0xcd] sm:$0xff]
        %v4149 = vld [vmem:[%s1545 + $0xdd] sm:$0xff]
        %v4150 = vld [vmem:[%s1545 + $0xe5] sm:$0xff]
        %v4151 = vld [vmem:[%s1545 + $0xf5] sm:$0xff]
        %v4152 = vld [vmem:[%s1545 + $0xfd] sm:$0xff]
        %v4153 = vld [vmem:[%s1545 + $0x10d] sm:$0xff]
        %v4154 = vld [vmem:[%s1545 + $0x115] sm:$0xff]
        %v4155 = vld [vmem:[%s1545 + $0x125] sm:$0xff]
        %v4156 = vld [vmem:[%s1545 + $0x12d] sm:$0xff]
        %v4157 = vld [vmem:[%s1545 + $0x13d] sm:$0xff]
        %v4158 = vld [vmem:[%s1545 + $0x145] sm:$0xff]
        %v4159 = vld [vmem:[%s1545 + $0x155] sm:$0xff]
        %v4160 = vld [vmem:[%s1545 + $0x15d] sm:$0xff]
        %v4161 = vld [vmem:[%s1545 + $0x16d] sm:$0xff]
        %v4162 = vld [vmem:[%s1545 + $0x175] sm:$0xff]
        %v4163 = vld [vmem:[%s3672 + $0x5] sm:$0x1]
        %v4164 = vperm.slane %v4163, 0
        %v4165 = vmul.f32 %v4131, %v4164
        %v4166 = vmul.f32 %v4132, %v4164
        %v4167 = vmul.f32 %v4133, %v4164
        %v4168 = vmul.f32 %v4134, %v4164
        %v4169 = vmul.f32 %v4135, %v4164
        %v4170 = vmul.f32 %v4136, %v4164
        %v4171 = vmul.f32 %v4137, %v4164
        %v4172 = vmul.f32 %v4138, %v4164
        %v4173 = vmul.f32 %v4139, %v4164
        %v4174 = vmul.f32 %v4140, %v4164
        %v4175 = vmul.f32 %v4141, %v4164
        %v4176 = vmul.f32 %v4142, %v4164
        %v4177 = vmul.f32 %v4143, %v4164
        %v4178 = vmul.f32 %v4144, %v4164
        %v4179 = vmul.f32 %v4145, %v4164
        %v4180 = vmul.f32 %v4146, %v4164
        %v4181 = vmul.f32 %v4147, %v4164
        %v4182 = vmul.f32 %v4148, %v4164
        %v4183 = vmul.f32 %v4149, %v4164
        %v4184 = vmul.f32 %v4150, %v4164
        %v4185 = vmul.f32 %v4151, %v4164
        %v4186 = vmul.f32 %v4152, %v4164
        %v4187 = vmul.f32 %v4153, %v4164
        %v4188 = vmul.f32 %v4154, %v4164
        %v4189 = vmul.f32 %v4155, %v4164
        %v4190 = vmul.f32 %v4156, %v4164
        %v4191 = vmul.f32 %v4157, %v4164
        %v4192 = vmul.f32 %v4158, %v4164
        %v4193 = vmul.f32 %v4159, %v4164
        %v4194 = vmul.f32 %v4160, %v4164
        %v4195 = vmul.f32 %v4161, %v4164
        %v4196 = vmul.f32 %v4162, %v4164
        %v4197 = vadd.f32 %v4099, %v4165
        %v4198 = vadd.f32 %v4100, %v4166
        %v4199 = vadd.f32 %v4101, %v4167
        %v4200 = vadd.f32 %v4102, %v4168
        %v4201 = vadd.f32 %v4103, %v4169
        %v4202 = vadd.f32 %v4104, %v4170
        %v4203 = vadd.f32 %v4105, %v4171
        %v4204 = vadd.f32 %v4106, %v4172
        %v4205 = vadd.f32 %v4107, %v4173
        %v4206 = vadd.f32 %v4108, %v4174
        %v4207 = vadd.f32 %v4109, %v4175
        %v4208 = vadd.f32 %v4110, %v4176
        %v4209 = vadd.f32 %v4111, %v4177
        %v4210 = vadd.f32 %v4112, %v4178
        %v4211 = vadd.f32 %v4113, %v4179
        %v4212 = vadd.f32 %v4114, %v4180
        %v4213 = vadd.f32 %v4115, %v4181
        %v4214 = vadd.f32 %v4116, %v4182
        %v4215 = vadd.f32 %v4117, %v4183
        %v4216 = vadd.f32 %v4118, %v4184
        %v4217 = vadd.f32 %v4119, %v4185
        %v4218 = vadd.f32 %v4120, %v4186
        %v4219 = vadd.f32 %v4121, %v4187
        %v4220 = vadd.f32 %v4122, %v4188
        %v4221 = vadd.f32 %v4123, %v4189
        %v4222 = vadd.f32 %v4124, %v4190
        %v4223 = vadd.f32 %v4125, %v4191
        %v4224 = vadd.f32 %v4126, %v4192
        %v4225 = vadd.f32 %v4127, %v4193
        %v4226 = vadd.f32 %v4128, %v4194
        %v4227 = vadd.f32 %v4129, %v4195
        %v4228 = vadd.f32 %v4130, %v4196
        %v4229 = vld [vmem:[%s1545 + $0x6] sm:$0xff]
        %v4230 = vld [vmem:[%s1545 + $0xe] sm:$0xff]
        %v4231 = vld [vmem:[%s1545 + $0x1e] sm:$0xff]
        %v4232 = vld [vmem:[%s1545 + $0x26] sm:$0xff]
        %v4233 = vld [vmem:[%s1545 + $0x36] sm:$0xff]
        %v4234 = vld [vmem:[%s1545 + $0x3e] sm:$0xff]
        %v4235 = vld [vmem:[%s1545 + $0x4e] sm:$0xff]
        %v4236 = vld [vmem:[%s1545 + $0x56] sm:$0xff]
        %v4237 = vld [vmem:[%s1545 + $0x66] sm:$0xff]
        %v4238 = vld [vmem:[%s1545 + $0x6e] sm:$0xff]
        %v4239 = vld [vmem:[%s1545 + $0x7e] sm:$0xff]
        %v4240 = vld [vmem:[%s1545 + $0x86] sm:$0xff]
        %v4241 = vld [vmem:[%s1545 + $0x96] sm:$0xff]
        %v4242 = vld [vmem:[%s1545 + $0x9e] sm:$0xff]
        %v4243 = vld [vmem:[%s1545 + $0xae] sm:$0xff]
        %v4244 = vld [vmem:[%s1545 + $0xb6] sm:$0xff]
        %v4245 = vld [vmem:[%s1545 + $0xc6] sm:$0xff]
        %v4246 = vld [vmem:[%s1545 + $0xce] sm:$0xff]
        %v4247 = vld [vmem:[%s1545 + $0xde] sm:$0xff]
        %v4248 = vld [vmem:[%s1545 + $0xe6] sm:$0xff]
        %v4249 = vld [vmem:[%s1545 + $0xf6] sm:$0xff]
        %v4250 = vld [vmem:[%s1545 + $0xfe] sm:$0xff]
        %v4251 = vld [vmem:[%s1545 + $0x10e] sm:$0xff]
        %v4252 = vld [vmem:[%s1545 + $0x116] sm:$0xff]
        %v4253 = vld [vmem:[%s1545 + $0x126] sm:$0xff]
        %v4254 = vld [vmem:[%s1545 + $0x12e] sm:$0xff]
        %v4255 = vld [vmem:[%s1545 + $0x13e] sm:$0xff]
        %v4256 = vld [vmem:[%s1545 + $0x146] sm:$0xff]
        %v4257 = vld [vmem:[%s1545 + $0x156] sm:$0xff]
        %v4258 = vld [vmem:[%s1545 + $0x15e] sm:$0xff]
        %v4259 = vld [vmem:[%s1545 + $0x16e] sm:$0xff]
        %v4260 = vld [vmem:[%s1545 + $0x176] sm:$0xff]
        %v4261 = vld [vmem:[%s3672 + $0x6] sm:$0x1]
        %v4262 = vperm.slane %v4261, 0
        %v4263 = vmul.f32 %v4229, %v4262
        %v4264 = vmul.f32 %v4230, %v4262
        %v4265 = vmul.f32 %v4231, %v4262
        %v4266 = vmul.f32 %v4232, %v4262
        %v4267 = vmul.f32 %v4233, %v4262
        %v4268 = vmul.f32 %v4234, %v4262
        %v4269 = vmul.f32 %v4235, %v4262
        %v4270 = vmul.f32 %v4236, %v4262
        %v4271 = vmul.f32 %v4237, %v4262
        %v4272 = vmul.f32 %v4238, %v4262
        %v4273 = vmul.f32 %v4239, %v4262
        %v4274 = vmul.f32 %v4240, %v4262
        %v4275 = vmul.f32 %v4241, %v4262
        %v4276 = vmul.f32 %v4242, %v4262
        %v4277 = vmul.f32 %v4243, %v4262
        %v4278 = vmul.f32 %v4244, %v4262
        %v4279 = vmul.f32 %v4245, %v4262
        %v4280 = vmul.f32 %v4246, %v4262
        %v4281 = vmul.f32 %v4247, %v4262
        %v4282 = vmul.f32 %v4248, %v4262
        %v4283 = vmul.f32 %v4249, %v4262
        %v4284 = vmul.f32 %v4250, %v4262
        %v4285 = vmul.f32 %v4251, %v4262
        %v4286 = vmul.f32 %v4252, %v4262
        %v4287 = vmul.f32 %v4253, %v4262
        %v4288 = vmul.f32 %v4254, %v4262
        %v4289 = vmul.f32 %v4255, %v4262
        %v4290 = vmul.f32 %v4256, %v4262
        %v4291 = vmul.f32 %v4257, %v4262
        %v4292 = vmul.f32 %v4258, %v4262
        %v4293 = vmul.f32 %v4259, %v4262
        %v4294 = vmul.f32 %v4260, %v4262
        %v4295 = vadd.f32 %v4197, %v4263
        %v4296 = vadd.f32 %v4198, %v4264
        %v4297 = vadd.f32 %v4199, %v4265
        %v4298 = vadd.f32 %v4200, %v4266
        %v4299 = vadd.f32 %v4201, %v4267
        %v4300 = vadd.f32 %v4202, %v4268
        %v4301 = vadd.f32 %v4203, %v4269
        %v4302 = vadd.f32 %v4204, %v4270
        %v4303 = vadd.f32 %v4205, %v4271
        %v4304 = vadd.f32 %v4206, %v4272
        %v4305 = vadd.f32 %v4207, %v4273
        %v4306 = vadd.f32 %v4208, %v4274
        %v4307 = vadd.f32 %v4209, %v4275
        %v4308 = vadd.f32 %v4210, %v4276
        %v4309 = vadd.f32 %v4211, %v4277
        %v4310 = vadd.f32 %v4212, %v4278
        %v4311 = vadd.f32 %v4213, %v4279
        %v4312 = vadd.f32 %v4214, %v4280
        %v4313 = vadd.f32 %v4215, %v4281
        %v4314 = vadd.f32 %v4216, %v4282
        %v4315 = vadd.f32 %v4217, %v4283
        %v4316 = vadd.f32 %v4218, %v4284
        %v4317 = vadd.f32 %v4219, %v4285
        %v4318 = vadd.f32 %v4220, %v4286
        %v4319 = vadd.f32 %v4221, %v4287
        %v4320 = vadd.f32 %v4222, %v4288
        %v4321 = vadd.f32 %v4223, %v4289
        %v4322 = vadd.f32 %v4224, %v4290
        %v4323 = vadd.f32 %v4225, %v4291
        %v4324 = vadd.f32 %v4226, %v4292
        %v4325 = vadd.f32 %v4227, %v4293
        %v4326 = vadd.f32 %v4228, %v4294
        %s4327 = scalar_lea.vmem [#allocation3], 96
        %v4328 = vld [vmem:[%s4327] sm:$0xff]
        %v4329 = vld [vmem:[%s4327 + $0x8] sm:$0xff]
        %v4330 = vld [vmem:[%s4327 + $0x18] sm:$0xff]
        %v4331 = vld [vmem:[%s4327 + $0x20] sm:$0xff]
        %v4332 = vld [vmem:[%s4327 + $0x30] sm:$0xff]
        %v4333 = vld [vmem:[%s4327 + $0x38] sm:$0xff]
        %v4334 = vld [vmem:[%s4327 + $0x48] sm:$0xff]
        %v4335 = vld [vmem:[%s4327 + $0x50] sm:$0xff]
        %v4336 = vld [vmem:[%s4327 + $0x60] sm:$0xff]
        %v4337 = vld [vmem:[%s4327 + $0x68] sm:$0xff]
        %v4338 = vld [vmem:[%s4327 + $0x78] sm:$0xff]
        %v4339 = vld [vmem:[%s4327 + $0x80] sm:$0xff]
        %v4340 = vld [vmem:[%s4327 + $0x90] sm:$0xff]
        %v4341 = vld [vmem:[%s4327 + $0x98] sm:$0xff]
        %v4342 = vld [vmem:[%s4327 + $0xa8] sm:$0xff]
        %v4343 = vld [vmem:[%s4327 + $0xb0] sm:$0xff]
        %v4344 = vld [vmem:[%s4327 + $0xc0] sm:$0xff]
        %v4345 = vld [vmem:[%s4327 + $0xc8] sm:$0xff]
        %v4346 = vld [vmem:[%s4327 + $0xd8] sm:$0xff]
        %v4347 = vld [vmem:[%s4327 + $0xe0] sm:$0xff]
        %v4348 = vld [vmem:[%s4327 + $0xf0] sm:$0xff]
        %v4349 = vld [vmem:[%s4327 + $0xf8] sm:$0xff]
        %v4350 = vld [vmem:[%s4327 + $0x108] sm:$0xff]
        %v4351 = vld [vmem:[%s4327 + $0x110] sm:$0xff]
        %v4352 = vld [vmem:[%s4327 + $0x120] sm:$0xff]
        %v4353 = vld [vmem:[%s4327 + $0x128] sm:$0xff]
        %v4354 = vld [vmem:[%s4327 + $0x138] sm:$0xff]
        %v4355 = vld [vmem:[%s4327 + $0x140] sm:$0xff]
        %v4356 = vld [vmem:[%s4327 + $0x150] sm:$0xff]
        %v4357 = vld [vmem:[%s4327 + $0x158] sm:$0xff]
        %v4358 = vld [vmem:[%s4327 + $0x168] sm:$0xff]
        %v4359 = vld [vmem:[%s4327 + $0x170] sm:$0xff]
        %s4360 = scalar_lea.vmem [#allocation10], 32
        %v4361 = vld [vmem:[%s4360] sm:$0x1]
        %v4362 = vperm.slane %v4361, 0
        %v4363 = vmul.f32 %v4328, %v4362
        %v4364 = vmul.f32 %v4329, %v4362
        %v4365 = vmul.f32 %v4330, %v4362
        %v4366 = vmul.f32 %v4331, %v4362
        %v4367 = vmul.f32 %v4332, %v4362
        %v4368 = vmul.f32 %v4333, %v4362
        %v4369 = vmul.f32 %v4334, %v4362
        %v4370 = vmul.f32 %v4335, %v4362
        %v4371 = vmul.f32 %v4336, %v4362
        %v4372 = vmul.f32 %v4337, %v4362
        %v4373 = vmul.f32 %v4338, %v4362
        %v4374 = vmul.f32 %v4339, %v4362
        %v4375 = vmul.f32 %v4340, %v4362
        %v4376 = vmul.f32 %v4341, %v4362
        %v4377 = vmul.f32 %v4342, %v4362
        %v4378 = vmul.f32 %v4343, %v4362
        %v4379 = vmul.f32 %v4344, %v4362
        %v4380 = vmul.f32 %v4345, %v4362
        %v4381 = vmul.f32 %v4346, %v4362
        %v4382 = vmul.f32 %v4347, %v4362
        %v4383 = vmul.f32 %v4348, %v4362
        %v4384 = vmul.f32 %v4349, %v4362
        %v4385 = vmul.f32 %v4350, %v4362
        %v4386 = vmul.f32 %v4351, %v4362
        %v4387 = vmul.f32 %v4352, %v4362
        %v4388 = vmul.f32 %v4353, %v4362
        %v4389 = vmul.f32 %v4354, %v4362
        %v4390 = vmul.f32 %v4355, %v4362
        %v4391 = vmul.f32 %v4356, %v4362
        %v4392 = vmul.f32 %v4357, %v4362
        %v4393 = vmul.f32 %v4358, %v4362
        %v4394 = vmul.f32 %v4359, %v4362
        %v4395 = vadd.f32 %v4295, %v4363
        %v4396 = vadd.f32 %v4296, %v4364
        %v4397 = vadd.f32 %v4297, %v4365
        %v4398 = vadd.f32 %v4298, %v4366
        %v4399 = vadd.f32 %v4299, %v4367
        %v4400 = vadd.f32 %v4300, %v4368
        %v4401 = vadd.f32 %v4301, %v4369
        %v4402 = vadd.f32 %v4302, %v4370
        %v4403 = vadd.f32 %v4303, %v4371
        %v4404 = vadd.f32 %v4304, %v4372
        %v4405 = vadd.f32 %v4305, %v4373
        %v4406 = vadd.f32 %v4306, %v4374
        %v4407 = vadd.f32 %v4307, %v4375
        %v4408 = vadd.f32 %v4308, %v4376
        %v4409 = vadd.f32 %v4309, %v4377
        %v4410 = vadd.f32 %v4310, %v4378
        %v4411 = vadd.f32 %v4311, %v4379
        %v4412 = vadd.f32 %v4312, %v4380
        %v4413 = vadd.f32 %v4313, %v4381
        %v4414 = vadd.f32 %v4314, %v4382
        %v4415 = vadd.f32 %v4315, %v4383
        %v4416 = vadd.f32 %v4316, %v4384
        %v4417 = vadd.f32 %v4317, %v4385
        %v4418 = vadd.f32 %v4318, %v4386
        %v4419 = vadd.f32 %v4319, %v4387
        %v4420 = vadd.f32 %v4320, %v4388
        %v4421 = vadd.f32 %v4321, %v4389
        %v4422 = vadd.f32 %v4322, %v4390
        %v4423 = vadd.f32 %v4323, %v4391
        %v4424 = vadd.f32 %v4324, %v4392
        %v4425 = vadd.f32 %v4325, %v4393
        %v4426 = vadd.f32 %v4326, %v4394
        %v4427 = vld [vmem:[%s4327 + $0x1] sm:$0xff]
        %v4428 = vld [vmem:[%s4327 + $0x9] sm:$0xff]
        %v4429 = vld [vmem:[%s4327 + $0x19] sm:$0xff]
        %v4430 = vld [vmem:[%s4327 + $0x21] sm:$0xff]
        %v4431 = vld [vmem:[%s4327 + $0x31] sm:$0xff]
        %v4432 = vld [vmem:[%s4327 + $0x39] sm:$0xff]
        %v4433 = vld [vmem:[%s4327 + $0x49] sm:$0xff]
        %v4434 = vld [vmem:[%s4327 + $0x51] sm:$0xff]
        %v4435 = vld [vmem:[%s4327 + $0x61] sm:$0xff]
        %v4436 = vld [vmem:[%s4327 + $0x69] sm:$0xff]
        %v4437 = vld [vmem:[%s4327 + $0x79] sm:$0xff]
        %v4438 = vld [vmem:[%s4327 + $0x81] sm:$0xff]
        %v4439 = vld [vmem:[%s4327 + $0x91] sm:$0xff]
        %v4440 = vld [vmem:[%s4327 + $0x99] sm:$0xff]
        %v4441 = vld [vmem:[%s4327 + $0xa9] sm:$0xff]
        %v4442 = vld [vmem:[%s4327 + $0xb1] sm:$0xff]
        %v4443 = vld [vmem:[%s4327 + $0xc1] sm:$0xff]
        %v4444 = vld [vmem:[%s4327 + $0xc9] sm:$0xff]
        %v4445 = vld [vmem:[%s4327 + $0xd9] sm:$0xff]
        %v4446 = vld [vmem:[%s4327 + $0xe1] sm:$0xff]
        %v4447 = vld [vmem:[%s4327 + $0xf1] sm:$0xff]
        %v4448 = vld [vmem:[%s4327 + $0xf9] sm:$0xff]
        %v4449 = vld [vmem:[%s4327 + $0x109] sm:$0xff]
        %v4450 = vld [vmem:[%s4327 + $0x111] sm:$0xff]
        %v4451 = vld [vmem:[%s4327 + $0x121] sm:$0xff]
        %v4452 = vld [vmem:[%s4327 + $0x129] sm:$0xff]
        %v4453 = vld [vmem:[%s4327 + $0x139] sm:$0xff]
        %v4454 = vld [vmem:[%s4327 + $0x141] sm:$0xff]
        %v4455 = vld [vmem:[%s4327 + $0x151] sm:$0xff]
        %v4456 = vld [vmem:[%s4327 + $0x159] sm:$0xff]
        %v4457 = vld [vmem:[%s4327 + $0x169] sm:$0xff]
        %v4458 = vld [vmem:[%s4327 + $0x171] sm:$0xff]
        %v4459 = vld [vmem:[%s4360 + $0x1] sm:$0x1]
        %v4460 = vperm.slane %v4459, 0
        %v4461 = vmul.f32 %v4427, %v4460
        %v4462 = vmul.f32 %v4428, %v4460
        %v4463 = vmul.f32 %v4429, %v4460
        %v4464 = vmul.f32 %v4430, %v4460
        %v4465 = vmul.f32 %v4431, %v4460
        %v4466 = vmul.f32 %v4432, %v4460
        %v4467 = vmul.f32 %v4433, %v4460
        %v4468 = vmul.f32 %v4434, %v4460
        %v4469 = vmul.f32 %v4435, %v4460
        %v4470 = vmul.f32 %v4436, %v4460
        %v4471 = vmul.f32 %v4437, %v4460
        %v4472 = vmul.f32 %v4438, %v4460
        %v4473 = vmul.f32 %v4439, %v4460
        %v4474 = vmul.f32 %v4440, %v4460
        %v4475 = vmul.f32 %v4441, %v4460
        %v4476 = vmul.f32 %v4442, %v4460
        %v4477 = vmul.f32 %v4443, %v4460
        %v4478 = vmul.f32 %v4444, %v4460
        %v4479 = vmul.f32 %v4445, %v4460
        %v4480 = vmul.f32 %v4446, %v4460
        %v4481 = vmul.f32 %v4447, %v4460
        %v4482 = vmul.f32 %v4448, %v4460
        %v4483 = vmul.f32 %v4449, %v4460
        %v4484 = vmul.f32 %v4450, %v4460
        %v4485 = vmul.f32 %v4451, %v4460
        %v4486 = vmul.f32 %v4452, %v4460
        %v4487 = vmul.f32 %v4453, %v4460
        %v4488 = vmul.f32 %v4454, %v4460
        %v4489 = vmul.f32 %v4455, %v4460
        %v4490 = vmul.f32 %v4456, %v4460
        %v4491 = vmul.f32 %v4457, %v4460
        %v4492 = vmul.f32 %v4458, %v4460
        %v4493 = vadd.f32 %v4395, %v4461
        %v4494 = vadd.f32 %v4396, %v4462
        %v4495 = vadd.f32 %v4397, %v4463
        %v4496 = vadd.f32 %v4398, %v4464
        %v4497 = vadd.f32 %v4399, %v4465
        %v4498 = vadd.f32 %v4400, %v4466
        %v4499 = vadd.f32 %v4401, %v4467
        %v4500 = vadd.f32 %v4402, %v4468
        %v4501 = vadd.f32 %v4403, %v4469
        %v4502 = vadd.f32 %v4404, %v4470
        %v4503 = vadd.f32 %v4405, %v4471
        %v4504 = vadd.f32 %v4406, %v4472
        %v4505 = vadd.f32 %v4407, %v4473
        %v4506 = vadd.f32 %v4408, %v4474
        %v4507 = vadd.f32 %v4409, %v4475
        %v4508 = vadd.f32 %v4410, %v4476
        %v4509 = vadd.f32 %v4411, %v4477
        %v4510 = vadd.f32 %v4412, %v4478
        %v4511 = vadd.f32 %v4413, %v4479
        %v4512 = vadd.f32 %v4414, %v4480
        %v4513 = vadd.f32 %v4415, %v4481
        %v4514 = vadd.f32 %v4416, %v4482
        %v4515 = vadd.f32 %v4417, %v4483
        %v4516 = vadd.f32 %v4418, %v4484
        %v4517 = vadd.f32 %v4419, %v4485
        %v4518 = vadd.f32 %v4420, %v4486
        %v4519 = vadd.f32 %v4421, %v4487
        %v4520 = vadd.f32 %v4422, %v4488
        %v4521 = vadd.f32 %v4423, %v4489
        %v4522 = vadd.f32 %v4424, %v4490
        %v4523 = vadd.f32 %v4425, %v4491
        %v4524 = vadd.f32 %v4426, %v4492
        %v4525 = vld [vmem:[%s4327 + $0x2] sm:$0xff]
        %v4526 = vld [vmem:[%s4327 + $0xa] sm:$0xff]
        %v4527 = vld [vmem:[%s4327 + $0x1a] sm:$0xff]
        %v4528 = vld [vmem:[%s4327 + $0x22] sm:$0xff]
        %v4529 = vld [vmem:[%s4327 + $0x32] sm:$0xff]
        %v4530 = vld [vmem:[%s4327 + $0x3a] sm:$0xff]
        %v4531 = vld [vmem:[%s4327 + $0x4a] sm:$0xff]
        %v4532 = vld [vmem:[%s4327 + $0x52] sm:$0xff]
        %v4533 = vld [vmem:[%s4327 + $0x62] sm:$0xff]
        %v4534 = vld [vmem:[%s4327 + $0x6a] sm:$0xff]
        %v4535 = vld [vmem:[%s4327 + $0x7a] sm:$0xff]
        %v4536 = vld [vmem:[%s4327 + $0x82] sm:$0xff]
        %v4537 = vld [vmem:[%s4327 + $0x92] sm:$0xff]
        %v4538 = vld [vmem:[%s4327 + $0x9a] sm:$0xff]
        %v4539 = vld [vmem:[%s4327 + $0xaa] sm:$0xff]
        %v4540 = vld [vmem:[%s4327 + $0xb2] sm:$0xff]
        %v4541 = vld [vmem:[%s4327 + $0xc2] sm:$0xff]
        %v4542 = vld [vmem:[%s4327 + $0xca] sm:$0xff]
        %v4543 = vld [vmem:[%s4327 + $0xda] sm:$0xff]
        %v4544 = vld [vmem:[%s4327 + $0xe2] sm:$0xff]
        %v4545 = vld [vmem:[%s4327 + $0xf2] sm:$0xff]
        %v4546 = vld [vmem:[%s4327 + $0xfa] sm:$0xff]
        %v4547 = vld [vmem:[%s4327 + $0x10a] sm:$0xff]
        %v4548 = vld [vmem:[%s4327 + $0x112] sm:$0xff]
        %v4549 = vld [vmem:[%s4327 + $0x122] sm:$0xff]
        %v4550 = vld [vmem:[%s4327 + $0x12a] sm:$0xff]
        %v4551 = vld [vmem:[%s4327 + $0x13a] sm:$0xff]
        %v4552 = vld [vmem:[%s4327 + $0x142] sm:$0xff]
        %v4553 = vld [vmem:[%s4327 + $0x152] sm:$0xff]
        %v4554 = vld [vmem:[%s4327 + $0x15a] sm:$0xff]
        %v4555 = vld [vmem:[%s4327 + $0x16a] sm:$0xff]
        %v4556 = vld [vmem:[%s4327 + $0x172] sm:$0xff]
        %v4557 = vld [vmem:[%s4360 + $0x2] sm:$0x1]
        %v4558 = vperm.slane %v4557, 0
        %v4559 = vmul.f32 %v4525, %v4558
        %v4560 = vmul.f32 %v4526, %v4558
        %v4561 = vmul.f32 %v4527, %v4558
        %v4562 = vmul.f32 %v4528, %v4558
        %v4563 = vmul.f32 %v4529, %v4558
        %v4564 = vmul.f32 %v4530, %v4558
        %v4565 = vmul.f32 %v4531, %v4558
        %v4566 = vmul.f32 %v4532, %v4558
        %v4567 = vmul.f32 %v4533, %v4558
        %v4568 = vmul.f32 %v4534, %v4558
        %v4569 = vmul.f32 %v4535, %v4558
        %v4570 = vmul.f32 %v4536, %v4558
        %v4571 = vmul.f32 %v4537, %v4558
        %v4572 = vmul.f32 %v4538, %v4558
        %v4573 = vmul.f32 %v4539, %v4558
        %v4574 = vmul.f32 %v4540, %v4558
        %v4575 = vmul.f32 %v4541, %v4558
        %v4576 = vmul.f32 %v4542, %v4558
        %v4577 = vmul.f32 %v4543, %v4558
        %v4578 = vmul.f32 %v4544, %v4558
        %v4579 = vmul.f32 %v4545, %v4558
        %v4580 = vmul.f32 %v4546, %v4558
        %v4581 = vmul.f32 %v4547, %v4558
        %v4582 = vmul.f32 %v4548, %v4558
        %v4583 = vmul.f32 %v4549, %v4558
        %v4584 = vmul.f32 %v4550, %v4558
        %v4585 = vmul.f32 %v4551, %v4558
        %v4586 = vmul.f32 %v4552, %v4558
        %v4587 = vmul.f32 %v4553, %v4558
        %v4588 = vmul.f32 %v4554, %v4558
        %v4589 = vmul.f32 %v4555, %v4558
        %v4590 = vmul.f32 %v4556, %v4558
        %v4591 = vadd.f32 %v4493, %v4559
        %v4592 = vadd.f32 %v4494, %v4560
        %v4593 = vadd.f32 %v4495, %v4561
        %v4594 = vadd.f32 %v4496, %v4562
        %v4595 = vadd.f32 %v4497, %v4563
        %v4596 = vadd.f32 %v4498, %v4564
        %v4597 = vadd.f32 %v4499, %v4565
        %v4598 = vadd.f32 %v4500, %v4566
        %v4599 = vadd.f32 %v4501, %v4567
        %v4600 = vadd.f32 %v4502, %v4568
        %v4601 = vadd.f32 %v4503, %v4569
        %v4602 = vadd.f32 %v4504, %v4570
        %v4603 = vadd.f32 %v4505, %v4571
        %v4604 = vadd.f32 %v4506, %v4572
        %v4605 = vadd.f32 %v4507, %v4573
        %v4606 = vadd.f32 %v4508, %v4574
        %v4607 = vadd.f32 %v4509, %v4575
        %v4608 = vadd.f32 %v4510, %v4576
        %v4609 = vadd.f32 %v4511, %v4577
        %v4610 = vadd.f32 %v4512, %v4578
        %v4611 = vadd.f32 %v4513, %v4579
        %v4612 = vadd.f32 %v4514, %v4580
        %v4613 = vadd.f32 %v4515, %v4581
        %v4614 = vadd.f32 %v4516, %v4582
        %v4615 = vadd.f32 %v4517, %v4583
        %v4616 = vadd.f32 %v4518, %v4584
        %v4617 = vadd.f32 %v4519, %v4585
        %v4618 = vadd.f32 %v4520, %v4586
        %v4619 = vadd.f32 %v4521, %v4587
        %v4620 = vadd.f32 %v4522, %v4588
        %v4621 = vadd.f32 %v4523, %v4589
        %v4622 = vadd.f32 %v4524, %v4590
        %v4623 = vld [vmem:[%s4327 + $0x3] sm:$0xff]
        %v4624 = vld [vmem:[%s4327 + $0xb] sm:$0xff]
        %v4625 = vld [vmem:[%s4327 + $0x1b] sm:$0xff]
        %v4626 = vld [vmem:[%s4327 + $0x23] sm:$0xff]
        %v4627 = vld [vmem:[%s4327 + $0x33] sm:$0xff]
        %v4628 = vld [vmem:[%s4327 + $0x3b] sm:$0xff]
        %v4629 = vld [vmem:[%s4327 + $0x4b] sm:$0xff]
        %v4630 = vld [vmem:[%s4327 + $0x53] sm:$0xff]
        %v4631 = vld [vmem:[%s4327 + $0x63] sm:$0xff]
        %v4632 = vld [vmem:[%s4327 + $0x6b] sm:$0xff]
        %v4633 = vld [vmem:[%s4327 + $0x7b] sm:$0xff]
        %v4634 = vld [vmem:[%s4327 + $0x83] sm:$0xff]
        %v4635 = vld [vmem:[%s4327 + $0x93] sm:$0xff]
        %v4636 = vld [vmem:[%s4327 + $0x9b] sm:$0xff]
        %v4637 = vld [vmem:[%s4327 + $0xab] sm:$0xff]
        %v4638 = vld [vmem:[%s4327 + $0xb3] sm:$0xff]
        %v4639 = vld [vmem:[%s4327 + $0xc3] sm:$0xff]
        %v4640 = vld [vmem:[%s4327 + $0xcb] sm:$0xff]
        %v4641 = vld [vmem:[%s4327 + $0xdb] sm:$0xff]
        %v4642 = vld [vmem:[%s4327 + $0xe3] sm:$0xff]
        %v4643 = vld [vmem:[%s4327 + $0xf3] sm:$0xff]
        %v4644 = vld [vmem:[%s4327 + $0xfb] sm:$0xff]
        %v4645 = vld [vmem:[%s4327 + $0x10b] sm:$0xff]
        %v4646 = vld [vmem:[%s4327 + $0x113] sm:$0xff]
        %v4647 = vld [vmem:[%s4327 + $0x123] sm:$0xff]
        %v4648 = vld [vmem:[%s4327 + $0x12b] sm:$0xff]
        %v4649 = vld [vmem:[%s4327 + $0x13b] sm:$0xff]
        %v4650 = vld [vmem:[%s4327 + $0x143] sm:$0xff]
        %v4651 = vld [vmem:[%s4327 + $0x153] sm:$0xff]
        %v4652 = vld [vmem:[%s4327 + $0x15b] sm:$0xff]
        %v4653 = vld [vmem:[%s4327 + $0x16b] sm:$0xff]
        %v4654 = vld [vmem:[%s4327 + $0x173] sm:$0xff]
        %v4655 = vld [vmem:[%s4360 + $0x3] sm:$0x1]
        %v4656 = vperm.slane %v4655, 0
        %v4657 = vmul.f32 %v4623, %v4656
        %v4658 = vmul.f32 %v4624, %v4656
        %v4659 = vmul.f32 %v4625, %v4656
        %v4660 = vmul.f32 %v4626, %v4656
        %v4661 = vmul.f32 %v4627, %v4656
        %v4662 = vmul.f32 %v4628, %v4656
        %v4663 = vmul.f32 %v4629, %v4656
        %v4664 = vmul.f32 %v4630, %v4656
        %v4665 = vmul.f32 %v4631, %v4656
        %v4666 = vmul.f32 %v4632, %v4656
        %v4667 = vmul.f32 %v4633, %v4656
        %v4668 = vmul.f32 %v4634, %v4656
        %v4669 = vmul.f32 %v4635, %v4656
        %v4670 = vmul.f32 %v4636, %v4656
        %v4671 = vmul.f32 %v4637, %v4656
        %v4672 = vmul.f32 %v4638, %v4656
        %v4673 = vmul.f32 %v4639, %v4656
        %v4674 = vmul.f32 %v4640, %v4656
        %v4675 = vmul.f32 %v4641, %v4656
        %v4676 = vmul.f32 %v4642, %v4656
        %v4677 = vmul.f32 %v4643, %v4656
        %v4678 = vmul.f32 %v4644, %v4656
        %v4679 = vmul.f32 %v4645, %v4656
        %v4680 = vmul.f32 %v4646, %v4656
        %v4681 = vmul.f32 %v4647, %v4656
        %v4682 = vmul.f32 %v4648, %v4656
        %v4683 = vmul.f32 %v4649, %v4656
        %v4684 = vmul.f32 %v4650, %v4656
        %v4685 = vmul.f32 %v4651, %v4656
        %v4686 = vmul.f32 %v4652, %v4656
        %v4687 = vmul.f32 %v4653, %v4656
        %v4688 = vmul.f32 %v4654, %v4656
        %v4689 = vadd.f32 %v4591, %v4657
        %v4690 = vadd.f32 %v4592, %v4658
        %v4691 = vadd.f32 %v4593, %v4659
        %v4692 = vadd.f32 %v4594, %v4660
        %v4693 = vadd.f32 %v4595, %v4661
        %v4694 = vadd.f32 %v4596, %v4662
        %v4695 = vadd.f32 %v4597, %v4663
        %v4696 = vadd.f32 %v4598, %v4664
        %v4697 = vadd.f32 %v4599, %v4665
        %v4698 = vadd.f32 %v4600, %v4666
        %v4699 = vadd.f32 %v4601, %v4667
        %v4700 = vadd.f32 %v4602, %v4668
        %v4701 = vadd.f32 %v4603, %v4669
        %v4702 = vadd.f32 %v4604, %v4670
        %v4703 = vadd.f32 %v4605, %v4671
        %v4704 = vadd.f32 %v4606, %v4672
        %v4705 = vadd.f32 %v4607, %v4673
        %v4706 = vadd.f32 %v4608, %v4674
        %v4707 = vadd.f32 %v4609, %v4675
        %v4708 = vadd.f32 %v4610, %v4676
        %v4709 = vadd.f32 %v4611, %v4677
        %v4710 = vadd.f32 %v4612, %v4678
        %v4711 = vadd.f32 %v4613, %v4679
        %v4712 = vadd.f32 %v4614, %v4680
        %v4713 = vadd.f32 %v4615, %v4681
        %v4714 = vadd.f32 %v4616, %v4682
        %v4715 = vadd.f32 %v4617, %v4683
        %v4716 = vadd.f32 %v4618, %v4684
        %v4717 = vadd.f32 %v4619, %v4685
        %v4718 = vadd.f32 %v4620, %v4686
        %v4719 = vadd.f32 %v4621, %v4687
        %v4720 = vadd.f32 %v4622, %v4688
        %v4721 = vld [vmem:[%s4327 + $0x4] sm:$0xff]
        %v4722 = vld [vmem:[%s4327 + $0xc] sm:$0xff]
        %v4723 = vld [vmem:[%s4327 + $0x1c] sm:$0xff]
        %v4724 = vld [vmem:[%s4327 + $0x24] sm:$0xff]
        %v4725 = vld [vmem:[%s4327 + $0x34] sm:$0xff]
        %v4726 = vld [vmem:[%s4327 + $0x3c] sm:$0xff]
        %v4727 = vld [vmem:[%s4327 + $0x4c] sm:$0xff]
        %v4728 = vld [vmem:[%s4327 + $0x54] sm:$0xff]
        %v4729 = vld [vmem:[%s4327 + $0x64] sm:$0xff]
        %v4730 = vld [vmem:[%s4327 + $0x6c] sm:$0xff]
        %v4731 = vld [vmem:[%s4327 + $0x7c] sm:$0xff]
        %v4732 = vld [vmem:[%s4327 + $0x84] sm:$0xff]
        %v4733 = vld [vmem:[%s4327 + $0x94] sm:$0xff]
        %v4734 = vld [vmem:[%s4327 + $0x9c] sm:$0xff]
        %v4735 = vld [vmem:[%s4327 + $0xac] sm:$0xff]
        %v4736 = vld [vmem:[%s4327 + $0xb4] sm:$0xff]
        %v4737 = vld [vmem:[%s4327 + $0xc4] sm:$0xff]
        %v4738 = vld [vmem:[%s4327 + $0xcc] sm:$0xff]
        %v4739 = vld [vmem:[%s4327 + $0xdc] sm:$0xff]
        %v4740 = vld [vmem:[%s4327 + $0xe4] sm:$0xff]
        %v4741 = vld [vmem:[%s4327 + $0xf4] sm:$0xff]
        %v4742 = vld [vmem:[%s4327 + $0xfc] sm:$0xff]
        %v4743 = vld [vmem:[%s4327 + $0x10c] sm:$0xff]
        %v4744 = vld [vmem:[%s4327 + $0x114] sm:$0xff]
        %v4745 = vld [vmem:[%s4327 + $0x124] sm:$0xff]
        %v4746 = vld [vmem:[%s4327 + $0x12c] sm:$0xff]
        %v4747 = vld [vmem:[%s4327 + $0x13c] sm:$0xff]
        %v4748 = vld [vmem:[%s4327 + $0x144] sm:$0xff]
        %v4749 = vld [vmem:[%s4327 + $0x154] sm:$0xff]
        %v4750 = vld [vmem:[%s4327 + $0x15c] sm:$0xff]
        %v4751 = vld [vmem:[%s4327 + $0x16c] sm:$0xff]
        %v4752 = vld [vmem:[%s4327 + $0x174] sm:$0xff]
        %v4753 = vld [vmem:[%s4360 + $0x4] sm:$0x1]
        %v4754 = vperm.slane %v4753, 0
        %v4755 = vmul.f32 %v4721, %v4754
        %v4756 = vmul.f32 %v4722, %v4754
        %v4757 = vmul.f32 %v4723, %v4754
        %v4758 = vmul.f32 %v4724, %v4754
        %v4759 = vmul.f32 %v4725, %v4754
        %v4760 = vmul.f32 %v4726, %v4754
        %v4761 = vmul.f32 %v4727, %v4754
        %v4762 = vmul.f32 %v4728, %v4754
        %v4763 = vmul.f32 %v4729, %v4754
        %v4764 = vmul.f32 %v4730, %v4754
        %v4765 = vmul.f32 %v4731, %v4754
        %v4766 = vmul.f32 %v4732, %v4754
        %v4767 = vmul.f32 %v4733, %v4754
        %v4768 = vmul.f32 %v4734, %v4754
        %v4769 = vmul.f32 %v4735, %v4754
        %v4770 = vmul.f32 %v4736, %v4754
        %v4771 = vmul.f32 %v4737, %v4754
        %v4772 = vmul.f32 %v4738, %v4754
        %v4773 = vmul.f32 %v4739, %v4754
        %v4774 = vmul.f32 %v4740, %v4754
        %v4775 = vmul.f32 %v4741, %v4754
        %v4776 = vmul.f32 %v4742, %v4754
        %v4777 = vmul.f32 %v4743, %v4754
        %v4778 = vmul.f32 %v4744, %v4754
        %v4779 = vmul.f32 %v4745, %v4754
        %v4780 = vmul.f32 %v4746, %v4754
        %v4781 = vmul.f32 %v4747, %v4754
        %v4782 = vmul.f32 %v4748, %v4754
        %v4783 = vmul.f32 %v4749, %v4754
        %v4784 = vmul.f32 %v4750, %v4754
        %v4785 = vmul.f32 %v4751, %v4754
        %v4786 = vmul.f32 %v4752, %v4754
        %v4787 = vadd.f32 %v4689, %v4755
        %v4788 = vadd.f32 %v4690, %v4756
        %v4789 = vadd.f32 %v4691, %v4757
        %v4790 = vadd.f32 %v4692, %v4758
        %v4791 = vadd.f32 %v4693, %v4759
        %v4792 = vadd.f32 %v4694, %v4760
        %v4793 = vadd.f32 %v4695, %v4761
        %v4794 = vadd.f32 %v4696, %v4762
        %v4795 = vadd.f32 %v4697, %v4763
        %v4796 = vadd.f32 %v4698, %v4764
        %v4797 = vadd.f32 %v4699, %v4765
        %v4798 = vadd.f32 %v4700, %v4766
        %v4799 = vadd.f32 %v4701, %v4767
        %v4800 = vadd.f32 %v4702, %v4768
        %v4801 = vadd.f32 %v4703, %v4769
        %v4802 = vadd.f32 %v4704, %v4770
        %v4803 = vadd.f32 %v4705, %v4771
        %v4804 = vadd.f32 %v4706, %v4772
        %v4805 = vadd.f32 %v4707, %v4773
        %v4806 = vadd.f32 %v4708, %v4774
        %v4807 = vadd.f32 %v4709, %v4775
        %v4808 = vadd.f32 %v4710, %v4776
        %v4809 = vadd.f32 %v4711, %v4777
        %v4810 = vadd.f32 %v4712, %v4778
        %v4811 = vadd.f32 %v4713, %v4779
        %v4812 = vadd.f32 %v4714, %v4780
        %v4813 = vadd.f32 %v4715, %v4781
        %v4814 = vadd.f32 %v4716, %v4782
        %v4815 = vadd.f32 %v4717, %v4783
        %v4816 = vadd.f32 %v4718, %v4784
        %v4817 = vadd.f32 %v4719, %v4785
        %v4818 = vadd.f32 %v4720, %v4786
        %v4819 = vld [vmem:[%s4327 + $0x5] sm:$0xff]
        %v4820 = vld [vmem:[%s4327 + $0xd] sm:$0xff]
        %v4821 = vld [vmem:[%s4327 + $0x1d] sm:$0xff]
        %v4822 = vld [vmem:[%s4327 + $0x25] sm:$0xff]
        %v4823 = vld [vmem:[%s4327 + $0x35] sm:$0xff]
        %v4824 = vld [vmem:[%s4327 + $0x3d] sm:$0xff]
        %v4825 = vld [vmem:[%s4327 + $0x4d] sm:$0xff]
        %v4826 = vld [vmem:[%s4327 + $0x55] sm:$0xff]
        %v4827 = vld [vmem:[%s4327 + $0x65] sm:$0xff]
        %v4828 = vld [vmem:[%s4327 + $0x6d] sm:$0xff]
        %v4829 = vld [vmem:[%s4327 + $0x7d] sm:$0xff]
        %v4830 = vld [vmem:[%s4327 + $0x85] sm:$0xff]
        %v4831 = vld [vmem:[%s4327 + $0x95] sm:$0xff]
        %v4832 = vld [vmem:[%s4327 + $0x9d] sm:$0xff]
        %v4833 = vld [vmem:[%s4327 + $0xad] sm:$0xff]
        %v4834 = vld [vmem:[%s4327 + $0xb5] sm:$0xff]
        %v4835 = vld [vmem:[%s4327 + $0xc5] sm:$0xff]
        %v4836 = vld [vmem:[%s4327 + $0xcd] sm:$0xff]
        %v4837 = vld [vmem:[%s4327 + $0xdd] sm:$0xff]
        %v4838 = vld [vmem:[%s4327 + $0xe5] sm:$0xff]
        %v4839 = vld [vmem:[%s4327 + $0xf5] sm:$0xff]
        %v4840 = vld [vmem:[%s4327 + $0xfd] sm:$0xff]
        %v4841 = vld [vmem:[%s4327 + $0x10d] sm:$0xff]
        %v4842 = vld [vmem:[%s4327 + $0x115] sm:$0xff]
        %v4843 = vld [vmem:[%s4327 + $0x125] sm:$0xff]
        %v4844 = vld [vmem:[%s4327 + $0x12d] sm:$0xff]
        %v4845 = vld [vmem:[%s4327 + $0x13d] sm:$0xff]
        %v4846 = vld [vmem:[%s4327 + $0x145] sm:$0xff]
        %v4847 = vld [vmem:[%s4327 + $0x155] sm:$0xff]
        %v4848 = vld [vmem:[%s4327 + $0x15d] sm:$0xff]
        %v4849 = vld [vmem:[%s4327 + $0x16d] sm:$0xff]
        %v4850 = vld [vmem:[%s4327 + $0x175] sm:$0xff]
        %v4851 = vld [vmem:[%s4360 + $0x5] sm:$0x1]
        %v4852 = vperm.slane %v4851, 0
        %v4853 = vmul.f32 %v4819, %v4852
        %v4854 = vmul.f32 %v4820, %v4852
        %v4855 = vmul.f32 %v4821, %v4852
        %v4856 = vmul.f32 %v4822, %v4852
        %v4857 = vmul.f32 %v4823, %v4852
        %v4858 = vmul.f32 %v4824, %v4852
        %v4859 = vmul.f32 %v4825, %v4852
        %v4860 = vmul.f32 %v4826, %v4852
        %v4861 = vmul.f32 %v4827, %v4852
        %v4862 = vmul.f32 %v4828, %v4852
        %v4863 = vmul.f32 %v4829, %v4852
        %v4864 = vmul.f32 %v4830, %v4852
        %v4865 = vmul.f32 %v4831, %v4852
        %v4866 = vmul.f32 %v4832, %v4852
        %v4867 = vmul.f32 %v4833, %v4852
        %v4868 = vmul.f32 %v4834, %v4852
        %v4869 = vmul.f32 %v4835, %v4852
        %v4870 = vmul.f32 %v4836, %v4852
        %v4871 = vmul.f32 %v4837, %v4852
        %v4872 = vmul.f32 %v4838, %v4852
        %v4873 = vmul.f32 %v4839, %v4852
        %v4874 = vmul.f32 %v4840, %v4852
        %v4875 = vmul.f32 %v4841, %v4852
        %v4876 = vmul.f32 %v4842, %v4852
        %v4877 = vmul.f32 %v4843, %v4852
        %v4878 = vmul.f32 %v4844, %v4852
        %v4879 = vmul.f32 %v4845, %v4852
        %v4880 = vmul.f32 %v4846, %v4852
        %v4881 = vmul.f32 %v4847, %v4852
        %v4882 = vmul.f32 %v4848, %v4852
        %v4883 = vmul.f32 %v4849, %v4852
        %v4884 = vmul.f32 %v4850, %v4852
        %v4885 = vadd.f32 %v4787, %v4853
        %v4886 = vadd.f32 %v4788, %v4854
        %v4887 = vadd.f32 %v4789, %v4855
        %v4888 = vadd.f32 %v4790, %v4856
        %v4889 = vadd.f32 %v4791, %v4857
        %v4890 = vadd.f32 %v4792, %v4858
        %v4891 = vadd.f32 %v4793, %v4859
        %v4892 = vadd.f32 %v4794, %v4860
        %v4893 = vadd.f32 %v4795, %v4861
        %v4894 = vadd.f32 %v4796, %v4862
        %v4895 = vadd.f32 %v4797, %v4863
        %v4896 = vadd.f32 %v4798, %v4864
        %v4897 = vadd.f32 %v4799, %v4865
        %v4898 = vadd.f32 %v4800, %v4866
        %v4899 = vadd.f32 %v4801, %v4867
        %v4900 = vadd.f32 %v4802, %v4868
        %v4901 = vadd.f32 %v4803, %v4869
        %v4902 = vadd.f32 %v4804, %v4870
        %v4903 = vadd.f32 %v4805, %v4871
        %v4904 = vadd.f32 %v4806, %v4872
        %v4905 = vadd.f32 %v4807, %v4873
        %v4906 = vadd.f32 %v4808, %v4874
        %v4907 = vadd.f32 %v4809, %v4875
        %v4908 = vadd.f32 %v4810, %v4876
        %v4909 = vadd.f32 %v4811, %v4877
        %v4910 = vadd.f32 %v4812, %v4878
        %v4911 = vadd.f32 %v4813, %v4879
        %v4912 = vadd.f32 %v4814, %v4880
        %v4913 = vadd.f32 %v4815, %v4881
        %v4914 = vadd.f32 %v4816, %v4882
        %v4915 = vadd.f32 %v4817, %v4883
        %v4916 = vadd.f32 %v4818, %v4884
        %v4917 = vld [vmem:[%s4327 + $0x6] sm:$0xff]
        %v4918 = vld [vmem:[%s4327 + $0xe] sm:$0xff]
        %v4919 = vld [vmem:[%s4327 + $0x1e] sm:$0xff]
        %v4920 = vld [vmem:[%s4327 + $0x26] sm:$0xff]
        %v4921 = vld [vmem:[%s4327 + $0x36] sm:$0xff]
        %v4922 = vld [vmem:[%s4327 + $0x3e] sm:$0xff]
        %v4923 = vld [vmem:[%s4327 + $0x4e] sm:$0xff]
        %v4924 = vld [vmem:[%s4327 + $0x56] sm:$0xff]
        %v4925 = vld [vmem:[%s4327 + $0x66] sm:$0xff]
        %v4926 = vld [vmem:[%s4327 + $0x6e] sm:$0xff]
        %v4927 = vld [vmem:[%s4327 + $0x7e] sm:$0xff]
        %v4928 = vld [vmem:[%s4327 + $0x86] sm:$0xff]
        %v4929 = vld [vmem:[%s4327 + $0x96] sm:$0xff]
        %v4930 = vld [vmem:[%s4327 + $0x9e] sm:$0xff]
        %v4931 = vld [vmem:[%s4327 + $0xae] sm:$0xff]
        %v4932 = vld [vmem:[%s4327 + $0xb6] sm:$0xff]
        %v4933 = vld [vmem:[%s4327 + $0xc6] sm:$0xff]
        %v4934 = vld [vmem:[%s4327 + $0xce] sm:$0xff]
        %v4935 = vld [vmem:[%s4327 + $0xde] sm:$0xff]
        %v4936 = vld [vmem:[%s4327 + $0xe6] sm:$0xff]
        %v4937 = vld [vmem:[%s4327 + $0xf6] sm:$0xff]
        %v4938 = vld [vmem:[%s4327 + $0xfe] sm:$0xff]
        %v4939 = vld [vmem:[%s4327 + $0x10e] sm:$0xff]
        %v4940 = vld [vmem:[%s4327 + $0x116] sm:$0xff]
        %v4941 = vld [vmem:[%s4327 + $0x126] sm:$0xff]
        %v4942 = vld [vmem:[%s4327 + $0x12e] sm:$0xff]
        %v4943 = vld [vmem:[%s4327 + $0x13e] sm:$0xff]
        %v4944 = vld [vmem:[%s4327 + $0x146] sm:$0xff]
        %v4945 = vld [vmem:[%s4327 + $0x156] sm:$0xff]
        %v4946 = vld [vmem:[%s4327 + $0x15e] sm:$0xff]
        %v4947 = vld [vmem:[%s4327 + $0x16e] sm:$0xff]
        %v4948 = vld [vmem:[%s4327 + $0x176] sm:$0xff]
        %v4949 = vld [vmem:[%s4360 + $0x6] sm:$0x1]
        %v4950 = vperm.slane %v4949, 0
        %v4951 = vmul.f32 %v4917, %v4950
        %v4952 = vmul.f32 %v4918, %v4950
        %v4953 = vmul.f32 %v4919, %v4950
        %v4954 = vmul.f32 %v4920, %v4950
        %v4955 = vmul.f32 %v4921, %v4950
        %v4956 = vmul.f32 %v4922, %v4950
        %v4957 = vmul.f32 %v4923, %v4950
        %v4958 = vmul.f32 %v4924, %v4950
        %v4959 = vmul.f32 %v4925, %v4950
        %v4960 = vmul.f32 %v4926, %v4950
        %v4961 = vmul.f32 %v4927, %v4950
        %v4962 = vmul.f32 %v4928, %v4950
        %v4963 = vmul.f32 %v4929, %v4950
        %v4964 = vmul.f32 %v4930, %v4950
        %v4965 = vmul.f32 %v4931, %v4950
        %v4966 = vmul.f32 %v4932, %v4950
        %v4967 = vmul.f32 %v4933, %v4950
        %v4968 = vmul.f32 %v4934, %v4950
        %v4969 = vmul.f32 %v4935, %v4950
        %v4970 = vmul.f32 %v4936, %v4950
        %v4971 = vmul.f32 %v4937, %v4950
        %v4972 = vmul.f32 %v4938, %v4950
        %v4973 = vmul.f32 %v4939, %v4950
        %v4974 = vmul.f32 %v4940, %v4950
        %v4975 = vmul.f32 %v4941, %v4950
        %v4976 = vmul.f32 %v4942, %v4950
        %v4977 = vmul.f32 %v4943, %v4950
        %v4978 = vmul.f32 %v4944, %v4950
        %v4979 = vmul.f32 %v4945, %v4950
        %v4980 = vmul.f32 %v4946, %v4950
        %v4981 = vmul.f32 %v4947, %v4950
        %v4982 = vmul.f32 %v4948, %v4950
        %v4983 = vadd.f32 %v4885, %v4951
        %v4984 = vadd.f32 %v4886, %v4952
        %v4985 = vadd.f32 %v4887, %v4953
        %v4986 = vadd.f32 %v4888, %v4954
        %v4987 = vadd.f32 %v4889, %v4955
        %v4988 = vadd.f32 %v4890, %v4956
        %v4989 = vadd.f32 %v4891, %v4957
        %v4990 = vadd.f32 %v4892, %v4958
        %v4991 = vadd.f32 %v4893, %v4959
        %v4992 = vadd.f32 %v4894, %v4960
        %v4993 = vadd.f32 %v4895, %v4961
        %v4994 = vadd.f32 %v4896, %v4962
        %v4995 = vadd.f32 %v4897, %v4963
        %v4996 = vadd.f32 %v4898, %v4964
        %v4997 = vadd.f32 %v4899, %v4965
        %v4998 = vadd.f32 %v4900, %v4966
        %v4999 = vadd.f32 %v4901, %v4967
        %v5000 = vadd.f32 %v4902, %v4968
        %v5001 = vadd.f32 %v4903, %v4969
        %v5002 = vadd.f32 %v4904, %v4970
        %v5003 = vadd.f32 %v4905, %v4971
        %v5004 = vadd.f32 %v4906, %v4972
        %v5005 = vadd.f32 %v4907, %v4973
        %v5006 = vadd.f32 %v4908, %v4974
        %v5007 = vadd.f32 %v4909, %v4975
        %v5008 = vadd.f32 %v4910, %v4976
        %v5009 = vadd.f32 %v4911, %v4977
        %v5010 = vadd.f32 %v4912, %v4978
        %v5011 = vadd.f32 %v4913, %v4979
        %v5012 = vadd.f32 %v4914, %v4980
        %v5013 = vadd.f32 %v4915, %v4981
        %v5014 = vadd.f32 %v4916, %v4982
        %s5015 = scalar_lea.vmem [#allocation3], 120
        %v5016 = vld [vmem:[%s5015] sm:$0xff]
        %v5017 = vld [vmem:[%s5015 + $0x8] sm:$0xff]
        %v5018 = vld [vmem:[%s5015 + $0x18] sm:$0xff]
        %v5019 = vld [vmem:[%s5015 + $0x20] sm:$0xff]
        %v5020 = vld [vmem:[%s5015 + $0x30] sm:$0xff]
        %v5021 = vld [vmem:[%s5015 + $0x38] sm:$0xff]
        %v5022 = vld [vmem:[%s5015 + $0x48] sm:$0xff]
        %v5023 = vld [vmem:[%s5015 + $0x50] sm:$0xff]
        %v5024 = vld [vmem:[%s5015 + $0x60] sm:$0xff]
        %v5025 = vld [vmem:[%s5015 + $0x68] sm:$0xff]
        %v5026 = vld [vmem:[%s5015 + $0x78] sm:$0xff]
        %v5027 = vld [vmem:[%s5015 + $0x80] sm:$0xff]
        %v5028 = vld [vmem:[%s5015 + $0x90] sm:$0xff]
        %v5029 = vld [vmem:[%s5015 + $0x98] sm:$0xff]
        %v5030 = vld [vmem:[%s5015 + $0xa8] sm:$0xff]
        %v5031 = vld [vmem:[%s5015 + $0xb0] sm:$0xff]
        %v5032 = vld [vmem:[%s5015 + $0xc0] sm:$0xff]
        %v5033 = vld [vmem:[%s5015 + $0xc8] sm:$0xff]
        %v5034 = vld [vmem:[%s5015 + $0xd8] sm:$0xff]
        %v5035 = vld [vmem:[%s5015 + $0xe0] sm:$0xff]
        %v5036 = vld [vmem:[%s5015 + $0xf0] sm:$0xff]
        %v5037 = vld [vmem:[%s5015 + $0xf8] sm:$0xff]
        %v5038 = vld [vmem:[%s5015 + $0x108] sm:$0xff]
        %v5039 = vld [vmem:[%s5015 + $0x110] sm:$0xff]
        %v5040 = vld [vmem:[%s5015 + $0x120] sm:$0xff]
        %v5041 = vld [vmem:[%s5015 + $0x128] sm:$0xff]
        %v5042 = vld [vmem:[%s5015 + $0x138] sm:$0xff]
        %v5043 = vld [vmem:[%s5015 + $0x140] sm:$0xff]
        %v5044 = vld [vmem:[%s5015 + $0x150] sm:$0xff]
        %v5045 = vld [vmem:[%s5015 + $0x158] sm:$0xff]
        %v5046 = vld [vmem:[%s5015 + $0x168] sm:$0xff]
        %v5047 = vld [vmem:[%s5015 + $0x170] sm:$0xff]
        %s5048 = scalar_lea.vmem [#allocation10], 40
        %v5049 = vld [vmem:[%s5048] sm:$0x1]
        %v5050 = vperm.slane %v5049, 0
        %v5051 = vmul.f32 %v5016, %v5050
        %v5052 = vmul.f32 %v5017, %v5050
        %v5053 = vmul.f32 %v5018, %v5050
        %v5054 = vmul.f32 %v5019, %v5050
        %v5055 = vmul.f32 %v5020, %v5050
        %v5056 = vmul.f32 %v5021, %v5050
        %v5057 = vmul.f32 %v5022, %v5050
        %v5058 = vmul.f32 %v5023, %v5050
        %v5059 = vmul.f32 %v5024, %v5050
        %v5060 = vmul.f32 %v5025, %v5050
        %v5061 = vmul.f32 %v5026, %v5050
        %v5062 = vmul.f32 %v5027, %v5050
        %v5063 = vmul.f32 %v5028, %v5050
        %v5064 = vmul.f32 %v5029, %v5050
        %v5065 = vmul.f32 %v5030, %v5050
        %v5066 = vmul.f32 %v5031, %v5050
        %v5067 = vmul.f32 %v5032, %v5050
        %v5068 = vmul.f32 %v5033, %v5050
        %v5069 = vmul.f32 %v5034, %v5050
        %v5070 = vmul.f32 %v5035, %v5050
        %v5071 = vmul.f32 %v5036, %v5050
        %v5072 = vmul.f32 %v5037, %v5050
        %v5073 = vmul.f32 %v5038, %v5050
        %v5074 = vmul.f32 %v5039, %v5050
        %v5075 = vmul.f32 %v5040, %v5050
        %v5076 = vmul.f32 %v5041, %v5050
        %v5077 = vmul.f32 %v5042, %v5050
        %v5078 = vmul.f32 %v5043, %v5050
        %v5079 = vmul.f32 %v5044, %v5050
        %v5080 = vmul.f32 %v5045, %v5050
        %v5081 = vmul.f32 %v5046, %v5050
        %v5082 = vmul.f32 %v5047, %v5050
        %v5083 = vadd.f32 %v4983, %v5051
        %v5084 = vadd.f32 %v4984, %v5052
        %v5085 = vadd.f32 %v4985, %v5053
        %v5086 = vadd.f32 %v4986, %v5054
        %v5087 = vadd.f32 %v4987, %v5055
        %v5088 = vadd.f32 %v4988, %v5056
        %v5089 = vadd.f32 %v4989, %v5057
        %v5090 = vadd.f32 %v4990, %v5058
        %v5091 = vadd.f32 %v4991, %v5059
        %v5092 = vadd.f32 %v4992, %v5060
        %v5093 = vadd.f32 %v4993, %v5061
        %v5094 = vadd.f32 %v4994, %v5062
        %v5095 = vadd.f32 %v4995, %v5063
        %v5096 = vadd.f32 %v4996, %v5064
        %v5097 = vadd.f32 %v4997, %v5065
        %v5098 = vadd.f32 %v4998, %v5066
        %v5099 = vadd.f32 %v4999, %v5067
        %v5100 = vadd.f32 %v5000, %v5068
        %v5101 = vadd.f32 %v5001, %v5069
        %v5102 = vadd.f32 %v5002, %v5070
        %v5103 = vadd.f32 %v5003, %v5071
        %v5104 = vadd.f32 %v5004, %v5072
        %v5105 = vadd.f32 %v5005, %v5073
        %v5106 = vadd.f32 %v5006, %v5074
        %v5107 = vadd.f32 %v5007, %v5075
        %v5108 = vadd.f32 %v5008, %v5076
        %v5109 = vadd.f32 %v5009, %v5077
        %v5110 = vadd.f32 %v5010, %v5078
        %v5111 = vadd.f32 %v5011, %v5079
        %v5112 = vadd.f32 %v5012, %v5080
        %v5113 = vadd.f32 %v5013, %v5081
        %v5114 = vadd.f32 %v5014, %v5082
        %v5115 = vld [vmem:[%s5015 + $0x1] sm:$0xff]
        %v5116 = vld [vmem:[%s5015 + $0x9] sm:$0xff]
        %v5117 = vld [vmem:[%s5015 + $0x19] sm:$0xff]
        %v5118 = vld [vmem:[%s5015 + $0x21] sm:$0xff]
        %v5119 = vld [vmem:[%s5015 + $0x31] sm:$0xff]
        %v5120 = vld [vmem:[%s5015 + $0x39] sm:$0xff]
        %v5121 = vld [vmem:[%s5015 + $0x49] sm:$0xff]
        %v5122 = vld [vmem:[%s5015 + $0x51] sm:$0xff]
        %v5123 = vld [vmem:[%s5015 + $0x61] sm:$0xff]
        %v5124 = vld [vmem:[%s5015 + $0x69] sm:$0xff]
        %v5125 = vld [vmem:[%s5015 + $0x79] sm:$0xff]
        %v5126 = vld [vmem:[%s5015 + $0x81] sm:$0xff]
        %v5127 = vld [vmem:[%s5015 + $0x91] sm:$0xff]
        %v5128 = vld [vmem:[%s5015 + $0x99] sm:$0xff]
        %v5129 = vld [vmem:[%s5015 + $0xa9] sm:$0xff]
        %v5130 = vld [vmem:[%s5015 + $0xb1] sm:$0xff]
        %v5131 = vld [vmem:[%s5015 + $0xc1] sm:$0xff]
        %v5132 = vld [vmem:[%s5015 + $0xc9] sm:$0xff]
        %v5133 = vld [vmem:[%s5015 + $0xd9] sm:$0xff]
        %v5134 = vld [vmem:[%s5015 + $0xe1] sm:$0xff]
        %v5135 = vld [vmem:[%s5015 + $0xf1] sm:$0xff]
        %v5136 = vld [vmem:[%s5015 + $0xf9] sm:$0xff]
        %v5137 = vld [vmem:[%s5015 + $0x109] sm:$0xff]
        %v5138 = vld [vmem:[%s5015 + $0x111] sm:$0xff]
        %v5139 = vld [vmem:[%s5015 + $0x121] sm:$0xff]
        %v5140 = vld [vmem:[%s5015 + $0x129] sm:$0xff]
        %v5141 = vld [vmem:[%s5015 + $0x139] sm:$0xff]
        %v5142 = vld [vmem:[%s5015 + $0x141] sm:$0xff]
        %v5143 = vld [vmem:[%s5015 + $0x151] sm:$0xff]
        %v5144 = vld [vmem:[%s5015 + $0x159] sm:$0xff]
        %v5145 = vld [vmem:[%s5015 + $0x169] sm:$0xff]
        %v5146 = vld [vmem:[%s5015 + $0x171] sm:$0xff]
        %v5147 = vld [vmem:[%s5048 + $0x1] sm:$0x1]
        %v5148 = vperm.slane %v5147, 0
        %v5149 = vmul.f32 %v5115, %v5148
        %v5150 = vmul.f32 %v5116, %v5148
        %v5151 = vmul.f32 %v5117, %v5148
        %v5152 = vmul.f32 %v5118, %v5148
        %v5153 = vmul.f32 %v5119, %v5148
        %v5154 = vmul.f32 %v5120, %v5148
        %v5155 = vmul.f32 %v5121, %v5148
        %v5156 = vmul.f32 %v5122, %v5148
        %v5157 = vmul.f32 %v5123, %v5148
        %v5158 = vmul.f32 %v5124, %v5148
        %v5159 = vmul.f32 %v5125, %v5148
        %v5160 = vmul.f32 %v5126, %v5148
        %v5161 = vmul.f32 %v5127, %v5148
        %v5162 = vmul.f32 %v5128, %v5148
        %v5163 = vmul.f32 %v5129, %v5148
        %v5164 = vmul.f32 %v5130, %v5148
        %v5165 = vmul.f32 %v5131, %v5148
        %v5166 = vmul.f32 %v5132, %v5148
        %v5167 = vmul.f32 %v5133, %v5148
        %v5168 = vmul.f32 %v5134, %v5148
        %v5169 = vmul.f32 %v5135, %v5148
        %v5170 = vmul.f32 %v5136, %v5148
        %v5171 = vmul.f32 %v5137, %v5148
        %v5172 = vmul.f32 %v5138, %v5148
        %v5173 = vmul.f32 %v5139, %v5148
        %v5174 = vmul.f32 %v5140, %v5148
        %v5175 = vmul.f32 %v5141, %v5148
        %v5176 = vmul.f32 %v5142, %v5148
        %v5177 = vmul.f32 %v5143, %v5148
        %v5178 = vmul.f32 %v5144, %v5148
        %v5179 = vmul.f32 %v5145, %v5148
        %v5180 = vmul.f32 %v5146, %v5148
        %v5181 = vadd.f32 %v5083, %v5149
        %v5182 = vadd.f32 %v5084, %v5150
        %v5183 = vadd.f32 %v5085, %v5151
        %v5184 = vadd.f32 %v5086, %v5152
        %v5185 = vadd.f32 %v5087, %v5153
        %v5186 = vadd.f32 %v5088, %v5154
        %v5187 = vadd.f32 %v5089, %v5155
        %v5188 = vadd.f32 %v5090, %v5156
        %v5189 = vadd.f32 %v5091, %v5157
        %v5190 = vadd.f32 %v5092, %v5158
        %v5191 = vadd.f32 %v5093, %v5159
        %v5192 = vadd.f32 %v5094, %v5160
        %v5193 = vadd.f32 %v5095, %v5161
        %v5194 = vadd.f32 %v5096, %v5162
        %v5195 = vadd.f32 %v5097, %v5163
        %v5196 = vadd.f32 %v5098, %v5164
        %v5197 = vadd.f32 %v5099, %v5165
        %v5198 = vadd.f32 %v5100, %v5166
        %v5199 = vadd.f32 %v5101, %v5167
        %v5200 = vadd.f32 %v5102, %v5168
        %v5201 = vadd.f32 %v5103, %v5169
        %v5202 = vadd.f32 %v5104, %v5170
        %v5203 = vadd.f32 %v5105, %v5171
        %v5204 = vadd.f32 %v5106, %v5172
        %v5205 = vadd.f32 %v5107, %v5173
        %v5206 = vadd.f32 %v5108, %v5174
        %v5207 = vadd.f32 %v5109, %v5175
        %v5208 = vadd.f32 %v5110, %v5176
        %v5209 = vadd.f32 %v5111, %v5177
        %v5210 = vadd.f32 %v5112, %v5178
        %v5211 = vadd.f32 %v5113, %v5179
        %v5212 = vadd.f32 %v5114, %v5180
        %v5213 = vld [vmem:[%s5015 + $0x2] sm:$0xff]
        %v5214 = vld [vmem:[%s5015 + $0xa] sm:$0xff]
        %v5215 = vld [vmem:[%s5015 + $0x1a] sm:$0xff]
        %v5216 = vld [vmem:[%s5015 + $0x22] sm:$0xff]
        %v5217 = vld [vmem:[%s5015 + $0x32] sm:$0xff]
        %v5218 = vld [vmem:[%s5015 + $0x3a] sm:$0xff]
        %v5219 = vld [vmem:[%s5015 + $0x4a] sm:$0xff]
        %v5220 = vld [vmem:[%s5015 + $0x52] sm:$0xff]
        %v5221 = vld [vmem:[%s5015 + $0x62] sm:$0xff]
        %v5222 = vld [vmem:[%s5015 + $0x6a] sm:$0xff]
        %v5223 = vld [vmem:[%s5015 + $0x7a] sm:$0xff]
        %v5224 = vld [vmem:[%s5015 + $0x82] sm:$0xff]
        %v5225 = vld [vmem:[%s5015 + $0x92] sm:$0xff]
        %v5226 = vld [vmem:[%s5015 + $0x9a] sm:$0xff]
        %v5227 = vld [vmem:[%s5015 + $0xaa] sm:$0xff]
        %v5228 = vld [vmem:[%s5015 + $0xb2] sm:$0xff]
        %v5229 = vld [vmem:[%s5015 + $0xc2] sm:$0xff]
        %v5230 = vld [vmem:[%s5015 + $0xca] sm:$0xff]
        %v5231 = vld [vmem:[%s5015 + $0xda] sm:$0xff]
        %v5232 = vld [vmem:[%s5015 + $0xe2] sm:$0xff]
        %v5233 = vld [vmem:[%s5015 + $0xf2] sm:$0xff]
        %v5234 = vld [vmem:[%s5015 + $0xfa] sm:$0xff]
        %v5235 = vld [vmem:[%s5015 + $0x10a] sm:$0xff]
        %v5236 = vld [vmem:[%s5015 + $0x112] sm:$0xff]
        %v5237 = vld [vmem:[%s5015 + $0x122] sm:$0xff]
        %v5238 = vld [vmem:[%s5015 + $0x12a] sm:$0xff]
        %v5239 = vld [vmem:[%s5015 + $0x13a] sm:$0xff]
        %v5240 = vld [vmem:[%s5015 + $0x142] sm:$0xff]
        %v5241 = vld [vmem:[%s5015 + $0x152] sm:$0xff]
        %v5242 = vld [vmem:[%s5015 + $0x15a] sm:$0xff]
        %v5243 = vld [vmem:[%s5015 + $0x16a] sm:$0xff]
        %v5244 = vld [vmem:[%s5015 + $0x172] sm:$0xff]
        %v5245 = vld [vmem:[%s5048 + $0x2] sm:$0x1]
        %v5246 = vperm.slane %v5245, 0
        %v5247 = vmul.f32 %v5213, %v5246
        %v5248 = vmul.f32 %v5214, %v5246
        %v5249 = vmul.f32 %v5215, %v5246
        %v5250 = vmul.f32 %v5216, %v5246
        %v5251 = vmul.f32 %v5217, %v5246
        %v5252 = vmul.f32 %v5218, %v5246
        %v5253 = vmul.f32 %v5219, %v5246
        %v5254 = vmul.f32 %v5220, %v5246
        %v5255 = vmul.f32 %v5221, %v5246
        %v5256 = vmul.f32 %v5222, %v5246
        %v5257 = vmul.f32 %v5223, %v5246
        %v5258 = vmul.f32 %v5224, %v5246
        %v5259 = vmul.f32 %v5225, %v5246
        %v5260 = vmul.f32 %v5226, %v5246
        %v5261 = vmul.f32 %v5227, %v5246
        %v5262 = vmul.f32 %v5228, %v5246
        %v5263 = vmul.f32 %v5229, %v5246
        %v5264 = vmul.f32 %v5230, %v5246
        %v5265 = vmul.f32 %v5231, %v5246
        %v5266 = vmul.f32 %v5232, %v5246
        %v5267 = vmul.f32 %v5233, %v5246
        %v5268 = vmul.f32 %v5234, %v5246
        %v5269 = vmul.f32 %v5235, %v5246
        %v5270 = vmul.f32 %v5236, %v5246
        %v5271 = vmul.f32 %v5237, %v5246
        %v5272 = vmul.f32 %v5238, %v5246
        %v5273 = vmul.f32 %v5239, %v5246
        %v5274 = vmul.f32 %v5240, %v5246
        %v5275 = vmul.f32 %v5241, %v5246
        %v5276 = vmul.f32 %v5242, %v5246
        %v5277 = vmul.f32 %v5243, %v5246
        %v5278 = vmul.f32 %v5244, %v5246
        %v5279 = vadd.f32 %v5181, %v5247
        %v5280 = vadd.f32 %v5182, %v5248
        %v5281 = vadd.f32 %v5183, %v5249
        %v5282 = vadd.f32 %v5184, %v5250
        %v5283 = vadd.f32 %v5185, %v5251
        %v5284 = vadd.f32 %v5186, %v5252
        %v5285 = vadd.f32 %v5187, %v5253
        %v5286 = vadd.f32 %v5188, %v5254
        %v5287 = vadd.f32 %v5189, %v5255
        %v5288 = vadd.f32 %v5190, %v5256
        %v5289 = vadd.f32 %v5191, %v5257
        %v5290 = vadd.f32 %v5192, %v5258
        %v5291 = vadd.f32 %v5193, %v5259
        %v5292 = vadd.f32 %v5194, %v5260
        %v5293 = vadd.f32 %v5195, %v5261
        %v5294 = vadd.f32 %v5196, %v5262
        %v5295 = vadd.f32 %v5197, %v5263
        %v5296 = vadd.f32 %v5198, %v5264
        %v5297 = vadd.f32 %v5199, %v5265
        %v5298 = vadd.f32 %v5200, %v5266
        %v5299 = vadd.f32 %v5201, %v5267
        %v5300 = vadd.f32 %v5202, %v5268
        %v5301 = vadd.f32 %v5203, %v5269
        %v5302 = vadd.f32 %v5204, %v5270
        %v5303 = vadd.f32 %v5205, %v5271
        %v5304 = vadd.f32 %v5206, %v5272
        %v5305 = vadd.f32 %v5207, %v5273
        %v5306 = vadd.f32 %v5208, %v5274
        %v5307 = vadd.f32 %v5209, %v5275
        %v5308 = vadd.f32 %v5210, %v5276
        %v5309 = vadd.f32 %v5211, %v5277
        %v5310 = vadd.f32 %v5212, %v5278
        %v5311 = vld [vmem:[%s5015 + $0x3] sm:$0xff]
        %v5312 = vld [vmem:[%s5015 + $0xb] sm:$0xff]
        %v5313 = vld [vmem:[%s5015 + $0x1b] sm:$0xff]
        %v5314 = vld [vmem:[%s5015 + $0x23] sm:$0xff]
        %v5315 = vld [vmem:[%s5015 + $0x33] sm:$0xff]
        %v5316 = vld [vmem:[%s5015 + $0x3b] sm:$0xff]
        %v5317 = vld [vmem:[%s5015 + $0x4b] sm:$0xff]
        %v5318 = vld [vmem:[%s5015 + $0x53] sm:$0xff]
        %v5319 = vld [vmem:[%s5015 + $0x63] sm:$0xff]
        %v5320 = vld [vmem:[%s5015 + $0x6b] sm:$0xff]
        %v5321 = vld [vmem:[%s5015 + $0x7b] sm:$0xff]
        %v5322 = vld [vmem:[%s5015 + $0x83] sm:$0xff]
        %v5323 = vld [vmem:[%s5015 + $0x93] sm:$0xff]
        %v5324 = vld [vmem:[%s5015 + $0x9b] sm:$0xff]
        %v5325 = vld [vmem:[%s5015 + $0xab] sm:$0xff]
        %v5326 = vld [vmem:[%s5015 + $0xb3] sm:$0xff]
        %v5327 = vld [vmem:[%s5015 + $0xc3] sm:$0xff]
        %v5328 = vld [vmem:[%s5015 + $0xcb] sm:$0xff]
        %v5329 = vld [vmem:[%s5015 + $0xdb] sm:$0xff]
        %v5330 = vld [vmem:[%s5015 + $0xe3] sm:$0xff]
        %v5331 = vld [vmem:[%s5015 + $0xf3] sm:$0xff]
        %v5332 = vld [vmem:[%s5015 + $0xfb] sm:$0xff]
        %v5333 = vld [vmem:[%s5015 + $0x10b] sm:$0xff]
        %v5334 = vld [vmem:[%s5015 + $0x113] sm:$0xff]
        %v5335 = vld [vmem:[%s5015 + $0x123] sm:$0xff]
        %v5336 = vld [vmem:[%s5015 + $0x12b] sm:$0xff]
        %v5337 = vld [vmem:[%s5015 + $0x13b] sm:$0xff]
        %v5338 = vld [vmem:[%s5015 + $0x143] sm:$0xff]
        %v5339 = vld [vmem:[%s5015 + $0x153] sm:$0xff]
        %v5340 = vld [vmem:[%s5015 + $0x15b] sm:$0xff]
        %v5341 = vld [vmem:[%s5015 + $0x16b] sm:$0xff]
        %v5342 = vld [vmem:[%s5015 + $0x173] sm:$0xff]
        %v5343 = vld [vmem:[%s5048 + $0x3] sm:$0x1]
        %v5344 = vperm.slane %v5343, 0
        %v5345 = vmul.f32 %v5311, %v5344
        %v5346 = vmul.f32 %v5312, %v5344
        %v5347 = vmul.f32 %v5313, %v5344
        %v5348 = vmul.f32 %v5314, %v5344
        %v5349 = vmul.f32 %v5315, %v5344
        %v5350 = vmul.f32 %v5316, %v5344
        %v5351 = vmul.f32 %v5317, %v5344
        %v5352 = vmul.f32 %v5318, %v5344
        %v5353 = vmul.f32 %v5319, %v5344
        %v5354 = vmul.f32 %v5320, %v5344
        %v5355 = vmul.f32 %v5321, %v5344
        %v5356 = vmul.f32 %v5322, %v5344
        %v5357 = vmul.f32 %v5323, %v5344
        %v5358 = vmul.f32 %v5324, %v5344
        %v5359 = vmul.f32 %v5325, %v5344
        %v5360 = vmul.f32 %v5326, %v5344
        %v5361 = vmul.f32 %v5327, %v5344
        %v5362 = vmul.f32 %v5328, %v5344
        %v5363 = vmul.f32 %v5329, %v5344
        %v5364 = vmul.f32 %v5330, %v5344
        %v5365 = vmul.f32 %v5331, %v5344
        %v5366 = vmul.f32 %v5332, %v5344
        %v5367 = vmul.f32 %v5333, %v5344
        %v5368 = vmul.f32 %v5334, %v5344
        %v5369 = vmul.f32 %v5335, %v5344
        %v5370 = vmul.f32 %v5336, %v5344
        %v5371 = vmul.f32 %v5337, %v5344
        %v5372 = vmul.f32 %v5338, %v5344
        %v5373 = vmul.f32 %v5339, %v5344
        %v5374 = vmul.f32 %v5340, %v5344
        %v5375 = vmul.f32 %v5341, %v5344
        %v5376 = vmul.f32 %v5342, %v5344
        %v5377 = vadd.f32 %v5279, %v5345
        %v5378 = vadd.f32 %v5280, %v5346
        %v5379 = vadd.f32 %v5281, %v5347
        %v5380 = vadd.f32 %v5282, %v5348
        %v5381 = vadd.f32 %v5283, %v5349
        %v5382 = vadd.f32 %v5284, %v5350
        %v5383 = vadd.f32 %v5285, %v5351
        %v5384 = vadd.f32 %v5286, %v5352
        %v5385 = vadd.f32 %v5287, %v5353
        %v5386 = vadd.f32 %v5288, %v5354
        %v5387 = vadd.f32 %v5289, %v5355
        %v5388 = vadd.f32 %v5290, %v5356
        %v5389 = vadd.f32 %v5291, %v5357
        %v5390 = vadd.f32 %v5292, %v5358
        %v5391 = vadd.f32 %v5293, %v5359
        %v5392 = vadd.f32 %v5294, %v5360
        %v5393 = vadd.f32 %v5295, %v5361
        %v5394 = vadd.f32 %v5296, %v5362
        %v5395 = vadd.f32 %v5297, %v5363
        %v5396 = vadd.f32 %v5298, %v5364
        %v5397 = vadd.f32 %v5299, %v5365
        %v5398 = vadd.f32 %v5300, %v5366
        %v5399 = vadd.f32 %v5301, %v5367
        %v5400 = vadd.f32 %v5302, %v5368
        %v5401 = vadd.f32 %v5303, %v5369
        %v5402 = vadd.f32 %v5304, %v5370
        %v5403 = vadd.f32 %v5305, %v5371
        %v5404 = vadd.f32 %v5306, %v5372
        %v5405 = vadd.f32 %v5307, %v5373
        %v5406 = vadd.f32 %v5308, %v5374
        %v5407 = vadd.f32 %v5309, %v5375
        %v5408 = vadd.f32 %v5310, %v5376
        %v5409 = vld [vmem:[%s5015 + $0x4] sm:$0xff]
        %v5410 = vld [vmem:[%s5015 + $0xc] sm:$0xff]
        %v5411 = vld [vmem:[%s5015 + $0x1c] sm:$0xff]
        %v5412 = vld [vmem:[%s5015 + $0x24] sm:$0xff]
        %v5413 = vld [vmem:[%s5015 + $0x34] sm:$0xff]
        %v5414 = vld [vmem:[%s5015 + $0x3c] sm:$0xff]
        %v5415 = vld [vmem:[%s5015 + $0x4c] sm:$0xff]
        %v5416 = vld [vmem:[%s5015 + $0x54] sm:$0xff]
        %v5417 = vld [vmem:[%s5015 + $0x64] sm:$0xff]
        %v5418 = vld [vmem:[%s5015 + $0x6c] sm:$0xff]
        %v5419 = vld [vmem:[%s5015 + $0x7c] sm:$0xff]
        %v5420 = vld [vmem:[%s5015 + $0x84] sm:$0xff]
        %v5421 = vld [vmem:[%s5015 + $0x94] sm:$0xff]
        %v5422 = vld [vmem:[%s5015 + $0x9c] sm:$0xff]
        %v5423 = vld [vmem:[%s5015 + $0xac] sm:$0xff]
        %v5424 = vld [vmem:[%s5015 + $0xb4] sm:$0xff]
        %v5425 = vld [vmem:[%s5015 + $0xc4] sm:$0xff]
        %v5426 = vld [vmem:[%s5015 + $0xcc] sm:$0xff]
        %v5427 = vld [vmem:[%s5015 + $0xdc] sm:$0xff]
        %v5428 = vld [vmem:[%s5015 + $0xe4] sm:$0xff]
        %v5429 = vld [vmem:[%s5015 + $0xf4] sm:$0xff]
        %v5430 = vld [vmem:[%s5015 + $0xfc] sm:$0xff]
        %v5431 = vld [vmem:[%s5015 + $0x10c] sm:$0xff]
        %v5432 = vld [vmem:[%s5015 + $0x114] sm:$0xff]
        %v5433 = vld [vmem:[%s5015 + $0x124] sm:$0xff]
        %v5434 = vld [vmem:[%s5015 + $0x12c] sm:$0xff]
        %v5435 = vld [vmem:[%s5015 + $0x13c] sm:$0xff]
        %v5436 = vld [vmem:[%s5015 + $0x144] sm:$0xff]
        %v5437 = vld [vmem:[%s5015 + $0x154] sm:$0xff]
        %v5438 = vld [vmem:[%s5015 + $0x15c] sm:$0xff]
        %v5439 = vld [vmem:[%s5015 + $0x16c] sm:$0xff]
        %v5440 = vld [vmem:[%s5015 + $0x174] sm:$0xff]
        %v5441 = vld [vmem:[%s5048 + $0x4] sm:$0x1]
        %v5442 = vperm.slane %v5441, 0
        %v5443 = vmul.f32 %v5409, %v5442
        %v5444 = vmul.f32 %v5410, %v5442
        %v5445 = vmul.f32 %v5411, %v5442
        %v5446 = vmul.f32 %v5412, %v5442
        %v5447 = vmul.f32 %v5413, %v5442
        %v5448 = vmul.f32 %v5414, %v5442
        %v5449 = vmul.f32 %v5415, %v5442
        %v5450 = vmul.f32 %v5416, %v5442
        %v5451 = vmul.f32 %v5417, %v5442
        %v5452 = vmul.f32 %v5418, %v5442
        %v5453 = vmul.f32 %v5419, %v5442
        %v5454 = vmul.f32 %v5420, %v5442
        %v5455 = vmul.f32 %v5421, %v5442
        %v5456 = vmul.f32 %v5422, %v5442
        %v5457 = vmul.f32 %v5423, %v5442
        %v5458 = vmul.f32 %v5424, %v5442
        %v5459 = vmul.f32 %v5425, %v5442
        %v5460 = vmul.f32 %v5426, %v5442
        %v5461 = vmul.f32 %v5427, %v5442
        %v5462 = vmul.f32 %v5428, %v5442
        %v5463 = vmul.f32 %v5429, %v5442
        %v5464 = vmul.f32 %v5430, %v5442
        %v5465 = vmul.f32 %v5431, %v5442
        %v5466 = vmul.f32 %v5432, %v5442
        %v5467 = vmul.f32 %v5433, %v5442
        %v5468 = vmul.f32 %v5434, %v5442
        %v5469 = vmul.f32 %v5435, %v5442
        %v5470 = vmul.f32 %v5436, %v5442
        %v5471 = vmul.f32 %v5437, %v5442
        %v5472 = vmul.f32 %v5438, %v5442
        %v5473 = vmul.f32 %v5439, %v5442
        %v5474 = vmul.f32 %v5440, %v5442
        %v5475 = vadd.f32 %v5377, %v5443
        %v5476 = vadd.f32 %v5378, %v5444
        %v5477 = vadd.f32 %v5379, %v5445
        %v5478 = vadd.f32 %v5380, %v5446
        %v5479 = vadd.f32 %v5381, %v5447
        %v5480 = vadd.f32 %v5382, %v5448
        %v5481 = vadd.f32 %v5383, %v5449
        %v5482 = vadd.f32 %v5384, %v5450
        %v5483 = vadd.f32 %v5385, %v5451
        %v5484 = vadd.f32 %v5386, %v5452
        %v5485 = vadd.f32 %v5387, %v5453
        %v5486 = vadd.f32 %v5388, %v5454
        %v5487 = vadd.f32 %v5389, %v5455
        %v5488 = vadd.f32 %v5390, %v5456
        %v5489 = vadd.f32 %v5391, %v5457
        %v5490 = vadd.f32 %v5392, %v5458
        %v5491 = vadd.f32 %v5393, %v5459
        %v5492 = vadd.f32 %v5394, %v5460
        %v5493 = vadd.f32 %v5395, %v5461
        %v5494 = vadd.f32 %v5396, %v5462
        %v5495 = vadd.f32 %v5397, %v5463
        %v5496 = vadd.f32 %v5398, %v5464
        %v5497 = vadd.f32 %v5399, %v5465
        %v5498 = vadd.f32 %v5400, %v5466
        %v5499 = vadd.f32 %v5401, %v5467
        %v5500 = vadd.f32 %v5402, %v5468
        %v5501 = vadd.f32 %v5403, %v5469
        %v5502 = vadd.f32 %v5404, %v5470
        %v5503 = vadd.f32 %v5405, %v5471
        %v5504 = vadd.f32 %v5406, %v5472
        %v5505 = vadd.f32 %v5407, %v5473
        %v5506 = vadd.f32 %v5408, %v5474
        %v5507 = vld [vmem:[%s5015 + $0x5] sm:$0xff]
        %v5508 = vld [vmem:[%s5015 + $0xd] sm:$0xff]
        %v5509 = vld [vmem:[%s5015 + $0x1d] sm:$0xff]
        %v5510 = vld [vmem:[%s5015 + $0x25] sm:$0xff]
        %v5511 = vld [vmem:[%s5015 + $0x35] sm:$0xff]
        %v5512 = vld [vmem:[%s5015 + $0x3d] sm:$0xff]
        %v5513 = vld [vmem:[%s5015 + $0x4d] sm:$0xff]
        %v5514 = vld [vmem:[%s5015 + $0x55] sm:$0xff]
        %v5515 = vld [vmem:[%s5015 + $0x65] sm:$0xff]
        %v5516 = vld [vmem:[%s5015 + $0x6d] sm:$0xff]
        %v5517 = vld [vmem:[%s5015 + $0x7d] sm:$0xff]
        %v5518 = vld [vmem:[%s5015 + $0x85] sm:$0xff]
        %v5519 = vld [vmem:[%s5015 + $0x95] sm:$0xff]
        %v5520 = vld [vmem:[%s5015 + $0x9d] sm:$0xff]
        %v5521 = vld [vmem:[%s5015 + $0xad] sm:$0xff]
        %v5522 = vld [vmem:[%s5015 + $0xb5] sm:$0xff]
        %v5523 = vld [vmem:[%s5015 + $0xc5] sm:$0xff]
        %v5524 = vld [vmem:[%s5015 + $0xcd] sm:$0xff]
        %v5525 = vld [vmem:[%s5015 + $0xdd] sm:$0xff]
        %v5526 = vld [vmem:[%s5015 + $0xe5] sm:$0xff]
        %v5527 = vld [vmem:[%s5015 + $0xf5] sm:$0xff]
        %v5528 = vld [vmem:[%s5015 + $0xfd] sm:$0xff]
        %v5529 = vld [vmem:[%s5015 + $0x10d] sm:$0xff]
        %v5530 = vld [vmem:[%s5015 + $0x115] sm:$0xff]
        %v5531 = vld [vmem:[%s5015 + $0x125] sm:$0xff]
        %v5532 = vld [vmem:[%s5015 + $0x12d] sm:$0xff]
        %v5533 = vld [vmem:[%s5015 + $0x13d] sm:$0xff]
        %v5534 = vld [vmem:[%s5015 + $0x145] sm:$0xff]
        %v5535 = vld [vmem:[%s5015 + $0x155] sm:$0xff]
        %v5536 = vld [vmem:[%s5015 + $0x15d] sm:$0xff]
        %v5537 = vld [vmem:[%s5015 + $0x16d] sm:$0xff]
        %v5538 = vld [vmem:[%s5015 + $0x175] sm:$0xff]
        %v5539 = vld [vmem:[%s5048 + $0x5] sm:$0x1]
        %v5540 = vperm.slane %v5539, 0
        %v5541 = vmul.f32 %v5507, %v5540
        %v5542 = vmul.f32 %v5508, %v5540
        %v5543 = vmul.f32 %v5509, %v5540
        %v5544 = vmul.f32 %v5510, %v5540
        %v5545 = vmul.f32 %v5511, %v5540
        %v5546 = vmul.f32 %v5512, %v5540
        %v5547 = vmul.f32 %v5513, %v5540
        %v5548 = vmul.f32 %v5514, %v5540
        %v5549 = vmul.f32 %v5515, %v5540
        %v5550 = vmul.f32 %v5516, %v5540
        %v5551 = vmul.f32 %v5517, %v5540
        %v5552 = vmul.f32 %v5518, %v5540
        %v5553 = vmul.f32 %v5519, %v5540
        %v5554 = vmul.f32 %v5520, %v5540
        %v5555 = vmul.f32 %v5521, %v5540
        %v5556 = vmul.f32 %v5522, %v5540
        %v5557 = vmul.f32 %v5523, %v5540
        %v5558 = vmul.f32 %v5524, %v5540
        %v5559 = vmul.f32 %v5525, %v5540
        %v5560 = vmul.f32 %v5526, %v5540
        %v5561 = vmul.f32 %v5527, %v5540
        %v5562 = vmul.f32 %v5528, %v5540
        %v5563 = vmul.f32 %v5529, %v5540
        %v5564 = vmul.f32 %v5530, %v5540
        %v5565 = vmul.f32 %v5531, %v5540
        %v5566 = vmul.f32 %v5532, %v5540
        %v5567 = vmul.f32 %v5533, %v5540
        %v5568 = vmul.f32 %v5534, %v5540
        %v5569 = vmul.f32 %v5535, %v5540
        %v5570 = vmul.f32 %v5536, %v5540
        %v5571 = vmul.f32 %v5537, %v5540
        %v5572 = vmul.f32 %v5538, %v5540
        %v5573 = vadd.f32 %v5475, %v5541
        %v5574 = vadd.f32 %v5476, %v5542
        %v5575 = vadd.f32 %v5477, %v5543
        %v5576 = vadd.f32 %v5478, %v5544
        %v5577 = vadd.f32 %v5479, %v5545
        %v5578 = vadd.f32 %v5480, %v5546
        %v5579 = vadd.f32 %v5481, %v5547
        %v5580 = vadd.f32 %v5482, %v5548
        %v5581 = vadd.f32 %v5483, %v5549
        %v5582 = vadd.f32 %v5484, %v5550
        %v5583 = vadd.f32 %v5485, %v5551
        %v5584 = vadd.f32 %v5486, %v5552
        %v5585 = vadd.f32 %v5487, %v5553
        %v5586 = vadd.f32 %v5488, %v5554
        %v5587 = vadd.f32 %v5489, %v5555
        %v5588 = vadd.f32 %v5490, %v5556
        %v5589 = vadd.f32 %v5491, %v5557
        %v5590 = vadd.f32 %v5492, %v5558
        %v5591 = vadd.f32 %v5493, %v5559
        %v5592 = vadd.f32 %v5494, %v5560
        %v5593 = vadd.f32 %v5495, %v5561
        %v5594 = vadd.f32 %v5496, %v5562
        %v5595 = vadd.f32 %v5497, %v5563
        %v5596 = vadd.f32 %v5498, %v5564
        %v5597 = vadd.f32 %v5499, %v5565
        %v5598 = vadd.f32 %v5500, %v5566
        %v5599 = vadd.f32 %v5501, %v5567
        %v5600 = vadd.f32 %v5502, %v5568
        %v5601 = vadd.f32 %v5503, %v5569
        %v5602 = vadd.f32 %v5504, %v5570
        %v5603 = vadd.f32 %v5505, %v5571
        %v5604 = vadd.f32 %v5506, %v5572
        %v5605 = vld [vmem:[%s5015 + $0x6] sm:$0xff]
        %v5606 = vld [vmem:[%s5015 + $0xe] sm:$0xff]
        %v5607 = vld [vmem:[%s5015 + $0x1e] sm:$0xff]
        %v5608 = vld [vmem:[%s5015 + $0x26] sm:$0xff]
        %v5609 = vld [vmem:[%s5015 + $0x36] sm:$0xff]
        %v5610 = vld [vmem:[%s5015 + $0x3e] sm:$0xff]
        %v5611 = vld [vmem:[%s5015 + $0x4e] sm:$0xff]
        %v5612 = vld [vmem:[%s5015 + $0x56] sm:$0xff]
        %v5613 = vld [vmem:[%s5015 + $0x66] sm:$0xff]
        %v5614 = vld [vmem:[%s5015 + $0x6e] sm:$0xff]
        %v5615 = vld [vmem:[%s5015 + $0x7e] sm:$0xff]
        %v5616 = vld [vmem:[%s5015 + $0x86] sm:$0xff]
        %v5617 = vld [vmem:[%s5015 + $0x96] sm:$0xff]
        %v5618 = vld [vmem:[%s5015 + $0x9e] sm:$0xff]
        %v5619 = vld [vmem:[%s5015 + $0xae] sm:$0xff]
        %v5620 = vld [vmem:[%s5015 + $0xb6] sm:$0xff]
        %v5621 = vld [vmem:[%s5015 + $0xc6] sm:$0xff]
        %v5622 = vld [vmem:[%s5015 + $0xce] sm:$0xff]
        %v5623 = vld [vmem:[%s5015 + $0xde] sm:$0xff]
        %v5624 = vld [vmem:[%s5015 + $0xe6] sm:$0xff]
        %v5625 = vld [vmem:[%s5015 + $0xf6] sm:$0xff]
        %v5626 = vld [vmem:[%s5015 + $0xfe] sm:$0xff]
        %v5627 = vld [vmem:[%s5015 + $0x10e] sm:$0xff]
        %v5628 = vld [vmem:[%s5015 + $0x116] sm:$0xff]
        %v5629 = vld [vmem:[%s5015 + $0x126] sm:$0xff]
        %v5630 = vld [vmem:[%s5015 + $0x12e] sm:$0xff]
        %v5631 = vld [vmem:[%s5015 + $0x13e] sm:$0xff]
        %v5632 = vld [vmem:[%s5015 + $0x146] sm:$0xff]
        %v5633 = vld [vmem:[%s5015 + $0x156] sm:$0xff]
        %v5634 = vld [vmem:[%s5015 + $0x15e] sm:$0xff]
        %v5635 = vld [vmem:[%s5015 + $0x16e] sm:$0xff]
        %v5636 = vld [vmem:[%s5015 + $0x176] sm:$0xff]
        %v5637 = vld [vmem:[%s5048 + $0x6] sm:$0x1]
        %v5638 = vperm.slane %v5637, 0
        %v5639 = vmul.f32 %v5605, %v5638
        %v5640 = vmul.f32 %v5606, %v5638
        %v5641 = vmul.f32 %v5607, %v5638
        %v5642 = vmul.f32 %v5608, %v5638
        %v5643 = vmul.f32 %v5609, %v5638
        %v5644 = vmul.f32 %v5610, %v5638
        %v5645 = vmul.f32 %v5611, %v5638
        %v5646 = vmul.f32 %v5612, %v5638
        %v5647 = vmul.f32 %v5613, %v5638
        %v5648 = vmul.f32 %v5614, %v5638
        %v5649 = vmul.f32 %v5615, %v5638
        %v5650 = vmul.f32 %v5616, %v5638
        %v5651 = vmul.f32 %v5617, %v5638
        %v5652 = vmul.f32 %v5618, %v5638
        %v5653 = vmul.f32 %v5619, %v5638
        %v5654 = vmul.f32 %v5620, %v5638
        %v5655 = vmul.f32 %v5621, %v5638
        %v5656 = vmul.f32 %v5622, %v5638
        %v5657 = vmul.f32 %v5623, %v5638
        %v5658 = vmul.f32 %v5624, %v5638
        %v5659 = vmul.f32 %v5625, %v5638
        %v5660 = vmul.f32 %v5626, %v5638
        %v5661 = vmul.f32 %v5627, %v5638
        %v5662 = vmul.f32 %v5628, %v5638
        %v5663 = vmul.f32 %v5629, %v5638
        %v5664 = vmul.f32 %v5630, %v5638
        %v5665 = vmul.f32 %v5631, %v5638
        %v5666 = vmul.f32 %v5632, %v5638
        %v5667 = vmul.f32 %v5633, %v5638
        %v5668 = vmul.f32 %v5634, %v5638
        %v5669 = vmul.f32 %v5635, %v5638
        %v5670 = vmul.f32 %v5636, %v5638
        %v5671 = vadd.f32 %v5573, %v5639
        %v5672 = vadd.f32 %v5574, %v5640
        %v5673 = vadd.f32 %v5575, %v5641
        %v5674 = vadd.f32 %v5576, %v5642
        %v5675 = vadd.f32 %v5577, %v5643
        %v5676 = vadd.f32 %v5578, %v5644
        %v5677 = vadd.f32 %v5579, %v5645
        %v5678 = vadd.f32 %v5580, %v5646
        %v5679 = vadd.f32 %v5581, %v5647
        %v5680 = vadd.f32 %v5582, %v5648
        %v5681 = vadd.f32 %v5583, %v5649
        %v5682 = vadd.f32 %v5584, %v5650
        %v5683 = vadd.f32 %v5585, %v5651
        %v5684 = vadd.f32 %v5586, %v5652
        %v5685 = vadd.f32 %v5587, %v5653
        %v5686 = vadd.f32 %v5588, %v5654
        %v5687 = vadd.f32 %v5589, %v5655
        %v5688 = vadd.f32 %v5590, %v5656
        %v5689 = vadd.f32 %v5591, %v5657
        %v5690 = vadd.f32 %v5592, %v5658
        %v5691 = vadd.f32 %v5593, %v5659
        %v5692 = vadd.f32 %v5594, %v5660
        %v5693 = vadd.f32 %v5595, %v5661
        %v5694 = vadd.f32 %v5596, %v5662
        %v5695 = vadd.f32 %v5597, %v5663
        %v5696 = vadd.f32 %v5598, %v5664
        %v5697 = vadd.f32 %v5599, %v5665
        %v5698 = vadd.f32 %v5600, %v5666
        %v5699 = vadd.f32 %v5601, %v5667
        %v5700 = vadd.f32 %v5602, %v5668
        %v5701 = vadd.f32 %v5603, %v5669
        %v5702 = vadd.f32 %v5604, %v5670
        %s5703 = scalar_lea.vmem [#allocation3], 144
        %v5704 = vld [vmem:[%s5703] sm:$0xff]
        %v5705 = vld [vmem:[%s5703 + $0x8] sm:$0xff]
        %v5706 = vld [vmem:[%s5703 + $0x18] sm:$0xff]
        %v5707 = vld [vmem:[%s5703 + $0x20] sm:$0xff]
        %v5708 = vld [vmem:[%s5703 + $0x30] sm:$0xff]
        %v5709 = vld [vmem:[%s5703 + $0x38] sm:$0xff]
        %v5710 = vld [vmem:[%s5703 + $0x48] sm:$0xff]
        %v5711 = vld [vmem:[%s5703 + $0x50] sm:$0xff]
        %v5712 = vld [vmem:[%s5703 + $0x60] sm:$0xff]
        %v5713 = vld [vmem:[%s5703 + $0x68] sm:$0xff]
        %v5714 = vld [vmem:[%s5703 + $0x78] sm:$0xff]
        %v5715 = vld [vmem:[%s5703 + $0x80] sm:$0xff]
        %v5716 = vld [vmem:[%s5703 + $0x90] sm:$0xff]
        %v5717 = vld [vmem:[%s5703 + $0x98] sm:$0xff]
        %v5718 = vld [vmem:[%s5703 + $0xa8] sm:$0xff]
        %v5719 = vld [vmem:[%s5703 + $0xb0] sm:$0xff]
        %v5720 = vld [vmem:[%s5703 + $0xc0] sm:$0xff]
        %v5721 = vld [vmem:[%s5703 + $0xc8] sm:$0xff]
        %v5722 = vld [vmem:[%s5703 + $0xd8] sm:$0xff]
        %v5723 = vld [vmem:[%s5703 + $0xe0] sm:$0xff]
        %v5724 = vld [vmem:[%s5703 + $0xf0] sm:$0xff]
        %v5725 = vld [vmem:[%s5703 + $0xf8] sm:$0xff]
        %v5726 = vld [vmem:[%s5703 + $0x108] sm:$0xff]
        %v5727 = vld [vmem:[%s5703 + $0x110] sm:$0xff]
        %v5728 = vld [vmem:[%s5703 + $0x120] sm:$0xff]
        %v5729 = vld [vmem:[%s5703 + $0x128] sm:$0xff]
        %v5730 = vld [vmem:[%s5703 + $0x138] sm:$0xff]
        %v5731 = vld [vmem:[%s5703 + $0x140] sm:$0xff]
        %v5732 = vld [vmem:[%s5703 + $0x150] sm:$0xff]
        %v5733 = vld [vmem:[%s5703 + $0x158] sm:$0xff]
        %v5734 = vld [vmem:[%s5703 + $0x168] sm:$0xff]
        %v5735 = vld [vmem:[%s5703 + $0x170] sm:$0xff]
        %s5736 = scalar_lea.vmem [#allocation10], 48
        %v5737 = vld [vmem:[%s5736] sm:$0x1]
        %v5738 = vperm.slane %v5737, 0
        %v5739 = vmul.f32 %v5704, %v5738
        %v5740 = vmul.f32 %v5705, %v5738
        %v5741 = vmul.f32 %v5706, %v5738
        %v5742 = vmul.f32 %v5707, %v5738
        %v5743 = vmul.f32 %v5708, %v5738
        %v5744 = vmul.f32 %v5709, %v5738
        %v5745 = vmul.f32 %v5710, %v5738
        %v5746 = vmul.f32 %v5711, %v5738
        %v5747 = vmul.f32 %v5712, %v5738
        %v5748 = vmul.f32 %v5713, %v5738
        %v5749 = vmul.f32 %v5714, %v5738
        %v5750 = vmul.f32 %v5715, %v5738
        %v5751 = vmul.f32 %v5716, %v5738
        %v5752 = vmul.f32 %v5717, %v5738
        %v5753 = vmul.f32 %v5718, %v5738
        %v5754 = vmul.f32 %v5719, %v5738
        %v5755 = vmul.f32 %v5720, %v5738
        %v5756 = vmul.f32 %v5721, %v5738
        %v5757 = vmul.f32 %v5722, %v5738
        %v5758 = vmul.f32 %v5723, %v5738
        %v5759 = vmul.f32 %v5724, %v5738
        %v5760 = vmul.f32 %v5725, %v5738
        %v5761 = vmul.f32 %v5726, %v5738
        %v5762 = vmul.f32 %v5727, %v5738
        %v5763 = vmul.f32 %v5728, %v5738
        %v5764 = vmul.f32 %v5729, %v5738
        %v5765 = vmul.f32 %v5730, %v5738
        %v5766 = vmul.f32 %v5731, %v5738
        %v5767 = vmul.f32 %v5732, %v5738
        %v5768 = vmul.f32 %v5733, %v5738
        %v5769 = vmul.f32 %v5734, %v5738
        %v5770 = vmul.f32 %v5735, %v5738
        %v5771 = vadd.f32 %v5671, %v5739
        %v5772 = vadd.f32 %v5672, %v5740
        %v5773 = vadd.f32 %v5673, %v5741
        %v5774 = vadd.f32 %v5674, %v5742
        %v5775 = vadd.f32 %v5675, %v5743
        %v5776 = vadd.f32 %v5676, %v5744
        %v5777 = vadd.f32 %v5677, %v5745
        %v5778 = vadd.f32 %v5678, %v5746
        %v5779 = vadd.f32 %v5679, %v5747
        %v5780 = vadd.f32 %v5680, %v5748
        %v5781 = vadd.f32 %v5681, %v5749
        %v5782 = vadd.f32 %v5682, %v5750
        %v5783 = vadd.f32 %v5683, %v5751
        %v5784 = vadd.f32 %v5684, %v5752
        %v5785 = vadd.f32 %v5685, %v5753
        %v5786 = vadd.f32 %v5686, %v5754
        %v5787 = vadd.f32 %v5687, %v5755
        %v5788 = vadd.f32 %v5688, %v5756
        %v5789 = vadd.f32 %v5689, %v5757
        %v5790 = vadd.f32 %v5690, %v5758
        %v5791 = vadd.f32 %v5691, %v5759
        %v5792 = vadd.f32 %v5692, %v5760
        %v5793 = vadd.f32 %v5693, %v5761
        %v5794 = vadd.f32 %v5694, %v5762
        %v5795 = vadd.f32 %v5695, %v5763
        %v5796 = vadd.f32 %v5696, %v5764
        %v5797 = vadd.f32 %v5697, %v5765
        %v5798 = vadd.f32 %v5698, %v5766
        %v5799 = vadd.f32 %v5699, %v5767
        %v5800 = vadd.f32 %v5700, %v5768
        %v5801 = vadd.f32 %v5701, %v5769
        %v5802 = vadd.f32 %v5702, %v5770
        %v5803 = vld [vmem:[%s5703 + $0x1] sm:$0xff]
        %v5804 = vld [vmem:[%s5703 + $0x9] sm:$0xff]
        %v5805 = vld [vmem:[%s5703 + $0x19] sm:$0xff]
        %v5806 = vld [vmem:[%s5703 + $0x21] sm:$0xff]
        %v5807 = vld [vmem:[%s5703 + $0x31] sm:$0xff]
        %v5808 = vld [vmem:[%s5703 + $0x39] sm:$0xff]
        %v5809 = vld [vmem:[%s5703 + $0x49] sm:$0xff]
        %v5810 = vld [vmem:[%s5703 + $0x51] sm:$0xff]
        %v5811 = vld [vmem:[%s5703 + $0x61] sm:$0xff]
        %v5812 = vld [vmem:[%s5703 + $0x69] sm:$0xff]
        %v5813 = vld [vmem:[%s5703 + $0x79] sm:$0xff]
        %v5814 = vld [vmem:[%s5703 + $0x81] sm:$0xff]
        %v5815 = vld [vmem:[%s5703 + $0x91] sm:$0xff]
        %v5816 = vld [vmem:[%s5703 + $0x99] sm:$0xff]
        %v5817 = vld [vmem:[%s5703 + $0xa9] sm:$0xff]
        %v5818 = vld [vmem:[%s5703 + $0xb1] sm:$0xff]
        %v5819 = vld [vmem:[%s5703 + $0xc1] sm:$0xff]
        %v5820 = vld [vmem:[%s5703 + $0xc9] sm:$0xff]
        %v5821 = vld [vmem:[%s5703 + $0xd9] sm:$0xff]
        %v5822 = vld [vmem:[%s5703 + $0xe1] sm:$0xff]
        %v5823 = vld [vmem:[%s5703 + $0xf1] sm:$0xff]
        %v5824 = vld [vmem:[%s5703 + $0xf9] sm:$0xff]
        %v5825 = vld [vmem:[%s5703 + $0x109] sm:$0xff]
        %v5826 = vld [vmem:[%s5703 + $0x111] sm:$0xff]
        %v5827 = vld [vmem:[%s5703 + $0x121] sm:$0xff]
        %v5828 = vld [vmem:[%s5703 + $0x129] sm:$0xff]
        %v5829 = vld [vmem:[%s5703 + $0x139] sm:$0xff]
        %v5830 = vld [vmem:[%s5703 + $0x141] sm:$0xff]
        %v5831 = vld [vmem:[%s5703 + $0x151] sm:$0xff]
        %v5832 = vld [vmem:[%s5703 + $0x159] sm:$0xff]
        %v5833 = vld [vmem:[%s5703 + $0x169] sm:$0xff]
        %v5834 = vld [vmem:[%s5703 + $0x171] sm:$0xff]
        %v5835 = vld [vmem:[%s5736 + $0x1] sm:$0x1]
        %v5836 = vperm.slane %v5835, 0
        %v5837 = vmul.f32 %v5803, %v5836
        %v5838 = vmul.f32 %v5804, %v5836
        %v5839 = vmul.f32 %v5805, %v5836
        %v5840 = vmul.f32 %v5806, %v5836
        %v5841 = vmul.f32 %v5807, %v5836
        %v5842 = vmul.f32 %v5808, %v5836
        %v5843 = vmul.f32 %v5809, %v5836
        %v5844 = vmul.f32 %v5810, %v5836
        %v5845 = vmul.f32 %v5811, %v5836
        %v5846 = vmul.f32 %v5812, %v5836
        %v5847 = vmul.f32 %v5813, %v5836
        %v5848 = vmul.f32 %v5814, %v5836
        %v5849 = vmul.f32 %v5815, %v5836
        %v5850 = vmul.f32 %v5816, %v5836
        %v5851 = vmul.f32 %v5817, %v5836
        %v5852 = vmul.f32 %v5818, %v5836
        %v5853 = vmul.f32 %v5819, %v5836
        %v5854 = vmul.f32 %v5820, %v5836
        %v5855 = vmul.f32 %v5821, %v5836
        %v5856 = vmul.f32 %v5822, %v5836
        %v5857 = vmul.f32 %v5823, %v5836
        %v5858 = vmul.f32 %v5824, %v5836
        %v5859 = vmul.f32 %v5825, %v5836
        %v5860 = vmul.f32 %v5826, %v5836
        %v5861 = vmul.f32 %v5827, %v5836
        %v5862 = vmul.f32 %v5828, %v5836
        %v5863 = vmul.f32 %v5829, %v5836
        %v5864 = vmul.f32 %v5830, %v5836
        %v5865 = vmul.f32 %v5831, %v5836
        %v5866 = vmul.f32 %v5832, %v5836
        %v5867 = vmul.f32 %v5833, %v5836
        %v5868 = vmul.f32 %v5834, %v5836
        %v5869 = vadd.f32 %v5771, %v5837
        %v5870 = vadd.f32 %v5772, %v5838
        %v5871 = vadd.f32 %v5773, %v5839
        %v5872 = vadd.f32 %v5774, %v5840
        %v5873 = vadd.f32 %v5775, %v5841
        %v5874 = vadd.f32 %v5776, %v5842
        %v5875 = vadd.f32 %v5777, %v5843
        %v5876 = vadd.f32 %v5778, %v5844
        %v5877 = vadd.f32 %v5779, %v5845
        %v5878 = vadd.f32 %v5780, %v5846
        %v5879 = vadd.f32 %v5781, %v5847
        %v5880 = vadd.f32 %v5782, %v5848
        %v5881 = vadd.f32 %v5783, %v5849
        %v5882 = vadd.f32 %v5784, %v5850
        %v5883 = vadd.f32 %v5785, %v5851
        %v5884 = vadd.f32 %v5786, %v5852
        %v5885 = vadd.f32 %v5787, %v5853
        %v5886 = vadd.f32 %v5788, %v5854
        %v5887 = vadd.f32 %v5789, %v5855
        %v5888 = vadd.f32 %v5790, %v5856
        %v5889 = vadd.f32 %v5791, %v5857
        %v5890 = vadd.f32 %v5792, %v5858
        %v5891 = vadd.f32 %v5793, %v5859
        %v5892 = vadd.f32 %v5794, %v5860
        %v5893 = vadd.f32 %v5795, %v5861
        %v5894 = vadd.f32 %v5796, %v5862
        %v5895 = vadd.f32 %v5797, %v5863
        %v5896 = vadd.f32 %v5798, %v5864
        %v5897 = vadd.f32 %v5799, %v5865
        %v5898 = vadd.f32 %v5800, %v5866
        %v5899 = vadd.f32 %v5801, %v5867
        %v5900 = vadd.f32 %v5802, %v5868
        %v5901 = vld [vmem:[%s5703 + $0x2] sm:$0xff]
        %v5902 = vld [vmem:[%s5703 + $0xa] sm:$0xff]
        %v5903 = vld [vmem:[%s5703 + $0x1a] sm:$0xff]
        %v5904 = vld [vmem:[%s5703 + $0x22] sm:$0xff]
        %v5905 = vld [vmem:[%s5703 + $0x32] sm:$0xff]
        %v5906 = vld [vmem:[%s5703 + $0x3a] sm:$0xff]
        %v5907 = vld [vmem:[%s5703 + $0x4a] sm:$0xff]
        %v5908 = vld [vmem:[%s5703 + $0x52] sm:$0xff]
        %v5909 = vld [vmem:[%s5703 + $0x62] sm:$0xff]
        %v5910 = vld [vmem:[%s5703 + $0x6a] sm:$0xff]
        %v5911 = vld [vmem:[%s5703 + $0x7a] sm:$0xff]
        %v5912 = vld [vmem:[%s5703 + $0x82] sm:$0xff]
        %v5913 = vld [vmem:[%s5703 + $0x92] sm:$0xff]
        %v5914 = vld [vmem:[%s5703 + $0x9a] sm:$0xff]
        %v5915 = vld [vmem:[%s5703 + $0xaa] sm:$0xff]
        %v5916 = vld [vmem:[%s5703 + $0xb2] sm:$0xff]
        %v5917 = vld [vmem:[%s5703 + $0xc2] sm:$0xff]
        %v5918 = vld [vmem:[%s5703 + $0xca] sm:$0xff]
        %v5919 = vld [vmem:[%s5703 + $0xda] sm:$0xff]
        %v5920 = vld [vmem:[%s5703 + $0xe2] sm:$0xff]
        %v5921 = vld [vmem:[%s5703 + $0xf2] sm:$0xff]
        %v5922 = vld [vmem:[%s5703 + $0xfa] sm:$0xff]
        %v5923 = vld [vmem:[%s5703 + $0x10a] sm:$0xff]
        %v5924 = vld [vmem:[%s5703 + $0x112] sm:$0xff]
        %v5925 = vld [vmem:[%s5703 + $0x122] sm:$0xff]
        %v5926 = vld [vmem:[%s5703 + $0x12a] sm:$0xff]
        %v5927 = vld [vmem:[%s5703 + $0x13a] sm:$0xff]
        %v5928 = vld [vmem:[%s5703 + $0x142] sm:$0xff]
        %v5929 = vld [vmem:[%s5703 + $0x152] sm:$0xff]
        %v5930 = vld [vmem:[%s5703 + $0x15a] sm:$0xff]
        %v5931 = vld [vmem:[%s5703 + $0x16a] sm:$0xff]
        %v5932 = vld [vmem:[%s5703 + $0x172] sm:$0xff]
        %v5933 = vld [vmem:[%s5736 + $0x2] sm:$0x1]
        %v5934 = vperm.slane %v5933, 0
        %v5935 = vmul.f32 %v5901, %v5934
        %v5936 = vmul.f32 %v5902, %v5934
        %v5937 = vmul.f32 %v5903, %v5934
        %v5938 = vmul.f32 %v5904, %v5934
        %v5939 = vmul.f32 %v5905, %v5934
        %v5940 = vmul.f32 %v5906, %v5934
        %v5941 = vmul.f32 %v5907, %v5934
        %v5942 = vmul.f32 %v5908, %v5934
        %v5943 = vmul.f32 %v5909, %v5934
        %v5944 = vmul.f32 %v5910, %v5934
        %v5945 = vmul.f32 %v5911, %v5934
        %v5946 = vmul.f32 %v5912, %v5934
        %v5947 = vmul.f32 %v5913, %v5934
        %v5948 = vmul.f32 %v5914, %v5934
        %v5949 = vmul.f32 %v5915, %v5934
        %v5950 = vmul.f32 %v5916, %v5934
        %v5951 = vmul.f32 %v5917, %v5934
        %v5952 = vmul.f32 %v5918, %v5934
        %v5953 = vmul.f32 %v5919, %v5934
        %v5954 = vmul.f32 %v5920, %v5934
        %v5955 = vmul.f32 %v5921, %v5934
        %v5956 = vmul.f32 %v5922, %v5934
        %v5957 = vmul.f32 %v5923, %v5934
        %v5958 = vmul.f32 %v5924, %v5934
        %v5959 = vmul.f32 %v5925, %v5934
        %v5960 = vmul.f32 %v5926, %v5934
        %v5961 = vmul.f32 %v5927, %v5934
        %v5962 = vmul.f32 %v5928, %v5934
        %v5963 = vmul.f32 %v5929, %v5934
        %v5964 = vmul.f32 %v5930, %v5934
        %v5965 = vmul.f32 %v5931, %v5934
        %v5966 = vmul.f32 %v5932, %v5934
        %v5967 = vadd.f32 %v5869, %v5935
        %v5968 = vadd.f32 %v5870, %v5936
        %v5969 = vadd.f32 %v5871, %v5937
        %v5970 = vadd.f32 %v5872, %v5938
        %v5971 = vadd.f32 %v5873, %v5939
        %v5972 = vadd.f32 %v5874, %v5940
        %v5973 = vadd.f32 %v5875, %v5941
        %v5974 = vadd.f32 %v5876, %v5942
        %v5975 = vadd.f32 %v5877, %v5943
        %v5976 = vadd.f32 %v5878, %v5944
        %v5977 = vadd.f32 %v5879, %v5945
        %v5978 = vadd.f32 %v5880, %v5946
        %v5979 = vadd.f32 %v5881, %v5947
        %v5980 = vadd.f32 %v5882, %v5948
        %v5981 = vadd.f32 %v5883, %v5949
        %v5982 = vadd.f32 %v5884, %v5950
        %v5983 = vadd.f32 %v5885, %v5951
        %v5984 = vadd.f32 %v5886, %v5952
        %v5985 = vadd.f32 %v5887, %v5953
        %v5986 = vadd.f32 %v5888, %v5954
        %v5987 = vadd.f32 %v5889, %v5955
        %v5988 = vadd.f32 %v5890, %v5956
        %v5989 = vadd.f32 %v5891, %v5957
        %v5990 = vadd.f32 %v5892, %v5958
        %v5991 = vadd.f32 %v5893, %v5959
        %v5992 = vadd.f32 %v5894, %v5960
        %v5993 = vadd.f32 %v5895, %v5961
        %v5994 = vadd.f32 %v5896, %v5962
        %v5995 = vadd.f32 %v5897, %v5963
        %v5996 = vadd.f32 %v5898, %v5964
        %v5997 = vadd.f32 %v5899, %v5965
        %v5998 = vadd.f32 %v5900, %v5966
        %v5999 = vld [vmem:[%s5703 + $0x3] sm:$0xff]
        %v6000 = vld [vmem:[%s5703 + $0xb] sm:$0xff]
        %v6001 = vld [vmem:[%s5703 + $0x1b] sm:$0xff]
        %v6002 = vld [vmem:[%s5703 + $0x23] sm:$0xff]
        %v6003 = vld [vmem:[%s5703 + $0x33] sm:$0xff]
        %v6004 = vld [vmem:[%s5703 + $0x3b] sm:$0xff]
        %v6005 = vld [vmem:[%s5703 + $0x4b] sm:$0xff]
        %v6006 = vld [vmem:[%s5703 + $0x53] sm:$0xff]
        %v6007 = vld [vmem:[%s5703 + $0x63] sm:$0xff]
        %v6008 = vld [vmem:[%s5703 + $0x6b] sm:$0xff]
        %v6009 = vld [vmem:[%s5703 + $0x7b] sm:$0xff]
        %v6010 = vld [vmem:[%s5703 + $0x83] sm:$0xff]
        %v6011 = vld [vmem:[%s5703 + $0x93] sm:$0xff]
        %v6012 = vld [vmem:[%s5703 + $0x9b] sm:$0xff]
        %v6013 = vld [vmem:[%s5703 + $0xab] sm:$0xff]
        %v6014 = vld [vmem:[%s5703 + $0xb3] sm:$0xff]
        %v6015 = vld [vmem:[%s5703 + $0xc3] sm:$0xff]
        %v6016 = vld [vmem:[%s5703 + $0xcb] sm:$0xff]
        %v6017 = vld [vmem:[%s5703 + $0xdb] sm:$0xff]
        %v6018 = vld [vmem:[%s5703 + $0xe3] sm:$0xff]
        %v6019 = vld [vmem:[%s5703 + $0xf3] sm:$0xff]
        %v6020 = vld [vmem:[%s5703 + $0xfb] sm:$0xff]
        %v6021 = vld [vmem:[%s5703 + $0x10b] sm:$0xff]
        %v6022 = vld [vmem:[%s5703 + $0x113] sm:$0xff]
        %v6023 = vld [vmem:[%s5703 + $0x123] sm:$0xff]
        %v6024 = vld [vmem:[%s5703 + $0x12b] sm:$0xff]
        %v6025 = vld [vmem:[%s5703 + $0x13b] sm:$0xff]
        %v6026 = vld [vmem:[%s5703 + $0x143] sm:$0xff]
        %v6027 = vld [vmem:[%s5703 + $0x153] sm:$0xff]
        %v6028 = vld [vmem:[%s5703 + $0x15b] sm:$0xff]
        %v6029 = vld [vmem:[%s5703 + $0x16b] sm:$0xff]
        %v6030 = vld [vmem:[%s5703 + $0x173] sm:$0xff]
        %v6031 = vld [vmem:[%s5736 + $0x3] sm:$0x1]
        %v6032 = vperm.slane %v6031, 0
        %v6033 = vmul.f32 %v5999, %v6032
        %v6034 = vmul.f32 %v6000, %v6032
        %v6035 = vmul.f32 %v6001, %v6032
        %v6036 = vmul.f32 %v6002, %v6032
        %v6037 = vmul.f32 %v6003, %v6032
        %v6038 = vmul.f32 %v6004, %v6032
        %v6039 = vmul.f32 %v6005, %v6032
        %v6040 = vmul.f32 %v6006, %v6032
        %v6041 = vmul.f32 %v6007, %v6032
        %v6042 = vmul.f32 %v6008, %v6032
        %v6043 = vmul.f32 %v6009, %v6032
        %v6044 = vmul.f32 %v6010, %v6032
        %v6045 = vmul.f32 %v6011, %v6032
        %v6046 = vmul.f32 %v6012, %v6032
        %v6047 = vmul.f32 %v6013, %v6032
        %v6048 = vmul.f32 %v6014, %v6032
        %v6049 = vmul.f32 %v6015, %v6032
        %v6050 = vmul.f32 %v6016, %v6032
        %v6051 = vmul.f32 %v6017, %v6032
        %v6052 = vmul.f32 %v6018, %v6032
        %v6053 = vmul.f32 %v6019, %v6032
        %v6054 = vmul.f32 %v6020, %v6032
        %v6055 = vmul.f32 %v6021, %v6032
        %v6056 = vmul.f32 %v6022, %v6032
        %v6057 = vmul.f32 %v6023, %v6032
        %v6058 = vmul.f32 %v6024, %v6032
        %v6059 = vmul.f32 %v6025, %v6032
        %v6060 = vmul.f32 %v6026, %v6032
        %v6061 = vmul.f32 %v6027, %v6032
        %v6062 = vmul.f32 %v6028, %v6032
        %v6063 = vmul.f32 %v6029, %v6032
        %v6064 = vmul.f32 %v6030, %v6032
        %v6065 = vadd.f32 %v5967, %v6033
        %v6066 = vadd.f32 %v5968, %v6034
        %v6067 = vadd.f32 %v5969, %v6035
        %v6068 = vadd.f32 %v5970, %v6036
        %v6069 = vadd.f32 %v5971, %v6037
        %v6070 = vadd.f32 %v5972, %v6038
        %v6071 = vadd.f32 %v5973, %v6039
        %v6072 = vadd.f32 %v5974, %v6040
        %v6073 = vadd.f32 %v5975, %v6041
        %v6074 = vadd.f32 %v5976, %v6042
        %v6075 = vadd.f32 %v5977, %v6043
        %v6076 = vadd.f32 %v5978, %v6044
        %v6077 = vadd.f32 %v5979, %v6045
        %v6078 = vadd.f32 %v5980, %v6046
        %v6079 = vadd.f32 %v5981, %v6047
        %v6080 = vadd.f32 %v5982, %v6048
        %v6081 = vadd.f32 %v5983, %v6049
        %v6082 = vadd.f32 %v5984, %v6050
        %v6083 = vadd.f32 %v5985, %v6051
        %v6084 = vadd.f32 %v5986, %v6052
        %v6085 = vadd.f32 %v5987, %v6053
        %v6086 = vadd.f32 %v5988, %v6054
        %v6087 = vadd.f32 %v5989, %v6055
        %v6088 = vadd.f32 %v5990, %v6056
        %v6089 = vadd.f32 %v5991, %v6057
        %v6090 = vadd.f32 %v5992, %v6058
        %v6091 = vadd.f32 %v5993, %v6059
        %v6092 = vadd.f32 %v5994, %v6060
        %v6093 = vadd.f32 %v5995, %v6061
        %v6094 = vadd.f32 %v5996, %v6062
        %v6095 = vadd.f32 %v5997, %v6063
        %v6096 = vadd.f32 %v5998, %v6064
        %v6097 = vld [vmem:[%s5703 + $0x4] sm:$0xff]
        %v6098 = vld [vmem:[%s5703 + $0xc] sm:$0xff]
        %v6099 = vld [vmem:[%s5703 + $0x1c] sm:$0xff]
        %v6100 = vld [vmem:[%s5703 + $0x24] sm:$0xff]
        %v6101 = vld [vmem:[%s5703 + $0x34] sm:$0xff]
        %v6102 = vld [vmem:[%s5703 + $0x3c] sm:$0xff]
        %v6103 = vld [vmem:[%s5703 + $0x4c] sm:$0xff]
        %v6104 = vld [vmem:[%s5703 + $0x54] sm:$0xff]
        %v6105 = vld [vmem:[%s5703 + $0x64] sm:$0xff]
        %v6106 = vld [vmem:[%s5703 + $0x6c] sm:$0xff]
        %v6107 = vld [vmem:[%s5703 + $0x7c] sm:$0xff]
        %v6108 = vld [vmem:[%s5703 + $0x84] sm:$0xff]
        %v6109 = vld [vmem:[%s5703 + $0x94] sm:$0xff]
        %v6110 = vld [vmem:[%s5703 + $0x9c] sm:$0xff]
        %v6111 = vld [vmem:[%s5703 + $0xac] sm:$0xff]
        %v6112 = vld [vmem:[%s5703 + $0xb4] sm:$0xff]
        %v6113 = vld [vmem:[%s5703 + $0xc4] sm:$0xff]
        %v6114 = vld [vmem:[%s5703 + $0xcc] sm:$0xff]
        %v6115 = vld [vmem:[%s5703 + $0xdc] sm:$0xff]
        %v6116 = vld [vmem:[%s5703 + $0xe4] sm:$0xff]
        %v6117 = vld [vmem:[%s5703 + $0xf4] sm:$0xff]
        %v6118 = vld [vmem:[%s5703 + $0xfc] sm:$0xff]
        %v6119 = vld [vmem:[%s5703 + $0x10c] sm:$0xff]
        %v6120 = vld [vmem:[%s5703 + $0x114] sm:$0xff]
        %v6121 = vld [vmem:[%s5703 + $0x124] sm:$0xff]
        %v6122 = vld [vmem:[%s5703 + $0x12c] sm:$0xff]
        %v6123 = vld [vmem:[%s5703 + $0x13c] sm:$0xff]
        %v6124 = vld [vmem:[%s5703 + $0x144] sm:$0xff]
        %v6125 = vld [vmem:[%s5703 + $0x154] sm:$0xff]
        %v6126 = vld [vmem:[%s5703 + $0x15c] sm:$0xff]
        %v6127 = vld [vmem:[%s5703 + $0x16c] sm:$0xff]
        %v6128 = vld [vmem:[%s5703 + $0x174] sm:$0xff]
        %v6129 = vld [vmem:[%s5736 + $0x4] sm:$0x1]
        %v6130 = vperm.slane %v6129, 0
        %v6131 = vmul.f32 %v6097, %v6130
        %v6132 = vmul.f32 %v6098, %v6130
        %v6133 = vmul.f32 %v6099, %v6130
        %v6134 = vmul.f32 %v6100, %v6130
        %v6135 = vmul.f32 %v6101, %v6130
        %v6136 = vmul.f32 %v6102, %v6130
        %v6137 = vmul.f32 %v6103, %v6130
        %v6138 = vmul.f32 %v6104, %v6130
        %v6139 = vmul.f32 %v6105, %v6130
        %v6140 = vmul.f32 %v6106, %v6130
        %v6141 = vmul.f32 %v6107, %v6130
        %v6142 = vmul.f32 %v6108, %v6130
        %v6143 = vmul.f32 %v6109, %v6130
        %v6144 = vmul.f32 %v6110, %v6130
        %v6145 = vmul.f32 %v6111, %v6130
        %v6146 = vmul.f32 %v6112, %v6130
        %v6147 = vmul.f32 %v6113, %v6130
        %v6148 = vmul.f32 %v6114, %v6130
        %v6149 = vmul.f32 %v6115, %v6130
        %v6150 = vmul.f32 %v6116, %v6130
        %v6151 = vmul.f32 %v6117, %v6130
        %v6152 = vmul.f32 %v6118, %v6130
        %v6153 = vmul.f32 %v6119, %v6130
        %v6154 = vmul.f32 %v6120, %v6130
        %v6155 = vmul.f32 %v6121, %v6130
        %v6156 = vmul.f32 %v6122, %v6130
        %v6157 = vmul.f32 %v6123, %v6130
        %v6158 = vmul.f32 %v6124, %v6130
        %v6159 = vmul.f32 %v6125, %v6130
        %v6160 = vmul.f32 %v6126, %v6130
        %v6161 = vmul.f32 %v6127, %v6130
        %v6162 = vmul.f32 %v6128, %v6130
        %v6163 = vadd.f32 %v6065, %v6131
        %v6164 = vadd.f32 %v6066, %v6132
        %v6165 = vadd.f32 %v6067, %v6133
        %v6166 = vadd.f32 %v6068, %v6134
        %v6167 = vadd.f32 %v6069, %v6135
        %v6168 = vadd.f32 %v6070, %v6136
        %v6169 = vadd.f32 %v6071, %v6137
        %v6170 = vadd.f32 %v6072, %v6138
        %v6171 = vadd.f32 %v6073, %v6139
        %v6172 = vadd.f32 %v6074, %v6140
        %v6173 = vadd.f32 %v6075, %v6141
        %v6174 = vadd.f32 %v6076, %v6142
        %v6175 = vadd.f32 %v6077, %v6143
        %v6176 = vadd.f32 %v6078, %v6144
        %v6177 = vadd.f32 %v6079, %v6145
        %v6178 = vadd.f32 %v6080, %v6146
        %v6179 = vadd.f32 %v6081, %v6147
        %v6180 = vadd.f32 %v6082, %v6148
        %v6181 = vadd.f32 %v6083, %v6149
        %v6182 = vadd.f32 %v6084, %v6150
        %v6183 = vadd.f32 %v6085, %v6151
        %v6184 = vadd.f32 %v6086, %v6152
        %v6185 = vadd.f32 %v6087, %v6153
        %v6186 = vadd.f32 %v6088, %v6154
        %v6187 = vadd.f32 %v6089, %v6155
        %v6188 = vadd.f32 %v6090, %v6156
        %v6189 = vadd.f32 %v6091, %v6157
        %v6190 = vadd.f32 %v6092, %v6158
        %v6191 = vadd.f32 %v6093, %v6159
        %v6192 = vadd.f32 %v6094, %v6160
        %v6193 = vadd.f32 %v6095, %v6161
        %v6194 = vadd.f32 %v6096, %v6162
        %v6195 = vld [vmem:[%s5703 + $0x5] sm:$0xff]
        %v6196 = vld [vmem:[%s5703 + $0xd] sm:$0xff]
        %v6197 = vld [vmem:[%s5703 + $0x1d] sm:$0xff]
        %v6198 = vld [vmem:[%s5703 + $0x25] sm:$0xff]
        %v6199 = vld [vmem:[%s5703 + $0x35] sm:$0xff]
        %v6200 = vld [vmem:[%s5703 + $0x3d] sm:$0xff]
        %v6201 = vld [vmem:[%s5703 + $0x4d] sm:$0xff]
        %v6202 = vld [vmem:[%s5703 + $0x55] sm:$0xff]
        %v6203 = vld [vmem:[%s5703 + $0x65] sm:$0xff]
        %v6204 = vld [vmem:[%s5703 + $0x6d] sm:$0xff]
        %v6205 = vld [vmem:[%s5703 + $0x7d] sm:$0xff]
        %v6206 = vld [vmem:[%s5703 + $0x85] sm:$0xff]
        %v6207 = vld [vmem:[%s5703 + $0x95] sm:$0xff]
        %v6208 = vld [vmem:[%s5703 + $0x9d] sm:$0xff]
        %v6209 = vld [vmem:[%s5703 + $0xad] sm:$0xff]
        %v6210 = vld [vmem:[%s5703 + $0xb5] sm:$0xff]
        %v6211 = vld [vmem:[%s5703 + $0xc5] sm:$0xff]
        %v6212 = vld [vmem:[%s5703 + $0xcd] sm:$0xff]
        %v6213 = vld [vmem:[%s5703 + $0xdd] sm:$0xff]
        %v6214 = vld [vmem:[%s5703 + $0xe5] sm:$0xff]
        %v6215 = vld [vmem:[%s5703 + $0xf5] sm:$0xff]
        %v6216 = vld [vmem:[%s5703 + $0xfd] sm:$0xff]
        %v6217 = vld [vmem:[%s5703 + $0x10d] sm:$0xff]
        %v6218 = vld [vmem:[%s5703 + $0x115] sm:$0xff]
        %v6219 = vld [vmem:[%s5703 + $0x125] sm:$0xff]
        %v6220 = vld [vmem:[%s5703 + $0x12d] sm:$0xff]
        %v6221 = vld [vmem:[%s5703 + $0x13d] sm:$0xff]
        %v6222 = vld [vmem:[%s5703 + $0x145] sm:$0xff]
        %v6223 = vld [vmem:[%s5703 + $0x155] sm:$0xff]
        %v6224 = vld [vmem:[%s5703 + $0x15d] sm:$0xff]
        %v6225 = vld [vmem:[%s5703 + $0x16d] sm:$0xff]
        %v6226 = vld [vmem:[%s5703 + $0x175] sm:$0xff]
        %v6227 = vld [vmem:[%s5736 + $0x5] sm:$0x1]
        %v6228 = vperm.slane %v6227, 0
        %v6229 = vmul.f32 %v6195, %v6228
        %v6230 = vmul.f32 %v6196, %v6228
        %v6231 = vmul.f32 %v6197, %v6228
        %v6232 = vmul.f32 %v6198, %v6228
        %v6233 = vmul.f32 %v6199, %v6228
        %v6234 = vmul.f32 %v6200, %v6228
        %v6235 = vmul.f32 %v6201, %v6228
        %v6236 = vmul.f32 %v6202, %v6228
        %v6237 = vmul.f32 %v6203, %v6228
        %v6238 = vmul.f32 %v6204, %v6228
        %v6239 = vmul.f32 %v6205, %v6228
        %v6240 = vmul.f32 %v6206, %v6228
        %v6241 = vmul.f32 %v6207, %v6228
        %v6242 = vmul.f32 %v6208, %v6228
        %v6243 = vmul.f32 %v6209, %v6228
        %v6244 = vmul.f32 %v6210, %v6228
        %v6245 = vmul.f32 %v6211, %v6228
        %v6246 = vmul.f32 %v6212, %v6228
        %v6247 = vmul.f32 %v6213, %v6228
        %v6248 = vmul.f32 %v6214, %v6228
        %v6249 = vmul.f32 %v6215, %v6228
        %v6250 = vmul.f32 %v6216, %v6228
        %v6251 = vmul.f32 %v6217, %v6228
        %v6252 = vmul.f32 %v6218, %v6228
        %v6253 = vmul.f32 %v6219, %v6228
        %v6254 = vmul.f32 %v6220, %v6228
        %v6255 = vmul.f32 %v6221, %v6228
        %v6256 = vmul.f32 %v6222, %v6228
        %v6257 = vmul.f32 %v6223, %v6228
        %v6258 = vmul.f32 %v6224, %v6228
        %v6259 = vmul.f32 %v6225, %v6228
        %v6260 = vmul.f32 %v6226, %v6228
        %v6261 = vadd.f32 %v6163, %v6229
        %v6262 = vadd.f32 %v6164, %v6230
        %v6263 = vadd.f32 %v6165, %v6231
        %v6264 = vadd.f32 %v6166, %v6232
        %v6265 = vadd.f32 %v6167, %v6233
        %v6266 = vadd.f32 %v6168, %v6234
        %v6267 = vadd.f32 %v6169, %v6235
        %v6268 = vadd.f32 %v6170, %v6236
        %v6269 = vadd.f32 %v6171, %v6237
        %v6270 = vadd.f32 %v6172, %v6238
        %v6271 = vadd.f32 %v6173, %v6239
        %v6272 = vadd.f32 %v6174, %v6240
        %v6273 = vadd.f32 %v6175, %v6241
        %v6274 = vadd.f32 %v6176, %v6242
        %v6275 = vadd.f32 %v6177, %v6243
        %v6276 = vadd.f32 %v6178, %v6244
        %v6277 = vadd.f32 %v6179, %v6245
        %v6278 = vadd.f32 %v6180, %v6246
        %v6279 = vadd.f32 %v6181, %v6247
        %v6280 = vadd.f32 %v6182, %v6248
        %v6281 = vadd.f32 %v6183, %v6249
        %v6282 = vadd.f32 %v6184, %v6250
        %v6283 = vadd.f32 %v6185, %v6251
        %v6284 = vadd.f32 %v6186, %v6252
        %v6285 = vadd.f32 %v6187, %v6253
        %v6286 = vadd.f32 %v6188, %v6254
        %v6287 = vadd.f32 %v6189, %v6255
        %v6288 = vadd.f32 %v6190, %v6256
        %v6289 = vadd.f32 %v6191, %v6257
        %v6290 = vadd.f32 %v6192, %v6258
        %v6291 = vadd.f32 %v6193, %v6259
        %v6292 = vadd.f32 %v6194, %v6260
        %v6293 = vld [vmem:[%s5703 + $0x6] sm:$0xff]
        %v6294 = vld [vmem:[%s5703 + $0xe] sm:$0xff]
        %v6295 = vld [vmem:[%s5703 + $0x1e] sm:$0xff]
        %v6296 = vld [vmem:[%s5703 + $0x26] sm:$0xff]
        %v6297 = vld [vmem:[%s5703 + $0x36] sm:$0xff]
        %v6298 = vld [vmem:[%s5703 + $0x3e] sm:$0xff]
        %v6299 = vld [vmem:[%s5703 + $0x4e] sm:$0xff]
        %v6300 = vld [vmem:[%s5703 + $0x56] sm:$0xff]
        %v6301 = vld [vmem:[%s5703 + $0x66] sm:$0xff]
        %v6302 = vld [vmem:[%s5703 + $0x6e] sm:$0xff]
        %v6303 = vld [vmem:[%s5703 + $0x7e] sm:$0xff]
        %v6304 = vld [vmem:[%s5703 + $0x86] sm:$0xff]
        %v6305 = vld [vmem:[%s5703 + $0x96] sm:$0xff]
        %v6306 = vld [vmem:[%s5703 + $0x9e] sm:$0xff]
        %v6307 = vld [vmem:[%s5703 + $0xae] sm:$0xff]
        %v6308 = vld [vmem:[%s5703 + $0xb6] sm:$0xff]
        %v6309 = vld [vmem:[%s5703 + $0xc6] sm:$0xff]
        %v6310 = vld [vmem:[%s5703 + $0xce] sm:$0xff]
        %v6311 = vld [vmem:[%s5703 + $0xde] sm:$0xff]
        %v6312 = vld [vmem:[%s5703 + $0xe6] sm:$0xff]
        %v6313 = vld [vmem:[%s5703 + $0xf6] sm:$0xff]
        %v6314 = vld [vmem:[%s5703 + $0xfe] sm:$0xff]
        %v6315 = vld [vmem:[%s5703 + $0x10e] sm:$0xff]
        %v6316 = vld [vmem:[%s5703 + $0x116] sm:$0xff]
        %v6317 = vld [vmem:[%s5703 + $0x126] sm:$0xff]
        %v6318 = vld [vmem:[%s5703 + $0x12e] sm:$0xff]
        %v6319 = vld [vmem:[%s5703 + $0x13e] sm:$0xff]
        %v6320 = vld [vmem:[%s5703 + $0x146] sm:$0xff]
        %v6321 = vld [vmem:[%s5703 + $0x156] sm:$0xff]
        %v6322 = vld [vmem:[%s5703 + $0x15e] sm:$0xff]
        %v6323 = vld [vmem:[%s5703 + $0x16e] sm:$0xff]
        %v6324 = vld [vmem:[%s5703 + $0x176] sm:$0xff]
        %v6325 = vld [vmem:[%s5736 + $0x6] sm:$0x1]
        %v6326 = vperm.slane %v6325, 0
        %v6327 = vmul.f32 %v6293, %v6326
        %v6328 = vmul.f32 %v6294, %v6326
        %v6329 = vmul.f32 %v6295, %v6326
        %v6330 = vmul.f32 %v6296, %v6326
        %v6331 = vmul.f32 %v6297, %v6326
        %v6332 = vmul.f32 %v6298, %v6326
        %v6333 = vmul.f32 %v6299, %v6326
        %v6334 = vmul.f32 %v6300, %v6326
        %v6335 = vmul.f32 %v6301, %v6326
        %v6336 = vmul.f32 %v6302, %v6326
        %v6337 = vmul.f32 %v6303, %v6326
        %v6338 = vmul.f32 %v6304, %v6326
        %v6339 = vmul.f32 %v6305, %v6326
        %v6340 = vmul.f32 %v6306, %v6326
        %v6341 = vmul.f32 %v6307, %v6326
        %v6342 = vmul.f32 %v6308, %v6326
        %v6343 = vmul.f32 %v6309, %v6326
        %v6344 = vmul.f32 %v6310, %v6326
        %v6345 = vmul.f32 %v6311, %v6326
        %v6346 = vmul.f32 %v6312, %v6326
        %v6347 = vmul.f32 %v6313, %v6326
        %v6348 = vmul.f32 %v6314, %v6326
        %v6349 = vmul.f32 %v6315, %v6326
        %v6350 = vmul.f32 %v6316, %v6326
        %v6351 = vmul.f32 %v6317, %v6326
        %v6352 = vmul.f32 %v6318, %v6326
        %v6353 = vmul.f32 %v6319, %v6326
        %v6354 = vmul.f32 %v6320, %v6326
        %v6355 = vmul.f32 %v6321, %v6326
        %v6356 = vmul.f32 %v6322, %v6326
        %v6357 = vmul.f32 %v6323, %v6326
        %v6358 = vmul.f32 %v6324, %v6326
        %v6359 = vadd.f32 %v6261, %v6327
        %v6360 = vadd.f32 %v6262, %v6328
        %v6361 = vadd.f32 %v6263, %v6329
        %v6362 = vadd.f32 %v6264, %v6330
        %v6363 = vadd.f32 %v6265, %v6331
        %v6364 = vadd.f32 %v6266, %v6332
        %v6365 = vadd.f32 %v6267, %v6333
        %v6366 = vadd.f32 %v6268, %v6334
        %v6367 = vadd.f32 %v6269, %v6335
        %v6368 = vadd.f32 %v6270, %v6336
        %v6369 = vadd.f32 %v6271, %v6337
        %v6370 = vadd.f32 %v6272, %v6338
        %v6371 = vadd.f32 %v6273, %v6339
        %v6372 = vadd.f32 %v6274, %v6340
        %v6373 = vadd.f32 %v6275, %v6341
        %v6374 = vadd.f32 %v6276, %v6342
        %v6375 = vadd.f32 %v6277, %v6343
        %v6376 = vadd.f32 %v6278, %v6344
        %v6377 = vadd.f32 %v6279, %v6345
        %v6378 = vadd.f32 %v6280, %v6346
        %v6379 = vadd.f32 %v6281, %v6347
        %v6380 = vadd.f32 %v6282, %v6348
        %v6381 = vadd.f32 %v6283, %v6349
        %v6382 = vadd.f32 %v6284, %v6350
        %v6383 = vadd.f32 %v6285, %v6351
        %v6384 = vadd.f32 %v6286, %v6352
        %v6385 = vadd.f32 %v6287, %v6353
        %v6386 = vadd.f32 %v6288, %v6354
        %v6387 = vadd.f32 %v6289, %v6355
        %v6388 = vadd.f32 %v6290, %v6356
        %v6389 = vadd.f32 %v6291, %v6357
        %v6390 = vadd.f32 %v6292, %v6358
        %v6391 = vld [vmem:[#allocation12] sm:$0xff]
        %v6392 = vld [vmem:[#allocation12 + $0x8] sm:$0xff]
        %v6393 = vld [vmem:[#allocation12 + $0x10] sm:$0xff]
        %v6394 = vld [vmem:[#allocation12 + $0x18] sm:$0xff]
        %v6395 = vld [vmem:[#allocation12 + $0x20] sm:$0xff]
        %v6396 = vld [vmem:[#allocation12 + $0x28] sm:$0xff]
        %v6397 = vld [vmem:[#allocation12 + $0x30] sm:$0xff]
        %v6398 = vld [vmem:[#allocation12 + $0x38] sm:$0xff]
        %v6399 = vld [vmem:[#allocation12 + $0x40] sm:$0xff]
        %v6400 = vld [vmem:[#allocation12 + $0x48] sm:$0xff]
        %v6401 = vld [vmem:[#allocation12 + $0x50] sm:$0xff]
        %v6402 = vld [vmem:[#allocation12 + $0x58] sm:$0xff]
        %v6403 = vld [vmem:[#allocation12 + $0x60] sm:$0xff]
        %v6404 = vld [vmem:[#allocation12 + $0x68] sm:$0xff]
        %v6405 = vld [vmem:[#allocation12 + $0x70] sm:$0xff]
        %v6406 = vld [vmem:[#allocation12 + $0x78] sm:$0xff]
        %v6407 = vld [vmem:[#allocation12 + $0x80] sm:$0xff]
        %v6408 = vld [vmem:[#allocation12 + $0x88] sm:$0xff]
        %v6409 = vld [vmem:[#allocation12 + $0x90] sm:$0xff]
        %v6410 = vld [vmem:[#allocation12 + $0x98] sm:$0xff]
        %v6411 = vld [vmem:[#allocation12 + $0xa0] sm:$0xff]
        %v6412 = vld [vmem:[#allocation12 + $0xa8] sm:$0xff]
        %v6413 = vld [vmem:[#allocation12 + $0xb0] sm:$0xff]
        %v6414 = vld [vmem:[#allocation12 + $0xb8] sm:$0xff]
        %v6415 = vld [vmem:[#allocation12 + $0xc0] sm:$0xff]
        %v6416 = vld [vmem:[#allocation12 + $0xc8] sm:$0xff]
        %v6417 = vld [vmem:[#allocation12 + $0xd0] sm:$0xff]
        %v6418 = vld [vmem:[#allocation12 + $0xd8] sm:$0xff]
        %v6419 = vld [vmem:[#allocation12 + $0xe0] sm:$0xff]
        %v6420 = vld [vmem:[#allocation12 + $0xe8] sm:$0xff]
        %v6421 = vld [vmem:[#allocation12 + $0xf0] sm:$0xff]
        %v6422 = vld [vmem:[#allocation12 + $0xf8] sm:$0xff]
        %v6423 = vld [vmem:[#allocation12 + $0x100] sm:$0xff]
        %v6424 = vld [vmem:[#allocation12 + $0x108] sm:$0xff]
        %v6425 = vld [vmem:[#allocation12 + $0x110] sm:$0xff]
        %v6426 = vld [vmem:[#allocation12 + $0x118] sm:$0xff]
        %v6427 = vld [vmem:[#allocation12 + $0x120] sm:$0xff]
        %v6428 = vld [vmem:[#allocation12 + $0x128] sm:$0xff]
        %v6429 = vld [vmem:[#allocation12 + $0x130] sm:$0xff]
        %v6430 = vld [vmem:[#allocation12 + $0x138] sm:$0xff]
        %v6431 = vld [vmem:[#allocation12 + $0x140] sm:$0xff]
        %v6432 = vld [vmem:[#allocation12 + $0x148] sm:$0xff]
        %v6433 = vld [vmem:[#allocation12 + $0x150] sm:$0xff]
        %v6434 = vld [vmem:[#allocation12 + $0x158] sm:$0xff]
        %v6435 = vld [vmem:[#allocation12 + $0x160] sm:$0xff]
        %v6436 = vld [vmem:[#allocation12 + $0x168] sm:$0xff]
        %v6437 = vld [vmem:[#allocation12 + $0x170] sm:$0xff]
        %v6438 = vld [vmem:[#allocation12 + $0x178] sm:$0xff]
        %v6439 = vld [vmem:[#allocation12 + $0x180] sm:$0xff]
        %v6440 = vld [vmem:[#allocation12 + $0x188] sm:$0xff]
        %v6441 = vld [vmem:[#allocation12 + $0x190] sm:$0xff]
        %v6442 = vld [vmem:[#allocation12 + $0x198] sm:$0xff]
        %v6443 = vld [vmem:[#allocation12 + $0x1a0] sm:$0xff]
        %v6444 = vld [vmem:[#allocation12 + $0x1a8] sm:$0xff]
        %v6445 = vld [vmem:[#allocation12 + $0x1b0] sm:$0xff]
        %v6446 = vld [vmem:[#allocation12 + $0x1b8] sm:$0xff]
        %v6447 = vld [vmem:[#allocation12 + $0x1c0] sm:$0xff]
        %v6448 = vld [vmem:[#allocation12 + $0x1c8] sm:$0xff]
        %v6449 = vld [vmem:[#allocation12 + $0x1d0] sm:$0xff]
        %v6450 = vld [vmem:[#allocation12 + $0x1d8] sm:$0xff]
        %v6451 = vld [vmem:[#allocation12 + $0x1e0] sm:$0xff]
        %v6452 = vld [vmem:[#allocation12 + $0x1e8] sm:$0xff]
        %v6453 = vld [vmem:[#allocation12 + $0x1f0] sm:$0xff]
        %v6454 = vld [vmem:[#allocation12 + $0x1f8] sm:$0xff]
        %v6455 = vld [vmem:[%s5] sm:$0xf]
        %v6457 = vperm.slane %v6455, 0
        %v6458 = vperm.slane %v6455, 1
        %v6459 = vperm.slane %v6455, 2
        %v6460 = vperm.slane %v6455, 3
        %6465 = vmatpush.msra.mxu0 %v6451
        %6466 = vmatpush.msra.mxu0 %v6447
        %6467 = vmatpush.msra.mxu0 %v6443
        %6468 = vmatpush.msra.mxu0 %v6439
        %6469 = vmatpush.msra.mxu0 %v6435
        %6470 = vmatpush.msra.mxu0 %v6431
        %6471 = vmatpush.msra.mxu0 %v6427
        %6472 = vmatpush.msra.mxu0 %v6423
        %6473 = vmatpush.msra.mxu0 %v6419
        %6474 = vmatpush.msra.mxu0 %v6415
        %6475 = vmatpush.msra.mxu0 %v6411
        %6476 = vmatpush.msra.mxu0 %v6407
        %6477 = vmatpush.msra.mxu0 %v6403
        %6478 = vmatpush.msra.mxu0 %v6399
        %6479 = vmatpush.msra.mxu0 %v6395
        %6480 = vmatpush.msra.mxu0 %v6391
        %6481 = vmatmul.f32.gmra.mxu0 %v6359
        %v6482 = vpop.f32.mrf.mxu0
        %v6483 = vadd.f32 %v6457, %v6482
        %6484 = vmatmul.f32.gmra.mxu0 %v6360
        %v6485 = vpop.f32.mrf.mxu0
        %v6486 = vadd.f32 %v6457, %v6485
        %6487 = vmatmul.f32.gmra.mxu0 %v6361
        %v6488 = vpop.f32.mrf.mxu0
        %v6489 = vadd.f32 %v6457, %v6488
        %6490 = vmatmul.f32.gmra.mxu0 %v6362
        %v6491 = vpop.f32.mrf.mxu0
        %v6492 = vadd.f32 %v6457, %v6491
        %6493 = vmatmul.f32.gmra.mxu0 %v6363
        %v6494 = vpop.f32.mrf.mxu0
        %v6495 = vadd.f32 %v6457, %v6494
        %6496 = vmatmul.f32.gmra.mxu0 %v6364
        %v6497 = vpop.f32.mrf.mxu0
        %v6498 = vadd.f32 %v6457, %v6497
        %6499 = vmatmul.f32.gmra.mxu0 %v6365
        %v6500 = vpop.f32.mrf.mxu0
        %v6501 = vadd.f32 %v6457, %v6500
        %6502 = vmatmul.f32.gmra.mxu0 %v6366
        %v6503 = vpop.f32.mrf.mxu0
        %v6504 = vadd.f32 %v6457, %v6503
        %6505 = vmatmul.f32.gmra.mxu0 %v6367
        %v6506 = vpop.f32.mrf.mxu0
        %v6507 = vadd.f32 %v6457, %v6506
        %6508 = vmatmul.f32.gmra.mxu0 %v6368
        %v6509 = vpop.f32.mrf.mxu0
        %v6510 = vadd.f32 %v6457, %v6509
        %6511 = vmatmul.f32.gmra.mxu0 %v6369
        %v6512 = vpop.f32.mrf.mxu0
        %v6513 = vadd.f32 %v6457, %v6512
        %6514 = vmatmul.f32.gmra.mxu0 %v6370
        %v6515 = vpop.f32.mrf.mxu0
        %v6516 = vadd.f32 %v6457, %v6515
        %6517 = vmatmul.f32.gmra.mxu0 %v6371
        %v6518 = vpop.f32.mrf.mxu0
        %v6519 = vadd.f32 %v6457, %v6518
        %6520 = vmatmul.f32.gmra.mxu0 %v6372
        %v6521 = vpop.f32.mrf.mxu0
        %v6522 = vadd.f32 %v6457, %v6521
        %6523 = vmatmul.f32.gmra.mxu0 %v6373
        %v6524 = vpop.f32.mrf.mxu0
        %v6525 = vadd.f32 %v6457, %v6524
        %6526 = vmatmul.f32.gmra.mxu0 %v6374
        %v6527 = vpop.f32.mrf.mxu0
        %v6528 = vadd.f32 %v6457, %v6527
        %6529 = vmatmul.f32.gmra.mxu0 %v6375
        %v6530 = vpop.f32.mrf.mxu0
        %v6531 = vadd.f32 %v6457, %v6530
        %6532 = vmatmul.f32.gmra.mxu0 %v6376
        %v6533 = vpop.f32.mrf.mxu0
        %v6534 = vadd.f32 %v6457, %v6533
        %6535 = vmatmul.f32.gmra.mxu0 %v6377
        %v6536 = vpop.f32.mrf.mxu0
        %v6537 = vadd.f32 %v6457, %v6536
        %6538 = vmatmul.f32.gmra.mxu0 %v6378
        %v6539 = vpop.f32.mrf.mxu0
        %v6540 = vadd.f32 %v6457, %v6539
        %6541 = vmatmul.f32.gmra.mxu0 %v6379
        %v6542 = vpop.f32.mrf.mxu0
        %v6543 = vadd.f32 %v6457, %v6542
        %6544 = vmatmul.f32.gmra.mxu0 %v6380
        %v6545 = vpop.f32.mrf.mxu0
        %v6546 = vadd.f32 %v6457, %v6545
        %6547 = vmatmul.f32.gmra.mxu0 %v6381
        %v6548 = vpop.f32.mrf.mxu0
        %v6549 = vadd.f32 %v6457, %v6548
        %6550 = vmatmul.f32.gmra.mxu0 %v6382
        %v6551 = vpop.f32.mrf.mxu0
        %v6552 = vadd.f32 %v6457, %v6551
        %6553 = vmatmul.f32.gmra.mxu0 %v6383
        %v6554 = vpop.f32.mrf.mxu0
        %v6555 = vadd.f32 %v6457, %v6554
        %6556 = vmatmul.f32.gmra.mxu0 %v6384
        %v6557 = vpop.f32.mrf.mxu0
        %v6558 = vadd.f32 %v6457, %v6557
        %6559 = vmatmul.f32.gmra.mxu0 %v6385
        %v6560 = vpop.f32.mrf.mxu0
        %v6561 = vadd.f32 %v6457, %v6560
        %6562 = vmatmul.f32.gmra.mxu0 %v6386
        %v6563 = vpop.f32.mrf.mxu0
        %v6564 = vadd.f32 %v6457, %v6563
        %6565 = vmatmul.f32.gmra.mxu0 %v6387
        %v6566 = vpop.f32.mrf.mxu0
        %v6567 = vadd.f32 %v6457, %v6566
        %6568 = vmatmul.f32.gmra.mxu0 %v6388
        %v6569 = vpop.f32.mrf.mxu0
        %v6570 = vadd.f32 %v6457, %v6569
        %6571 = vmatmul.f32.gmra.mxu0 %v6389
        %v6572 = vpop.f32.mrf.mxu0
        %v6573 = vadd.f32 %v6457, %v6572
        %6574 = vmatmul.f32.gmra.mxu0 %v6390
        %v6575 = vpop.f32.mrf.mxu0
        %v6576 = vadd.f32 %v6457, %v6575
        %6577 = vdwg.mxu0
        %6578 = vmatpush.msra.mxu0 %v6452
        %6579 = vmatpush.msra.mxu0 %v6448
        %6580 = vmatpush.msra.mxu0 %v6444
        %6581 = vmatpush.msra.mxu0 %v6440
        %6582 = vmatpush.msra.mxu0 %v6436
        %6583 = vmatpush.msra.mxu0 %v6432
        %6584 = vmatpush.msra.mxu0 %v6428
        %6585 = vmatpush.msra.mxu0 %v6424
        %6586 = vmatpush.msra.mxu0 %v6420
        %6587 = vmatpush.msra.mxu0 %v6416
        %6588 = vmatpush.msra.mxu0 %v6412
        %6589 = vmatpush.msra.mxu0 %v6408
        %6590 = vmatpush.msra.mxu0 %v6404
        %6591 = vmatpush.msra.mxu0 %v6400
        %6592 = vmatpush.msra.mxu0 %v6396
        %6593 = vmatpush.msra.mxu0 %v6392
        %6594 = vmatmul.f32.gmra.mxu0 %v6359
        %v6595 = vpop.f32.mrf.mxu0
        %v6596 = vadd.f32 %v6458, %v6595
        %6597 = vmatmul.f32.gmra.mxu0 %v6360
        %v6598 = vpop.f32.mrf.mxu0
        %v6599 = vadd.f32 %v6458, %v6598
        %6600 = vmatmul.f32.gmra.mxu0 %v6361
        %v6601 = vpop.f32.mrf.mxu0
        %v6602 = vadd.f32 %v6458, %v6601
        %6603 = vmatmul.f32.gmra.mxu0 %v6362
        %v6604 = vpop.f32.mrf.mxu0
        %v6605 = vadd.f32 %v6458, %v6604
        %6606 = vmatmul.f32.gmra.mxu0 %v6363
        %v6607 = vpop.f32.mrf.mxu0
        %v6608 = vadd.f32 %v6458, %v6607
        %6609 = vmatmul.f32.gmra.mxu0 %v6364
        %v6610 = vpop.f32.mrf.mxu0
        %v6611 = vadd.f32 %v6458, %v6610
        %6612 = vmatmul.f32.gmra.mxu0 %v6365
        %v6613 = vpop.f32.mrf.mxu0
        %v6614 = vadd.f32 %v6458, %v6613
        %6615 = vmatmul.f32.gmra.mxu0 %v6366
        %v6616 = vpop.f32.mrf.mxu0
        %v6617 = vadd.f32 %v6458, %v6616
        %6618 = vmatmul.f32.gmra.mxu0 %v6367
        %v6619 = vpop.f32.mrf.mxu0
        %v6620 = vadd.f32 %v6458, %v6619
        %6621 = vmatmul.f32.gmra.mxu0 %v6368
        %v6622 = vpop.f32.mrf.mxu0
        %v6623 = vadd.f32 %v6458, %v6622
        %6624 = vmatmul.f32.gmra.mxu0 %v6369
        %v6625 = vpop.f32.mrf.mxu0
        %v6626 = vadd.f32 %v6458, %v6625
        %6627 = vmatmul.f32.gmra.mxu0 %v6370
        %v6628 = vpop.f32.mrf.mxu0
        %v6629 = vadd.f32 %v6458, %v6628
        %6630 = vmatmul.f32.gmra.mxu0 %v6371
        %v6631 = vpop.f32.mrf.mxu0
        %v6632 = vadd.f32 %v6458, %v6631
        %6633 = vmatmul.f32.gmra.mxu0 %v6372
        %v6634 = vpop.f32.mrf.mxu0
        %v6635 = vadd.f32 %v6458, %v6634
        %6636 = vmatmul.f32.gmra.mxu0 %v6373
        %v6637 = vpop.f32.mrf.mxu0
        %v6638 = vadd.f32 %v6458, %v6637
        %6639 = vmatmul.f32.gmra.mxu0 %v6374
        %v6640 = vpop.f32.mrf.mxu0
        %v6641 = vadd.f32 %v6458, %v6640
        %6642 = vmatmul.f32.gmra.mxu0 %v6375
        %v6643 = vpop.f32.mrf.mxu0
        %v6644 = vadd.f32 %v6458, %v6643
        %6645 = vmatmul.f32.gmra.mxu0 %v6376
        %v6646 = vpop.f32.mrf.mxu0
        %v6647 = vadd.f32 %v6458, %v6646
        %6648 = vmatmul.f32.gmra.mxu0 %v6377
        %v6649 = vpop.f32.mrf.mxu0
        %v6650 = vadd.f32 %v6458, %v6649
        %6651 = vmatmul.f32.gmra.mxu0 %v6378
        %v6652 = vpop.f32.mrf.mxu0
        %v6653 = vadd.f32 %v6458, %v6652
        %6654 = vmatmul.f32.gmra.mxu0 %v6379
        %v6655 = vpop.f32.mrf.mxu0
        %v6656 = vadd.f32 %v6458, %v6655
        %6657 = vmatmul.f32.gmra.mxu0 %v6380
        %v6658 = vpop.f32.mrf.mxu0
        %v6659 = vadd.f32 %v6458, %v6658
        %6660 = vmatmul.f32.gmra.mxu0 %v6381
        %v6661 = vpop.f32.mrf.mxu0
        %v6662 = vadd.f32 %v6458, %v6661
        %6663 = vmatmul.f32.gmra.mxu0 %v6382
        %v6664 = vpop.f32.mrf.mxu0
        %v6665 = vadd.f32 %v6458, %v6664
        %6666 = vmatmul.f32.gmra.mxu0 %v6383
        %v6667 = vpop.f32.mrf.mxu0
        %v6668 = vadd.f32 %v6458, %v6667
        %6669 = vmatmul.f32.gmra.mxu0 %v6384
        %v6670 = vpop.f32.mrf.mxu0
        %v6671 = vadd.f32 %v6458, %v6670
        %6672 = vmatmul.f32.gmra.mxu0 %v6385
        %v6673 = vpop.f32.mrf.mxu0
        %v6674 = vadd.f32 %v6458, %v6673
        %6675 = vmatmul.f32.gmra.mxu0 %v6386
        %v6676 = vpop.f32.mrf.mxu0
        %v6677 = vadd.f32 %v6458, %v6676
        %6678 = vmatmul.f32.gmra.mxu0 %v6387
        %v6679 = vpop.f32.mrf.mxu0
        %v6680 = vadd.f32 %v6458, %v6679
        %6681 = vmatmul.f32.gmra.mxu0 %v6388
        %v6682 = vpop.f32.mrf.mxu0
        %v6683 = vadd.f32 %v6458, %v6682
        %6684 = vmatmul.f32.gmra.mxu0 %v6389
        %v6685 = vpop.f32.mrf.mxu0
        %v6686 = vadd.f32 %v6458, %v6685
        %6687 = vmatmul.f32.gmra.mxu0 %v6390
        %v6688 = vpop.f32.mrf.mxu0
        %v6689 = vadd.f32 %v6458, %v6688
        %6690 = vdwg.mxu0
        %6691 = vmatpush.msra.mxu0 %v6453
        %6692 = vmatpush.msra.mxu0 %v6449
        %6693 = vmatpush.msra.mxu0 %v6445
        %6694 = vmatpush.msra.mxu0 %v6441
        %6695 = vmatpush.msra.mxu0 %v6437
        %6696 = vmatpush.msra.mxu0 %v6433
        %6697 = vmatpush.msra.mxu0 %v6429
        %6698 = vmatpush.msra.mxu0 %v6425
        %6699 = vmatpush.msra.mxu0 %v6421
        %6700 = vmatpush.msra.mxu0 %v6417
        %6701 = vmatpush.msra.mxu0 %v6413
        %6702 = vmatpush.msra.mxu0 %v6409
        %6703 = vmatpush.msra.mxu0 %v6405
        %6704 = vmatpush.msra.mxu0 %v6401
        %6705 = vmatpush.msra.mxu0 %v6397
        %6706 = vmatpush.msra.mxu0 %v6393
        %6707 = vmatmul.f32.gmra.mxu0 %v6359
        %v6708 = vpop.f32.mrf.mxu0
        %v6709 = vadd.f32 %v6459, %v6708
        %6710 = vmatmul.f32.gmra.mxu0 %v6360
        %v6711 = vpop.f32.mrf.mxu0
        %v6712 = vadd.f32 %v6459, %v6711
        %6713 = vmatmul.f32.gmra.mxu0 %v6361
        %v6714 = vpop.f32.mrf.mxu0
        %v6715 = vadd.f32 %v6459, %v6714
        %6716 = vmatmul.f32.gmra.mxu0 %v6362
        %v6717 = vpop.f32.mrf.mxu0
        %v6718 = vadd.f32 %v6459, %v6717
        %6719 = vmatmul.f32.gmra.mxu0 %v6363
        %v6720 = vpop.f32.mrf.mxu0
        %v6721 = vadd.f32 %v6459, %v6720
        %6722 = vmatmul.f32.gmra.mxu0 %v6364
        %v6723 = vpop.f32.mrf.mxu0
        %v6724 = vadd.f32 %v6459, %v6723
        %6725 = vmatmul.f32.gmra.mxu0 %v6365
        %v6726 = vpop.f32.mrf.mxu0
        %v6727 = vadd.f32 %v6459, %v6726
        %6728 = vmatmul.f32.gmra.mxu0 %v6366
        %v6729 = vpop.f32.mrf.mxu0
        %v6730 = vadd.f32 %v6459, %v6729
        %6731 = vmatmul.f32.gmra.mxu0 %v6367
        %v6732 = vpop.f32.mrf.mxu0
        %v6733 = vadd.f32 %v6459, %v6732
        %6734 = vmatmul.f32.gmra.mxu0 %v6368
        %v6735 = vpop.f32.mrf.mxu0
        %v6736 = vadd.f32 %v6459, %v6735
        %6737 = vmatmul.f32.gmra.mxu0 %v6369
        %v6738 = vpop.f32.mrf.mxu0
        %v6739 = vadd.f32 %v6459, %v6738
        %6740 = vmatmul.f32.gmra.mxu0 %v6370
        %v6741 = vpop.f32.mrf.mxu0
        %v6742 = vadd.f32 %v6459, %v6741
        %6743 = vmatmul.f32.gmra.mxu0 %v6371
        %v6744 = vpop.f32.mrf.mxu0
        %v6745 = vadd.f32 %v6459, %v6744
        %6746 = vmatmul.f32.gmra.mxu0 %v6372
        %v6747 = vpop.f32.mrf.mxu0
        %v6748 = vadd.f32 %v6459, %v6747
        %6749 = vmatmul.f32.gmra.mxu0 %v6373
        %v6750 = vpop.f32.mrf.mxu0
        %v6751 = vadd.f32 %v6459, %v6750
        %6752 = vmatmul.f32.gmra.mxu0 %v6374
        %v6753 = vpop.f32.mrf.mxu0
        %v6754 = vadd.f32 %v6459, %v6753
        %6755 = vmatmul.f32.gmra.mxu0 %v6375
        %v6756 = vpop.f32.mrf.mxu0
        %v6757 = vadd.f32 %v6459, %v6756
        %6758 = vmatmul.f32.gmra.mxu0 %v6376
        %v6759 = vpop.f32.mrf.mxu0
        %v6760 = vadd.f32 %v6459, %v6759
        %6761 = vmatmul.f32.gmra.mxu0 %v6377
        %v6762 = vpop.f32.mrf.mxu0
        %v6763 = vadd.f32 %v6459, %v6762
        %6764 = vmatmul.f32.gmra.mxu0 %v6378
        %v6765 = vpop.f32.mrf.mxu0
        %v6766 = vadd.f32 %v6459, %v6765
        %6767 = vmatmul.f32.gmra.mxu0 %v6379
        %v6768 = vpop.f32.mrf.mxu0
        %v6769 = vadd.f32 %v6459, %v6768
        %6770 = vmatmul.f32.gmra.mxu0 %v6380
        %v6771 = vpop.f32.mrf.mxu0
        %v6772 = vadd.f32 %v6459, %v6771
        %6773 = vmatmul.f32.gmra.mxu0 %v6381
        %v6774 = vpop.f32.mrf.mxu0
        %v6775 = vadd.f32 %v6459, %v6774
        %6776 = vmatmul.f32.gmra.mxu0 %v6382
        %v6777 = vpop.f32.mrf.mxu0
        %v6778 = vadd.f32 %v6459, %v6777
        %6779 = vmatmul.f32.gmra.mxu0 %v6383
        %v6780 = vpop.f32.mrf.mxu0
        %v6781 = vadd.f32 %v6459, %v6780
        %6782 = vmatmul.f32.gmra.mxu0 %v6384
        %v6783 = vpop.f32.mrf.mxu0
        %v6784 = vadd.f32 %v6459, %v6783
        %6785 = vmatmul.f32.gmra.mxu0 %v6385
        %v6786 = vpop.f32.mrf.mxu0
        %v6787 = vadd.f32 %v6459, %v6786
        %6788 = vmatmul.f32.gmra.mxu0 %v6386
        %v6789 = vpop.f32.mrf.mxu0
        %v6790 = vadd.f32 %v6459, %v6789
        %6791 = vmatmul.f32.gmra.mxu0 %v6387
        %v6792 = vpop.f32.mrf.mxu0
        %v6793 = vadd.f32 %v6459, %v6792
        %6794 = vmatmul.f32.gmra.mxu0 %v6388
        %v6795 = vpop.f32.mrf.mxu0
        %v6796 = vadd.f32 %v6459, %v6795
        %6797 = vmatmul.f32.gmra.mxu0 %v6389
        %v6798 = vpop.f32.mrf.mxu0
        %v6799 = vadd.f32 %v6459, %v6798
        %6800 = vmatmul.f32.gmra.mxu0 %v6390
        %v6801 = vpop.f32.mrf.mxu0
        %v6802 = vadd.f32 %v6459, %v6801
        %6803 = vdwg.mxu0
        %6804 = vmatpush.msra.mxu0 %v6454
        %6805 = vmatpush.msra.mxu0 %v6450
        %6806 = vmatpush.msra.mxu0 %v6446
        %6807 = vmatpush.msra.mxu0 %v6442
        %6808 = vmatpush.msra.mxu0 %v6438
        %6809 = vmatpush.msra.mxu0 %v6434
        %6810 = vmatpush.msra.mxu0 %v6430
        %6811 = vmatpush.msra.mxu0 %v6426
        %6812 = vmatpush.msra.mxu0 %v6422
        %6813 = vmatpush.msra.mxu0 %v6418
        %6814 = vmatpush.msra.mxu0 %v6414
        %6815 = vmatpush.msra.mxu0 %v6410
        %6816 = vmatpush.msra.mxu0 %v6406
        %6817 = vmatpush.msra.mxu0 %v6402
        %6818 = vmatpush.msra.mxu0 %v6398
        %6819 = vmatpush.msra.mxu0 %v6394
        %6820 = vmatmul.f32.gmra.mxu0 %v6359
        %v6821 = vpop.f32.mrf.mxu0
        %v6822 = vadd.f32 %v6460, %v6821
        %6823 = vmatmul.f32.gmra.mxu0 %v6360
        %v6824 = vpop.f32.mrf.mxu0
        %v6825 = vadd.f32 %v6460, %v6824
        %6826 = vmatmul.f32.gmra.mxu0 %v6361
        %v6827 = vpop.f32.mrf.mxu0
        %v6828 = vadd.f32 %v6460, %v6827
        %6829 = vmatmul.f32.gmra.mxu0 %v6362
        %v6830 = vpop.f32.mrf.mxu0
        %v6831 = vadd.f32 %v6460, %v6830
        %6832 = vmatmul.f32.gmra.mxu0 %v6363
        %v6833 = vpop.f32.mrf.mxu0
        %v6834 = vadd.f32 %v6460, %v6833
        %6835 = vmatmul.f32.gmra.mxu0 %v6364
        %v6836 = vpop.f32.mrf.mxu0
        %v6837 = vadd.f32 %v6460, %v6836
        %6838 = vmatmul.f32.gmra.mxu0 %v6365
        %v6839 = vpop.f32.mrf.mxu0
        %v6840 = vadd.f32 %v6460, %v6839
        %6841 = vmatmul.f32.gmra.mxu0 %v6366
        %v6842 = vpop.f32.mrf.mxu0
        %v6843 = vadd.f32 %v6460, %v6842
        %6844 = vmatmul.f32.gmra.mxu0 %v6367
        %v6845 = vpop.f32.mrf.mxu0
        %v6846 = vadd.f32 %v6460, %v6845
        %6847 = vmatmul.f32.gmra.mxu0 %v6368
        %v6848 = vpop.f32.mrf.mxu0
        %v6849 = vadd.f32 %v6460, %v6848
        %6850 = vmatmul.f32.gmra.mxu0 %v6369
        %v6851 = vpop.f32.mrf.mxu0
        %v6852 = vadd.f32 %v6460, %v6851
        %6853 = vmatmul.f32.gmra.mxu0 %v6370
        %v6854 = vpop.f32.mrf.mxu0
        %v6855 = vadd.f32 %v6460, %v6854
        %6856 = vmatmul.f32.gmra.mxu0 %v6371
        %v6857 = vpop.f32.mrf.mxu0
        %v6858 = vadd.f32 %v6460, %v6857
        %6859 = vmatmul.f32.gmra.mxu0 %v6372
        %v6860 = vpop.f32.mrf.mxu0
        %v6861 = vadd.f32 %v6460, %v6860
        %6862 = vmatmul.f32.gmra.mxu0 %v6373
        %v6863 = vpop.f32.mrf.mxu0
        %v6864 = vadd.f32 %v6460, %v6863
        %6865 = vmatmul.f32.gmra.mxu0 %v6374
        %v6866 = vpop.f32.mrf.mxu0
        %v6867 = vadd.f32 %v6460, %v6866
        %6868 = vmatmul.f32.gmra.mxu0 %v6375
        %v6869 = vpop.f32.mrf.mxu0
        %v6870 = vadd.f32 %v6460, %v6869
        %6871 = vmatmul.f32.gmra.mxu0 %v6376
        %v6872 = vpop.f32.mrf.mxu0
        %v6873 = vadd.f32 %v6460, %v6872
        %6874 = vmatmul.f32.gmra.mxu0 %v6377
        %v6875 = vpop.f32.mrf.mxu0
        %v6876 = vadd.f32 %v6460, %v6875
        %6877 = vmatmul.f32.gmra.mxu0 %v6378
        %v6878 = vpop.f32.mrf.mxu0
        %v6879 = vadd.f32 %v6460, %v6878
        %6880 = vmatmul.f32.gmra.mxu0 %v6379
        %v6881 = vpop.f32.mrf.mxu0
        %v6882 = vadd.f32 %v6460, %v6881
        %6883 = vmatmul.f32.gmra.mxu0 %v6380
        %v6884 = vpop.f32.mrf.mxu0
        %v6885 = vadd.f32 %v6460, %v6884
        %6886 = vmatmul.f32.gmra.mxu0 %v6381
        %v6887 = vpop.f32.mrf.mxu0
        %v6888 = vadd.f32 %v6460, %v6887
        %6889 = vmatmul.f32.gmra.mxu0 %v6382
        %v6890 = vpop.f32.mrf.mxu0
        %v6891 = vadd.f32 %v6460, %v6890
        %6892 = vmatmul.f32.gmra.mxu0 %v6383
        %v6893 = vpop.f32.mrf.mxu0
        %v6894 = vadd.f32 %v6460, %v6893
        %6895 = vmatmul.f32.gmra.mxu0 %v6384
        %v6896 = vpop.f32.mrf.mxu0
        %v6897 = vadd.f32 %v6460, %v6896
        %6898 = vmatmul.f32.gmra.mxu0 %v6385
        %v6899 = vpop.f32.mrf.mxu0
        %v6900 = vadd.f32 %v6460, %v6899
        %6901 = vmatmul.f32.gmra.mxu0 %v6386
        %v6902 = vpop.f32.mrf.mxu0
        %v6903 = vadd.f32 %v6460, %v6902
        %6904 = vmatmul.f32.gmra.mxu0 %v6387
        %v6905 = vpop.f32.mrf.mxu0
        %v6906 = vadd.f32 %v6460, %v6905
        %6907 = vmatmul.f32.gmra.mxu0 %v6388
        %v6908 = vpop.f32.mrf.mxu0
        %v6909 = vadd.f32 %v6460, %v6908
        %6910 = vmatmul.f32.gmra.mxu0 %v6389
        %v6911 = vpop.f32.mrf.mxu0
        %v6912 = vadd.f32 %v6460, %v6911
        %6913 = vmatmul.f32.gmra.mxu0 %v6390
        %v6914 = vpop.f32.mrf.mxu0
        %v6915 = vadd.f32 %v6460, %v6914
        %6916 = vdwg.mxu0
        %v6917 = vmul.f32 %v6483, %v6483
        %v6918 = vmul.f32 %v6596, %v6596
        %v6919 = vmul.f32 %v6709, %v6709
        %v6920 = vmul.f32 %v6822, %v6822
        %v6921 = vmul.f32 %v6486, %v6486
        %v6922 = vmul.f32 %v6599, %v6599
        %v6923 = vmul.f32 %v6712, %v6712
        %v6924 = vmul.f32 %v6825, %v6825
        %v6925 = vmul.f32 %v6489, %v6489
        %v6926 = vmul.f32 %v6602, %v6602
        %v6927 = vmul.f32 %v6715, %v6715
        %v6928 = vmul.f32 %v6828, %v6828
        %v6929 = vmul.f32 %v6492, %v6492
        %v6930 = vmul.f32 %v6605, %v6605
        %v6931 = vmul.f32 %v6718, %v6718
        %v6932 = vmul.f32 %v6831, %v6831
        %v6933 = vmul.f32 %v6495, %v6495
        %v6934 = vmul.f32 %v6608, %v6608
        %v6935 = vmul.f32 %v6721, %v6721
        %v6936 = vmul.f32 %v6834, %v6834
        %v6937 = vmul.f32 %v6498, %v6498
        %v6938 = vmul.f32 %v6611, %v6611
        %v6939 = vmul.f32 %v6724, %v6724
        %v6940 = vmul.f32 %v6837, %v6837
        %v6941 = vmul.f32 %v6501, %v6501
        %v6942 = vmul.f32 %v6614, %v6614
        %v6943 = vmul.f32 %v6727, %v6727
        %v6944 = vmul.f32 %v6840, %v6840
        %v6945 = vmul.f32 %v6504, %v6504
        %v6946 = vmul.f32 %v6617, %v6617
        %v6947 = vmul.f32 %v6730, %v6730
        %v6948 = vmul.f32 %v6843, %v6843
        %v6949 = vmul.f32 %v6507, %v6507
        %v6950 = vmul.f32 %v6620, %v6620
        %v6951 = vmul.f32 %v6733, %v6733
        %v6952 = vmul.f32 %v6846, %v6846
        %v6953 = vmul.f32 %v6510, %v6510
        %v6954 = vmul.f32 %v6623, %v6623
        %v6955 = vmul.f32 %v6736, %v6736
        %v6956 = vmul.f32 %v6849, %v6849
        %v6957 = vmul.f32 %v6513, %v6513
        %v6958 = vmul.f32 %v6626, %v6626
        %v6959 = vmul.f32 %v6739, %v6739
        %v6960 = vmul.f32 %v6852, %v6852
        %v6961 = vmul.f32 %v6516, %v6516
        %v6962 = vmul.f32 %v6629, %v6629
        %v6963 = vmul.f32 %v6742, %v6742
        %v6964 = vmul.f32 %v6855, %v6855
        %v6965 = vmul.f32 %v6519, %v6519
        %v6966 = vmul.f32 %v6632, %v6632
        %v6967 = vmul.f32 %v6745, %v6745
        %v6968 = vmul.f32 %v6858, %v6858
        %v6969 = vmul.f32 %v6522, %v6522
        %v6970 = vmul.f32 %v6635, %v6635
        %v6971 = vmul.f32 %v6748, %v6748
        %v6972 = vmul.f32 %v6861, %v6861
        %v6973 = vmul.f32 %v6525, %v6525
        %v6974 = vmul.f32 %v6638, %v6638
        %v6975 = vmul.f32 %v6751, %v6751
        %v6976 = vmul.f32 %v6864, %v6864
        %v6977 = vmul.f32 %v6528, %v6528
        %v6978 = vmul.f32 %v6641, %v6641
        %v6979 = vmul.f32 %v6754, %v6754
        %v6980 = vmul.f32 %v6867, %v6867
        %v6981 = vmul.f32 %v6531, %v6531
        %v6982 = vmul.f32 %v6644, %v6644
        %v6983 = vmul.f32 %v6757, %v6757
        %v6984 = vmul.f32 %v6870, %v6870
        %v6985 = vmul.f32 %v6534, %v6534
        %v6986 = vmul.f32 %v6647, %v6647
        %v6987 = vmul.f32 %v6760, %v6760
        %v6988 = vmul.f32 %v6873, %v6873
        %v6989 = vmul.f32 %v6537, %v6537
        %v6990 = vmul.f32 %v6650, %v6650
        %v6991 = vmul.f32 %v6763, %v6763
        %v6992 = vmul.f32 %v6876, %v6876
        %v6993 = vmul.f32 %v6540, %v6540
        %v6994 = vmul.f32 %v6653, %v6653
        %v6995 = vmul.f32 %v6766, %v6766
        %v6996 = vmul.f32 %v6879, %v6879
        %v6997 = vmul.f32 %v6543, %v6543
        %v6998 = vmul.f32 %v6656, %v6656
        %v6999 = vmul.f32 %v6769, %v6769
        %v7000 = vmul.f32 %v6882, %v6882
        %v7001 = vmul.f32 %v6546, %v6546
        %v7002 = vmul.f32 %v6659, %v6659
        %v7003 = vmul.f32 %v6772, %v6772
        %v7004 = vmul.f32 %v6885, %v6885
        %v7005 = vmul.f32 %v6549, %v6549
        %v7006 = vmul.f32 %v6662, %v6662
        %v7007 = vmul.f32 %v6775, %v6775
        %v7008 = vmul.f32 %v6888, %v6888
        %v7009 = vmul.f32 %v6552, %v6552
        %v7010 = vmul.f32 %v6665, %v6665
        %v7011 = vmul.f32 %v6778, %v6778
        %v7012 = vmul.f32 %v6891, %v6891
        %v7013 = vmul.f32 %v6555, %v6555
        %v7014 = vmul.f32 %v6668, %v6668
        %v7015 = vmul.f32 %v6781, %v6781
        %v7016 = vmul.f32 %v6894, %v6894
        %v7017 = vmul.f32 %v6558, %v6558
        %v7018 = vmul.f32 %v6671, %v6671
        %v7019 = vmul.f32 %v6784, %v6784
        %v7020 = vmul.f32 %v6897, %v6897
        %v7021 = vmul.f32 %v6561, %v6561
        %v7022 = vmul.f32 %v6674, %v6674
        %v7023 = vmul.f32 %v6787, %v6787
        %v7024 = vmul.f32 %v6900, %v6900
        %v7025 = vmul.f32 %v6564, %v6564
        %v7026 = vmul.f32 %v6677, %v6677
        %v7027 = vmul.f32 %v6790, %v6790
        %v7028 = vmul.f32 %v6903, %v6903
        %v7029 = vmul.f32 %v6567, %v6567
        %v7030 = vmul.f32 %v6680, %v6680
        %v7031 = vmul.f32 %v6793, %v6793
        %v7032 = vmul.f32 %v6906, %v6906
        %v7033 = vmul.f32 %v6570, %v6570
        %v7034 = vmul.f32 %v6683, %v6683
        %v7035 = vmul.f32 %v6796, %v6796
        %v7036 = vmul.f32 %v6909, %v6909
        %v7037 = vmul.f32 %v6573, %v6573
        %v7038 = vmul.f32 %v6686, %v6686
        %v7039 = vmul.f32 %v6799, %v6799
        %v7040 = vmul.f32 %v6912, %v6912
        %v7041 = vmul.f32 %v6576, %v6576
        %v7042 = vmul.f32 %v6689, %v6689
        %v7043 = vmul.f32 %v6802, %v6802
        %v7044 = vmul.f32 %v6915, %v6915
        %v7045 = vmul.f32 %v6483, %v6917
        %v7046 = vmul.f32 %v6596, %v6918
        %v7047 = vmul.f32 %v6709, %v6919
        %v7048 = vmul.f32 %v6822, %v6920
        %v7049 = vmul.f32 %v6486, %v6921
        %v7050 = vmul.f32 %v6599, %v6922
        %v7051 = vmul.f32 %v6712, %v6923
        %v7052 = vmul.f32 %v6825, %v6924
        %v7053 = vmul.f32 %v6489, %v6925
        %v7054 = vmul.f32 %v6602, %v6926
        %v7055 = vmul.f32 %v6715, %v6927
        %v7056 = vmul.f32 %v6828, %v6928
        %v7057 = vmul.f32 %v6492, %v6929
        %v7058 = vmul.f32 %v6605, %v6930
        %v7059 = vmul.f32 %v6718, %v6931
        %v7060 = vmul.f32 %v6831, %v6932
        %v7061 = vmul.f32 %v6495, %v6933
        %v7062 = vmul.f32 %v6608, %v6934
        %v7063 = vmul.f32 %v6721, %v6935
        %v7064 = vmul.f32 %v6834, %v6936
        %v7065 = vmul.f32 %v6498, %v6937
        %v7066 = vmul.f32 %v6611, %v6938
        %v7067 = vmul.f32 %v6724, %v6939
        %v7068 = vmul.f32 %v6837, %v6940
        %v7069 = vmul.f32 %v6501, %v6941
        %v7070 = vmul.f32 %v6614, %v6942
        %v7071 = vmul.f32 %v6727, %v6943
        %v7072 = vmul.f32 %v6840, %v6944
        %v7073 = vmul.f32 %v6504, %v6945
        %v7074 = vmul.f32 %v6617, %v6946
        %v7075 = vmul.f32 %v6730, %v6947
        %v7076 = vmul.f32 %v6843, %v6948
        %v7077 = vmul.f32 %v6507, %v6949
        %v7078 = vmul.f32 %v6620, %v6950
        %v7079 = vmul.f32 %v6733, %v6951
        %v7080 = vmul.f32 %v6846, %v6952
        %v7081 = vmul.f32 %v6510, %v6953
        %v7082 = vmul.f32 %v6623, %v6954
        %v7083 = vmul.f32 %v6736, %v6955
        %v7084 = vmul.f32 %v6849, %v6956
        %v7085 = vmul.f32 %v6513, %v6957
        %v7086 = vmul.f32 %v6626, %v6958
        %v7087 = vmul.f32 %v6739, %v6959
        %v7088 = vmul.f32 %v6852, %v6960
        %v7089 = vmul.f32 %v6516, %v6961
        %v7090 = vmul.f32 %v6629, %v6962
        %v7091 = vmul.f32 %v6742, %v6963
        %v7092 = vmul.f32 %v6855, %v6964
        %v7093 = vmul.f32 %v6519, %v6965
        %v7094 = vmul.f32 %v6632, %v6966
        %v7095 = vmul.f32 %v6745, %v6967
        %v7096 = vmul.f32 %v6858, %v6968
        %v7097 = vmul.f32 %v6522, %v6969
        %v7098 = vmul.f32 %v6635, %v6970
        %v7099 = vmul.f32 %v6748, %v6971
        %v7100 = vmul.f32 %v6861, %v6972
        %v7101 = vmul.f32 %v6525, %v6973
        %v7102 = vmul.f32 %v6638, %v6974
        %v7103 = vmul.f32 %v6751, %v6975
        %v7104 = vmul.f32 %v6864, %v6976
        %v7105 = vmul.f32 %v6528, %v6977
        %v7106 = vmul.f32 %v6641, %v6978
        %v7107 = vmul.f32 %v6754, %v6979
        %v7108 = vmul.f32 %v6867, %v6980
        %v7109 = vmul.f32 %v6531, %v6981
        %v7110 = vmul.f32 %v6644, %v6982
        %v7111 = vmul.f32 %v6757, %v6983
        %v7112 = vmul.f32 %v6870, %v6984
        %v7113 = vmul.f32 %v6534, %v6985
        %v7114 = vmul.f32 %v6647, %v6986
        %v7115 = vmul.f32 %v6760, %v6987
        %v7116 = vmul.f32 %v6873, %v6988
        %v7117 = vmul.f32 %v6537, %v6989
        %v7118 = vmul.f32 %v6650, %v6990
        %v7119 = vmul.f32 %v6763, %v6991
        %v7120 = vmul.f32 %v6876, %v6992
        %v7121 = vmul.f32 %v6540, %v6993
        %v7122 = vmul.f32 %v6653, %v6994
        %v7123 = vmul.f32 %v6766, %v6995
        %v7124 = vmul.f32 %v6879, %v6996
        %v7125 = vmul.f32 %v6543, %v6997
        %v7126 = vmul.f32 %v6656, %v6998
        %v7127 = vmul.f32 %v6769, %v6999
        %v7128 = vmul.f32 %v6882, %v7000
        %v7129 = vmul.f32 %v6546, %v7001
        %v7130 = vmul.f32 %v6659, %v7002
        %v7131 = vmul.f32 %v6772, %v7003
        %v7132 = vmul.f32 %v6885, %v7004
        %v7133 = vmul.f32 %v6549, %v7005
        %v7134 = vmul.f32 %v6662, %v7006
        %v7135 = vmul.f32 %v6775, %v7007
        %v7136 = vmul.f32 %v6888, %v7008
        %v7137 = vmul.f32 %v6552, %v7009
        %v7138 = vmul.f32 %v6665, %v7010
        %v7139 = vmul.f32 %v6778, %v7011
        %v7140 = vmul.f32 %v6891, %v7012
        %v7141 = vmul.f32 %v6555, %v7013
        %v7142 = vmul.f32 %v6668, %v7014
        %v7143 = vmul.f32 %v6781, %v7015
        %v7144 = vmul.f32 %v6894, %v7016
        %v7145 = vmul.f32 %v6558, %v7017
        %v7146 = vmul.f32 %v6671, %v7018
        %v7147 = vmul.f32 %v6784, %v7019
        %v7148 = vmul.f32 %v6897, %v7020
        %v7149 = vmul.f32 %v6561, %v7021
        %v7150 = vmul.f32 %v6674, %v7022
        %v7151 = vmul.f32 %v6787, %v7023
        %v7152 = vmul.f32 %v6900, %v7024
        %v7153 = vmul.f32 %v6564, %v7025
        %v7154 = vmul.f32 %v6677, %v7026
        %v7155 = vmul.f32 %v6790, %v7027
        %v7156 = vmul.f32 %v6903, %v7028
        %v7157 = vmul.f32 %v6567, %v7029
        %v7158 = vmul.f32 %v6680, %v7030
        %v7159 = vmul.f32 %v6793, %v7031
        %v7160 = vmul.f32 %v6906, %v7032
        %v7161 = vmul.f32 %v6570, %v7033
        %v7162 = vmul.f32 %v6683, %v7034
        %v7163 = vmul.f32 %v6796, %v7035
        %v7164 = vmul.f32 %v6909, %v7036
        %v7165 = vmul.f32 %v6573, %v7037
        %v7166 = vmul.f32 %v6686, %v7038
        %v7167 = vmul.f32 %v6799, %v7039
        %v7168 = vmul.f32 %v6912, %v7040
        %v7169 = vmul.f32 %v6576, %v7041
        %v7170 = vmul.f32 %v6689, %v7042
        %v7171 = vmul.f32 %v6802, %v7043
        %v7172 = vmul.f32 %v6915, %v7044
        %v7173 = vmul.f32 %v7045, 0.044715
        %v7174 = vmul.f32 %v7046, 0.044715
        %v7175 = vmul.f32 %v7047, 0.044715
        %v7176 = vmul.f32 %v7048, 0.044715
        %v7177 = vmul.f32 %v7049, 0.044715
        %v7178 = vmul.f32 %v7050, 0.044715
        %v7179 = vmul.f32 %v7051, 0.044715
        %v7180 = vmul.f32 %v7052, 0.044715
        %v7181 = vmul.f32 %v7053, 0.044715
        %v7182 = vmul.f32 %v7054, 0.044715
        %v7183 = vmul.f32 %v7055, 0.044715
        %v7184 = vmul.f32 %v7056, 0.044715
        %v7185 = vmul.f32 %v7057, 0.044715
        %v7186 = vmul.f32 %v7058, 0.044715
        %v7187 = vmul.f32 %v7059, 0.044715
        %v7188 = vmul.f32 %v7060, 0.044715
        %v7189 = vmul.f32 %v7061, 0.044715
        %v7190 = vmul.f32 %v7062, 0.044715
        %v7191 = vmul.f32 %v7063, 0.044715
        %v7192 = vmul.f32 %v7064, 0.044715
        %v7193 = vmul.f32 %v7065, 0.044715
        %v7194 = vmul.f32 %v7066, 0.044715
        %v7195 = vmul.f32 %v7067, 0.044715
        %v7196 = vmul.f32 %v7068, 0.044715
        %v7197 = vmul.f32 %v7069, 0.044715
        %v7198 = vmul.f32 %v7070, 0.044715
        %v7199 = vmul.f32 %v7071, 0.044715
        %v7200 = vmul.f32 %v7072, 0.044715
        %v7201 = vmul.f32 %v7073, 0.044715
        %v7202 = vmul.f32 %v7074, 0.044715
        %v7203 = vmul.f32 %v7075, 0.044715
        %v7204 = vmul.f32 %v7076, 0.044715
        %v7205 = vmul.f32 %v7077, 0.044715
        %v7206 = vmul.f32 %v7078, 0.044715
        %v7207 = vmul.f32 %v7079, 0.044715
        %v7208 = vmul.f32 %v7080, 0.044715
        %v7209 = vmul.f32 %v7081, 0.044715
        %v7210 = vmul.f32 %v7082, 0.044715
        %v7211 = vmul.f32 %v7083, 0.044715
        %v7212 = vmul.f32 %v7084, 0.044715
        %v7213 = vmul.f32 %v7085, 0.044715
        %v7214 = vmul.f32 %v7086, 0.044715
        %v7215 = vmul.f32 %v7087, 0.044715
        %v7216 = vmul.f32 %v7088, 0.044715
        %v7217 = vmul.f32 %v7089, 0.044715
        %v7218 = vmul.f32 %v7090, 0.044715
        %v7219 = vmul.f32 %v7091, 0.044715
        %v7220 = vmul.f32 %v7092, 0.044715
        %v7221 = vmul.f32 %v7093, 0.044715
        %v7222 = vmul.f32 %v7094, 0.044715
        %v7223 = vmul.f32 %v7095, 0.044715
        %v7224 = vmul.f32 %v7096, 0.044715
        %v7225 = vmul.f32 %v7097, 0.044715
        %v7226 = vmul.f32 %v7098, 0.044715
        %v7227 = vmul.f32 %v7099, 0.044715
        %v7228 = vmul.f32 %v7100, 0.044715
        %v7229 = vmul.f32 %v7101, 0.044715
        %v7230 = vmul.f32 %v7102, 0.044715
        %v7231 = vmul.f32 %v7103, 0.044715
        %v7232 = vmul.f32 %v7104, 0.044715
        %v7233 = vmul.f32 %v7105, 0.044715
        %v7234 = vmul.f32 %v7106, 0.044715
        %v7235 = vmul.f32 %v7107, 0.044715
        %v7236 = vmul.f32 %v7108, 0.044715
        %v7237 = vmul.f32 %v7109, 0.044715
        %v7238 = vmul.f32 %v7110, 0.044715
        %v7239 = vmul.f32 %v7111, 0.044715
        %v7240 = vmul.f32 %v7112, 0.044715
        %v7241 = vmul.f32 %v7113, 0.044715
        %v7242 = vmul.f32 %v7114, 0.044715
        %v7243 = vmul.f32 %v7115, 0.044715
        %v7244 = vmul.f32 %v7116, 0.044715
        %v7245 = vmul.f32 %v7117, 0.044715
        %v7246 = vmul.f32 %v7118, 0.044715
        %v7247 = vmul.f32 %v7119, 0.044715
        %v7248 = vmul.f32 %v7120, 0.044715
        %v7249 = vmul.f32 %v7121, 0.044715
        %v7250 = vmul.f32 %v7122, 0.044715
        %v7251 = vmul.f32 %v7123, 0.044715
        %v7252 = vmul.f32 %v7124, 0.044715
        %v7253 = vmul.f32 %v7125, 0.044715
        %v7254 = vmul.f32 %v7126, 0.044715
        %v7255 = vmul.f32 %v7127, 0.044715
        %v7256 = vmul.f32 %v7128, 0.044715
        %v7257 = vmul.f32 %v7129, 0.044715
        %v7258 = vmul.f32 %v7130, 0.044715
        %v7259 = vmul.f32 %v7131, 0.044715
        %v7260 = vmul.f32 %v7132, 0.044715
        %v7261 = vmul.f32 %v7133, 0.044715
        %v7262 = vmul.f32 %v7134, 0.044715
        %v7263 = vmul.f32 %v7135, 0.044715
        %v7264 = vmul.f32 %v7136, 0.044715
        %v7265 = vmul.f32 %v7137, 0.044715
        %v7266 = vmul.f32 %v7138, 0.044715
        %v7267 = vmul.f32 %v7139, 0.044715
        %v7268 = vmul.f32 %v7140, 0.044715
        %v7269 = vmul.f32 %v7141, 0.044715
        %v7270 = vmul.f32 %v7142, 0.044715
        %v7271 = vmul.f32 %v7143, 0.044715
        %v7272 = vmul.f32 %v7144, 0.044715
        %v7273 = vmul.f32 %v7145, 0.044715
        %v7274 = vmul.f32 %v7146, 0.044715
        %v7275 = vmul.f32 %v7147, 0.044715
        %v7276 = vmul.f32 %v7148, 0.044715
        %v7277 = vmul.f32 %v7149, 0.044715
        %v7278 = vmul.f32 %v7150, 0.044715
        %v7279 = vmul.f32 %v7151, 0.044715
        %v7280 = vmul.f32 %v7152, 0.044715
        %v7281 = vmul.f32 %v7153, 0.044715
        %v7282 = vmul.f32 %v7154, 0.044715
        %v7283 = vmul.f32 %v7155, 0.044715
        %v7284 = vmul.f32 %v7156, 0.044715
        %v7285 = vmul.f32 %v7157, 0.044715
        %v7286 = vmul.f32 %v7158, 0.044715
        %v7287 = vmul.f32 %v7159, 0.044715
        %v7288 = vmul.f32 %v7160, 0.044715
        %v7289 = vmul.f32 %v7161, 0.044715
        %v7290 = vmul.f32 %v7162, 0.044715
        %v7291 = vmul.f32 %v7163, 0.044715
        %v7292 = vmul.f32 %v7164, 0.044715
        %v7293 = vmul.f32 %v7165, 0.044715
        %v7294 = vmul.f32 %v7166, 0.044715
        %v7295 = vmul.f32 %v7167, 0.044715
        %v7296 = vmul.f32 %v7168, 0.044715
        %v7297 = vmul.f32 %v7169, 0.044715
        %v7298 = vmul.f32 %v7170, 0.044715
        %v7299 = vmul.f32 %v7171, 0.044715
        %v7300 = vmul.f32 %v7172, 0.044715
        %v7301 = vadd.f32 %v6483, %v7173
        %v7302 = vadd.f32 %v6596, %v7174
        %v7303 = vadd.f32 %v6709, %v7175
        %v7304 = vadd.f32 %v6822, %v7176
        %v7305 = vadd.f32 %v6486, %v7177
        %v7306 = vadd.f32 %v6599, %v7178
        %v7307 = vadd.f32 %v6712, %v7179
        %v7308 = vadd.f32 %v6825, %v7180
        %v7309 = vadd.f32 %v6489, %v7181
        %v7310 = vadd.f32 %v6602, %v7182
        %v7311 = vadd.f32 %v6715, %v7183
        %v7312 = vadd.f32 %v6828, %v7184
        %v7313 = vadd.f32 %v6492, %v7185
        %v7314 = vadd.f32 %v6605, %v7186
        %v7315 = vadd.f32 %v6718, %v7187
        %v7316 = vadd.f32 %v6831, %v7188
        %v7317 = vadd.f32 %v6495, %v7189
        %v7318 = vadd.f32 %v6608, %v7190
        %v7319 = vadd.f32 %v6721, %v7191
        %v7320 = vadd.f32 %v6834, %v7192
        %v7321 = vadd.f32 %v6498, %v7193
        %v7322 = vadd.f32 %v6611, %v7194
        %v7323 = vadd.f32 %v6724, %v7195
        %v7324 = vadd.f32 %v6837, %v7196
        %v7325 = vadd.f32 %v6501, %v7197
        %v7326 = vadd.f32 %v6614, %v7198
        %v7327 = vadd.f32 %v6727, %v7199
        %v7328 = vadd.f32 %v6840, %v7200
        %v7329 = vadd.f32 %v6504, %v7201
        %v7330 = vadd.f32 %v6617, %v7202
        %v7331 = vadd.f32 %v6730, %v7203
        %v7332 = vadd.f32 %v6843, %v7204
        %v7333 = vadd.f32 %v6507, %v7205
        %v7334 = vadd.f32 %v6620, %v7206
        %v7335 = vadd.f32 %v6733, %v7207
        %v7336 = vadd.f32 %v6846, %v7208
        %v7337 = vadd.f32 %v6510, %v7209
        %v7338 = vadd.f32 %v6623, %v7210
        %v7339 = vadd.f32 %v6736, %v7211
        %v7340 = vadd.f32 %v6849, %v7212
        %v7341 = vadd.f32 %v6513, %v7213
        %v7342 = vadd.f32 %v6626, %v7214
        %v7343 = vadd.f32 %v6739, %v7215
        %v7344 = vadd.f32 %v6852, %v7216
        %v7345 = vadd.f32 %v6516, %v7217
        %v7346 = vadd.f32 %v6629, %v7218
        %v7347 = vadd.f32 %v6742, %v7219
        %v7348 = vadd.f32 %v6855, %v7220
        %v7349 = vadd.f32 %v6519, %v7221
        %v7350 = vadd.f32 %v6632, %v7222
        %v7351 = vadd.f32 %v6745, %v7223
        %v7352 = vadd.f32 %v6858, %v7224
        %v7353 = vadd.f32 %v6522, %v7225
        %v7354 = vadd.f32 %v6635, %v7226
        %v7355 = vadd.f32 %v6748, %v7227
        %v7356 = vadd.f32 %v6861, %v7228
        %v7357 = vadd.f32 %v6525, %v7229
        %v7358 = vadd.f32 %v6638, %v7230
        %v7359 = vadd.f32 %v6751, %v7231
        %v7360 = vadd.f32 %v6864, %v7232
        %v7361 = vadd.f32 %v6528, %v7233
        %v7362 = vadd.f32 %v6641, %v7234
        %v7363 = vadd.f32 %v6754, %v7235
        %v7364 = vadd.f32 %v6867, %v7236
        %v7365 = vadd.f32 %v6531, %v7237
        %v7366 = vadd.f32 %v6644, %v7238
        %v7367 = vadd.f32 %v6757, %v7239
        %v7368 = vadd.f32 %v6870, %v7240
        %v7369 = vadd.f32 %v6534, %v7241
        %v7370 = vadd.f32 %v6647, %v7242
        %v7371 = vadd.f32 %v6760, %v7243
        %v7372 = vadd.f32 %v6873, %v7244
        %v7373 = vadd.f32 %v6537, %v7245
        %v7374 = vadd.f32 %v6650, %v7246
        %v7375 = vadd.f32 %v6763, %v7247
        %v7376 = vadd.f32 %v6876, %v7248
        %v7377 = vadd.f32 %v6540, %v7249
        %v7378 = vadd.f32 %v6653, %v7250
        %v7379 = vadd.f32 %v6766, %v7251
        %v7380 = vadd.f32 %v6879, %v7252
        %v7381 = vadd.f32 %v6543, %v7253
        %v7382 = vadd.f32 %v6656, %v7254
        %v7383 = vadd.f32 %v6769, %v7255
        %v7384 = vadd.f32 %v6882, %v7256
        %v7385 = vadd.f32 %v6546, %v7257
        %v7386 = vadd.f32 %v6659, %v7258
        %v7387 = vadd.f32 %v6772, %v7259
        %v7388 = vadd.f32 %v6885, %v7260
        %v7389 = vadd.f32 %v6549, %v7261
        %v7390 = vadd.f32 %v6662, %v7262
        %v7391 = vadd.f32 %v6775, %v7263
        %v7392 = vadd.f32 %v6888, %v7264
        %v7393 = vadd.f32 %v6552, %v7265
        %v7394 = vadd.f32 %v6665, %v7266
        %v7395 = vadd.f32 %v6778, %v7267
        %v7396 = vadd.f32 %v6891, %v7268
        %v7397 = vadd.f32 %v6555, %v7269
        %v7398 = vadd.f32 %v6668, %v7270
        %v7399 = vadd.f32 %v6781, %v7271
        %v7400 = vadd.f32 %v6894, %v7272
        %v7401 = vadd.f32 %v6558, %v7273
        %v7402 = vadd.f32 %v6671, %v7274
        %v7403 = vadd.f32 %v6784, %v7275
        %v7404 = vadd.f32 %v6897, %v7276
        %v7405 = vadd.f32 %v6561, %v7277
        %v7406 = vadd.f32 %v6674, %v7278
        %v7407 = vadd.f32 %v6787, %v7279
        %v7408 = vadd.f32 %v6900, %v7280
        %v7409 = vadd.f32 %v6564, %v7281
        %v7410 = vadd.f32 %v6677, %v7282
        %v7411 = vadd.f32 %v6790, %v7283
        %v7412 = vadd.f32 %v6903, %v7284
        %v7413 = vadd.f32 %v6567, %v7285
        %v7414 = vadd.f32 %v6680, %v7286
        %v7415 = vadd.f32 %v6793, %v7287
        %v7416 = vadd.f32 %v6906, %v7288
        %v7417 = vadd.f32 %v6570, %v7289
        %v7418 = vadd.f32 %v6683, %v7290
        %v7419 = vadd.f32 %v6796, %v7291
        %v7420 = vadd.f32 %v6909, %v7292
        %v7421 = vadd.f32 %v6573, %v7293
        %v7422 = vadd.f32 %v6686, %v7294
        %v7423 = vadd.f32 %v6799, %v7295
        %v7424 = vadd.f32 %v6912, %v7296
        %v7425 = vadd.f32 %v6576, %v7297
        %v7426 = vadd.f32 %v6689, %v7298
        %v7427 = vadd.f32 %v6802, %v7299
        %v7428 = vadd.f32 %v6915, %v7300
        %v7429 = vmul.f32 %v7301, 0.7978846
        %v7430 = vmul.f32 %v7302, 0.7978846
        %v7431 = vmul.f32 %v7303, 0.7978846
        %v7432 = vmul.f32 %v7304, 0.7978846
        %v7433 = vmul.f32 %v7305, 0.7978846
        %v7434 = vmul.f32 %v7306, 0.7978846
        %v7435 = vmul.f32 %v7307, 0.7978846
        %v7436 = vmul.f32 %v7308, 0.7978846
        %v7437 = vmul.f32 %v7309, 0.7978846
        %v7438 = vmul.f32 %v7310, 0.7978846
        %v7439 = vmul.f32 %v7311, 0.7978846
        %v7440 = vmul.f32 %v7312, 0.7978846
        %v7441 = vmul.f32 %v7313, 0.7978846
        %v7442 = vmul.f32 %v7314, 0.7978846
        %v7443 = vmul.f32 %v7315, 0.7978846
        %v7444 = vmul.f32 %v7316, 0.7978846
        %v7445 = vmul.f32 %v7317, 0.7978846
        %v7446 = vmul.f32 %v7318, 0.7978846
        %v7447 = vmul.f32 %v7319, 0.7978846
        %v7448 = vmul.f32 %v7320, 0.7978846
        %v7449 = vmul.f32 %v7321, 0.7978846
        %v7450 = vmul.f32 %v7322, 0.7978846
        %v7451 = vmul.f32 %v7323, 0.7978846
        %v7452 = vmul.f32 %v7324, 0.7978846
        %v7453 = vmul.f32 %v7325, 0.7978846
        %v7454 = vmul.f32 %v7326, 0.7978846
        %v7455 = vmul.f32 %v7327, 0.7978846
        %v7456 = vmul.f32 %v7328, 0.7978846
        %v7457 = vmul.f32 %v7329, 0.7978846
        %v7458 = vmul.f32 %v7330, 0.7978846
        %v7459 = vmul.f32 %v7331, 0.7978846
        %v7460 = vmul.f32 %v7332, 0.7978846
        %v7461 = vmul.f32 %v7333, 0.7978846
        %v7462 = vmul.f32 %v7334, 0.7978846
        %v7463 = vmul.f32 %v7335, 0.7978846
        %v7464 = vmul.f32 %v7336, 0.7978846
        %v7465 = vmul.f32 %v7337, 0.7978846
        %v7466 = vmul.f32 %v7338, 0.7978846
        %v7467 = vmul.f32 %v7339, 0.7978846
        %v7468 = vmul.f32 %v7340, 0.7978846
        %v7469 = vmul.f32 %v7341, 0.7978846
        %v7470 = vmul.f32 %v7342, 0.7978846
        %v7471 = vmul.f32 %v7343, 0.7978846
        %v7472 = vmul.f32 %v7344, 0.7978846
        %v7473 = vmul.f32 %v7345, 0.7978846
        %v7474 = vmul.f32 %v7346, 0.7978846
        %v7475 = vmul.f32 %v7347, 0.7978846
        %v7476 = vmul.f32 %v7348, 0.7978846
        %v7477 = vmul.f32 %v7349, 0.7978846
        %v7478 = vmul.f32 %v7350, 0.7978846
        %v7479 = vmul.f32 %v7351, 0.7978846
        %v7480 = vmul.f32 %v7352, 0.7978846
        %v7481 = vmul.f32 %v7353, 0.7978846
        %v7482 = vmul.f32 %v7354, 0.7978846
        %v7483 = vmul.f32 %v7355, 0.7978846
        %v7484 = vmul.f32 %v7356, 0.7978846
        %v7485 = vmul.f32 %v7357, 0.7978846
        %v7486 = vmul.f32 %v7358, 0.7978846
        %v7487 = vmul.f32 %v7359, 0.7978846
        %v7488 = vmul.f32 %v7360, 0.7978846
        %v7489 = vmul.f32 %v7361, 0.7978846
        %v7490 = vmul.f32 %v7362, 0.7978846
        %v7491 = vmul.f32 %v7363, 0.7978846
        %v7492 = vmul.f32 %v7364, 0.7978846
        %v7493 = vmul.f32 %v7365, 0.7978846
        %v7494 = vmul.f32 %v7366, 0.7978846
        %v7495 = vmul.f32 %v7367, 0.7978846
        %v7496 = vmul.f32 %v7368, 0.7978846
        %v7497 = vmul.f32 %v7369, 0.7978846
        %v7498 = vmul.f32 %v7370, 0.7978846
        %v7499 = vmul.f32 %v7371, 0.7978846
        %v7500 = vmul.f32 %v7372, 0.7978846
        %v7501 = vmul.f32 %v7373, 0.7978846
        %v7502 = vmul.f32 %v7374, 0.7978846
        %v7503 = vmul.f32 %v7375, 0.7978846
        %v7504 = vmul.f32 %v7376, 0.7978846
        %v7505 = vmul.f32 %v7377, 0.7978846
        %v7506 = vmul.f32 %v7378, 0.7978846
        %v7507 = vmul.f32 %v7379, 0.7978846
        %v7508 = vmul.f32 %v7380, 0.7978846
        %v7509 = vmul.f32 %v7381, 0.7978846
        %v7510 = vmul.f32 %v7382, 0.7978846
        %v7511 = vmul.f32 %v7383, 0.7978846
        %v7512 = vmul.f32 %v7384, 0.7978846
        %v7513 = vmul.f32 %v7385, 0.7978846
        %v7514 = vmul.f32 %v7386, 0.7978846
        %v7515 = vmul.f32 %v7387, 0.7978846
        %v7516 = vmul.f32 %v7388, 0.7978846
        %v7517 = vmul.f32 %v7389, 0.7978846
        %v7518 = vmul.f32 %v7390, 0.7978846
        %v7519 = vmul.f32 %v7391, 0.7978846
        %v7520 = vmul.f32 %v7392, 0.7978846
        %v7521 = vmul.f32 %v7393, 0.7978846
        %v7522 = vmul.f32 %v7394, 0.7978846
        %v7523 = vmul.f32 %v7395, 0.7978846
        %v7524 = vmul.f32 %v7396, 0.7978846
        %v7525 = vmul.f32 %v7397, 0.7978846
        %v7526 = vmul.f32 %v7398, 0.7978846
        %v7527 = vmul.f32 %v7399, 0.7978846
        %v7528 = vmul.f32 %v7400, 0.7978846
        %v7529 = vmul.f32 %v7401, 0.7978846
        %v7530 = vmul.f32 %v7402, 0.7978846
        %v7531 = vmul.f32 %v7403, 0.7978846
        %v7532 = vmul.f32 %v7404, 0.7978846
        %v7533 = vmul.f32 %v7405, 0.7978846
        %v7534 = vmul.f32 %v7406, 0.7978846
        %v7535 = vmul.f32 %v7407, 0.7978846
        %v7536 = vmul.f32 %v7408, 0.7978846
        %v7537 = vmul.f32 %v7409, 0.7978846
        %v7538 = vmul.f32 %v7410, 0.7978846
        %v7539 = vmul.f32 %v7411, 0.7978846
        %v7540 = vmul.f32 %v7412, 0.7978846
        %v7541 = vmul.f32 %v7413, 0.7978846
        %v7542 = vmul.f32 %v7414, 0.7978846
        %v7543 = vmul.f32 %v7415, 0.7978846
        %v7544 = vmul.f32 %v7416, 0.7978846
        %v7545 = vmul.f32 %v7417, 0.7978846
        %v7546 = vmul.f32 %v7418, 0.7978846
        %v7547 = vmul.f32 %v7419, 0.7978846
        %v7548 = vmul.f32 %v7420, 0.7978846
        %v7549 = vmul.f32 %v7421, 0.7978846
        %v7550 = vmul.f32 %v7422, 0.7978846
        %v7551 = vmul.f32 %v7423, 0.7978846
        %v7552 = vmul.f32 %v7424, 0.7978846
        %v7553 = vmul.f32 %v7425, 0.7978846
        %v7554 = vmul.f32 %v7426, 0.7978846
        %v7555 = vmul.f32 %v7427, 0.7978846
        %v7556 = vmul.f32 %v7428, 0.7978846
        %v7557 = vtanh.pop %v7429
        %v7558 = vtanh.pop %v7430
        %v7559 = vtanh.pop %v7431
        %v7560 = vtanh.pop %v7432
        %v7561 = vtanh.pop %v7433
        %v7562 = vtanh.pop %v7434
        %v7563 = vtanh.pop %v7435
        %v7564 = vtanh.pop %v7436
        %v7565 = vtanh.pop %v7437
        %v7566 = vtanh.pop %v7438
        %v7567 = vtanh.pop %v7439
        %v7568 = vtanh.pop %v7440
        %v7569 = vtanh.pop %v7441
        %v7570 = vtanh.pop %v7442
        %v7571 = vtanh.pop %v7443
        %v7572 = vtanh.pop %v7444
        %v7573 = vtanh.pop %v7445
        %v7574 = vtanh.pop %v7446
        %v7575 = vtanh.pop %v7447
        %v7576 = vtanh.pop %v7448
        %v7577 = vtanh.pop %v7449
        %v7578 = vtanh.pop %v7450
        %v7579 = vtanh.pop %v7451
        %v7580 = vtanh.pop %v7452
        %v7581 = vtanh.pop %v7453
        %v7582 = vtanh.pop %v7454
        %v7583 = vtanh.pop %v7455
        %v7584 = vtanh.pop %v7456
        %v7585 = vtanh.pop %v7457
        %v7586 = vtanh.pop %v7458
        %v7587 = vtanh.pop %v7459
        %v7588 = vtanh.pop %v7460
        %v7589 = vtanh.pop %v7461
        %v7590 = vtanh.pop %v7462
        %v7591 = vtanh.pop %v7463
        %v7592 = vtanh.pop %v7464
        %v7593 = vtanh.pop %v7465
        %v7594 = vtanh.pop %v7466
        %v7595 = vtanh.pop %v7467
        %v7596 = vtanh.pop %v7468
        %v7597 = vtanh.pop %v7469
        %v7598 = vtanh.pop %v7470
        %v7599 = vtanh.pop %v7471
        %v7600 = vtanh.pop %v7472
        %v7601 = vtanh.pop %v7473
        %v7602 = vtanh.pop %v7474
        %v7603 = vtanh.pop %v7475
        %v7604 = vtanh.pop %v7476
        %v7605 = vtanh.pop %v7477
        %v7606 = vtanh.pop %v7478
        %v7607 = vtanh.pop %v7479
        %v7608 = vtanh.pop %v7480
        %v7609 = vtanh.pop %v7481
        %v7610 = vtanh.pop %v7482
        %v7611 = vtanh.pop %v7483
        %v7612 = vtanh.pop %v7484
        %v7613 = vtanh.pop %v7485
        %v7614 = vtanh.pop %v7486
        %v7615 = vtanh.pop %v7487
        %v7616 = vtanh.pop %v7488
        %v7617 = vtanh.pop %v7489
        %v7618 = vtanh.pop %v7490
        %v7619 = vtanh.pop %v7491
        %v7620 = vtanh.pop %v7492
        %v7621 = vtanh.pop %v7493
        %v7622 = vtanh.pop %v7494
        %v7623 = vtanh.pop %v7495
        %v7624 = vtanh.pop %v7496
        %v7625 = vtanh.pop %v7497
        %v7626 = vtanh.pop %v7498
        %v7627 = vtanh.pop %v7499
        %v7628 = vtanh.pop %v7500
        %v7629 = vtanh.pop %v7501
        %v7630 = vtanh.pop %v7502
        %v7631 = vtanh.pop %v7503
        %v7632 = vtanh.pop %v7504
        %v7633 = vtanh.pop %v7505
        %v7634 = vtanh.pop %v7506
        %v7635 = vtanh.pop %v7507
        %v7636 = vtanh.pop %v7508
        %v7637 = vtanh.pop %v7509
        %v7638 = vtanh.pop %v7510
        %v7639 = vtanh.pop %v7511
        %v7640 = vtanh.pop %v7512
        %v7641 = vtanh.pop %v7513
        %v7642 = vtanh.pop %v7514
        %v7643 = vtanh.pop %v7515
        %v7644 = vtanh.pop %v7516
        %v7645 = vtanh.pop %v7517
        %v7646 = vtanh.pop %v7518
        %v7647 = vtanh.pop %v7519
        %v7648 = vtanh.pop %v7520
        %v7649 = vtanh.pop %v7521
        %v7650 = vtanh.pop %v7522
        %v7651 = vtanh.pop %v7523
        %v7652 = vtanh.pop %v7524
        %v7653 = vtanh.pop %v7525
        %v7654 = vtanh.pop %v7526
        %v7655 = vtanh.pop %v7527
        %v7656 = vtanh.pop %v7528
        %v7657 = vtanh.pop %v7529
        %v7658 = vtanh.pop %v7530
        %v7659 = vtanh.pop %v7531
        %v7660 = vtanh.pop %v7532
        %v7661 = vtanh.pop %v7533
        %v7662 = vtanh.pop %v7534
        %v7663 = vtanh.pop %v7535
        %v7664 = vtanh.pop %v7536
        %v7665 = vtanh.pop %v7537
        %v7666 = vtanh.pop %v7538
        %v7667 = vtanh.pop %v7539
        %v7668 = vtanh.pop %v7540
        %v7669 = vtanh.pop %v7541
        %v7670 = vtanh.pop %v7542
        %v7671 = vtanh.pop %v7543
        %v7672 = vtanh.pop %v7544
        %v7673 = vtanh.pop %v7545
        %v7674 = vtanh.pop %v7546
        %v7675 = vtanh.pop %v7547
        %v7676 = vtanh.pop %v7548
        %v7677 = vtanh.pop %v7549
        %v7678 = vtanh.pop %v7550
        %v7679 = vtanh.pop %v7551
        %v7680 = vtanh.pop %v7552
        %v7681 = vtanh.pop %v7553
        %v7682 = vtanh.pop %v7554
        %v7683 = vtanh.pop %v7555
        %v7684 = vtanh.pop %v7556
        %v7685 = vadd.f32 %v7557, 1.0
        %v7686 = vadd.f32 %v7558, 1.0
        %v7687 = vadd.f32 %v7559, 1.0
        %v7688 = vadd.f32 %v7560, 1.0
        %v7689 = vadd.f32 %v7561, 1.0
        %v7690 = vadd.f32 %v7562, 1.0
        %v7691 = vadd.f32 %v7563, 1.0
        %v7692 = vadd.f32 %v7564, 1.0
        %v7693 = vadd.f32 %v7565, 1.0
        %v7694 = vadd.f32 %v7566, 1.0
        %v7695 = vadd.f32 %v7567, 1.0
        %v7696 = vadd.f32 %v7568, 1.0
        %v7697 = vadd.f32 %v7569, 1.0
        %v7698 = vadd.f32 %v7570, 1.0
        %v7699 = vadd.f32 %v7571, 1.0
        %v7700 = vadd.f32 %v7572, 1.0
        %v7701 = vadd.f32 %v7573, 1.0
        %v7702 = vadd.f32 %v7574, 1.0
        %v7703 = vadd.f32 %v7575, 1.0
        %v7704 = vadd.f32 %v7576, 1.0
        %v7705 = vadd.f32 %v7577, 1.0
        %v7706 = vadd.f32 %v7578, 1.0
        %v7707 = vadd.f32 %v7579, 1.0
        %v7708 = vadd.f32 %v7580, 1.0
        %v7709 = vadd.f32 %v7581, 1.0
        %v7710 = vadd.f32 %v7582, 1.0
        %v7711 = vadd.f32 %v7583, 1.0
        %v7712 = vadd.f32 %v7584, 1.0
        %v7713 = vadd.f32 %v7585, 1.0
        %v7714 = vadd.f32 %v7586, 1.0
        %v7715 = vadd.f32 %v7587, 1.0
        %v7716 = vadd.f32 %v7588, 1.0
        %v7717 = vadd.f32 %v7589, 1.0
        %v7718 = vadd.f32 %v7590, 1.0
        %v7719 = vadd.f32 %v7591, 1.0
        %v7720 = vadd.f32 %v7592, 1.0
        %v7721 = vadd.f32 %v7593, 1.0
        %v7722 = vadd.f32 %v7594, 1.0
        %v7723 = vadd.f32 %v7595, 1.0
        %v7724 = vadd.f32 %v7596, 1.0
        %v7725 = vadd.f32 %v7597, 1.0
        %v7726 = vadd.f32 %v7598, 1.0
        %v7727 = vadd.f32 %v7599, 1.0
        %v7728 = vadd.f32 %v7600, 1.0
        %v7729 = vadd.f32 %v7601, 1.0
        %v7730 = vadd.f32 %v7602, 1.0
        %v7731 = vadd.f32 %v7603, 1.0
        %v7732 = vadd.f32 %v7604, 1.0
        %v7733 = vadd.f32 %v7605, 1.0
        %v7734 = vadd.f32 %v7606, 1.0
        %v7735 = vadd.f32 %v7607, 1.0
        %v7736 = vadd.f32 %v7608, 1.0
        %v7737 = vadd.f32 %v7609, 1.0
        %v7738 = vadd.f32 %v7610, 1.0
        %v7739 = vadd.f32 %v7611, 1.0
        %v7740 = vadd.f32 %v7612, 1.0
        %v7741 = vadd.f32 %v7613, 1.0
        %v7742 = vadd.f32 %v7614, 1.0
        %v7743 = vadd.f32 %v7615, 1.0
        %v7744 = vadd.f32 %v7616, 1.0
        %v7745 = vadd.f32 %v7617, 1.0
        %v7746 = vadd.f32 %v7618, 1.0
        %v7747 = vadd.f32 %v7619, 1.0
        %v7748 = vadd.f32 %v7620, 1.0
        %v7749 = vadd.f32 %v7621, 1.0
        %v7750 = vadd.f32 %v7622, 1.0
        %v7751 = vadd.f32 %v7623, 1.0
        %v7752 = vadd.f32 %v7624, 1.0
        %v7753 = vadd.f32 %v7625, 1.0
        %v7754 = vadd.f32 %v7626, 1.0
        %v7755 = vadd.f32 %v7627, 1.0
        %v7756 = vadd.f32 %v7628, 1.0
        %v7757 = vadd.f32 %v7629, 1.0
        %v7758 = vadd.f32 %v7630, 1.0
        %v7759 = vadd.f32 %v7631, 1.0
        %v7760 = vadd.f32 %v7632, 1.0
        %v7761 = vadd.f32 %v7633, 1.0
        %v7762 = vadd.f32 %v7634, 1.0
        %v7763 = vadd.f32 %v7635, 1.0
        %v7764 = vadd.f32 %v7636, 1.0
        %v7765 = vadd.f32 %v7637, 1.0
        %v7766 = vadd.f32 %v7638, 1.0
        %v7767 = vadd.f32 %v7639, 1.0
        %v7768 = vadd.f32 %v7640, 1.0
        %v7769 = vadd.f32 %v7641, 1.0
        %v7770 = vadd.f32 %v7642, 1.0
        %v7771 = vadd.f32 %v7643, 1.0
        %v7772 = vadd.f32 %v7644, 1.0
        %v7773 = vadd.f32 %v7645, 1.0
        %v7774 = vadd.f32 %v7646, 1.0
        %v7775 = vadd.f32 %v7647, 1.0
        %v7776 = vadd.f32 %v7648, 1.0
        %v7777 = vadd.f32 %v7649, 1.0
        %v7778 = vadd.f32 %v7650, 1.0
        %v7779 = vadd.f32 %v7651, 1.0
        %v7780 = vadd.f32 %v7652, 1.0
        %v7781 = vadd.f32 %v7653, 1.0
        %v7782 = vadd.f32 %v7654, 1.0
        %v7783 = vadd.f32 %v7655, 1.0
        %v7784 = vadd.f32 %v7656, 1.0
        %v7785 = vadd.f32 %v7657, 1.0
        %v7786 = vadd.f32 %v7658, 1.0
        %v7787 = vadd.f32 %v7659, 1.0
        %v7788 = vadd.f32 %v7660, 1.0
        %v7789 = vadd.f32 %v7661, 1.0
        %v7790 = vadd.f32 %v7662, 1.0
        %v7791 = vadd.f32 %v7663, 1.0
        %v7792 = vadd.f32 %v7664, 1.0
        %v7793 = vadd.f32 %v7665, 1.0
        %v7794 = vadd.f32 %v7666, 1.0
        %v7795 = vadd.f32 %v7667, 1.0
        %v7796 = vadd.f32 %v7668, 1.0
        %v7797 = vadd.f32 %v7669, 1.0
        %v7798 = vadd.f32 %v7670, 1.0
        %v7799 = vadd.f32 %v7671, 1.0
        %v7800 = vadd.f32 %v7672, 1.0
        %v7801 = vadd.f32 %v7673, 1.0
        %v7802 = vadd.f32 %v7674, 1.0
        %v7803 = vadd.f32 %v7675, 1.0
        %v7804 = vadd.f32 %v7676, 1.0
        %v7805 = vadd.f32 %v7677, 1.0
        %v7806 = vadd.f32 %v7678, 1.0
        %v7807 = vadd.f32 %v7679, 1.0
        %v7808 = vadd.f32 %v7680, 1.0
        %v7809 = vadd.f32 %v7681, 1.0
        %v7810 = vadd.f32 %v7682, 1.0
        %v7811 = vadd.f32 %v7683, 1.0
        %v7812 = vadd.f32 %v7684, 1.0
        %v7813 = vmul.f32 %v7685, 0.5
        %v7814 = vmul.f32 %v7686, 0.5
        %v7815 = vmul.f32 %v7687, 0.5
        %v7816 = vmul.f32 %v7688, 0.5
        %v7817 = vmul.f32 %v7689, 0.5
        %v7818 = vmul.f32 %v7690, 0.5
        %v7819 = vmul.f32 %v7691, 0.5
        %v7820 = vmul.f32 %v7692, 0.5
        %v7821 = vmul.f32 %v7693, 0.5
        %v7822 = vmul.f32 %v7694, 0.5
        %v7823 = vmul.f32 %v7695, 0.5
        %v7824 = vmul.f32 %v7696, 0.5
        %v7825 = vmul.f32 %v7697, 0.5
        %v7826 = vmul.f32 %v7698, 0.5
        %v7827 = vmul.f32 %v7699, 0.5
        %v7828 = vmul.f32 %v7700, 0.5
        %v7829 = vmul.f32 %v7701, 0.5
        %v7830 = vmul.f32 %v7702, 0.5
        %v7831 = vmul.f32 %v7703, 0.5
        %v7832 = vmul.f32 %v7704, 0.5
        %v7833 = vmul.f32 %v7705, 0.5
        %v7834 = vmul.f32 %v7706, 0.5
        %v7835 = vmul.f32 %v7707, 0.5
        %v7836 = vmul.f32 %v7708, 0.5
        %v7837 = vmul.f32 %v7709, 0.5
        %v7838 = vmul.f32 %v7710, 0.5
        %v7839 = vmul.f32 %v7711, 0.5
        %v7840 = vmul.f32 %v7712, 0.5
        %v7841 = vmul.f32 %v7713, 0.5
        %v7842 = vmul.f32 %v7714, 0.5
        %v7843 = vmul.f32 %v7715, 0.5
        %v7844 = vmul.f32 %v7716, 0.5
        %v7845 = vmul.f32 %v7717, 0.5
        %v7846 = vmul.f32 %v7718, 0.5
        %v7847 = vmul.f32 %v7719, 0.5
        %v7848 = vmul.f32 %v7720, 0.5
        %v7849 = vmul.f32 %v7721, 0.5
        %v7850 = vmul.f32 %v7722, 0.5
        %v7851 = vmul.f32 %v7723, 0.5
        %v7852 = vmul.f32 %v7724, 0.5
        %v7853 = vmul.f32 %v7725, 0.5
        %v7854 = vmul.f32 %v7726, 0.5
        %v7855 = vmul.f32 %v7727, 0.5
        %v7856 = vmul.f32 %v7728, 0.5
        %v7857 = vmul.f32 %v7729, 0.5
        %v7858 = vmul.f32 %v7730, 0.5
        %v7859 = vmul.f32 %v7731, 0.5
        %v7860 = vmul.f32 %v7732, 0.5
        %v7861 = vmul.f32 %v7733, 0.5
        %v7862 = vmul.f32 %v7734, 0.5
        %v7863 = vmul.f32 %v7735, 0.5
        %v7864 = vmul.f32 %v7736, 0.5
        %v7865 = vmul.f32 %v7737, 0.5
        %v7866 = vmul.f32 %v7738, 0.5
        %v7867 = vmul.f32 %v7739, 0.5
        %v7868 = vmul.f32 %v7740, 0.5
        %v7869 = vmul.f32 %v7741, 0.5
        %v7870 = vmul.f32 %v7742, 0.5
        %v7871 = vmul.f32 %v7743, 0.5
        %v7872 = vmul.f32 %v7744, 0.5
        %v7873 = vmul.f32 %v7745, 0.5
        %v7874 = vmul.f32 %v7746, 0.5
        %v7875 = vmul.f32 %v7747, 0.5
        %v7876 = vmul.f32 %v7748, 0.5
        %v7877 = vmul.f32 %v7749, 0.5
        %v7878 = vmul.f32 %v7750, 0.5
        %v7879 = vmul.f32 %v7751, 0.5
        %v7880 = vmul.f32 %v7752, 0.5
        %v7881 = vmul.f32 %v7753, 0.5
        %v7882 = vmul.f32 %v7754, 0.5
        %v7883 = vmul.f32 %v7755, 0.5
        %v7884 = vmul.f32 %v7756, 0.5
        %v7885 = vmul.f32 %v7757, 0.5
        %v7886 = vmul.f32 %v7758, 0.5
        %v7887 = vmul.f32 %v7759, 0.5
        %v7888 = vmul.f32 %v7760, 0.5
        %v7889 = vmul.f32 %v7761, 0.5
        %v7890 = vmul.f32 %v7762, 0.5
        %v7891 = vmul.f32 %v7763, 0.5
        %v7892 = vmul.f32 %v7764, 0.5
        %v7893 = vmul.f32 %v7765, 0.5
        %v7894 = vmul.f32 %v7766, 0.5
        %v7895 = vmul.f32 %v7767, 0.5
        %v7896 = vmul.f32 %v7768, 0.5
        %v7897 = vmul.f32 %v7769, 0.5
        %v7898 = vmul.f32 %v7770, 0.5
        %v7899 = vmul.f32 %v7771, 0.5
        %v7900 = vmul.f32 %v7772, 0.5
        %v7901 = vmul.f32 %v7773, 0.5
        %v7902 = vmul.f32 %v7774, 0.5
        %v7903 = vmul.f32 %v7775, 0.5
        %v7904 = vmul.f32 %v7776, 0.5
        %v7905 = vmul.f32 %v7777, 0.5
        %v7906 = vmul.f32 %v7778, 0.5
        %v7907 = vmul.f32 %v7779, 0.5
        %v7908 = vmul.f32 %v7780, 0.5
        %v7909 = vmul.f32 %v7781, 0.5
        %v7910 = vmul.f32 %v7782, 0.5
        %v7911 = vmul.f32 %v7783, 0.5
        %v7912 = vmul.f32 %v7784, 0.5
        %v7913 = vmul.f32 %v7785, 0.5
        %v7914 = vmul.f32 %v7786, 0.5
        %v7915 = vmul.f32 %v7787, 0.5
        %v7916 = vmul.f32 %v7788, 0.5
        %v7917 = vmul.f32 %v7789, 0.5
        %v7918 = vmul.f32 %v7790, 0.5
        %v7919 = vmul.f32 %v7791, 0.5
        %v7920 = vmul.f32 %v7792, 0.5
        %v7921 = vmul.f32 %v7793, 0.5
        %v7922 = vmul.f32 %v7794, 0.5
        %v7923 = vmul.f32 %v7795, 0.5
        %v7924 = vmul.f32 %v7796, 0.5
        %v7925 = vmul.f32 %v7797, 0.5
        %v7926 = vmul.f32 %v7798, 0.5
        %v7927 = vmul.f32 %v7799, 0.5
        %v7928 = vmul.f32 %v7800, 0.5
        %v7929 = vmul.f32 %v7801, 0.5
        %v7930 = vmul.f32 %v7802, 0.5
        %v7931 = vmul.f32 %v7803, 0.5
        %v7932 = vmul.f32 %v7804, 0.5
        %v7933 = vmul.f32 %v7805, 0.5
        %v7934 = vmul.f32 %v7806, 0.5
        %v7935 = vmul.f32 %v7807, 0.5
        %v7936 = vmul.f32 %v7808, 0.5
        %v7937 = vmul.f32 %v7809, 0.5
        %v7938 = vmul.f32 %v7810, 0.5
        %v7939 = vmul.f32 %v7811, 0.5
        %v7940 = vmul.f32 %v7812, 0.5
        %v7941 = vmul.f32 %v6483, %v7813
        %v7942 = vmul.f32 %v6596, %v7814
        %v7943 = vmul.f32 %v6709, %v7815
        %v7944 = vmul.f32 %v6822, %v7816
        %v7945 = vmul.f32 %v6486, %v7817
        %v7946 = vmul.f32 %v6599, %v7818
        %v7947 = vmul.f32 %v6712, %v7819
        %v7948 = vmul.f32 %v6825, %v7820
        %v7949 = vmul.f32 %v6489, %v7821
        %v7950 = vmul.f32 %v6602, %v7822
        %v7951 = vmul.f32 %v6715, %v7823
        %v7952 = vmul.f32 %v6828, %v7824
        %v7953 = vmul.f32 %v6492, %v7825
        %v7954 = vmul.f32 %v6605, %v7826
        %v7955 = vmul.f32 %v6718, %v7827
        %v7956 = vmul.f32 %v6831, %v7828
        %v7957 = vmul.f32 %v6495, %v7829
        %v7958 = vmul.f32 %v6608, %v7830
        %v7959 = vmul.f32 %v6721, %v7831
        %v7960 = vmul.f32 %v6834, %v7832
        %v7961 = vmul.f32 %v6498, %v7833
        %v7962 = vmul.f32 %v6611, %v7834
        %v7963 = vmul.f32 %v6724, %v7835
        %v7964 = vmul.f32 %v6837, %v7836
        %v7965 = vmul.f32 %v6501, %v7837
        %v7966 = vmul.f32 %v6614, %v7838
        %v7967 = vmul.f32 %v6727, %v7839
        %v7968 = vmul.f32 %v6840, %v7840
        %v7969 = vmul.f32 %v6504, %v7841
        %v7970 = vmul.f32 %v6617, %v7842
        %v7971 = vmul.f32 %v6730, %v7843
        %v7972 = vmul.f32 %v6843, %v7844
        %v7973 = vmul.f32 %v6507, %v7845
        %v7974 = vmul.f32 %v6620, %v7846
        %v7975 = vmul.f32 %v6733, %v7847
        %v7976 = vmul.f32 %v6846, %v7848
        %v7977 = vmul.f32 %v6510, %v7849
        %v7978 = vmul.f32 %v6623, %v7850
        %v7979 = vmul.f32 %v6736, %v7851
        %v7980 = vmul.f32 %v6849, %v7852
        %v7981 = vmul.f32 %v6513, %v7853
        %v7982 = vmul.f32 %v6626, %v7854
        %v7983 = vmul.f32 %v6739, %v7855
        %v7984 = vmul.f32 %v6852, %v7856
        %v7985 = vmul.f32 %v6516, %v7857
        %v7986 = vmul.f32 %v6629, %v7858
        %v7987 = vmul.f32 %v6742, %v7859
        %v7988 = vmul.f32 %v6855, %v7860
        %v7989 = vmul.f32 %v6519, %v7861
        %v7990 = vmul.f32 %v6632, %v7862
        %v7991 = vmul.f32 %v6745, %v7863
        %v7992 = vmul.f32 %v6858, %v7864
        %v7993 = vmul.f32 %v6522, %v7865
        %v7994 = vmul.f32 %v6635, %v7866
        %v7995 = vmul.f32 %v6748, %v7867
        %v7996 = vmul.f32 %v6861, %v7868
        %v7997 = vmul.f32 %v6525, %v7869
        %v7998 = vmul.f32 %v6638, %v7870
        %v7999 = vmul.f32 %v6751, %v7871
        %v8000 = vmul.f32 %v6864, %v7872
        %v8001 = vmul.f32 %v6528, %v7873
        %v8002 = vmul.f32 %v6641, %v7874
        %v8003 = vmul.f32 %v6754, %v7875
        %v8004 = vmul.f32 %v6867, %v7876
        %v8005 = vmul.f32 %v6531, %v7877
        %v8006 = vmul.f32 %v6644, %v7878
        %v8007 = vmul.f32 %v6757, %v7879
        %v8008 = vmul.f32 %v6870, %v7880
        %v8009 = vmul.f32 %v6534, %v7881
        %v8010 = vmul.f32 %v6647, %v7882
        %v8011 = vmul.f32 %v6760, %v7883
        %v8012 = vmul.f32 %v6873, %v7884
        %v8013 = vmul.f32 %v6537, %v7885
        %v8014 = vmul.f32 %v6650, %v7886
        %v8015 = vmul.f32 %v6763, %v7887
        %v8016 = vmul.f32 %v6876, %v7888
        %v8017 = vmul.f32 %v6540, %v7889
        %v8018 = vmul.f32 %v6653, %v7890
        %v8019 = vmul.f32 %v6766, %v7891
        %v8020 = vmul.f32 %v6879, %v7892
        %v8021 = vmul.f32 %v6543, %v7893
        %v8022 = vmul.f32 %v6656, %v7894
        %v8023 = vmul.f32 %v6769, %v7895
        %v8024 = vmul.f32 %v6882, %v7896
        %v8025 = vmul.f32 %v6546, %v7897
        %v8026 = vmul.f32 %v6659, %v7898
        %v8027 = vmul.f32 %v6772, %v7899
        %v8028 = vmul.f32 %v6885, %v7900
        %v8029 = vmul.f32 %v6549, %v7901
        %v8030 = vmul.f32 %v6662, %v7902
        %v8031 = vmul.f32 %v6775, %v7903
        %v8032 = vmul.f32 %v6888, %v7904
        %v8033 = vmul.f32 %v6552, %v7905
        %v8034 = vmul.f32 %v6665, %v7906
        %v8035 = vmul.f32 %v6778, %v7907
        %v8036 = vmul.f32 %v6891, %v7908
        %v8037 = vmul.f32 %v6555, %v7909
        %v8038 = vmul.f32 %v6668, %v7910
        %v8039 = vmul.f32 %v6781, %v7911
        %v8040 = vmul.f32 %v6894, %v7912
        %v8041 = vmul.f32 %v6558, %v7913
        %v8042 = vmul.f32 %v6671, %v7914
        %v8043 = vmul.f32 %v6784, %v7915
        %v8044 = vmul.f32 %v6897, %v7916
        %v8045 = vmul.f32 %v6561, %v7917
        %v8046 = vmul.f32 %v6674, %v7918
        %v8047 = vmul.f32 %v6787, %v7919
        %v8048 = vmul.f32 %v6900, %v7920
        %v8049 = vmul.f32 %v6564, %v7921
        %v8050 = vmul.f32 %v6677, %v7922
        %v8051 = vmul.f32 %v6790, %v7923
        %v8052 = vmul.f32 %v6903, %v7924
        %v8053 = vmul.f32 %v6567, %v7925
        %v8054 = vmul.f32 %v6680, %v7926
        %v8055 = vmul.f32 %v6793, %v7927
        %v8056 = vmul.f32 %v6906, %v7928
        %v8057 = vmul.f32 %v6570, %v7929
        %v8058 = vmul.f32 %v6683, %v7930
        %v8059 = vmul.f32 %v6796, %v7931
        %v8060 = vmul.f32 %v6909, %v7932
        %v8061 = vmul.f32 %v6573, %v7933
        %v8062 = vmul.f32 %v6686, %v7934
        %v8063 = vmul.f32 %v6799, %v7935
        %v8064 = vmul.f32 %v6912, %v7936
        %v8065 = vmul.f32 %v6576, %v7937
        %v8066 = vmul.f32 %v6689, %v7938
        %v8067 = vmul.f32 %v6802, %v7939
        %v8068 = vmul.f32 %v6915, %v7940
        %v8069 = vld [vmem:[#allocation13] sm:$0xff]
        %v8070 = vld [vmem:[#allocation13 + $0x8] sm:$0xff]
        %v8071 = vld [vmem:[#allocation13 + $0x10] sm:$0xff]
        %v8072 = vld [vmem:[#allocation13 + $0x18] sm:$0xff]
        %v8073 = vld [vmem:[#allocation13 + $0x20] sm:$0xff]
        %v8074 = vld [vmem:[#allocation13 + $0x28] sm:$0xff]
        %v8075 = vld [vmem:[#allocation13 + $0x30] sm:$0xff]
        %v8076 = vld [vmem:[#allocation13 + $0x38] sm:$0xff]
        %v8077 = vld [vmem:[#allocation13 + $0x40] sm:$0xff]
        %v8078 = vld [vmem:[#allocation13 + $0x48] sm:$0xff]
        %v8079 = vld [vmem:[#allocation13 + $0x50] sm:$0xff]
        %v8080 = vld [vmem:[#allocation13 + $0x58] sm:$0xff]
        %v8081 = vld [vmem:[#allocation13 + $0x60] sm:$0xff]
        %v8082 = vld [vmem:[#allocation13 + $0x68] sm:$0xff]
        %v8083 = vld [vmem:[#allocation13 + $0x70] sm:$0xff]
        %v8084 = vld [vmem:[#allocation13 + $0x78] sm:$0xff]
        %v8085 = vld [vmem:[#allocation13 + $0x80] sm:$0xff]
        %v8086 = vld [vmem:[#allocation13 + $0x88] sm:$0xff]
        %v8087 = vld [vmem:[#allocation13 + $0x90] sm:$0xff]
        %v8088 = vld [vmem:[#allocation13 + $0x98] sm:$0xff]
        %v8089 = vld [vmem:[#allocation13 + $0xa0] sm:$0xff]
        %v8090 = vld [vmem:[#allocation13 + $0xa8] sm:$0xff]
        %v8091 = vld [vmem:[#allocation13 + $0xb0] sm:$0xff]
        %v8092 = vld [vmem:[#allocation13 + $0xb8] sm:$0xff]
        %v8093 = vld [vmem:[#allocation13 + $0xc0] sm:$0xff]
        %v8094 = vld [vmem:[#allocation13 + $0xc8] sm:$0xff]
        %v8095 = vld [vmem:[#allocation13 + $0xd0] sm:$0xff]
        %v8096 = vld [vmem:[#allocation13 + $0xd8] sm:$0xff]
        %v8097 = vld [vmem:[#allocation13 + $0xe0] sm:$0xff]
        %v8098 = vld [vmem:[#allocation13 + $0xe8] sm:$0xff]
        %v8099 = vld [vmem:[#allocation13 + $0xf0] sm:$0xff]
        %v8100 = vld [vmem:[#allocation13 + $0xf8] sm:$0xff]
        %v8101 = vld [vmem:[#allocation13 + $0x100] sm:$0xff]
        %v8102 = vld [vmem:[#allocation13 + $0x108] sm:$0xff]
        %v8103 = vld [vmem:[#allocation13 + $0x110] sm:$0xff]
        %v8104 = vld [vmem:[#allocation13 + $0x118] sm:$0xff]
        %v8105 = vld [vmem:[#allocation13 + $0x120] sm:$0xff]
        %v8106 = vld [vmem:[#allocation13 + $0x128] sm:$0xff]
        %v8107 = vld [vmem:[#allocation13 + $0x130] sm:$0xff]
        %v8108 = vld [vmem:[#allocation13 + $0x138] sm:$0xff]
        %v8109 = vld [vmem:[#allocation13 + $0x140] sm:$0xff]
        %v8110 = vld [vmem:[#allocation13 + $0x148] sm:$0xff]
        %v8111 = vld [vmem:[#allocation13 + $0x150] sm:$0xff]
        %v8112 = vld [vmem:[#allocation13 + $0x158] sm:$0xff]
        %v8113 = vld [vmem:[#allocation13 + $0x160] sm:$0xff]
        %v8114 = vld [vmem:[#allocation13 + $0x168] sm:$0xff]
        %v8115 = vld [vmem:[#allocation13 + $0x170] sm:$0xff]
        %v8116 = vld [vmem:[#allocation13 + $0x178] sm:$0xff]
        %v8117 = vld [vmem:[#allocation13 + $0x180] sm:$0xff]
        %v8118 = vld [vmem:[#allocation13 + $0x188] sm:$0xff]
        %v8119 = vld [vmem:[#allocation13 + $0x190] sm:$0xff]
        %v8120 = vld [vmem:[#allocation13 + $0x198] sm:$0xff]
        %v8121 = vld [vmem:[#allocation13 + $0x1a0] sm:$0xff]
        %v8122 = vld [vmem:[#allocation13 + $0x1a8] sm:$0xff]
        %v8123 = vld [vmem:[#allocation13 + $0x1b0] sm:$0xff]
        %v8124 = vld [vmem:[#allocation13 + $0x1b8] sm:$0xff]
        %v8125 = vld [vmem:[#allocation13 + $0x1c0] sm:$0xff]
        %v8126 = vld [vmem:[#allocation13 + $0x1c8] sm:$0xff]
        %v8127 = vld [vmem:[#allocation13 + $0x1d0] sm:$0xff]
        %v8128 = vld [vmem:[#allocation13 + $0x1d8] sm:$0xff]
        %v8129 = vld [vmem:[#allocation13 + $0x1e0] sm:$0xff]
        %v8130 = vld [vmem:[#allocation13 + $0x1e8] sm:$0xff]
        %v8131 = vld [vmem:[#allocation13 + $0x1f0] sm:$0xff]
        %v8132 = vld [vmem:[#allocation13 + $0x1f8] sm:$0xff]
        %v8133 = vld [vmem:[%s7] sm:$0x1]
        %v8135 = vperm.slane %v8133, 0
        %8137 = vmatpush.msra.mxu0 %v8084
        %8138 = vmatpush.msra.mxu0 %v8083
        %8139 = vmatpush.msra.mxu0 %v8082
        %8140 = vmatpush.msra.mxu0 %v8081
        %8141 = vmatpush.msra.mxu0 %v8080
        %8142 = vmatpush.msra.mxu0 %v8079
        %8143 = vmatpush.msra.mxu0 %v8078
        %8144 = vmatpush.msra.mxu0 %v8077
        %8145 = vmatpush.msra.mxu0 %v8076
        %8146 = vmatpush.msra.mxu0 %v8075
        %8147 = vmatpush.msra.mxu0 %v8074
        %8148 = vmatpush.msra.mxu0 %v8073
        %8149 = vmatpush.msra.mxu0 %v8072
        %8150 = vmatpush.msra.mxu0 %v8071
        %8151 = vmatpush.msra.mxu0 %v8070
        %8152 = vmatpush.msra.mxu0 %v8069
        %8153 = vmatmul.f32.gmra.mxu0 %v7941
        %v8154 = vpop.f32.mrf.mxu0
        %v8155 = vadd.f32 %v8135, %v8154
        %8156 = vmatmul.f32.gmra.mxu0 %v7945
        %v8157 = vpop.f32.mrf.mxu0
        %v8158 = vadd.f32 %v8135, %v8157
        %8159 = vmatmul.f32.gmra.mxu0 %v7949
        %v8160 = vpop.f32.mrf.mxu0
        %v8161 = vadd.f32 %v8135, %v8160
        %8162 = vmatmul.f32.gmra.mxu0 %v7953
        %v8163 = vpop.f32.mrf.mxu0
        %v8164 = vadd.f32 %v8135, %v8163
        %8165 = vmatmul.f32.gmra.mxu0 %v7957
        %v8166 = vpop.f32.mrf.mxu0
        %v8167 = vadd.f32 %v8135, %v8166
        %8168 = vmatmul.f32.gmra.mxu0 %v7961
        %v8169 = vpop.f32.mrf.mxu0
        %v8170 = vadd.f32 %v8135, %v8169
        %8171 = vmatmul.f32.gmra.mxu0 %v7965
        %v8172 = vpop.f32.mrf.mxu0
        %v8173 = vadd.f32 %v8135, %v8172
        %8174 = vmatmul.f32.gmra.mxu0 %v7969
        %v8175 = vpop.f32.mrf.mxu0
        %v8176 = vadd.f32 %v8135, %v8175
        %8177 = vmatmul.f32.gmra.mxu0 %v7973
        %v8178 = vpop.f32.mrf.mxu0
        %v8179 = vadd.f32 %v8135, %v8178
        %8180 = vmatmul.f32.gmra.mxu0 %v7977
        %v8181 = vpop.f32.mrf.mxu0
        %v8182 = vadd.f32 %v8135, %v8181
        %8183 = vmatmul.f32.gmra.mxu0 %v7981
        %v8184 = vpop.f32.mrf.mxu0
        %v8185 = vadd.f32 %v8135, %v8184
        %8186 = vmatmul.f32.gmra.mxu0 %v7985
        %v8187 = vpop.f32.mrf.mxu0
        %v8188 = vadd.f32 %v8135, %v8187
        %8189 = vmatmul.f32.gmra.mxu0 %v7989
        %v8190 = vpop.f32.mrf.mxu0
        %v8191 = vadd.f32 %v8135, %v8190
        %8192 = vmatmul.f32.gmra.mxu0 %v7993
        %v8193 = vpop.f32.mrf.mxu0
        %v8194 = vadd.f32 %v8135, %v8193
        %8195 = vmatmul.f32.gmra.mxu0 %v7997
        %v8196 = vpop.f32.mrf.mxu0
        %v8197 = vadd.f32 %v8135, %v8196
        %8198 = vmatmul.f32.gmra.mxu0 %v8001
        %v8199 = vpop.f32.mrf.mxu0
        %v8200 = vadd.f32 %v8135, %v8199
        %8201 = vmatmul.f32.gmra.mxu0 %v8005
        %v8202 = vpop.f32.mrf.mxu0
        %v8203 = vadd.f32 %v8135, %v8202
        %8204 = vmatmul.f32.gmra.mxu0 %v8009
        %v8205 = vpop.f32.mrf.mxu0
        %v8206 = vadd.f32 %v8135, %v8205
        %8207 = vmatmul.f32.gmra.mxu0 %v8013
        %v8208 = vpop.f32.mrf.mxu0
        %v8209 = vadd.f32 %v8135, %v8208
        %8210 = vmatmul.f32.gmra.mxu0 %v8017
        %v8211 = vpop.f32.mrf.mxu0
        %v8212 = vadd.f32 %v8135, %v8211
        %8213 = vmatmul.f32.gmra.mxu0 %v8021
        %v8214 = vpop.f32.mrf.mxu0
        %v8215 = vadd.f32 %v8135, %v8214
        %8216 = vmatmul.f32.gmra.mxu0 %v8025
        %v8217 = vpop.f32.mrf.mxu0
        %v8218 = vadd.f32 %v8135, %v8217
        %8219 = vmatmul.f32.gmra.mxu0 %v8029
        %v8220 = vpop.f32.mrf.mxu0
        %v8221 = vadd.f32 %v8135, %v8220
        %8222 = vmatmul.f32.gmra.mxu0 %v8033
        %v8223 = vpop.f32.mrf.mxu0
        %v8224 = vadd.f32 %v8135, %v8223
        %8225 = vmatmul.f32.gmra.mxu0 %v8037
        %v8226 = vpop.f32.mrf.mxu0
        %v8227 = vadd.f32 %v8135, %v8226
        %8228 = vmatmul.f32.gmra.mxu0 %v8041
        %v8229 = vpop.f32.mrf.mxu0
        %v8230 = vadd.f32 %v8135, %v8229
        %8231 = vmatmul.f32.gmra.mxu0 %v8045
        %v8232 = vpop.f32.mrf.mxu0
        %v8233 = vadd.f32 %v8135, %v8232
        %8234 = vmatmul.f32.gmra.mxu0 %v8049
        %v8235 = vpop.f32.mrf.mxu0
        %v8236 = vadd.f32 %v8135, %v8235
        %8237 = vmatmul.f32.gmra.mxu0 %v8053
        %v8238 = vpop.f32.mrf.mxu0
        %v8239 = vadd.f32 %v8135, %v8238
        %8240 = vmatmul.f32.gmra.mxu0 %v8057
        %v8241 = vpop.f32.mrf.mxu0
        %v8242 = vadd.f32 %v8135, %v8241
        %8243 = vmatmul.f32.gmra.mxu0 %v8061
        %v8244 = vpop.f32.mrf.mxu0
        %v8245 = vadd.f32 %v8135, %v8244
        %8246 = vmatmul.f32.gmra.mxu0 %v8065
        %v8247 = vpop.f32.mrf.mxu0
        %v8248 = vadd.f32 %v8135, %v8247
        %8249 = vdwg.mxu0
        %8250 = vmatpush.msra.mxu0 %v8100
        %8251 = vmatpush.msra.mxu0 %v8099
        %8252 = vmatpush.msra.mxu0 %v8098
        %8253 = vmatpush.msra.mxu0 %v8097
        %8254 = vmatpush.msra.mxu0 %v8096
        %8255 = vmatpush.msra.mxu0 %v8095
        %8256 = vmatpush.msra.mxu0 %v8094
        %8257 = vmatpush.msra.mxu0 %v8093
        %8258 = vmatpush.msra.mxu0 %v8092
        %8259 = vmatpush.msra.mxu0 %v8091
        %8260 = vmatpush.msra.mxu0 %v8090
        %8261 = vmatpush.msra.mxu0 %v8089
        %8262 = vmatpush.msra.mxu0 %v8088
        %8263 = vmatpush.msra.mxu0 %v8087
        %8264 = vmatpush.msra.mxu0 %v8086
        %8265 = vmatpush.msra.mxu0 %v8085
        %8266 = vmatmul.f32.gmra.mxu0 %v7942
        %v8267 = vpop.f32.mrf.mxu0
        %v8268 = vadd.f32 %v8155, %v8267
        %8269 = vmatmul.f32.gmra.mxu0 %v7946
        %v8270 = vpop.f32.mrf.mxu0
        %v8271 = vadd.f32 %v8158, %v8270
        %8272 = vmatmul.f32.gmra.mxu0 %v7950
        %v8273 = vpop.f32.mrf.mxu0
        %v8274 = vadd.f32 %v8161, %v8273
        %8275 = vmatmul.f32.gmra.mxu0 %v7954
        %v8276 = vpop.f32.mrf.mxu0
        %v8277 = vadd.f32 %v8164, %v8276
        %8278 = vmatmul.f32.gmra.mxu0 %v7958
        %v8279 = vpop.f32.mrf.mxu0
        %v8280 = vadd.f32 %v8167, %v8279
        %8281 = vmatmul.f32.gmra.mxu0 %v7962
        %v8282 = vpop.f32.mrf.mxu0
        %v8283 = vadd.f32 %v8170, %v8282
        %8284 = vmatmul.f32.gmra.mxu0 %v7966
        %v8285 = vpop.f32.mrf.mxu0
        %v8286 = vadd.f32 %v8173, %v8285
        %8287 = vmatmul.f32.gmra.mxu0 %v7970
        %v8288 = vpop.f32.mrf.mxu0
        %v8289 = vadd.f32 %v8176, %v8288
        %8290 = vmatmul.f32.gmra.mxu0 %v7974
        %v8291 = vpop.f32.mrf.mxu0
        %v8292 = vadd.f32 %v8179, %v8291
        %8293 = vmatmul.f32.gmra.mxu0 %v7978
        %v8294 = vpop.f32.mrf.mxu0
        %v8295 = vadd.f32 %v8182, %v8294
        %8296 = vmatmul.f32.gmra.mxu0 %v7982
        %v8297 = vpop.f32.mrf.mxu0
        %v8298 = vadd.f32 %v8185, %v8297
        %8299 = vmatmul.f32.gmra.mxu0 %v7986
        %v8300 = vpop.f32.mrf.mxu0
        %v8301 = vadd.f32 %v8188, %v8300
        %8302 = vmatmul.f32.gmra.mxu0 %v7990
        %v8303 = vpop.f32.mrf.mxu0
        %v8304 = vadd.f32 %v8191, %v8303
        %8305 = vmatmul.f32.gmra.mxu0 %v7994
        %v8306 = vpop.f32.mrf.mxu0
        %v8307 = vadd.f32 %v8194, %v8306
        %8308 = vmatmul.f32.gmra.mxu0 %v7998
        %v8309 = vpop.f32.mrf.mxu0
        %v8310 = vadd.f32 %v8197, %v8309
        %8311 = vmatmul.f32.gmra.mxu0 %v8002
        %v8312 = vpop.f32.mrf.mxu0
        %v8313 = vadd.f32 %v8200, %v8312
        %8314 = vmatmul.f32.gmra.mxu0 %v8006
        %v8315 = vpop.f32.mrf.mxu0
        %v8316 = vadd.f32 %v8203, %v8315
        %8317 = vmatmul.f32.gmra.mxu0 %v8010
        %v8318 = vpop.f32.mrf.mxu0
        %v8319 = vadd.f32 %v8206, %v8318
        %8320 = vmatmul.f32.gmra.mxu0 %v8014
        %v8321 = vpop.f32.mrf.mxu0
        %v8322 = vadd.f32 %v8209, %v8321
        %8323 = vmatmul.f32.gmra.mxu0 %v8018
        %v8324 = vpop.f32.mrf.mxu0
        %v8325 = vadd.f32 %v8212, %v8324
        %8326 = vmatmul.f32.gmra.mxu0 %v8022
        %v8327 = vpop.f32.mrf.mxu0
        %v8328 = vadd.f32 %v8215, %v8327
        %8329 = vmatmul.f32.gmra.mxu0 %v8026
        %v8330 = vpop.f32.mrf.mxu0
        %v8331 = vadd.f32 %v8218, %v8330
        %8332 = vmatmul.f32.gmra.mxu0 %v8030
        %v8333 = vpop.f32.mrf.mxu0
        %v8334 = vadd.f32 %v8221, %v8333
        %8335 = vmatmul.f32.gmra.mxu0 %v8034
        %v8336 = vpop.f32.mrf.mxu0
        %v8337 = vadd.f32 %v8224, %v8336
        %8338 = vmatmul.f32.gmra.mxu0 %v8038
        %v8339 = vpop.f32.mrf.mxu0
        %v8340 = vadd.f32 %v8227, %v8339
        %8341 = vmatmul.f32.gmra.mxu0 %v8042
        %v8342 = vpop.f32.mrf.mxu0
        %v8343 = vadd.f32 %v8230, %v8342
        %8344 = vmatmul.f32.gmra.mxu0 %v8046
        %v8345 = vpop.f32.mrf.mxu0
        %v8346 = vadd.f32 %v8233, %v8345
        %8347 = vmatmul.f32.gmra.mxu0 %v8050
        %v8348 = vpop.f32.mrf.mxu0
        %v8349 = vadd.f32 %v8236, %v8348
        %8350 = vmatmul.f32.gmra.mxu0 %v8054
        %v8351 = vpop.f32.mrf.mxu0
        %v8352 = vadd.f32 %v8239, %v8351
        %8353 = vmatmul.f32.gmra.mxu0 %v8058
        %v8354 = vpop.f32.mrf.mxu0
        %v8355 = vadd.f32 %v8242, %v8354
        %8356 = vmatmul.f32.gmra.mxu0 %v8062
        %v8357 = vpop.f32.mrf.mxu0
        %v8358 = vadd.f32 %v8245, %v8357
        %8359 = vmatmul.f32.gmra.mxu0 %v8066
        %v8360 = vpop.f32.mrf.mxu0
        %v8361 = vadd.f32 %v8248, %v8360
        %8362 = vdwg.mxu0
        %8363 = vmatpush.msra.mxu0 %v8116
        %8364 = vmatpush.msra.mxu0 %v8115
        %8365 = vmatpush.msra.mxu0 %v8114
        %8366 = vmatpush.msra.mxu0 %v8113
        %8367 = vmatpush.msra.mxu0 %v8112
        %8368 = vmatpush.msra.mxu0 %v8111
        %8369 = vmatpush.msra.mxu0 %v8110
        %8370 = vmatpush.msra.mxu0 %v8109
        %8371 = vmatpush.msra.mxu0 %v8108
        %8372 = vmatpush.msra.mxu0 %v8107
        %8373 = vmatpush.msra.mxu0 %v8106
        %8374 = vmatpush.msra.mxu0 %v8105
        %8375 = vmatpush.msra.mxu0 %v8104
        %8376 = vmatpush.msra.mxu0 %v8103
        %8377 = vmatpush.msra.mxu0 %v8102
        %8378 = vmatpush.msra.mxu0 %v8101
        %8379 = vmatmul.f32.gmra.mxu0 %v7943
        %v8380 = vpop.f32.mrf.mxu0
        %v8381 = vadd.f32 %v8268, %v8380
        %8382 = vmatmul.f32.gmra.mxu0 %v7947
        %v8383 = vpop.f32.mrf.mxu0
        %v8384 = vadd.f32 %v8271, %v8383
        %8385 = vmatmul.f32.gmra.mxu0 %v7951
        %v8386 = vpop.f32.mrf.mxu0
        %v8387 = vadd.f32 %v8274, %v8386
        %8388 = vmatmul.f32.gmra.mxu0 %v7955
        %v8389 = vpop.f32.mrf.mxu0
        %v8390 = vadd.f32 %v8277, %v8389
        %8391 = vmatmul.f32.gmra.mxu0 %v7959
        %v8392 = vpop.f32.mrf.mxu0
        %v8393 = vadd.f32 %v8280, %v8392
        %8394 = vmatmul.f32.gmra.mxu0 %v7963
        %v8395 = vpop.f32.mrf.mxu0
        %v8396 = vadd.f32 %v8283, %v8395
        %8397 = vmatmul.f32.gmra.mxu0 %v7967
        %v8398 = vpop.f32.mrf.mxu0
        %v8399 = vadd.f32 %v8286, %v8398
        %8400 = vmatmul.f32.gmra.mxu0 %v7971
        %v8401 = vpop.f32.mrf.mxu0
        %v8402 = vadd.f32 %v8289, %v8401
        %8403 = vmatmul.f32.gmra.mxu0 %v7975
        %v8404 = vpop.f32.mrf.mxu0
        %v8405 = vadd.f32 %v8292, %v8404
        %8406 = vmatmul.f32.gmra.mxu0 %v7979
        %v8407 = vpop.f32.mrf.mxu0
        %v8408 = vadd.f32 %v8295, %v8407
        %8409 = vmatmul.f32.gmra.mxu0 %v7983
        %v8410 = vpop.f32.mrf.mxu0
        %v8411 = vadd.f32 %v8298, %v8410
        %8412 = vmatmul.f32.gmra.mxu0 %v7987
        %v8413 = vpop.f32.mrf.mxu0
        %v8414 = vadd.f32 %v8301, %v8413
        %8415 = vmatmul.f32.gmra.mxu0 %v7991
        %v8416 = vpop.f32.mrf.mxu0
        %v8417 = vadd.f32 %v8304, %v8416
        %8418 = vmatmul.f32.gmra.mxu0 %v7995
        %v8419 = vpop.f32.mrf.mxu0
        %v8420 = vadd.f32 %v8307, %v8419
        %8421 = vmatmul.f32.gmra.mxu0 %v7999
        %v8422 = vpop.f32.mrf.mxu0
        %v8423 = vadd.f32 %v8310, %v8422
        %8424 = vmatmul.f32.gmra.mxu0 %v8003
        %v8425 = vpop.f32.mrf.mxu0
        %v8426 = vadd.f32 %v8313, %v8425
        %8427 = vmatmul.f32.gmra.mxu0 %v8007
        %v8428 = vpop.f32.mrf.mxu0
        %v8429 = vadd.f32 %v8316, %v8428
        %8430 = vmatmul.f32.gmra.mxu0 %v8011
        %v8431 = vpop.f32.mrf.mxu0
        %v8432 = vadd.f32 %v8319, %v8431
        %8433 = vmatmul.f32.gmra.mxu0 %v8015
        %v8434 = vpop.f32.mrf.mxu0
        %v8435 = vadd.f32 %v8322, %v8434
        %8436 = vmatmul.f32.gmra.mxu0 %v8019
        %v8437 = vpop.f32.mrf.mxu0
        %v8438 = vadd.f32 %v8325, %v8437
        %8439 = vmatmul.f32.gmra.mxu0 %v8023
        %v8440 = vpop.f32.mrf.mxu0
        %v8441 = vadd.f32 %v8328, %v8440
        %8442 = vmatmul.f32.gmra.mxu0 %v8027
        %v8443 = vpop.f32.mrf.mxu0
        %v8444 = vadd.f32 %v8331, %v8443
        %8445 = vmatmul.f32.gmra.mxu0 %v8031
        %v8446 = vpop.f32.mrf.mxu0
        %v8447 = vadd.f32 %v8334, %v8446
        %8448 = vmatmul.f32.gmra.mxu0 %v8035
        %v8449 = vpop.f32.mrf.mxu0
        %v8450 = vadd.f32 %v8337, %v8449
        %8451 = vmatmul.f32.gmra.mxu0 %v8039
        %v8452 = vpop.f32.mrf.mxu0
        %v8453 = vadd.f32 %v8340, %v8452
        %8454 = vmatmul.f32.gmra.mxu0 %v8043
        %v8455 = vpop.f32.mrf.mxu0
        %v8456 = vadd.f32 %v8343, %v8455
        %8457 = vmatmul.f32.gmra.mxu0 %v8047
        %v8458 = vpop.f32.mrf.mxu0
        %v8459 = vadd.f32 %v8346, %v8458
        %8460 = vmatmul.f32.gmra.mxu0 %v8051
        %v8461 = vpop.f32.mrf.mxu0
        %v8462 = vadd.f32 %v8349, %v8461
        %8463 = vmatmul.f32.gmra.mxu0 %v8055
        %v8464 = vpop.f32.mrf.mxu0
        %v8465 = vadd.f32 %v8352, %v8464
        %8466 = vmatmul.f32.gmra.mxu0 %v8059
        %v8467 = vpop.f32.mrf.mxu0
        %v8468 = vadd.f32 %v8355, %v8467
        %8469 = vmatmul.f32.gmra.mxu0 %v8063
        %v8470 = vpop.f32.mrf.mxu0
        %v8471 = vadd.f32 %v8358, %v8470
        %8472 = vmatmul.f32.gmra.mxu0 %v8067
        %v8473 = vpop.f32.mrf.mxu0
        %v8474 = vadd.f32 %v8361, %v8473
        %8475 = vdwg.mxu0
        %8476 = vmatpush.msra.mxu0 %v8132
        %8477 = vmatpush.msra.mxu0 %v8131
        %8478 = vmatpush.msra.mxu0 %v8130
        %8479 = vmatpush.msra.mxu0 %v8129
        %8480 = vmatpush.msra.mxu0 %v8128
        %8481 = vmatpush.msra.mxu0 %v8127
        %8482 = vmatpush.msra.mxu0 %v8126
        %8483 = vmatpush.msra.mxu0 %v8125
        %8484 = vmatpush.msra.mxu0 %v8124
        %8485 = vmatpush.msra.mxu0 %v8123
        %8486 = vmatpush.msra.mxu0 %v8122
        %8487 = vmatpush.msra.mxu0 %v8121
        %8488 = vmatpush.msra.mxu0 %v8120
        %8489 = vmatpush.msra.mxu0 %v8119
        %8490 = vmatpush.msra.mxu0 %v8118
        %8491 = vmatpush.msra.mxu0 %v8117
        %8492 = vmatmul.f32.gmra.mxu0 %v7944
        %v8493 = vpop.f32.mrf.mxu0
        %v8494 = vadd.f32 %v8381, %v8493
        %8495 = vmatmul.f32.gmra.mxu0 %v7948
        %v8496 = vpop.f32.mrf.mxu0
        %v8497 = vadd.f32 %v8384, %v8496
        %8498 = vmatmul.f32.gmra.mxu0 %v7952
        %v8499 = vpop.f32.mrf.mxu0
        %v8500 = vadd.f32 %v8387, %v8499
        %8501 = vmatmul.f32.gmra.mxu0 %v7956
        %v8502 = vpop.f32.mrf.mxu0
        %v8503 = vadd.f32 %v8390, %v8502
        %8504 = vmatmul.f32.gmra.mxu0 %v7960
        %v8505 = vpop.f32.mrf.mxu0
        %v8506 = vadd.f32 %v8393, %v8505
        %8507 = vmatmul.f32.gmra.mxu0 %v7964
        %v8508 = vpop.f32.mrf.mxu0
        %v8509 = vadd.f32 %v8396, %v8508
        %8510 = vmatmul.f32.gmra.mxu0 %v7968
        %v8511 = vpop.f32.mrf.mxu0
        %v8512 = vadd.f32 %v8399, %v8511
        %8513 = vmatmul.f32.gmra.mxu0 %v7972
        %v8514 = vpop.f32.mrf.mxu0
        %v8515 = vadd.f32 %v8402, %v8514
        %8516 = vmatmul.f32.gmra.mxu0 %v7976
        %v8517 = vpop.f32.mrf.mxu0
        %v8518 = vadd.f32 %v8405, %v8517
        %8519 = vmatmul.f32.gmra.mxu0 %v7980
        %v8520 = vpop.f32.mrf.mxu0
        %v8521 = vadd.f32 %v8408, %v8520
        %8522 = vmatmul.f32.gmra.mxu0 %v7984
        %v8523 = vpop.f32.mrf.mxu0
        %v8524 = vadd.f32 %v8411, %v8523
        %8525 = vmatmul.f32.gmra.mxu0 %v7988
        %v8526 = vpop.f32.mrf.mxu0
        %v8527 = vadd.f32 %v8414, %v8526
        %8528 = vmatmul.f32.gmra.mxu0 %v7992
        %v8529 = vpop.f32.mrf.mxu0
        %v8530 = vadd.f32 %v8417, %v8529
        %8531 = vmatmul.f32.gmra.mxu0 %v7996
        %v8532 = vpop.f32.mrf.mxu0
        %v8533 = vadd.f32 %v8420, %v8532
        %8534 = vmatmul.f32.gmra.mxu0 %v8000
        %v8535 = vpop.f32.mrf.mxu0
        %v8536 = vadd.f32 %v8423, %v8535
        %8537 = vmatmul.f32.gmra.mxu0 %v8004
        %v8538 = vpop.f32.mrf.mxu0
        %v8539 = vadd.f32 %v8426, %v8538
        %8540 = vmatmul.f32.gmra.mxu0 %v8008
        %v8541 = vpop.f32.mrf.mxu0
        %v8542 = vadd.f32 %v8429, %v8541
        %8543 = vmatmul.f32.gmra.mxu0 %v8012
        %v8544 = vpop.f32.mrf.mxu0
        %v8545 = vadd.f32 %v8432, %v8544
        %8546 = vmatmul.f32.gmra.mxu0 %v8016
        %v8547 = vpop.f32.mrf.mxu0
        %v8548 = vadd.f32 %v8435, %v8547
        %8549 = vmatmul.f32.gmra.mxu0 %v8020
        %v8550 = vpop.f32.mrf.mxu0
        %v8551 = vadd.f32 %v8438, %v8550
        %8552 = vmatmul.f32.gmra.mxu0 %v8024
        %v8553 = vpop.f32.mrf.mxu0
        %v8554 = vadd.f32 %v8441, %v8553
        %8555 = vmatmul.f32.gmra.mxu0 %v8028
        %v8556 = vpop.f32.mrf.mxu0
        %v8557 = vadd.f32 %v8444, %v8556
        %8558 = vmatmul.f32.gmra.mxu0 %v8032
        %v8559 = vpop.f32.mrf.mxu0
        %v8560 = vadd.f32 %v8447, %v8559
        %8561 = vmatmul.f32.gmra.mxu0 %v8036
        %v8562 = vpop.f32.mrf.mxu0
        %v8563 = vadd.f32 %v8450, %v8562
        %8564 = vmatmul.f32.gmra.mxu0 %v8040
        %v8565 = vpop.f32.mrf.mxu0
        %v8566 = vadd.f32 %v8453, %v8565
        %8567 = vmatmul.f32.gmra.mxu0 %v8044
        %v8568 = vpop.f32.mrf.mxu0
        %v8569 = vadd.f32 %v8456, %v8568
        %8570 = vmatmul.f32.gmra.mxu0 %v8048
        %v8571 = vpop.f32.mrf.mxu0
        %v8572 = vadd.f32 %v8459, %v8571
        %8573 = vmatmul.f32.gmra.mxu0 %v8052
        %v8574 = vpop.f32.mrf.mxu0
        %v8575 = vadd.f32 %v8462, %v8574
        %8576 = vmatmul.f32.gmra.mxu0 %v8056
        %v8577 = vpop.f32.mrf.mxu0
        %v8578 = vadd.f32 %v8465, %v8577
        %8579 = vmatmul.f32.gmra.mxu0 %v8060
        %v8580 = vpop.f32.mrf.mxu0
        %v8581 = vadd.f32 %v8468, %v8580
        %8582 = vmatmul.f32.gmra.mxu0 %v8064
        %v8583 = vpop.f32.mrf.mxu0
        %v8584 = vadd.f32 %v8471, %v8583
        %8585 = vmatmul.f32.gmra.mxu0 %v8068
        %v8586 = vpop.f32.mrf.mxu0
        %v8587 = vadd.f32 %v8474, %v8586
        %8588 = vdwg.mxu0
        %v8589 = vld [vmem:[%s406] sm:$0xff]
        %v8590 = vld [vmem:[%s406 + $0x8] sm:$0xff]
        %v8591 = vld [vmem:[%s406 + $0x10] sm:$0xff]
        %v8592 = vld [vmem:[%s406 + $0x18] sm:$0xff]
        %v8593 = vld [vmem:[%s406 + $0x20] sm:$0xff]
        %v8594 = vld [vmem:[%s406 + $0x28] sm:$0xff]
        %v8595 = vld [vmem:[%s406 + $0x30] sm:$0xff]
        %v8596 = vld [vmem:[%s406 + $0x38] sm:$0xff]
        %v8597 = vld [vmem:[%s406 + $0x40] sm:$0xff]
        %v8598 = vld [vmem:[%s406 + $0x48] sm:$0xff]
        %v8599 = vld [vmem:[%s406 + $0x50] sm:$0xff]
        %v8600 = vld [vmem:[%s406 + $0x58] sm:$0xff]
        %v8601 = vld [vmem:[%s406 + $0x60] sm:$0xff]
        %v8602 = vld [vmem:[%s406 + $0x68] sm:$0xff]
        %v8603 = vld [vmem:[%s406 + $0x70] sm:$0xff]
        %v8604 = vld [vmem:[%s406 + $0x78] sm:$0xff]
        %v8605 = vld [vmem:[%s406 + $0x80] sm:$0xff]
        %v8606 = vld [vmem:[%s406 + $0x88] sm:$0xff]
        %v8607 = vld [vmem:[%s406 + $0x90] sm:$0xff]
        %v8608 = vld [vmem:[%s406 + $0x98] sm:$0xff]
        %v8609 = vld [vmem:[%s406 + $0xa0] sm:$0xff]
        %v8610 = vld [vmem:[%s406 + $0xa8] sm:$0xff]
        %v8611 = vld [vmem:[%s406 + $0xb0] sm:$0xff]
        %v8612 = vld [vmem:[%s406 + $0xb8] sm:$0xff]
        %v8613 = vld [vmem:[%s406 + $0xc0] sm:$0xff]
        %v8614 = vld [vmem:[%s406 + $0xc8] sm:$0xff]
        %v8615 = vld [vmem:[%s406 + $0xd0] sm:$0xff]
        %v8616 = vld [vmem:[%s406 + $0xd8] sm:$0xff]
        %v8617 = vld [vmem:[%s406 + $0xe0] sm:$0xff]
        %v8618 = vld [vmem:[%s406 + $0xe8] sm:$0xff]
        %v8619 = vld [vmem:[%s406 + $0xf0] sm:$0xff]
        %v8620 = vld [vmem:[%s406 + $0xf8] sm:$0xff]
        %v8621 = vadd.f32 %v8589, %v8494
        %v8622 = vadd.f32 %v8590, %v8497
        %v8623 = vadd.f32 %v8591, %v8500
        %v8624 = vadd.f32 %v8592, %v8503
        %v8625 = vadd.f32 %v8593, %v8506
        %v8626 = vadd.f32 %v8594, %v8509
        %v8627 = vadd.f32 %v8595, %v8512
        %v8628 = vadd.f32 %v8596, %v8515
        %v8629 = vadd.f32 %v8597, %v8518
        %v8630 = vadd.f32 %v8598, %v8521
        %v8631 = vadd.f32 %v8599, %v8524
        %v8632 = vadd.f32 %v8600, %v8527
        %v8633 = vadd.f32 %v8601, %v8530
        %v8634 = vadd.f32 %v8602, %v8533
        %v8635 = vadd.f32 %v8603, %v8536
        %v8636 = vadd.f32 %v8604, %v8539
        %v8637 = vadd.f32 %v8605, %v8542
        %v8638 = vadd.f32 %v8606, %v8545
        %v8639 = vadd.f32 %v8607, %v8548
        %v8640 = vadd.f32 %v8608, %v8551
        %v8641 = vadd.f32 %v8609, %v8554
        %v8642 = vadd.f32 %v8610, %v8557
        %v8643 = vadd.f32 %v8611, %v8560
        %v8644 = vadd.f32 %v8612, %v8563
        %v8645 = vadd.f32 %v8613, %v8566
        %v8646 = vadd.f32 %v8614, %v8569
        %v8647 = vadd.f32 %v8615, %v8572
        %v8648 = vadd.f32 %v8616, %v8575
        %v8649 = vadd.f32 %v8617, %v8578
        %v8650 = vadd.f32 %v8618, %v8581
        %v8651 = vadd.f32 %v8619, %v8584
        %v8652 = vadd.f32 %v8620, %v8587
        %8653 = vst [vmem:[%s406] sm:$0xff] %v8621
        %8654 = vst [vmem:[%s406 + $0x8] sm:$0xff] %v8622
        %8655 = vst [vmem:[%s406 + $0x10] sm:$0xff] %v8623
        %8656 = vst [vmem:[%s406 + $0x18] sm:$0xff] %v8624
        %8657 = vst [vmem:[%s406 + $0x20] sm:$0xff] %v8625
        %8658 = vst [vmem:[%s406 + $0x28] sm:$0xff] %v8626
        %8659 = vst [vmem:[%s406 + $0x30] sm:$0xff] %v8627
        %8660 = vst [vmem:[%s406 + $0x38] sm:$0xff] %v8628
        %8661 = vst [vmem:[%s406 + $0x40] sm:$0xff] %v8629
        %8662 = vst [vmem:[%s406 + $0x48] sm:$0xff] %v8630
        %8663 = vst [vmem:[%s406 + $0x50] sm:$0xff] %v8631
        %8664 = vst [vmem:[%s406 + $0x58] sm:$0xff] %v8632
        %8665 = vst [vmem:[%s406 + $0x60] sm:$0xff] %v8633
        %8666 = vst [vmem:[%s406 + $0x68] sm:$0xff] %v8634
        %8667 = vst [vmem:[%s406 + $0x70] sm:$0xff] %v8635
        %8668 = vst [vmem:[%s406 + $0x78] sm:$0xff] %v8636
        %8669 = vst [vmem:[%s406 + $0x80] sm:$0xff] %v8637
        %8670 = vst [vmem:[%s406 + $0x88] sm:$0xff] %v8638
        %8671 = vst [vmem:[%s406 + $0x90] sm:$0xff] %v8639
        %8672 = vst [vmem:[%s406 + $0x98] sm:$0xff] %v8640
        %8673 = vst [vmem:[%s406 + $0xa0] sm:$0xff] %v8641
        %8674 = vst [vmem:[%s406 + $0xa8] sm:$0xff] %v8642
        %8675 = vst [vmem:[%s406 + $0xb0] sm:$0xff] %v8643
        %8676 = vst [vmem:[%s406 + $0xb8] sm:$0xff] %v8644
        %8677 = vst [vmem:[%s406 + $0xc0] sm:$0xff] %v8645
        %8678 = vst [vmem:[%s406 + $0xc8] sm:$0xff] %v8646
        %8679 = vst [vmem:[%s406 + $0xd0] sm:$0xff] %v8647
        %8680 = vst [vmem:[%s406 + $0xd8] sm:$0xff] %v8648
        %8681 = vst [vmem:[%s406 + $0xe0] sm:$0xff] %v8649
        %8682 = vst [vmem:[%s406 + $0xe8] sm:$0xff] %v8650
        %8683 = vst [vmem:[%s406 + $0xf0] sm:$0xff] %v8651
        %8684 = vst [vmem:[%s406 + $0xf8] sm:$0xff] %v8652
        %s8685 = sand.u32 %s209, 1
        %s8686 = scalar_lea.sflag [#allocation6], %s8685
        %s8687 = sand.u32 %s209, 1
        %s8688 = smul.addr %s8687, 256
        %s8689 = scalar_lea.vmem [#allocation15], %s8688
        // Predicated region
        $region77: #{tpu_custom_call.1} parent=51 // pred_check
          %p8690 = pneg %p219
        $region78: #{tpu_custom_call.1} parent=51 // pred_check_branch
          %8692 = sbr.rel (%p8690) target = $region80
        $region79: #{tpu_custom_call.1} parent=51 // pred_region
          %8694 = vsyncadd %s8686, 0
          %s8695 = smul.addr %s28, 32
          %s8696 = smul.addr %s8695, 8
          %s8697 = scalar_lea.hbm %s8, %s8696
          %s8698 = sshll.u32 %s8689, 4
          %s8699 = int_to_ptr.vmem [resolvable:$true] %s8698
          %s8700 = sshll.u32 %s8697, 4
          %s8701 = int_to_ptr.hbm [resolvable:$true] %s8700
          %8706 = dma.vmem_to_hbm [thread:$0]  %s8699, 4096, %s8701, %s8686, 128, 128, 8
        $region80: #{tpu_custom_call.1} parent=51 // pred_fallthru
          _
      $region52: #{tpu_custom_call.1} parent=5 // pred_fallthru
        _
      %p8707 = scmp.le.s32.totalorder 2, %s23
      // Predicated region
      $region81: #{tpu_custom_call.1} parent=5 // pred_check
        %p8708 = pneg %p8707
      $region82: #{tpu_custom_call.1} parent=5 // pred_check_branch
        %8710 = sbr.rel (%p8708) target = $region84
      $region83: #{tpu_custom_call.1} parent=5 // pred_region
        %s8711 = ssub.s32 %s23, 2
        // Predicated region
        $region85: #{tpu_custom_call.1} parent=83 // pred_check
          %p8712 = pneg %p225
        $region86: #{tpu_custom_call.1} parent=83 // pred_check_branch
          %8714 = sbr.rel (%p8712) target = $region88
        $region87: #{tpu_custom_call.1} parent=83 // pred_region
          %s8715 = sand.u32 %s210, 1
          %s8716 = scalar_lea.sflag [#allocation6], %s8715
          %s8717 = sand.u32 %s210, 1
          %s8718 = smul.addr %s8717, 256
          %s8719 = scalar_lea.vmem [#allocation15], %s8718
          %8721 = dma.done %s8716, 4096
        $region88: #{tpu_custom_call.1} parent=83 // pred_fallthru
          _
      $region84: #{tpu_custom_call.1} parent=5 // pred_fallthru
        _
    $region6: #{tpu_custom_call.1} parent=1 // loop_footer
      %s27 = sadd.s32 1, %s23
    $region7: #{tpu_custom_call.1} parent=1 // loop_footer_branch
      %22 = sbr.rel target = $region3
    $region8: #{tpu_custom_call.1} parent=1 // loop_exit
      _
    %8722 = vsyncpa [#allocation5], 1
    %s8723 = scalar_lea.sflag [#allocation5], 1
    %8724 = vsyncpa %s8723, 1
    %8725 = vsyncpa [#allocation8], 1
    %8726 = vsyncpa [#allocation11], 1
    %8727 = vsyncpa [#allocation14], 1
    %8728 = vsyncpa [#allocation6], 1
    %s8729 = scalar_lea.sflag [#allocation6], 1
    %8730 = vsyncpa %s8729, 1

</llo_original>
